<compile_context>
chip_gen: v6e
topology: v6e:2x2x1
jax: 0.10.0
libtpu: 0.0.40
codegen_flags: <defaults>
</compile_context>

<pallas_src>
import functools

import jax
import jax.numpy as jnp
from jax import lax
from jax.experimental import pallas as pl
from jax.experimental.pallas import tpu as pltpu

IN_CHANNELS = 1
KERNEL_SIZE = 5
NB_FEATURES = 336
OUT_CHANNELS_1 = 12
OUT_CHANNELS_2 = 32
PADDING = KERNEL_SIZE // 2
POOLING_KERNEL_SIZE = 2

IMG = 14                                        # conv1 'same' keeps 14
CONV2_OUT = IMG - KERNEL_SIZE + 1               # 10
POOLED = CONV2_OUT // POOLING_KERNEL_SIZE       # 5
K1 = IN_CHANNELS * KERNEL_SIZE * KERNEL_SIZE    # 25
K2 = OUT_CHANNELS_1 * KERNEL_SIZE * KERNEL_SIZE  # 300


# ---------------- Pallas kernels ----------------

def _conv1_kernel(p_ref, w_ref, b_ref, o_ref):
    # relu(patches @ w + b): matmul on the MXU, bias/ReLU epilogue on the VPU.
    acc = jnp.dot(p_ref[...], w_ref[...], preferred_element_type=jnp.float32)
    o_ref[...] = jnp.maximum(acc + b_ref[...], 0.0)


def _conv2_pool_fc_kernel(p2_ref, w2_ref, b2_ref,
                          wf1_ref, bf1_ref, wf2_ref, bf2_ref,
                          wf3_ref, bf3_ref, wf4_ref, bf4_ref,
                          o_ref, *, batch):
    n = batch
    # conv2 as one im2col matmul.  The wrapper pre-permuted the patch rows to
    # row = ((g*2 + dy)*2 + dx)*n + b   with g = y'*5 + x' the pooled pixel.
    h2 = jnp.dot(p2_ref[...], w2_ref[...], preferred_element_type=jnp.float32)
    h2 = jnp.maximum(h2 + b2_ref[...], 0.0)                       # (100*n, 32)

    # Fused 2x2 max-pool + flatten + fc1: the 4 pooling partners of pixel g are
    # four contiguous n-row blocks; contract the 32 channels against that
    # pixel's pre-sliced fc1 weight slab and accumulate.
    acc1 = jnp.zeros((n, NB_FEATURES), jnp.float32)
    for g in range(POOLED * POOLED):
        base = g * 4 * n
        c00 = h2[base + 0 * n: base + 1 * n, :]
        c01 = h2[base + 1 * n: base + 2 * n, :]
        c10 = h2[base + 2 * n: base + 3 * n, :]
        c11 = h2[base + 3 * n: base + 4 * n, :]
        pooled = jnp.maximum(jnp.maximum(c00, c01),
                             jnp.maximum(c10, c11))               # (n, 32)
        acc1 = acc1 + jnp.dot(pooled, wf1_ref[g],
                              preferred_element_type=jnp.float32)
    h = jnp.maximum(acc1 + bf1_ref[...], 0.0)                                 # (n, 336)
    h = jnp.maximum(jnp.dot(h, wf2_ref[...],
                            preferred_element_type=jnp.float32) + bf2_ref[...], 0.0)  # (n, 168)
    h = jnp.maximum(jnp.dot(h, wf3_ref[...],
                            preferred_element_type=jnp.float32) + bf3_ref[...], 0.0)  # (n, 84)
    o_ref[...] = (jnp.dot(h, wf4_ref[...],
                          preferred_element_type=jnp.float32) + bf4_ref[...])         # (n, 10)


# ---------------- pallas_call wrappers ----------------

def _vmem_specs(k):
    return [pl.BlockSpec(memory_space=pltpu.MemorySpace.VMEM)] * k


def conv1_matmul(patches, w, b):
    m = patches.shape[0]
    return pl.pallas_call(
        _conv1_kernel,
        out_shape=jax.ShapeDtypeStruct((m, w.shape[1]), jnp.float32),
        in_specs=_vmem_specs(3),
        out_specs=pl.BlockSpec(memory_space=pltpu.MemorySpace.VMEM),
    )(patches, w, b)


def conv2_pool_fc(patches2, prep, batch):
    args = (patches2, prep["w2"], prep["b2"], prep["wf1"], prep["bf1"],
            prep["wf2"], prep["bf2"], prep["wf3"], prep["bf3"],
            prep["wf4"], prep["bf4"])
    kernel = functools.partial(_conv2_pool_fc_kernel, batch=batch)
    return pl.pallas_call(
        kernel,
        out_shape=jax.ShapeDtypeStruct((batch, 10), jnp.float32),
        in_specs=_vmem_specs(len(args)),
        out_specs=pl.BlockSpec(memory_space=pltpu.MemorySpace.VMEM),
    )(*args)


# ---------------- parameters ----------------

def init_params(key):
    ks = jax.random.split(key, 12)

    def w(k, shape, scale):
        return jax.random.normal(k, shape, jnp.float32) * scale

    return {  # PyTorch-layout parameters (same layout as the nn.Module).
        "conv1_w": w(ks[0], (OUT_CHANNELS_1, IN_CHANNELS, KERNEL_SIZE, KERNEL_SIZE), 0.2),
        "conv1_b": w(ks[1], (OUT_CHANNELS_1,), 0.1),
        "conv2_w": w(ks[2], (OUT_CHANNELS_2, OUT_CHANNELS_1, KERNEL_SIZE, KERNEL_SIZE), 0.05),
        "conv2_b": w(ks[3], (OUT_CHANNELS_2,), 0.1),
        "fc1_w": w(ks[4], (NB_FEATURES, OUT_CHANNELS_2 * POOLED * POOLED), 0.03),
        "fc1_b": w(ks[5], (NB_FEATURES,), 0.1),
        "fc2_w": w(ks[6], (NB_FEATURES // 2, NB_FEATURES), 0.05),
        "fc2_b": w(ks[7], (NB_FEATURES // 2,), 0.1),
        "fc3_w": w(ks[8], (NB_FEATURES // 4, NB_FEATURES // 2), 0.08),
        "fc3_b": w(ks[9], (NB_FEATURES // 4,), 0.1),
        "fc4_w": w(ks[10], (10, NB_FEATURES // 4), 0.1),
        "fc4_b": w(ks[11], (10,), 0.1),
    }


def prepare_params(p):
    """One-time re-layout of PyTorch-style params into kernel layouts."""
    # Conv weights -> (Cin*kh*kw, Cout) im2col matrices, feature order (c, i, j)
    # which matches lax.conv_general_dilated_patches output channel ordering.
    w1 = p["conv1_w"].reshape(OUT_CHANNELS_1, K1).T
    w2 = p["conv2_w"].reshape(OUT_CHANNELS_2, K2).T
    # fc1 weight -> (25, 32, 336): one (C, F) slab per pooled pixel g = y'*5+x',
    # so the kernel contracts channels right after pooling (PyTorch flatten
    # order c*25 + y'*5 + x' is preserved).
    wf1 = (p["fc1_w"]
           .reshape(NB_FEATURES, OUT_CHANNELS_2, POOLED, POOLED)
           .transpose(2, 3, 1, 0)
           .reshape(POOLED * POOLED, OUT_CHANNELS_2, NB_FEATURES))
    return {
        "w1": w1, "b1": p["conv1_b"].reshape(1, OUT_CHANNELS_1),
        "w2": w2, "b2": p["conv2_b"].reshape(1, OUT_CHANNELS_2),
        "wf1": wf1, "bf1": p["fc1_b"].reshape(1, NB_FEATURES),
        "wf2": p["fc2_w"].T, "bf2": p["fc2_b"].reshape(1, NB_FEATURES // 2),
        "wf3": p["fc3_w"].T, "bf3": p["fc3_b"].reshape(1, NB_FEATURES // 4),
        "wf4": p["fc4_w"].T, "bf4": p["fc4_b"].reshape(1, 10),
    }


# ---------------- forward ----------------

def lenet5_forward(prep, x):
    """x: (N, 1, 14, 14) NCHW float32 -> (N, 10) logits."""
    n = x.shape[0]
    x = x.reshape(n, IMG, IMG, IN_CHANNELS)   # NCHW->NHWC is a pure reshape (C=1)

    # conv1: one fused XLA im2col op + Pallas matmul(+bias+ReLU).
    p1 = lax.conv_general_dilated_patches(
        x, (KERNEL_SIZE, KERNEL_SIZE), (1, 1),
        ((PADDING, PADDING), (PADDING, PADDING)),
        dimension_numbers=("NHWC", "HWIO", "NHWC"))            # (N, 14, 14, 25)
    p1 = p1.reshape(n * IMG * IMG, K1)
    h1 = conv1_matmul(p1, prep["w1"], prep["b1"])              # (N*196, 12)
    h1 = h1.reshape(n, IMG, IMG, OUT_CHANNELS_1)               # NHWC

    # conv2 patches (feature order ci,kh,kw matches conv2_w.reshape); rows are
    # permuted to (y', x', dy, dx, n) so the max-pool partners are contiguous.
    p2 = lax.conv_general_dilated_patches(
        h1, (KERNEL_SIZE, KERNEL_SIZE), (1, 1), ((0, 0), (0, 0)),
        dimension_numbers=("NHWC", "HWIO", "NHWC"))            # (N, 10, 10, 300)
    p2 = p2.reshape(n, POOLED, 2, POOLED, 2, K2).transpose(1, 3, 2, 4, 0, 5)
    p2 = p2.reshape(CONV2_OUT * CONV2_OUT * n, K2)             # (100*N, 300)

    # conv2 + bias + ReLU + 2x2 max-pool + fc1..fc4, all in one Pallas kernel.
    return conv2_pool_fc(p2, prep, n)


if __name__ == "__main__":
    key = jax.random.PRNGKey(0)
    pkey, xkey = jax.random.split(key)
    prep = prepare_params(init_params(pkey))   # one-time weight re-layout
    x = jax.random.normal(xkey, (2, IN_CHANNELS, IMG, IMG), jnp.float32)
    out = jax.jit(lenet5_forward)(prep, x)
    out = jax.block_until_ready(out)
    assert out.shape == (2, 10), out.shape
    assert out.dtype == jnp.float32
    print("KERNEL_OK")
</pallas_src>

<mosaic_0001>
module attributes {stable_mosaic.version = 11 : i64} {
  func.func @_conv1_kernel(%arg0: memref<392x25xf32, #tpu.memory_space<vmem>>, %arg1: memref<25x12xf32, #tpu.memory_space<vmem>>, %arg2: memref<1x12xf32, #tpu.memory_space<vmem>>, %arg3: memref<392x12xf32, #tpu.memory_space<vmem>>) attributes {dimension_semantics = [], scalar_prefetch = 0 : i64, scratch_operands = 0 : i64, tpu.core_type = #tpu.core_type<tc>} {
    %c0 = arith.constant 0 : index
    %c0_0 = arith.constant 0 : index
    %0 = vector.load %arg0[%c0, %c0_0] : memref<392x25xf32, #tpu.memory_space<vmem>>, vector<392x25xf32>
    %c0_1 = arith.constant 0 : index
    %c0_2 = arith.constant 0 : index
    %1 = vector.load %arg1[%c0_1, %c0_2] : memref<25x12xf32, #tpu.memory_space<vmem>>, vector<25x12xf32>
    %cst = arith.constant dense<0.000000e+00> : vector<392x12xf32>
    %2 = tpu.matmul %0, %1, %cst {dimension_numbers = #tpu.dot_dimension_numbers<[1], [0], [0], [1], [0, 0, 1, 1], [], []>} : vector<392x25xf32>, vector<25x12xf32>, vector<392x12xf32> -> vector<392x12xf32>
    %c0_3 = arith.constant 0 : index
    %c0_4 = arith.constant 0 : index
    %3 = vector.load %arg2[%c0_3, %c0_4] : memref<1x12xf32, #tpu.memory_space<vmem>>, vector<1x12xf32>
    %4 = vector.broadcast %3 : vector<1x12xf32> to vector<392x12xf32>
    %5 = arith.addf %2, %4 : vector<392x12xf32>
    %cst_5 = arith.constant 0.000000e+00 : f32
    %6 = vector.broadcast %cst_5 : f32 to vector<392x12xf32>
    %7 = arith.maximumf %5, %6 : vector<392x12xf32>
    %c0_6 = arith.constant 0 : index
    %c0_7 = arith.constant 0 : index
    %8 = vector.load %arg3[%c0_6, %c0_7] : memref<392x12xf32, #tpu.memory_space<vmem>>, vector<392x12xf32>
    tpu.vector_store %arg3[%c0_6, %c0_7], %7 {strides = array<i32>} : memref<392x12xf32, #tpu.memory_space<vmem>>, vector<392x12xf32>,
    return
  }
}

module attributes {stable_mosaic.version = 11 : i64} {
  func.func @_conv2_pool_fc_kernel(%arg0: memref<200x300xf32, #tpu.memory_space<vmem>>, %arg1: memref<300x32xf32, #tpu.memory_space<vmem>>, %arg2: memref<1x32xf32, #tpu.memory_space<vmem>>, %arg3: memref<25x32x336xf32, #tpu.memory_space<vmem>>, %arg4: memref<1x336xf32, #tpu.memory_space<vmem>>, %arg5: memref<336x168xf32, #tpu.memory_space<vmem>>, %arg6: memref<1x168xf32, #tpu.memory_space<vmem>>, %arg7: memref<168x84xf32, #tpu.memory_space<vmem>>, %arg8: memref<1x84xf32, #tpu.memory_space<vmem>>, %arg9: memref<84x10xf32, #tpu.memory_space<vmem>>, %arg10: memref<1x10xf32, #tpu.memory_space<vmem>>, %arg11: memref<2x10xf32, #tpu.memory_space<vmem>>) attributes {dimension_semantics = [], scalar_prefetch = 0 : i64, scratch_operands = 0 : i64, tpu.core_type = #tpu.core_type<tc>} {
    %c0 = arith.constant 0 : index
    %c0_0 = arith.constant 0 : index
    %0 = vector.load %arg0[%c0, %c0_0] : memref<200x300xf32, #tpu.memory_space<vmem>>, vector<200x300xf32>
    %c0_1 = arith.constant 0 : index
    %c0_2 = arith.constant 0 : index
    %1 = vector.load %arg1[%c0_1, %c0_2] : memref<300x32xf32, #tpu.memory_space<vmem>>, vector<300x32xf32>
    %cst = arith.constant dense<0.000000e+00> : vector<200x32xf32>
    %2 = tpu.matmul %0, %1, %cst {dimension_numbers = #tpu.dot_dimension_numbers<[1], [0], [0], [1], [0, 0, 1, 1], [], []>} : vector<200x300xf32>, vector<300x32xf32>, vector<200x32xf32> -> vector<200x32xf32>
    %c0_3 = arith.constant 0 : index
    %c0_4 = arith.constant 0 : index
    %3 = vector.load %arg2[%c0_3, %c0_4] : memref<1x32xf32, #tpu.memory_space<vmem>>, vector<1x32xf32>
    %4 = vector.broadcast %3 : vector<1x32xf32> to vector<200x32xf32>
    %5 = arith.addf %2, %4 : vector<200x32xf32>
    %cst_5 = arith.constant 0.000000e+00 : f32
    %6 = vector.broadcast %cst_5 : f32 to vector<200x32xf32>
    %7 = arith.maximumf %5, %6 : vector<200x32xf32>
    %cst_6 = arith.constant 0.000000e+00 : f32
    %8 = vector.broadcast %cst_6 : f32 to vector<2x336xf32>
    %9 = vector.extract_strided_slice %7 {offsets = [0, 0], sizes = [2, 32], strides = [1, 1]} : vector<200x32xf32> to vector<2x32xf32>
    %10 = vector.extract_strided_slice %7 {offsets = [2, 0], sizes = [2, 32], strides = [1, 1]} : vector<200x32xf32> to vector<2x32xf32>
    %11 = vector.extract_strided_slice %7 {offsets = [4, 0], sizes = [2, 32], strides = [1, 1]} : vector<200x32xf32> to vector<2x32xf32>
    %12 = vector.extract_strided_slice %7 {offsets = [6, 0], sizes = [2, 32], strides = [1, 1]} : vector<200x32xf32> to vector<2x32xf32>
    %13 = arith.maximumf %9, %10 : vector<2x32xf32>
    %14 = arith.maximumf %11, %12 : vector<2x32xf32>
    %15 = arith.maximumf %13, %14 : vector<2x32xf32>
    %c0_7 = arith.constant 0 : index
    %c0_8 = arith.constant 0 : index
    %c0_9 = arith.constant 0 : index
    %16 = vector.load %arg3[%c0_7, %c0_8, %c0_9] : memref<25x32x336xf32, #tpu.memory_space<vmem>>, vector<1x32x336xf32>
    %17 = vector.shape_cast %16 : vector<1x32x336xf32> to vector<32x336xf32>
    %cst_10 = arith.constant dense<0.000000e+00> : vector<2x336xf32>
    %18 = tpu.matmul %15, %17, %cst_10 {dimension_numbers = #tpu.dot_dimension_numbers<[1], [0], [0], [1], [0, 0, 1, 1], [], []>} : vector<2x32xf32>, vector<32x336xf32>, vector<2x336xf32> -> vector<2x336xf32>
    %19 = arith.addf %8, %18 : vector<2x336xf32>
    %20 = vector.extract_strided_slice %7 {offsets = [8, 0], sizes = [2, 32], strides = [1, 1]} : vector<200x32xf32> to vector<2x32xf32>
    %21 = vector.extract_strided_slice %7 {offsets = [10, 0], sizes = [2, 32], strides = [1, 1]} : vector<200x32xf32> to vector<2x32xf32>
    %22 = vector.extract_strided_slice %7 {offsets = [12, 0], sizes = [2, 32], strides = [1, 1]} : vector<200x32xf32> to vector<2x32xf32>
    %23 = vector.extract_strided_slice %7 {offsets = [14, 0], sizes = [2, 32], strides = [1, 1]} : vector<200x32xf32> to vector<2x32xf32>
    %24 = arith.maximumf %20, %21 : vector<2x32xf32>
    %25 = arith.maximumf %22, %23 : vector<2x32xf32>
    %26 = arith.maximumf %24, %25 : vector<2x32xf32>
    %c1 = arith.constant 1 : index
    %c0_11 = arith.constant 0 : index
    %c0_12 = arith.constant 0 : index
    %27 = vector.load %arg3[%c1, %c0_11, %c0_12] : memref<25x32x336xf32, #tpu.memory_space<vmem>>, vector<1x32x336xf32>
    %28 = vector.shape_cast %27 : vector<1x32x336xf32> to vector<32x336xf32>
    %cst_13 = arith.constant dense<0.000000e+00> : vector<2x336xf32>
    %29 = tpu.matmul %26, %28, %cst_13 {dimension_numbers = #tpu.dot_dimension_numbers<[1], [0], [0], [1], [0, 0, 1, 1], [], []>} : vector<2x32xf32>, vector<32x336xf32>, vector<2x336xf32> -> vector<2x336xf32>
    %30 = arith.addf %19, %29 : vector<2x336xf32>
    %31 = vector.extract_strided_slice %7 {offsets = [16, 0], sizes = [2, 32], strides = [1, 1]} : vector<200x32xf32> to vector<2x32xf32>
    %32 = vector.extract_strided_slice %7 {offsets = [18, 0], sizes = [2, 32], strides = [1, 1]} : vector<200x32xf32> to vector<2x32xf32>
    %33 = vector.extract_strided_slice %7 {offsets = [20, 0], sizes = [2, 32], strides = [1, 1]} : vector<200x32xf32> to vector<2x32xf32>
    %34 = vector.extract_strided_slice %7 {offsets = [22, 0], sizes = [2, 32], strides = [1, 1]} : vector<200x32xf32> to vector<2x32xf32>
    %35 = arith.maximumf %31, %32 : vector<2x32xf32>
    %36 = arith.maximumf %33, %34 : vector<2x32xf32>
    %37 = arith.maximumf %35, %36 : vector<2x32xf32>
    %c2 = arith.constant 2 : index
    %c0_14 = arith.constant 0 : index
    %c0_15 = arith.constant 0 : index
    %38 = vector.load %arg3[%c2, %c0_14, %c0_15] : memref<25x32x336xf32, #tpu.memory_space<vmem>>, vector<1x32x336xf32>
    %39 = vector.shape_cast %38 : vector<1x32x336xf32> to vector<32x336xf32>
    %cst_16 = arith.constant dense<0.000000e+00> : vector<2x336xf32>
    %40 = tpu.matmul %37, %39, %cst_16 {dimension_numbers = #tpu.dot_dimension_numbers<[1], [0], [0], [1], [0, 0, 1, 1], [], []>} : vector<2x32xf32>, vector<32x336xf32>, vector<2x336xf32> -> vector<2x336xf32>
    %41 = arith.addf %30, %40 : vector<2x336xf32>
    %42 = vector.extract_strided_slice %7 {offsets = [24, 0], sizes = [2, 32], strides = [1, 1]} : vector<200x32xf32> to vector<2x32xf32>
    %43 = vector.extract_strided_slice %7 {offsets = [26, 0], sizes = [2, 32], strides = [1, 1]} : vector<200x32xf32> to vector<2x32xf32>
    %44 = vector.extract_strided_slice %7 {offsets = [28, 0], sizes = [2, 32], strides = [1, 1]} : vector<200x32xf32> to vector<2x32xf32>
    %45 = vector.extract_strided_slice %7 {offsets = [30, 0], sizes = [2, 32], strides = [1, 1]} : vector<200x32xf32> to vector<2x32xf32>
    %46 = arith.maximumf %42, %43 : vector<2x32xf32>
    %47 = arith.maximumf %44, %45 : vector<2x32xf32>
    %48 = arith.maximumf %46, %47 : vector<2x32xf32>
    %c3 = arith.constant 3 : index
    %c0_17 = arith.constant 0 : index
    %c0_18 = arith.constant 0 : index
    %49 = vector.load %arg3[%c3, %c0_17, %c0_18] : memref<25x32x336xf32, #tpu.memory_space<vmem>>, vector<1x32x336xf32>
    %50 = vector.shape_cast %49 : vector<1x32x336xf32> to vector<32x336xf32>
    %cst_19 = arith.constant dense<0.000000e+00> : vector<2x336xf32>
    %51 = tpu.matmul %48, %50, %cst_19 {dimension_numbers = #tpu.dot_dimension_numbers<[1], [0], [0], [1], [0, 0, 1, 1], [], []>} : vector<2x32xf32>, vector<32x336xf32>, vector<2x336xf32> -> vector<2x336xf32>
    %52 = arith.addf %41, %51 : vector<2x336xf32>
    %53 = vector.extract_strided_slice %7 {offsets = [32, 0], sizes = [2, 32], strides = [1, 1]} : vector<200x32xf32> to vector<2x32xf32>
    %54 = vector.extract_strided_slice %7 {offsets = [34, 0], sizes = [2, 32], strides = [1, 1]} : vector<200x32xf32> to vector<2x32xf32>
    %55 = vector.extract_strided_slice %7 {offsets = [36, 0], sizes = [2, 32], strides = [1, 1]} : vector<200x32xf32> to vector<2x32xf32>
    %56 = vector.extract_strided_slice %7 {offsets = [38, 0], sizes = [2, 32], strides = [1, 1]} : vector<200x32xf32> to vector<2x32xf32>
    %57 = arith.maximumf %53, %54 : vector<2x32xf32>
    %58 = arith.maximumf %55, %56 : vector<2x32xf32>
    %59 = arith.maximumf %57, %58 : vector<2x32xf32>
    %c4 = arith.constant 4 : index
    %c0_20 = arith.constant 0 : index
    %c0_21 = arith.constant 0 : index
    %60 = vector.load %arg3[%c4, %c0_20, %c0_21] : memref<25x32x336xf32, #tpu.memory_space<vmem>>, vector<1x32x336xf32>
    %61 = vector.shape_cast %60 : vector<1x32x336xf32> to vector<32x336xf32>
    %cst_22 = arith.constant dense<0.000000e+00> : vector<2x336xf32>
    %62 = tpu.matmul %59, %61, %cst_22 {dimension_numbers = #tpu.dot_dimension_numbers<[1], [0], [0], [1], [0, 0, 1, 1], [], []>} : vector<2x32xf32>, vector<32x336xf32>, vector<2x336xf32> -> vector<2x336xf32>
    %63 = arith.addf %52, %62 : vector<2x336xf32>
    %64 = vector.extract_strided_slice %7 {offsets = [40, 0], sizes = [2, 32], strides = [1, 1]} : vector<200x32xf32> to vector<2x32xf32>
    %65 = vector.extract_strided_slice %7 {offsets = [42, 0], sizes = [2, 32], strides = [1, 1]} : vector<200x32xf32> to vector<2x32xf32>
    %66 = vector.extract_strided_slice %7 {offsets = [44, 0], sizes = [2, 32], strides = [1, 1]} : vector<200x32xf32> to vector<2x32xf32>
    %67 = vector.extract_strided_slice %7 {offsets = [46, 0], sizes = [2, 32], strides = [1, 1]} : vector<200x32xf32> to vector<2x32xf32>
    %68 = arith.maximumf %64, %65 : vector<2x32xf32>
    %69 = arith.maximumf %66, %67 : vector<2x32xf32>
    %70 = arith.maximumf %68, %69 : vector<2x32xf32>
    %c5 = arith.constant 5 : index
    %c0_23 = arith.constant 0 : index
    %c0_24 = arith.constant 0 : index
    %71 = vector.load %arg3[%c5, %c0_23, %c0_24] : memref<25x32x336xf32, #tpu.memory_space<vmem>>, vector<1x32x336xf32>
    %72 = vector.shape_cast %71 : vector<1x32x336xf32> to vector<32x336xf32>
    %cst_25 = arith.constant dense<0.000000e+00> : vector<2x336xf32>
    %73 = tpu.matmul %70, %72, %cst_25 {dimension_numbers = #tpu.dot_dimension_numbers<[1], [0], [0], [1], [0, 0, 1, 1], [], []>} : vector<2x32xf32>, vector<32x336xf32>, vector<2x336xf32> -> vector<2x336xf32>
    %74 = arith.addf %63, %73 : vector<2x336xf32>
    %75 = vector.extract_strided_slice %7 {offsets = [48, 0], sizes = [2, 32], strides = [1, 1]} : vector<200x32xf32> to vector<2x32xf32>
    %76 = vector.extract_strided_slice %7 {offsets = [50, 0], sizes = [2, 32], strides = [1, 1]} : vector<200x32xf32> to vector<2x32xf32>
    %77 = vector.extract_strided_slice %7 {offsets = [52, 0], sizes = [2, 32], strides = [1, 1]} : vector<200x32xf32> to vector<2x32xf32>
    %78 = vector.extract_strided_slice %7 {offsets = [54, 0], sizes = [2, 32], strides = [1, 1]} : vector<200x32xf32> to vector<2x32xf32>
    %79 = arith.maximumf %75, %76 : vector<2x32xf32>
    %80 = arith.maximumf %77, %78 : vector<2x32xf32>
    %81 = arith.maximumf %79, %80 : vector<2x32xf32>
    %c6 = arith.constant 6 : index
    %c0_26 = arith.constant 0 : index
    %c0_27 = arith.constant 0 : index
    %82 = vector.load %arg3[%c6, %c0_26, %c0_27] : memref<25x32x336xf32, #tpu.memory_space<vmem>>, vector<1x32x336xf32>
    %83 = vector.shape_cast %82 : vector<1x32x336xf32> to vector<32x336xf32>
    %cst_28 = arith.constant dense<0.000000e+00> : vector<2x336xf32>
    %84 = tpu.matmul %81, %83, %cst_28 {dimension_numbers = #tpu.dot_dimension_numbers<[1], [0], [0], [1], [0, 0, 1, 1], [], []>} : vector<2x32xf32>, vector<32x336xf32>, vector<2x336xf32> -> vector<2x336xf32>
    %85 = arith.addf %74, %84 : vector<2x336xf32>
    %86 = vector.extract_strided_slice %7 {offsets = [56, 0], sizes = [2, 32], strides = [1, 1]} : vector<200x32xf32> to vector<2x32xf32>
    %87 = vector.extract_strided_slice %7 {offsets = [58, 0], sizes = [2, 32], strides = [1, 1]} : vector<200x32xf32> to vector<2x32xf32>
    %88 = vector.extract_strided_slice %7 {offsets = [60, 0], sizes = [2, 32], strides = [1, 1]} : vector<200x32xf32> to vector<2x32xf32>
    %89 = vector.extract_strided_slice %7 {offsets = [62, 0], sizes = [2, 32], strides = [1, 1]} : vector<200x32xf32> to vector<2x32xf32>
    %90 = arith.maximumf %86, %87 : vector<2x32xf32>
    %91 = arith.maximumf %88, %89 : vector<2x32xf32>
    %92 = arith.maximumf %90, %91 : vector<2x32xf32>
    %c7 = arith.constant 7 : index
    %c0_29 = arith.constant 0 : index
    %c0_30 = arith.constant 0 : index
    %93 = vector.load %arg3[%c7, %c0_29, %c0_30] : memref<25x32x336xf32, #tpu.memory_space<vmem>>, vector<1x32x336xf32>
    %94 = vector.shape_cast %93 : vector<1x32x336xf32> to vector<32x336xf32>
    %cst_31 = arith.constant dense<0.000000e+00> : vector<2x336xf32>
    %95 = tpu.matmul %92, %94, %cst_31 {dimension_numbers = #tpu.dot_dimension_numbers<[1], [0], [0], [1], [0, 0, 1, 1], [], []>} : vector<2x32xf32>, vector<32x336xf32>, vector<2x336xf32> -> vector<2x336xf32>
    %96 = arith.addf %85, %95 : vector<2x336xf32>
    %97 = vector.extract_strided_slice %7 {offsets = [64, 0], sizes = [2, 32], strides = [1, 1]} : vector<200x32xf32> to vector<2x32xf32>
    %98 = vector.extract_strided_slice %7 {offsets = [66, 0], sizes = [2, 32], strides = [1, 1]} : vector<200x32xf32> to vector<2x32xf32>
    %99 = vector.extract_strided_slice %7 {offsets = [68, 0], sizes = [2, 32], strides = [1, 1]} : vector<200x32xf32> to vector<2x32xf32>
    %100 = vector.extract_strided_slice %7 {offsets = [70, 0], sizes = [2, 32], strides = [1, 1]} : vector<200x32xf32> to vector<2x32xf32>
    %101 = arith.maximumf %97, %98 : vector<2x32xf32>
    %102 = arith.maximumf %99, %100 : vector<2x32xf32>
    %103 = arith.maximumf %101, %102 : vector<2x32xf32>
    %c8 = arith.constant 8 : index
    %c0_32 = arith.constant 0 : index
    %c0_33 = arith.constant 0 : index
    %104 = vector.load %arg3[%c8, %c0_32, %c0_33] : memref<25x32x336xf32, #tpu.memory_space<vmem>>, vector<1x32x336xf32>
    %105 = vector.shape_cast %104 : vector<1x32x336xf32> to vector<32x336xf32>
    %cst_34 = arith.constant dense<0.000000e+00> : vector<2x336xf32>
    %106 = tpu.matmul %103, %105, %cst_34 {dimension_numbers = #tpu.dot_dimension_numbers<[1], [0], [0], [1], [0, 0, 1, 1], [], []>} : vector<2x32xf32>, vector<32x336xf32>, vector<2x336xf32> -> vector<2x336xf32>
    %107 = arith.addf %96, %106 : vector<2x336xf32>
    %108 = vector.extract_strided_slice %7 {offsets = [72, 0], sizes = [2, 32], strides = [1, 1]} : vector<200x32xf32> to vector<2x32xf32>
    %109 = vector.extract_strided_slice %7 {offsets = [74, 0], sizes = [2, 32], strides = [1, 1]} : vector<200x32xf32> to vector<2x32xf32>
    %110 = vector.extract_strided_slice %7 {offsets = [76, 0], sizes = [2, 32], strides = [1, 1]} : vector<200x32xf32> to vector<2x32xf32>
    %111 = vector.extract_strided_slice %7 {offsets = [78, 0], sizes = [2, 32], strides = [1, 1]} : vector<200x32xf32> to vector<2x32xf32>
    %112 = arith.maximumf %108, %109 : vector<2x32xf32>
    %113 = arith.maximumf %110, %111 : vector<2x32xf32>
    %114 = arith.maximumf %112, %113 : vector<2x32xf32>
    %c9 = arith.constant 9 : index
    %c0_35 = arith.constant 0 : index
    %c0_36 = arith.constant 0 : index
    %115 = vector.load %arg3[%c9, %c0_35, %c0_36] : memref<25x32x336xf32, #tpu.memory_space<vmem>>, vector<1x32x336xf32>
    %116 = vector.shape_cast %115 : vector<1x32x336xf32> to vector<32x336xf32>
    %cst_37 = arith.constant dense<0.000000e+00> : vector<2x336xf32>
    %117 = tpu.matmul %114, %116, %cst_37 {dimension_numbers = #tpu.dot_dimension_numbers<[1], [0], [0], [1], [0, 0, 1, 1], [], []>} : vector<2x32xf32>, vector<32x336xf32>, vector<2x336xf32> -> vector<2x336xf32>
    %118 = arith.addf %107, %117 : vector<2x336xf32>
    %119 = vector.extract_strided_slice %7 {offsets = [80, 0], sizes = [2, 32], strides = [1, 1]} : vector<200x32xf32> to vector<2x32xf32>
    %120 = vector.extract_strided_slice %7 {offsets = [82, 0], sizes = [2, 32], strides = [1, 1]} : vector<200x32xf32> to vector<2x32xf32>
    %121 = vector.extract_strided_slice %7 {offsets = [84, 0], sizes = [2, 32], strides = [1, 1]} : vector<200x32xf32> to vector<2x32xf32>
    %122 = vector.extract_strided_slice %7 {offsets = [86, 0], sizes = [2, 32], strides = [1, 1]} : vector<200x32xf32> to vector<2x32xf32>
    %123 = arith.maximumf %119, %120 : vector<2x32xf32>
    %124 = arith.maximumf %121, %122 : vector<2x32xf32>
    %125 = arith.maximumf %123, %124 : vector<2x32xf32>
    %c10 = arith.constant 10 : index
    %c0_38 = arith.constant 0 : index
    %c0_39 = arith.constant 0 : index
    %126 = vector.load %arg3[%c10, %c0_38, %c0_39] : memref<25x32x336xf32, #tpu.memory_space<vmem>>, vector<1x32x336xf32>
    %127 = vector.shape_cast %126 : vector<1x32x336xf32> to vector<32x336xf32>
    %cst_40 = arith.constant dense<0.000000e+00> : vector<2x336xf32>
    %128 = tpu.matmul %125, %127, %cst_40 {dimension_numbers = #tpu.dot_dimension_numbers<[1], [0], [0], [1], [0, 0, 1, 1], [], []>} : vector<2x32xf32>, vector<32x336xf32>, vector<2x336xf32> -> vector<2x336xf32>
    %129 = arith.addf %118, %128 : vector<2x336xf32>
    %130 = vector.extract_strided_slice %7 {offsets = [88, 0], sizes = [2, 32], strides = [1, 1]} : vector<200x32xf32> to vector<2x32xf32>
    %131 = vector.extract_strided_slice %7 {offsets = [90, 0], sizes = [2, 32], strides = [1, 1]} : vector<200x32xf32> to vector<2x32xf32>
    %132 = vector.extract_strided_slice %7 {offsets = [92, 0], sizes = [2, 32], strides = [1, 1]} : vector<200x32xf32> to vector<2x32xf32>
    %133 = vector.extract_strided_slice %7 {offsets = [94, 0], sizes = [2, 32], strides = [1, 1]} : vector<200x32xf32> to vector<2x32xf32>
    %134 = arith.maximumf %130, %131 : vector<2x32xf32>
    %135 = arith.maximumf %132, %133 : vector<2x32xf32>
    %136 = arith.maximumf %134, %135 : vector<2x32xf32>
    %c11 = arith.constant 11 : index
    %c0_41 = arith.constant 0 : index
    %c0_42 = arith.constant 0 : index
    %137 = vector.load %arg3[%c11, %c0_41, %c0_42] : memref<25x32x336xf32, #tpu.memory_space<vmem>>, vector<1x32x336xf32>
    %138 = vector.shape_cast %137 : vector<1x32x336xf32> to vector<32x336xf32>
    %cst_43 = arith.constant dense<0.000000e+00> : vector<2x336xf32>
    %139 = tpu.matmul %136, %138, %cst_43 {dimension_numbers = #tpu.dot_dimension_numbers<[1], [0], [0], [1], [0, 0, 1, 1], [], []>} : vector<2x32xf32>, vector<32x336xf32>, vector<2x336xf32> -> vector<2x336xf32>
    %140 = arith.addf %129, %139 : vector<2x336xf32>
    %141 = vector.extract_strided_slice %7 {offsets = [96, 0], sizes = [2, 32], strides = [1, 1]} : vector<200x32xf32> to vector<2x32xf32>
    %142 = vector.extract_strided_slice %7 {offsets = [98, 0], sizes = [2, 32], strides = [1, 1]} : vector<200x32xf32> to vector<2x32xf32>
    %143 = vector.extract_strided_slice %7 {offsets = [100, 0], sizes = [2, 32], strides = [1, 1]} : vector<200x32xf32> to vector<2x32xf32>
    %144 = vector.extract_strided_slice %7 {offsets = [102, 0], sizes = [2, 32], strides = [1, 1]} : vector<200x32xf32> to vector<2x32xf32>
    %145 = arith.maximumf %141, %142 : vector<2x32xf32>
    %146 = arith.maximumf %143, %144 : vector<2x32xf32>
    %147 = arith.maximumf %145, %146 : vector<2x32xf32>
    %c12 = arith.constant 12 : index
    %c0_44 = arith.constant 0 : index
    %c0_45 = arith.constant 0 : index
    %148 = vector.load %arg3[%c12, %c0_44, %c0_45] : memref<25x32x336xf32, #tpu.memory_space<vmem>>, vector<1x32x336xf32>
    %149 = vector.shape_cast %148 : vector<1x32x336xf32> to vector<32x336xf32>
    %cst_46 = arith.constant dense<0.000000e+00> : vector<2x336xf32>
    %150 = tpu.matmul %147, %149, %cst_46 {dimension_numbers = #tpu.dot_dimension_numbers<[1], [0], [0], [1], [0, 0, 1, 1], [], []>} : vector<2x32xf32>, vector<32x336xf32>, vector<2x336xf32> -> vector<2x336xf32>
    %151 = arith.addf %140, %150 : vector<2x336xf32>
    %152 = vector.extract_strided_slice %7 {offsets = [104, 0], sizes = [2, 32], strides = [1, 1]} : vector<200x32xf32> to vector<2x32xf32>
    %153 = vector.extract_strided_slice %7 {offsets = [106, 0], sizes = [2, 32], strides = [1, 1]} : vector<200x32xf32> to vector<2x32xf32>
    %154 = vector.extract_strided_slice %7 {offsets = [108, 0], sizes = [2, 32], strides = [1, 1]} : vector<200x32xf32> to vector<2x32xf32>
    %155 = vector.extract_strided_slice %7 {offsets = [110, 0], sizes = [2, 32], strides = [1, 1]} : vector<200x32xf32> to vector<2x32xf32>
    %156 = arith.maximumf %152, %153 : vector<2x32xf32>
    %157 = arith.maximumf %154, %155 : vector<2x32xf32>
    %158 = arith.maximumf %156, %157 : vector<2x32xf32>
    %c13 = arith.constant 13 : index
    %c0_47 = arith.constant 0 : index
    %c0_48 = arith.constant 0 : index
    %159 = vector.load %arg3[%c13, %c0_47, %c0_48] : memref<25x32x336xf32, #tpu.memory_space<vmem>>, vector<1x32x336xf32>
    %160 = vector.shape_cast %159 : vector<1x32x336xf32> to vector<32x336xf32>
    %cst_49 = arith.constant dense<0.000000e+00> : vector<2x336xf32>
    %161 = tpu.matmul %158, %160, %cst_49 {dimension_numbers = #tpu.dot_dimension_numbers<[1], [0], [0], [1], [0, 0, 1, 1], [], []>} : vector<2x32xf32>, vector<32x336xf32>, vector<2x336xf32> -> vector<2x336xf32>
    %162 = arith.addf %151, %161 : vector<2x336xf32>
    %163 = vector.extract_strided_slice %7 {offsets = [112, 0], sizes = [2, 32], strides = [1, 1]} : vector<200x32xf32> to vector<2x32xf32>
    %164 = vector.extract_strided_slice %7 {offsets = [114, 0], sizes = [2, 32], strides = [1, 1]} : vector<200x32xf32> to vector<2x32xf32>
    %165 = vector.extract_strided_slice %7 {offsets = [116, 0], sizes = [2, 32], strides = [1, 1]} : vector<200x32xf32> to vector<2x32xf32>
    %166 = vector.extract_strided_slice %7 {offsets = [118, 0], sizes = [2, 32], strides = [1, 1]} : vector<200x32xf32> to vector<2x32xf32>
    %167 = arith.maximumf %163, %164 : vector<2x32xf32>
    %168 = arith.maximumf %165, %166 : vector<2x32xf32>
    %169 = arith.maximumf %167, %168 : vector<2x32xf32>
    %c14 = arith.constant 14 : index
    %c0_50 = arith.constant 0 : index
    %c0_51 = arith.constant 0 : index
    %170 = vector.load %arg3[%c14, %c0_50, %c0_51] : memref<25x32x336xf32, #tpu.memory_space<vmem>>, vector<1x32x336xf32>
    %171 = vector.shape_cast %170 : vector<1x32x336xf32> to vector<32x336xf32>
    %cst_52 = arith.constant dense<0.000000e+00> : vector<2x336xf32>
    %172 = tpu.matmul %169, %171, %cst_52 {dimension_numbers = #tpu.dot_dimension_numbers<[1], [0], [0], [1], [0, 0, 1, 1], [], []>} : vector<2x32xf32>, vector<32x336xf32>, vector<2x336xf32> -> vector<2x336xf32>
    %173 = arith.addf %162, %172 : vector<2x336xf32>
    %174 = vector.extract_strided_slice %7 {offsets = [120, 0], sizes = [2, 32], strides = [1, 1]} : vector<200x32xf32> to vector<2x32xf32>
    %175 = vector.extract_strided_slice %7 {offsets = [122, 0], sizes = [2, 32], strides = [1, 1]} : vector<200x32xf32> to vector<2x32xf32>
    %176 = vector.extract_strided_slice %7 {offsets = [124, 0], sizes = [2, 32], strides = [1, 1]} : vector<200x32xf32> to vector<2x32xf32>
    %177 = vector.extract_strided_slice %7 {offsets = [126, 0], sizes = [2, 32], strides = [1, 1]} : vector<200x32xf32> to vector<2x32xf32>
    %178 = arith.maximumf %174, %175 : vector<2x32xf32>
    %179 = arith.maximumf %176, %177 : vector<2x32xf32>
    %180 = arith.maximumf %178, %179 : vector<2x32xf32>
    %c15 = arith.constant 15 : index
    %c0_53 = arith.constant 0 : index
    %c0_54 = arith.constant 0 : index
    %181 = vector.load %arg3[%c15, %c0_53, %c0_54] : memref<25x32x336xf32, #tpu.memory_space<vmem>>, vector<1x32x336xf32>
    %182 = vector.shape_cast %181 : vector<1x32x336xf32> to vector<32x336xf32>
    %cst_55 = arith.constant dense<0.000000e+00> : vector<2x336xf32>
    %183 = tpu.matmul %180, %182, %cst_55 {dimension_numbers = #tpu.dot_dimension_numbers<[1], [0], [0], [1], [0, 0, 1, 1], [], []>} : vector<2x32xf32>, vector<32x336xf32>, vector<2x336xf32> -> vector<2x336xf32>
    %184 = arith.addf %173, %183 : vector<2x336xf32>
    %185 = vector.extract_strided_slice %7 {offsets = [128, 0], sizes = [2, 32], strides = [1, 1]} : vector<200x32xf32> to vector<2x32xf32>
    %186 = vector.extract_strided_slice %7 {offsets = [130, 0], sizes = [2, 32], strides = [1, 1]} : vector<200x32xf32> to vector<2x32xf32>
    %187 = vector.extract_strided_slice %7 {offsets = [132, 0], sizes = [2, 32], strides = [1, 1]} : vector<200x32xf32> to vector<2x32xf32>
    %188 = vector.extract_strided_slice %7 {offsets = [134, 0], sizes = [2, 32], strides = [1, 1]} : vector<200x32xf32> to vector<2x32xf32>
    %189 = arith.maximumf %185, %186 : vector<2x32xf32>
    %190 = arith.maximumf %187, %188 : vector<2x32xf32>
    %191 = arith.maximumf %189, %190 : vector<2x32xf32>
    %c16 = arith.constant 16 : index
    %c0_56 = arith.constant 0 : index
    %c0_57 = arith.constant 0 : index
    %192 = vector.load %arg3[%c16, %c0_56, %c0_57] : memref<25x32x336xf32, #tpu.memory_space<vmem>>, vector<1x32x336xf32>
    %193 = vector.shape_cast %192 : vector<1x32x336xf32> to vector<32x336xf32>
    %cst_58 = arith.constant dense<0.000000e+00> : vector<2x336xf32>
    %194 = tpu.matmul %191, %193, %cst_58 {dimension_numbers = #tpu.dot_dimension_numbers<[1], [0], [0], [1], [0, 0, 1, 1], [], []>} : vector<2x32xf32>, vector<32x336xf32>, vector<2x336xf32> -> vector<2x336xf32>
    %195 = arith.addf %184, %194 : vector<2x336xf32>
    %196 = vector.extract_strided_slice %7 {offsets = [136, 0], sizes = [2, 32], strides = [1, 1]} : vector<200x32xf32> to vector<2x32xf32>
    %197 = vector.extract_strided_slice %7 {offsets = [138, 0], sizes = [2, 32], strides = [1, 1]} : vector<200x32xf32> to vector<2x32xf32>
    %198 = vector.extract_strided_slice %7 {offsets = [140, 0], sizes = [2, 32], strides = [1, 1]} : vector<200x32xf32> to vector<2x32xf32>
    %199 = vector.extract_strided_slice %7 {offsets = [142, 0], sizes = [2, 32], strides = [1, 1]} : vector<200x32xf32> to vector<2x32xf32>
    %200 = arith.maximumf %196, %197 : vector<2x32xf32>
    %201 = arith.maximumf %198, %199 : vector<2x32xf32>
    %202 = arith.maximumf %200, %201 : vector<2x32xf32>
    %c17 = arith.constant 17 : index
    %c0_59 = arith.constant 0 : index
    %c0_60 = arith.constant 0 : index
    %203 = vector.load %arg3[%c17, %c0_59, %c0_60] : memref<25x32x336xf32, #tpu.memory_space<vmem>>, vector<1x32x336xf32>
    %204 = vector.shape_cast %203 : vector<1x32x336xf32> to vector<32x336xf32>
    %cst_61 = arith.constant dense<0.000000e+00> : vector<2x336xf32>
    %205 = tpu.matmul %202, %204, %cst_61 {dimension_numbers = #tpu.dot_dimension_numbers<[1], [0], [0], [1], [0, 0, 1, 1], [], []>} : vector<2x32xf32>, vector<32x336xf32>, vector<2x336xf32> -> vector<2x336xf32>
    %206 = arith.addf %195, %205 : vector<2x336xf32>
    %207 = vector.extract_strided_slice %7 {offsets = [144, 0], sizes = [2, 32], strides = [1, 1]} : vector<200x32xf32> to vector<2x32xf32>
    %208 = vector.extract_strided_slice %7 {offsets = [146, 0], sizes = [2, 32], strides = [1, 1]} : vector<200x32xf32> to vector<2x32xf32>
    %209 = vector.extract_strided_slice %7 {offsets = [148, 0], sizes = [2, 32], strides = [1, 1]} : vector<200x32xf32> to vector<2x32xf32>
    %210 = vector.extract_strided_slice %7 {offsets = [150, 0], sizes = [2, 32], strides = [1, 1]} : vector<200x32xf32> to vector<2x32xf32>
    %211 = arith.maximumf %207, %208 : vector<2x32xf32>
    %212 = arith.maximumf %209, %210 : vector<2x32xf32>
    %213 = arith.maximumf %211, %212 : vector<2x32xf32>
    %c18 = arith.constant 18 : index
    %c0_62 = arith.constant 0 : index
    %c0_63 = arith.constant 0 : index
    %214 = vector.load %arg3[%c18, %c0_62, %c0_63] : memref<25x32x336xf32, #tpu.memory_space<vmem>>, vector<1x32x336xf32>
    %215 = vector.shape_cast %214 : vector<1x32x336xf32> to vector<32x336xf32>
    %cst_64 = arith.constant dense<0.000000e+00> : vector<2x336xf32>
    %216 = tpu.matmul %213, %215, %cst_64 {dimension_numbers = #tpu.dot_dimension_numbers<[1], [0], [0], [1], [0, 0, 1, 1], [], []>} : vector<2x32xf32>, vector<32x336xf32>, vector<2x336xf32> -> vector<2x336xf32>
    %217 = arith.addf %206, %216 : vector<2x336xf32>
    %218 = vector.extract_strided_slice %7 {offsets = [152, 0], sizes = [2, 32], strides = [1, 1]} : vector<200x32xf32> to vector<2x32xf32>
    %219 = vector.extract_strided_slice %7 {offsets = [154, 0], sizes = [2, 32], strides = [1, 1]} : vector<200x32xf32> to vector<2x32xf32>
    %220 = vector.extract_strided_slice %7 {offsets = [156, 0], sizes = [2, 32], strides = [1, 1]} : vector<200x32xf32> to vector<2x32xf32>
    %221 = vector.extract_strided_slice %7 {offsets = [158, 0], sizes = [2, 32], strides = [1, 1]} : vector<200x32xf32> to vector<2x32xf32>
    %222 = arith.maximumf %218, %219 : vector<2x32xf32>
    %223 = arith.maximumf %220, %221 : vector<2x32xf32>
    %224 = arith.maximumf %222, %223 : vector<2x32xf32>
    %c19 = arith.constant 19 : index
    %c0_65 = arith.constant 0 : index
    %c0_66 = arith.constant 0 : index
    %225 = vector.load %arg3[%c19, %c0_65, %c0_66] : memref<25x32x336xf32, #tpu.memory_space<vmem>>, vector<1x32x336xf32>
    %226 = vector.shape_cast %225 : vector<1x32x336xf32> to vector<32x336xf32>
    %cst_67 = arith.constant dense<0.000000e+00> : vector<2x336xf32>
    %227 = tpu.matmul %224, %226, %cst_67 {dimension_numbers = #tpu.dot_dimension_numbers<[1], [0], [0], [1], [0, 0, 1, 1], [], []>} : vector<2x32xf32>, vector<32x336xf32>, vector<2x336xf32> -> vector<2x336xf32>
    %228 = arith.addf %217, %227 : vector<2x336xf32>
    %229 = vector.extract_strided_slice %7 {offsets = [160, 0], sizes = [2, 32], strides = [1, 1]} : vector<200x32xf32> to vector<2x32xf32>
    %230 = vector.extract_strided_slice %7 {offsets = [162, 0], sizes = [2, 32], strides = [1, 1]} : vector<200x32xf32> to vector<2x32xf32>
    %231 = vector.extract_strided_slice %7 {offsets = [164, 0], sizes = [2, 32], strides = [1, 1]} : vector<200x32xf32> to vector<2x32xf32>
    %232 = vector.extract_strided_slice %7 {offsets = [166, 0], sizes = [2, 32], strides = [1, 1]} : vector<200x32xf32> to vector<2x32xf32>
    %233 = arith.maximumf %229, %230 : vector<2x32xf32>
    %234 = arith.maximumf %231, %232 : vector<2x32xf32>
    %235 = arith.maximumf %233, %234 : vector<2x32xf32>
    %c20 = arith.constant 20 : index
    %c0_68 = arith.constant 0 : index
    %c0_69 = arith.constant 0 : index
    %236 = vector.load %arg3[%c20, %c0_68, %c0_69] : memref<25x32x336xf32, #tpu.memory_space<vmem>>, vector<1x32x336xf32>
    %237 = vector.shape_cast %236 : vector<1x32x336xf32> to vector<32x336xf32>
    %cst_70 = arith.constant dense<0.000000e+00> : vector<2x336xf32>
    %238 = tpu.matmul %235, %237, %cst_70 {dimension_numbers = #tpu.dot_dimension_numbers<[1], [0], [0], [1], [0, 0, 1, 1], [], []>} : vector<2x32xf32>, vector<32x336xf32>, vector<2x336xf32> -> vector<2x336xf32>
    %239 = arith.addf %228, %238 : vector<2x336xf32>
    %240 = vector.extract_strided_slice %7 {offsets = [168, 0], sizes = [2, 32], strides = [1, 1]} : vector<200x32xf32> to vector<2x32xf32>
    %241 = vector.extract_strided_slice %7 {offsets = [170, 0], sizes = [2, 32], strides = [1, 1]} : vector<200x32xf32> to vector<2x32xf32>
    %242 = vector.extract_strided_slice %7 {offsets = [172, 0], sizes = [2, 32], strides = [1, 1]} : vector<200x32xf32> to vector<2x32xf32>
    %243 = vector.extract_strided_slice %7 {offsets = [174, 0], sizes = [2, 32], strides = [1, 1]} : vector<200x32xf32> to vector<2x32xf32>
    %244 = arith.maximumf %240, %241 : vector<2x32xf32>
    %245 = arith.maximumf %242, %243 : vector<2x32xf32>
    %246 = arith.maximumf %244, %245 : vector<2x32xf32>
    %c21 = arith.constant 21 : index
    %c0_71 = arith.constant 0 : index
    %c0_72 = arith.constant 0 : index
    %247 = vector.load %arg3[%c21, %c0_71, %c0_72] : memref<25x32x336xf32, #tpu.memory_space<vmem>>, vector<1x32x336xf32>
    %248 = vector.shape_cast %247 : vector<1x32x336xf32> to vector<32x336xf32>
    %cst_73 = arith.constant dense<0.000000e+00> : vector<2x336xf32>
    %249 = tpu.matmul %246, %248, %cst_73 {dimension_numbers = #tpu.dot_dimension_numbers<[1], [0], [0], [1], [0, 0, 1, 1], [], []>} : vector<2x32xf32>, vector<32x336xf32>, vector<2x336xf32> -> vector<2x336xf32>
    %250 = arith.addf %239, %249 : vector<2x336xf32>
    %251 = vector.extract_strided_slice %7 {offsets = [176, 0], sizes = [2, 32], strides = [1, 1]} : vector<200x32xf32> to vector<2x32xf32>
    %252 = vector.extract_strided_slice %7 {offsets = [178, 0], sizes = [2, 32], strides = [1, 1]} : vector<200x32xf32> to vector<2x32xf32>
    %253 = vector.extract_strided_slice %7 {offsets = [180, 0], sizes = [2, 32], strides = [1, 1]} : vector<200x32xf32> to vector<2x32xf32>
    %254 = vector.extract_strided_slice %7 {offsets = [182, 0], sizes = [2, 32], strides = [1, 1]} : vector<200x32xf32> to vector<2x32xf32>
    %255 = arith.maximumf %251, %252 : vector<2x32xf32>
    %256 = arith.maximumf %253, %254 : vector<2x32xf32>
    %257 = arith.maximumf %255, %256 : vector<2x32xf32>
    %c22 = arith.constant 22 : index
    %c0_74 = arith.constant 0 : index
    %c0_75 = arith.constant 0 : index
    %258 = vector.load %arg3[%c22, %c0_74, %c0_75] : memref<25x32x336xf32, #tpu.memory_space<vmem>>, vector<1x32x336xf32>
    %259 = vector.shape_cast %258 : vector<1x32x336xf32> to vector<32x336xf32>
    %cst_76 = arith.constant dense<0.000000e+00> : vector<2x336xf32>
    %260 = tpu.matmul %257, %259, %cst_76 {dimension_numbers = #tpu.dot_dimension_numbers<[1], [0], [0], [1], [0, 0, 1, 1], [], []>} : vector<2x32xf32>, vector<32x336xf32>, vector<2x336xf32> -> vector<2x336xf32>
    %261 = arith.addf %250, %260 : vector<2x336xf32>
    %262 = vector.extract_strided_slice %7 {offsets = [184, 0], sizes = [2, 32], strides = [1, 1]} : vector<200x32xf32> to vector<2x32xf32>
    %263 = vector.extract_strided_slice %7 {offsets = [186, 0], sizes = [2, 32], strides = [1, 1]} : vector<200x32xf32> to vector<2x32xf32>
    %264 = vector.extract_strided_slice %7 {offsets = [188, 0], sizes = [2, 32], strides = [1, 1]} : vector<200x32xf32> to vector<2x32xf32>
    %265 = vector.extract_strided_slice %7 {offsets = [190, 0], sizes = [2, 32], strides = [1, 1]} : vector<200x32xf32> to vector<2x32xf32>
    %266 = arith.maximumf %262, %263 : vector<2x32xf32>
    %267 = arith.maximumf %264, %265 : vector<2x32xf32>
    %268 = arith.maximumf %266, %267 : vector<2x32xf32>
    %c23 = arith.constant 23 : index
    %c0_77 = arith.constant 0 : index
    %c0_78 = arith.constant 0 : index
    %269 = vector.load %arg3[%c23, %c0_77, %c0_78] : memref<25x32x336xf32, #tpu.memory_space<vmem>>, vector<1x32x336xf32>
    %270 = vector.shape_cast %269 : vector<1x32x336xf32> to vector<32x336xf32>
    %cst_79 = arith.constant dense<0.000000e+00> : vector<2x336xf32>
    %271 = tpu.matmul %268, %270, %cst_79 {dimension_numbers = #tpu.dot_dimension_numbers<[1], [0], [0], [1], [0, 0, 1, 1], [], []>} : vector<2x32xf32>, vector<32x336xf32>, vector<2x336xf32> -> vector<2x336xf32>
    %272 = arith.addf %261, %271 : vector<2x336xf32>
    %273 = vector.extract_strided_slice %7 {offsets = [192, 0], sizes = [2, 32], strides = [1, 1]} : vector<200x32xf32> to vector<2x32xf32>
    %274 = vector.extract_strided_slice %7 {offsets = [194, 0], sizes = [2, 32], strides = [1, 1]} : vector<200x32xf32> to vector<2x32xf32>
    %275 = vector.extract_strided_slice %7 {offsets = [196, 0], sizes = [2, 32], strides = [1, 1]} : vector<200x32xf32> to vector<2x32xf32>
    %276 = vector.extract_strided_slice %7 {offsets = [198, 0], sizes = [2, 32], strides = [1, 1]} : vector<200x32xf32> to vector<2x32xf32>
    %277 = arith.maximumf %273, %274 : vector<2x32xf32>
    %278 = arith.maximumf %275, %276 : vector<2x32xf32>
    %279 = arith.maximumf %277, %278 : vector<2x32xf32>
    %c24 = arith.constant 24 : index
    %c0_80 = arith.constant 0 : index
    %c0_81 = arith.constant 0 : index
    %280 = vector.load %arg3[%c24, %c0_80, %c0_81] : memref<25x32x336xf32, #tpu.memory_space<vmem>>, vector<1x32x336xf32>
    %281 = vector.shape_cast %280 : vector<1x32x336xf32> to vector<32x336xf32>
    %cst_82 = arith.constant dense<0.000000e+00> : vector<2x336xf32>
    %282 = tpu.matmul %279, %281, %cst_82 {dimension_numbers = #tpu.dot_dimension_numbers<[1], [0], [0], [1], [0, 0, 1, 1], [], []>} : vector<2x32xf32>, vector<32x336xf32>, vector<2x336xf32> -> vector<2x336xf32>
    %283 = arith.addf %272, %282 : vector<2x336xf32>
    %c0_83 = arith.constant 0 : index
    %c0_84 = arith.constant 0 : index
    %284 = vector.load %arg4[%c0_83, %c0_84] : memref<1x336xf32, #tpu.memory_space<vmem>>, vector<1x336xf32>
    %285 = vector.broadcast %284 : vector<1x336xf32> to vector<2x336xf32>
    %286 = arith.addf %283, %285 : vector<2x336xf32>
    %cst_85 = arith.constant 0.000000e+00 : f32
    %287 = vector.broadcast %cst_85 : f32 to vector<2x336xf32>
    %288 = arith.maximumf %286, %287 : vector<2x336xf32>
    %c0_86 = arith.constant 0 : index
    %c0_87 = arith.constant 0 : index
    %289 = vector.load %arg5[%c0_86, %c0_87] : memref<336x168xf32, #tpu.memory_space<vmem>>, vector<336x168xf32>
    %cst_88 = arith.constant dense<0.000000e+00> : vector<2x168xf32>
    %290 = tpu.matmul %288, %289, %cst_88 {dimension_numbers = #tpu.dot_dimension_numbers<[1], [0], [0], [1], [0, 0, 1, 1], [], []>} : vector<2x336xf32>, vector<336x168xf32>, vector<2x168xf32> -> vector<2x168xf32>
    %c0_89 = arith.constant 0 : index
    %c0_90 = arith.constant 0 : index
    %291 = vector.load %arg6[%c0_89, %c0_90] : memref<1x168xf32, #tpu.memory_space<vmem>>, vector<1x168xf32>
    %292 = vector.broadcast %291 : vector<1x168xf32> to vector<2x168xf32>
    %293 = arith.addf %290, %292 : vector<2x168xf32>
    %cst_91 = arith.constant 0.000000e+00 : f32
    %294 = vector.broadcast %cst_91 : f32 to vector<2x168xf32>
    %295 = arith.maximumf %293, %294 : vector<2x168xf32>
    %c0_92 = arith.constant 0 : index
    %c0_93 = arith.constant 0 : index
    %296 = vector.load %arg7[%c0_92, %c0_93] : memref<168x84xf32, #tpu.memory_space<vmem>>, vector<168x84xf32>
    %cst_94 = arith.constant dense<0.000000e+00> : vector<2x84xf32>
    %297 = tpu.matmul %295, %296, %cst_94 {dimension_numbers = #tpu.dot_dimension_numbers<[1], [0], [0], [1], [0, 0, 1, 1], [], []>} : vector<2x168xf32>, vector<168x84xf32>, vector<2x84xf32> -> vector<2x84xf32>
    %c0_95 = arith.constant 0 : index
    %c0_96 = arith.constant 0 : index
    %298 = vector.load %arg8[%c0_95, %c0_96] : memref<1x84xf32, #tpu.memory_space<vmem>>, vector<1x84xf32>
    %299 = vector.broadcast %298 : vector<1x84xf32> to vector<2x84xf32>
    %300 = arith.addf %297, %299 : vector<2x84xf32>
    %cst_97 = arith.constant 0.000000e+00 : f32
    %301 = vector.broadcast %cst_97 : f32 to vector<2x84xf32>
    %302 = arith.maximumf %300, %301 : vector<2x84xf32>
    %c0_98 = arith.constant 0 : index
    %c0_99 = arith.constant 0 : index
    %303 = vector.load %arg9[%c0_98, %c0_99] : memref<84x10xf32, #tpu.memory_space<vmem>>, vector<84x10xf32>
    %cst_100 = arith.constant dense<0.000000e+00> : vector<2x10xf32>
    %304 = tpu.matmul %302, %303, %cst_100 {dimension_numbers = #tpu.dot_dimension_numbers<[1], [0], [0], [1], [0, 0, 1, 1], [], []>} : vector<2x84xf32>, vector<84x10xf32>, vector<2x10xf32> -> vector<2x10xf32>
    %c0_101 = arith.constant 0 : index
    %c0_102 = arith.constant 0 : index
    %305 = vector.load %arg10[%c0_101, %c0_102] : memref<1x10xf32, #tpu.memory_space<vmem>>, vector<1x10xf32>
    %306 = vector.broadcast %305 : vector<1x10xf32> to vector<2x10xf32>
    %307 = arith.addf %304, %306 : vector<2x10xf32>
    %c0_103 = arith.constant 0 : index
    %c0_104 = arith.constant 0 : index
    %308 = vector.load %arg11[%c0_103, %c0_104] : memref<2x10xf32, #tpu.memory_space<vmem>>, vector<2x10xf32>
    tpu.vector_store %arg11[%c0_103, %c0_104], %307 {strides = array<i32>} : memref<2x10xf32, #tpu.memory_space<vmem>>, vector<2x10xf32>,
    return
  }
}

</mosaic_0001>

<llo_original>
// kernel: lenet5_forward.2
$region0: #{lenet5_forward.2}
  #allocation0 [shape = 'u32[]', space=smem, size = 0x4, offset = 0x4, fixed_abs, tag = 'smem constant byte address 0x4 - core index']
  #allocation1 [shape = 'u32[144,128]{1,0:T(1,128)}', space=vmem, size = 0x12000, scoped, tag = 'internal scratch']
  %s0 = inlined_call_operand.vmem [shape: f32[392,25], index: 0, kind: input, shape index: {}]
  %s1 = inlined_call_operand.vmem [shape: f32[25,12], index: 1, kind: input, shape index: {}]
  %s2 = inlined_call_operand.vmem [shape: f32[1,12], index: 2, kind: input, shape index: {}]
  %s3 = inlined_call_operand.vmem [shape: f32[392,12], index: 3, kind: output, shape index: {}]
  %s4 = sld [smem:[#allocation0]]
  $region22: #{lenet5_forward.2} parent=0
    _
  %s6 = ssub.s32 1, %s4
  %s7 = scalar_select 0, %s6, %s4
  // Predicated region
  $region2: #{lenet5_forward.2} parent=0 // pred_check
    _
  $region3: #{lenet5_forward.2} parent=0 // pred_check_branch
    %9 = sbr.rel (0) target = $region5
  $region4: #{lenet5_forward.2} parent=0 // pred_region
    _
  $region5: #{lenet5_forward.2} parent=0 // pred_fallthru
    _
  // Predicated region
  $region6: #{lenet5_forward.2} parent=0 // pred_check
    _
  $region7: #{lenet5_forward.2} parent=0 // pred_check_branch
    %11 = sbr.rel (0) target = $region9
  $region8: #{lenet5_forward.2} parent=0 // pred_region
    _
  $region9: #{lenet5_forward.2} parent=0 // pred_fallthru
    _
  // Predicated region
  $region10: #{lenet5_forward.2} parent=0 // pred_check
    _
  $region11: #{lenet5_forward.2} parent=0 // pred_check_branch
    %13 = sbr.rel (0) target = $region13
  $region12: #{lenet5_forward.2} parent=0 // pred_region
    _
  $region13: #{lenet5_forward.2} parent=0 // pred_fallthru
    _
  %v14 = vld [vmem:[%s0] sm:$0xff]
  %v15 = vld [vmem:[%s0 + $0x8] sm:$0xff]
  %v16 = vld [vmem:[%s0 + $0x10] sm:$0xff]
  %v17 = vld [vmem:[%s0 + $0x18] sm:$0xff]
  %v18 = vld [vmem:[%s0 + $0x20] sm:$0xff]
  %v19 = vld [vmem:[%s0 + $0x28] sm:$0xff]
  %v20 = vld [vmem:[%s0 + $0x30] sm:$0xff]
  %v21 = vld [vmem:[%s0 + $0x38] sm:$0xff]
  %v22 = vld [vmem:[%s0 + $0x40] sm:$0xff]
  %v23 = vld [vmem:[%s0 + $0x48] sm:$0xff]
  %v24 = vld [vmem:[%s0 + $0x50] sm:$0xff]
  %v25 = vld [vmem:[%s0 + $0x58] sm:$0xff]
  %v26 = vld [vmem:[%s0 + $0x60] sm:$0xff]
  %v27 = vld [vmem:[%s0 + $0x68] sm:$0xff]
  %v28 = vld [vmem:[%s0 + $0x70] sm:$0xff]
  %v29 = vld [vmem:[%s0 + $0x78] sm:$0xff]
  %v30 = vld [vmem:[%s0 + $0x80] sm:$0xff]
  %v31 = vld [vmem:[%s0 + $0x88] sm:$0xff]
  %v32 = vld [vmem:[%s0 + $0x90] sm:$0xff]
  %v33 = vld [vmem:[%s0 + $0x98] sm:$0xff]
  %v34 = vld [vmem:[%s0 + $0xa0] sm:$0xff]
  %v35 = vld [vmem:[%s0 + $0xa8] sm:$0xff]
  %v36 = vld [vmem:[%s0 + $0xb0] sm:$0xff]
  %v37 = vld [vmem:[%s0 + $0xb8] sm:$0xff]
  %v38 = vld [vmem:[%s0 + $0xc0] sm:$0xff]
  %v39 = vld [vmem:[%s0 + $0xc8] sm:$0xff]
  %v40 = vld [vmem:[%s0 + $0xd0] sm:$0xff]
  %v41 = vld [vmem:[%s0 + $0xd8] sm:$0xff]
  %v42 = vld [vmem:[%s0 + $0xe0] sm:$0xff]
  %v43 = vld [vmem:[%s0 + $0xe8] sm:$0xff]
  %v44 = vld [vmem:[%s0 + $0xf0] sm:$0xff]
  %v45 = vld [vmem:[%s0 + $0xf8] sm:$0xff]
  %v46 = vld [vmem:[%s0 + $0x100] sm:$0xff]
  %v47 = vld [vmem:[%s0 + $0x108] sm:$0xff]
  %v48 = vld [vmem:[%s0 + $0x110] sm:$0xff]
  %v49 = vld [vmem:[%s0 + $0x118] sm:$0xff]
  %v50 = vld [vmem:[%s0 + $0x120] sm:$0xff]
  %v51 = vld [vmem:[%s0 + $0x128] sm:$0xff]
  %v52 = vld [vmem:[%s0 + $0x130] sm:$0xff]
  %v53 = vld [vmem:[%s0 + $0x138] sm:$0xff]
  %v54 = vld [vmem:[%s0 + $0x140] sm:$0xff]
  %v55 = vld [vmem:[%s0 + $0x148] sm:$0xff]
  %v56 = vld [vmem:[%s0 + $0x150] sm:$0xff]
  %v57 = vld [vmem:[%s0 + $0x158] sm:$0xff]
  %v58 = vld [vmem:[%s0 + $0x160] sm:$0xff]
  %v59 = vld [vmem:[%s0 + $0x168] sm:$0xff]
  %v60 = vld [vmem:[%s0 + $0x170] sm:$0xff]
  %v61 = vld [vmem:[%s0 + $0x178] sm:$0xff]
  %v62 = vld [vmem:[%s0 + $0x180] sm:$0xff]
  %v63 = vld [vmem:[%s1] sm:$0xff]
  %v64 = vld [vmem:[%s1 + $0x8] sm:$0xff]
  %v65 = vld [vmem:[%s1 + $0x10] sm:$0xff]
  %v66 = vld [vmem:[%s1 + $0x18] sm:$0x1]
  %v67 = vld [vmem:[%s2] sm:$0x1]
  %v69 = vlaneseq
  %v70 = vshrl.u32 %v69, 7
  %v71 = vsub.s32 0, %v70
  %v72 = vrot.slane %v67, %v71
  %vm74 = vcmask 203776
  %v76 = vsel %vm74, %v14, 0
  %v79 = vsel %vm74, %v15, 0
  %v82 = vsel %vm74, %v16, 0
  %v85 = vsel %vm74, %v17, 0
  %v88 = vsel %vm74, %v18, 0
  %v91 = vsel %vm74, %v19, 0
  %v94 = vsel %vm74, %v20, 0
  %v97 = vsel %vm74, %v21, 0
  %v100 = vsel %vm74, %v22, 0
  %v103 = vsel %vm74, %v23, 0
  %v106 = vsel %vm74, %v24, 0
  %v109 = vsel %vm74, %v25, 0
  %v112 = vsel %vm74, %v26, 0
  %v115 = vsel %vm74, %v27, 0
  %v118 = vsel %vm74, %v28, 0
  %v121 = vsel %vm74, %v29, 0
  %v124 = vsel %vm74, %v30, 0
  %v127 = vsel %vm74, %v31, 0
  %v130 = vsel %vm74, %v32, 0
  %v133 = vsel %vm74, %v33, 0
  %v136 = vsel %vm74, %v34, 0
  %v139 = vsel %vm74, %v35, 0
  %v142 = vsel %vm74, %v36, 0
  %v145 = vsel %vm74, %v37, 0
  %v148 = vsel %vm74, %v38, 0
  %v151 = vsel %vm74, %v39, 0
  %v154 = vsel %vm74, %v40, 0
  %v157 = vsel %vm74, %v41, 0
  %v160 = vsel %vm74, %v42, 0
  %v163 = vsel %vm74, %v43, 0
  %v166 = vsel %vm74, %v44, 0
  %v169 = vsel %vm74, %v45, 0
  %v172 = vsel %vm74, %v46, 0
  %v175 = vsel %vm74, %v47, 0
  %v178 = vsel %vm74, %v48, 0
  %v181 = vsel %vm74, %v49, 0
  %v184 = vsel %vm74, %v50, 0
  %v187 = vsel %vm74, %v51, 0
  %v190 = vsel %vm74, %v52, 0
  %v193 = vsel %vm74, %v53, 0
  %v196 = vsel %vm74, %v54, 0
  %v199 = vsel %vm74, %v55, 0
  %v202 = vsel %vm74, %v56, 0
  %v205 = vsel %vm74, %v57, 0
  %v208 = vsel %vm74, %v58, 0
  %v211 = vsel %vm74, %v59, 0
  %v214 = vsel %vm74, %v60, 0
  %v217 = vsel %vm74, %v61, 0
  %v220 = vsel %vm74, %v62, 0
  %vm222 = vcmask 1040384
  %v224 = vsel %vm222, %v66, 0
  %226 = vmatprep.subr.mxu0 0.0
  %227 = vmatpush1.msra.mxu0 0.0
  %228 = vmatprep.subr.mxu0 0.0
  %229 = vmatpush1.msra.mxu0 0.0
  %230 = vmatprep.subr.mxu0 0.0
  %231 = vmatpush1.msra.mxu0 0.0
  %232 = vmatprep.subr.mxu0 0.0
  %233 = vmatpush1.msra.mxu0 0.0
  %234 = vmatprep.subr.mxu0 0.0
  %235 = vmatpush1.msra.mxu0 0.0
  %236 = vmatprep.subr.mxu0 0.0
  %237 = vmatpush1.msra.mxu0 0.0
  %238 = vmatprep.subr.mxu0 0.0
  %239 = vmatpush1.msra.mxu0 0.0
  %240 = vmatprep.subr.mxu0 0.0
  %241 = vmatpush1.msra.mxu0 0.0
  %242 = vmatprep.subr.mxu0 0.0
  %243 = vmatpush1.msra.mxu0 0.0
  %244 = vmatprep.subr.mxu0 0.0
  %245 = vmatpush1.msra.mxu0 0.0
  %246 = vmatprep.subr.mxu0 0.0
  %247 = vmatpush1.msra.mxu0 0.0
  %248 = vmatprep.subr.mxu0 0.0
  %249 = vmatpush1.msra.mxu0 0.0
  %250 = vmatprep.subr.mxu0 0.0
  %251 = vmatpush1.msra.mxu0 %v224
  %252 = vmatprep.subr.mxu0 0.0
  %253 = vmatpush1.msra.mxu0 %v65
  %254 = vmatprep.subr.mxu0 0.0
  %255 = vmatpush1.msra.mxu0 %v64
  %256 = vmatprep.subr.mxu0 0.0
  %257 = vmatpush1.msra.mxu0 %v63
  %258 = vmatprep.subr.mxu0 0.0
  %259 = vmatpush2.msra.mxu0 0.0
  %260 = vmatprep.subr.mxu0 0.0
  %261 = vmatpush2.msra.mxu0 0.0
  %262 = vmatprep.subr.mxu0 0.0
  %263 = vmatpush2.msra.mxu0 0.0
  %264 = vmatprep.subr.mxu0 0.0
  %265 = vmatpush2.msra.mxu0 0.0
  %266 = vmatprep.subr.mxu0 0.0
  %267 = vmatpush2.msra.mxu0 0.0
  %268 = vmatprep.subr.mxu0 0.0
  %269 = vmatpush2.msra.mxu0 0.0
  %270 = vmatprep.subr.mxu0 0.0
  %271 = vmatpush2.msra.mxu0 0.0
  %272 = vmatprep.subr.mxu0 0.0
  %273 = vmatpush2.msra.mxu0 0.0
  %274 = vmatprep.subr.mxu0 0.0
  %275 = vmatpush2.msra.mxu0 0.0
  %276 = vmatprep.subr.mxu0 0.0
  %277 = vmatpush2.msra.mxu0 0.0
  %278 = vmatprep.subr.mxu0 0.0
  %279 = vmatpush2.msra.mxu0 0.0
  %280 = vmatprep.subr.mxu0 0.0
  %281 = vmatpush2.msra.mxu0 0.0
  %282 = vmatprep.subr.mxu0 0.0
  %283 = vmatpush2.msra.mxu0 0.0
  %284 = vmatprep.subr.mxu0 0.0
  %285 = vmatpush2.msra.mxu0 0.0
  %286 = vmatprep.subr.mxu0 0.0
  %287 = vmatpush2.msra.mxu0 0.0
  %288 = vmatprep.subr.mxu0 0.0
  %289 = vmatpush2.msra.mxu0 0.0
  %290 = vmatprep.mubr.f32.mxu0 0.0
  %291 = vmatmul.mubr.f32.gmra.mxu0 %v76
  %v292 = vpop.f32.mrf.mxu0
  %v293 = vadd.f32 %v72, %v292
  %v294 = vpop.f32.mrf.mxu0
  %295 = vmatprep.mubr.f32.mxu0 0.0
  %296 = vmatmul.mubr.f32.gmra.mxu0 %v79
  %v297 = vpop.f32.mrf.mxu0
  %v298 = vadd.f32 %v72, %v297
  %v299 = vpop.f32.mrf.mxu0
  %300 = vmatprep.mubr.f32.mxu0 0.0
  %301 = vmatmul.mubr.f32.gmra.mxu0 %v82
  %v302 = vpop.f32.mrf.mxu0
  %v303 = vadd.f32 %v72, %v302
  %v304 = vpop.f32.mrf.mxu0
  %305 = vmatprep.mubr.f32.mxu0 0.0
  %306 = vmatmul.mubr.f32.gmra.mxu0 %v85
  %v307 = vpop.f32.mrf.mxu0
  %v308 = vadd.f32 %v72, %v307
  %v309 = vpop.f32.mrf.mxu0
  %310 = vmatprep.mubr.f32.mxu0 0.0
  %311 = vmatmul.mubr.f32.gmra.mxu0 %v88
  %v312 = vpop.f32.mrf.mxu0
  %v313 = vadd.f32 %v72, %v312
  %v314 = vpop.f32.mrf.mxu0
  %315 = vmatprep.mubr.f32.mxu0 0.0
  %316 = vmatmul.mubr.f32.gmra.mxu0 %v91
  %v317 = vpop.f32.mrf.mxu0
  %v318 = vadd.f32 %v72, %v317
  %v319 = vpop.f32.mrf.mxu0
  %320 = vmatprep.mubr.f32.mxu0 0.0
  %321 = vmatmul.mubr.f32.gmra.mxu0 %v94
  %v322 = vpop.f32.mrf.mxu0
  %v323 = vadd.f32 %v72, %v322
  %v324 = vpop.f32.mrf.mxu0
  %325 = vmatprep.mubr.f32.mxu0 0.0
  %326 = vmatmul.mubr.f32.gmra.mxu0 %v97
  %v327 = vpop.f32.mrf.mxu0
  %v328 = vadd.f32 %v72, %v327
  %v329 = vpop.f32.mrf.mxu0
  %330 = vmatprep.mubr.f32.mxu0 0.0
  %331 = vmatmul.mubr.f32.gmra.mxu0 %v100
  %v332 = vpop.f32.mrf.mxu0
  %v333 = vadd.f32 %v72, %v332
  %v334 = vpop.f32.mrf.mxu0
  %335 = vmatprep.mubr.f32.mxu0 0.0
  %336 = vmatmul.mubr.f32.gmra.mxu0 %v103
  %v337 = vpop.f32.mrf.mxu0
  %v338 = vadd.f32 %v72, %v337
  %v339 = vpop.f32.mrf.mxu0
  %340 = vmatprep.mubr.f32.mxu0 0.0
  %341 = vmatmul.mubr.f32.gmra.mxu0 %v106
  %v342 = vpop.f32.mrf.mxu0
  %v343 = vadd.f32 %v72, %v342
  %v344 = vpop.f32.mrf.mxu0
  %345 = vmatprep.mubr.f32.mxu0 0.0
  %346 = vmatmul.mubr.f32.gmra.mxu0 %v109
  %v347 = vpop.f32.mrf.mxu0
  %v348 = vadd.f32 %v72, %v347
  %v349 = vpop.f32.mrf.mxu0
  %350 = vmatprep.mubr.f32.mxu0 0.0
  %351 = vmatmul.mubr.f32.gmra.mxu0 %v112
  %v352 = vpop.f32.mrf.mxu0
  %v353 = vadd.f32 %v72, %v352
  %v354 = vpop.f32.mrf.mxu0
  %355 = vmatprep.mubr.f32.mxu0 0.0
  %356 = vmatmul.mubr.f32.gmra.mxu0 %v115
  %v357 = vpop.f32.mrf.mxu0
  %v358 = vadd.f32 %v72, %v357
  %v359 = vpop.f32.mrf.mxu0
  %360 = vmatprep.mubr.f32.mxu0 0.0
  %361 = vmatmul.mubr.f32.gmra.mxu0 %v118
  %v362 = vpop.f32.mrf.mxu0
  %v363 = vadd.f32 %v72, %v362
  %v364 = vpop.f32.mrf.mxu0
  %365 = vmatprep.mubr.f32.mxu0 0.0
  %366 = vmatmul.mubr.f32.gmra.mxu0 %v121
  %v367 = vpop.f32.mrf.mxu0
  %v368 = vadd.f32 %v72, %v367
  %v369 = vpop.f32.mrf.mxu0
  %370 = vmatprep.mubr.f32.mxu0 0.0
  %371 = vmatmul.mubr.f32.gmra.mxu0 %v124
  %v372 = vpop.f32.mrf.mxu0
  %v373 = vadd.f32 %v72, %v372
  %v374 = vpop.f32.mrf.mxu0
  %375 = vmatprep.mubr.f32.mxu0 0.0
  %376 = vmatmul.mubr.f32.gmra.mxu0 %v127
  %v377 = vpop.f32.mrf.mxu0
  %v378 = vadd.f32 %v72, %v377
  %v379 = vpop.f32.mrf.mxu0
  %380 = vmatprep.mubr.f32.mxu0 0.0
  %381 = vmatmul.mubr.f32.gmra.mxu0 %v130
  %v382 = vpop.f32.mrf.mxu0
  %v383 = vadd.f32 %v72, %v382
  %v384 = vpop.f32.mrf.mxu0
  %385 = vmatprep.mubr.f32.mxu0 0.0
  %386 = vmatmul.mubr.f32.gmra.mxu0 %v133
  %v387 = vpop.f32.mrf.mxu0
  %v388 = vadd.f32 %v72, %v387
  %v389 = vpop.f32.mrf.mxu0
  %390 = vmatprep.mubr.f32.mxu0 0.0
  %391 = vmatmul.mubr.f32.gmra.mxu0 %v136
  %v392 = vpop.f32.mrf.mxu0
  %v393 = vadd.f32 %v72, %v392
  %v394 = vpop.f32.mrf.mxu0
  %395 = vmatprep.mubr.f32.mxu0 0.0
  %396 = vmatmul.mubr.f32.gmra.mxu0 %v139
  %v397 = vpop.f32.mrf.mxu0
  %v398 = vadd.f32 %v72, %v397
  %v399 = vpop.f32.mrf.mxu0
  %400 = vmatprep.mubr.f32.mxu0 0.0
  %401 = vmatmul.mubr.f32.gmra.mxu0 %v142
  %v402 = vpop.f32.mrf.mxu0
  %v403 = vadd.f32 %v72, %v402
  %v404 = vpop.f32.mrf.mxu0
  %405 = vmatprep.mubr.f32.mxu0 0.0
  %406 = vmatmul.mubr.f32.gmra.mxu0 %v145
  %v407 = vpop.f32.mrf.mxu0
  %v408 = vadd.f32 %v72, %v407
  %v409 = vpop.f32.mrf.mxu0
  %410 = vmatprep.mubr.f32.mxu0 0.0
  %411 = vmatmul.mubr.f32.gmra.mxu0 %v148
  %v412 = vpop.f32.mrf.mxu0
  %v413 = vadd.f32 %v72, %v412
  %v414 = vpop.f32.mrf.mxu0
  %415 = vmatprep.mubr.f32.mxu0 0.0
  %416 = vmatmul.mubr.f32.gmra.mxu0 %v151
  %v417 = vpop.f32.mrf.mxu0
  %v418 = vadd.f32 %v72, %v417
  %v419 = vpop.f32.mrf.mxu0
  %420 = vmatprep.mubr.f32.mxu0 0.0
  %421 = vmatmul.mubr.f32.gmra.mxu0 %v154
  %v422 = vpop.f32.mrf.mxu0
  %v423 = vadd.f32 %v72, %v422
  %v424 = vpop.f32.mrf.mxu0
  %425 = vmatprep.mubr.f32.mxu0 0.0
  %426 = vmatmul.mubr.f32.gmra.mxu0 %v157
  %v427 = vpop.f32.mrf.mxu0
  %v428 = vadd.f32 %v72, %v427
  %v429 = vpop.f32.mrf.mxu0
  %430 = vmatprep.mubr.f32.mxu0 0.0
  %431 = vmatmul.mubr.f32.gmra.mxu0 %v160
  %v432 = vpop.f32.mrf.mxu0
  %v433 = vadd.f32 %v72, %v432
  %v434 = vpop.f32.mrf.mxu0
  %435 = vmatprep.mubr.f32.mxu0 0.0
  %436 = vmatmul.mubr.f32.gmra.mxu0 %v163
  %v437 = vpop.f32.mrf.mxu0
  %v438 = vadd.f32 %v72, %v437
  %v439 = vpop.f32.mrf.mxu0
  %440 = vmatprep.mubr.f32.mxu0 0.0
  %441 = vmatmul.mubr.f32.gmra.mxu0 %v166
  %v442 = vpop.f32.mrf.mxu0
  %v443 = vadd.f32 %v72, %v442
  %v444 = vpop.f32.mrf.mxu0
  %445 = vmatprep.mubr.f32.mxu0 0.0
  %446 = vmatmul.mubr.f32.gmra.mxu0 %v169
  %v447 = vpop.f32.mrf.mxu0
  %v448 = vadd.f32 %v72, %v447
  %v449 = vpop.f32.mrf.mxu0
  %450 = vmatprep.mubr.f32.mxu0 0.0
  %451 = vmatmul.mubr.f32.gmra.mxu0 %v172
  %v452 = vpop.f32.mrf.mxu0
  %v453 = vadd.f32 %v72, %v452
  %v454 = vpop.f32.mrf.mxu0
  %455 = vmatprep.mubr.f32.mxu0 0.0
  %456 = vmatmul.mubr.f32.gmra.mxu0 %v175
  %v457 = vpop.f32.mrf.mxu0
  %v458 = vadd.f32 %v72, %v457
  %v459 = vpop.f32.mrf.mxu0
  %460 = vmatprep.mubr.f32.mxu0 0.0
  %461 = vmatmul.mubr.f32.gmra.mxu0 %v178
  %v462 = vpop.f32.mrf.mxu0
  %v463 = vadd.f32 %v72, %v462
  %v464 = vpop.f32.mrf.mxu0
  %465 = vmatprep.mubr.f32.mxu0 0.0
  %466 = vmatmul.mubr.f32.gmra.mxu0 %v181
  %v467 = vpop.f32.mrf.mxu0
  %v468 = vadd.f32 %v72, %v467
  %v469 = vpop.f32.mrf.mxu0
  %470 = vmatprep.mubr.f32.mxu0 0.0
  %471 = vmatmul.mubr.f32.gmra.mxu0 %v184
  %v472 = vpop.f32.mrf.mxu0
  %v473 = vadd.f32 %v72, %v472
  %v474 = vpop.f32.mrf.mxu0
  %475 = vmatprep.mubr.f32.mxu0 0.0
  %476 = vmatmul.mubr.f32.gmra.mxu0 %v187
  %v477 = vpop.f32.mrf.mxu0
  %v478 = vadd.f32 %v72, %v477
  %v479 = vpop.f32.mrf.mxu0
  %480 = vmatprep.mubr.f32.mxu0 0.0
  %481 = vmatmul.mubr.f32.gmra.mxu0 %v190
  %v482 = vpop.f32.mrf.mxu0
  %v483 = vadd.f32 %v72, %v482
  %v484 = vpop.f32.mrf.mxu0
  %485 = vmatprep.mubr.f32.mxu0 0.0
  %486 = vmatmul.mubr.f32.gmra.mxu0 %v193
  %v487 = vpop.f32.mrf.mxu0
  %v488 = vadd.f32 %v72, %v487
  %v489 = vpop.f32.mrf.mxu0
  %490 = vmatprep.mubr.f32.mxu0 0.0
  %491 = vmatmul.mubr.f32.gmra.mxu0 %v196
  %v492 = vpop.f32.mrf.mxu0
  %v493 = vadd.f32 %v72, %v492
  %v494 = vpop.f32.mrf.mxu0
  %495 = vmatprep.mubr.f32.mxu0 0.0
  %496 = vmatmul.mubr.f32.gmra.mxu0 %v199
  %v497 = vpop.f32.mrf.mxu0
  %v498 = vadd.f32 %v72, %v497
  %v499 = vpop.f32.mrf.mxu0
  %500 = vmatprep.mubr.f32.mxu0 0.0
  %501 = vmatmul.mubr.f32.gmra.mxu0 %v202
  %v502 = vpop.f32.mrf.mxu0
  %v503 = vadd.f32 %v72, %v502
  %v504 = vpop.f32.mrf.mxu0
  %505 = vmatprep.mubr.f32.mxu0 0.0
  %506 = vmatmul.mubr.f32.gmra.mxu0 %v205
  %v507 = vpop.f32.mrf.mxu0
  %v508 = vadd.f32 %v72, %v507
  %v509 = vpop.f32.mrf.mxu0
  %510 = vmatprep.mubr.f32.mxu0 0.0
  %511 = vmatmul.mubr.f32.gmra.mxu0 %v208
  %v512 = vpop.f32.mrf.mxu0
  %v513 = vadd.f32 %v72, %v512
  %v514 = vpop.f32.mrf.mxu0
  %515 = vmatprep.mubr.f32.mxu0 0.0
  %516 = vmatmul.mubr.f32.gmra.mxu0 %v211
  %v517 = vpop.f32.mrf.mxu0
  %v518 = vadd.f32 %v72, %v517
  %v519 = vpop.f32.mrf.mxu0
  %520 = vmatprep.mubr.f32.mxu0 0.0
  %521 = vmatmul.mubr.f32.gmra.mxu0 %v214
  %v522 = vpop.f32.mrf.mxu0
  %v523 = vadd.f32 %v72, %v522
  %v524 = vpop.f32.mrf.mxu0
  %525 = vmatprep.mubr.f32.mxu0 0.0
  %526 = vmatmul.mubr.f32.gmra.mxu0 %v217
  %v527 = vpop.f32.mrf.mxu0
  %v528 = vadd.f32 %v72, %v527
  %v529 = vpop.f32.mrf.mxu0
  %530 = vmatprep.mubr.f32.mxu0 0.0
  %531 = vmatmul.mubr.f32.gmra.mxu0 %v220
  %v532 = vpop.f32.mrf.mxu0
  %v533 = vadd.f32 %v72, %v532
  %v534 = vpop.f32.mrf.mxu0
  %535 = vdwg.mxu0
  %v536 = vmax.f32 %v293, 0.0
  %v537 = vmax.f32 %v298, 0.0
  %v538 = vmax.f32 %v303, 0.0
  %v539 = vmax.f32 %v308, 0.0
  %v540 = vmax.f32 %v313, 0.0
  %v541 = vmax.f32 %v318, 0.0
  %v542 = vmax.f32 %v323, 0.0
  %v543 = vmax.f32 %v328, 0.0
  %v544 = vmax.f32 %v333, 0.0
  %v545 = vmax.f32 %v338, 0.0
  %v546 = vmax.f32 %v343, 0.0
  %v547 = vmax.f32 %v348, 0.0
  %v548 = vmax.f32 %v353, 0.0
  %v549 = vmax.f32 %v358, 0.0
  %v550 = vmax.f32 %v363, 0.0
  %v551 = vmax.f32 %v368, 0.0
  %v552 = vmax.f32 %v373, 0.0
  %v553 = vmax.f32 %v378, 0.0
  %v554 = vmax.f32 %v383, 0.0
  %v555 = vmax.f32 %v388, 0.0
  %v556 = vmax.f32 %v393, 0.0
  %v557 = vmax.f32 %v398, 0.0
  %v558 = vmax.f32 %v403, 0.0
  %v559 = vmax.f32 %v408, 0.0
  %v560 = vmax.f32 %v413, 0.0
  %v561 = vmax.f32 %v418, 0.0
  %v562 = vmax.f32 %v423, 0.0
  %v563 = vmax.f32 %v428, 0.0
  %v564 = vmax.f32 %v433, 0.0
  %v565 = vmax.f32 %v438, 0.0
  %v566 = vmax.f32 %v443, 0.0
  %v567 = vmax.f32 %v448, 0.0
  %v568 = vmax.f32 %v453, 0.0
  %v569 = vmax.f32 %v458, 0.0
  %v570 = vmax.f32 %v463, 0.0
  %v571 = vmax.f32 %v468, 0.0
  %v572 = vmax.f32 %v473, 0.0
  %v573 = vmax.f32 %v478, 0.0
  %v574 = vmax.f32 %v483, 0.0
  %v575 = vmax.f32 %v488, 0.0
  %v576 = vmax.f32 %v493, 0.0
  %v577 = vmax.f32 %v498, 0.0
  %v578 = vmax.f32 %v503, 0.0
  %v579 = vmax.f32 %v508, 0.0
  %v580 = vmax.f32 %v513, 0.0
  %v581 = vmax.f32 %v518, 0.0
  %v582 = vmax.f32 %v523, 0.0
  %v583 = vmax.f32 %v528, 0.0
  %v584 = vmax.f32 %v533, 0.0
  %vm585 = vcmask 97280
  %586 = vst.msk [vmem:[%s3] sm:$0xff] %vm585, %v536
  %587 = vst.msk [vmem:[%s3 + $0x8] sm:$0xff] %vm585, %v537
  %588 = vst.msk [vmem:[%s3 + $0x10] sm:$0xff] %vm585, %v538
  %589 = vst.msk [vmem:[%s3 + $0x18] sm:$0xff] %vm585, %v539
  %590 = vst.msk [vmem:[%s3 + $0x20] sm:$0xff] %vm585, %v540
  %591 = vst.msk [vmem:[%s3 + $0x28] sm:$0xff] %vm585, %v541
  %592 = vst.msk [vmem:[%s3 + $0x30] sm:$0xff] %vm585, %v542
  %593 = vst.msk [vmem:[%s3 + $0x38] sm:$0xff] %vm585, %v543
  %594 = vst.msk [vmem:[%s3 + $0x40] sm:$0xff] %vm585, %v544
  %595 = vst.msk [vmem:[%s3 + $0x48] sm:$0xff] %vm585, %v545
  %596 = vst.msk [vmem:[%s3 + $0x50] sm:$0xff] %vm585, %v546
  %597 = vst.msk [vmem:[%s3 + $0x58] sm:$0xff] %vm585, %v547
  %598 = vst.msk [vmem:[%s3 + $0x60] sm:$0xff] %vm585, %v548
  %599 = vst.msk [vmem:[%s3 + $0x68] sm:$0xff] %vm585, %v549
  %600 = vst.msk [vmem:[%s3 + $0x70] sm:$0xff] %vm585, %v550
  %601 = vst.msk [vmem:[%s3 + $0x78] sm:$0xff] %vm585, %v551
  %602 = vst.msk [vmem:[%s3 + $0x80] sm:$0xff] %vm585, %v552
  %603 = vst.msk [vmem:[%s3 + $0x88] sm:$0xff] %vm585, %v553
  %604 = vst.msk [vmem:[%s3 + $0x90] sm:$0xff] %vm585, %v554
  %605 = vst.msk [vmem:[%s3 + $0x98] sm:$0xff] %vm585, %v555
  %606 = vst.msk [vmem:[%s3 + $0xa0] sm:$0xff] %vm585, %v556
  %607 = vst.msk [vmem:[%s3 + $0xa8] sm:$0xff] %vm585, %v557
  %608 = vst.msk [vmem:[%s3 + $0xb0] sm:$0xff] %vm585, %v558
  %609 = vst.msk [vmem:[%s3 + $0xb8] sm:$0xff] %vm585, %v559
  %610 = vst.msk [vmem:[%s3 + $0xc0] sm:$0xff] %vm585, %v560
  %611 = vst.msk [vmem:[%s3 + $0xc8] sm:$0xff] %vm585, %v561
  %612 = vst.msk [vmem:[%s3 + $0xd0] sm:$0xff] %vm585, %v562
  %613 = vst.msk [vmem:[%s3 + $0xd8] sm:$0xff] %vm585, %v563
  %614 = vst.msk [vmem:[%s3 + $0xe0] sm:$0xff] %vm585, %v564
  %615 = vst.msk [vmem:[%s3 + $0xe8] sm:$0xff] %vm585, %v565
  %616 = vst.msk [vmem:[%s3 + $0xf0] sm:$0xff] %vm585, %v566
  %617 = vst.msk [vmem:[%s3 + $0xf8] sm:$0xff] %vm585, %v567
  %618 = vst.msk [vmem:[%s3 + $0x100] sm:$0xff] %vm585, %v568
  %619 = vst.msk [vmem:[%s3 + $0x108] sm:$0xff] %vm585, %v569
  %620 = vst.msk [vmem:[%s3 + $0x110] sm:$0xff] %vm585, %v570
  %621 = vst.msk [vmem:[%s3 + $0x118] sm:$0xff] %vm585, %v571
  %622 = vst.msk [vmem:[%s3 + $0x120] sm:$0xff] %vm585, %v572
  %623 = vst.msk [vmem:[%s3 + $0x128] sm:$0xff] %vm585, %v573
  %624 = vst.msk [vmem:[%s3 + $0x130] sm:$0xff] %vm585, %v574
  %625 = vst.msk [vmem:[%s3 + $0x138] sm:$0xff] %vm585, %v575
  %626 = vst.msk [vmem:[%s3 + $0x140] sm:$0xff] %vm585, %v576
  %627 = vst.msk [vmem:[%s3 + $0x148] sm:$0xff] %vm585, %v577
  %628 = vst.msk [vmem:[%s3 + $0x150] sm:$0xff] %vm585, %v578
  %629 = vst.msk [vmem:[%s3 + $0x158] sm:$0xff] %vm585, %v579
  %630 = vst.msk [vmem:[%s3 + $0x160] sm:$0xff] %vm585, %v580
  %631 = vst.msk [vmem:[%s3 + $0x168] sm:$0xff] %vm585, %v581
  %632 = vst.msk [vmem:[%s3 + $0x170] sm:$0xff] %vm585, %v582
  %633 = vst.msk [vmem:[%s3 + $0x178] sm:$0xff] %vm585, %v583
  %634 = vst.msk [vmem:[%s3 + $0x180] sm:$0xff] %vm585, %v584
  // Predicated region
  $region14: #{lenet5_forward.2} parent=0 // pred_check
    _
  $region15: #{lenet5_forward.2} parent=0 // pred_check_branch
    %636 = sbr.rel (0) target = $region17
  $region16: #{lenet5_forward.2} parent=0 // pred_region
    _
  $region17: #{lenet5_forward.2} parent=0 // pred_fallthru
    _
  // Predicated region
  $region18: #{lenet5_forward.2} parent=0 // pred_check
    _
  $region19: #{lenet5_forward.2} parent=0 // pred_check_branch
    %638 = sbr.rel (0) target = $region21
  $region20: #{lenet5_forward.2} parent=0 // pred_region
    _
  $region21: #{lenet5_forward.2} parent=0 // pred_fallthru
    _

// kernel: lenet5_forward.3
$region0: #{lenet5_forward.3}
  #allocation0 [shape = 'u32[]', space=smem, size = 0x4, offset = 0x4, fixed_abs, tag = 'smem constant byte address 0x4 - core index']
  #allocation1 [shape = 'u32[144,128]{1,0:T(1,128)}', space=vmem, size = 0x12000, scoped, tag = 'internal scratch']
  %s0 = inlined_call_operand.vmem [shape: f32[200,300], index: 0, kind: input, shape index: {}]
  %s1 = inlined_call_operand.vmem [shape: f32[300,32], index: 1, kind: input, shape index: {}]
  %s2 = inlined_call_operand.vmem [shape: f32[1,32], index: 2, kind: input, shape index: {}]
  %s3 = inlined_call_operand.vmem [shape: f32[25,32,336], index: 3, kind: input, shape index: {}]
  %s4 = inlined_call_operand.vmem [shape: f32[1,336], index: 4, kind: input, shape index: {}]
  %s5 = inlined_call_operand.vmem [shape: f32[336,168], index: 5, kind: input, shape index: {}]
  %s6 = inlined_call_operand.vmem [shape: f32[1,168], index: 6, kind: input, shape index: {}]
  %s7 = inlined_call_operand.vmem [shape: f32[168,84], index: 7, kind: input, shape index: {}]
  %s8 = inlined_call_operand.vmem [shape: f32[1,84], index: 8, kind: input, shape index: {}]
  %s9 = inlined_call_operand.vmem [shape: f32[84,10], index: 9, kind: input, shape index: {}]
  %s10 = inlined_call_operand.vmem [shape: f32[1,10], index: 10, kind: input, shape index: {}]
  %s11 = inlined_call_operand.hbm [shape: f32[2,10], index: 11, kind: output, shape index: {}]
  %s12 = sld [smem:[#allocation0]]
  $region54: #{lenet5_forward.3} parent=0
    _
  %s14 = ssub.s32 1, %s12
  %s15 = scalar_select 0, %s14, %s12
  $region1: #{lenet5_forward.3} parent=0
    #allocation2 [shape = 'u8[1024]{0}', space=vmem, size = 0x400, scoped, tag = 'output window, operand 0, single buffered']
    #allocation3 [shape = 's32[1]{0}', space=sflag, size = 0x4, scoped, tag = 'scoped memory for lenet5_forward.3']
    %16 = vsyncpa [#allocation3], 0
    // Predicated region
    $region2: #{lenet5_forward.3} parent=1 // pred_check
      _
    $region3: #{lenet5_forward.3} parent=1 // pred_check_branch
      %18 = sbr.rel (0) target = $region5
    $region4: #{lenet5_forward.3} parent=1 // pred_region
      _
    $region5: #{lenet5_forward.3} parent=1 // pred_fallthru
      _
    // Predicated region
    $region6: #{lenet5_forward.3} parent=1 // pred_check
      _
    $region7: #{lenet5_forward.3} parent=1 // pred_check_branch
      %20 = sbr.rel (0) target = $region9
    $region8: #{lenet5_forward.3} parent=1 // pred_region
      _
    $region9: #{lenet5_forward.3} parent=1 // pred_fallthru
      _
    // Predicated region
    $region10: #{lenet5_forward.3} parent=1 // pred_check
      _
    $region11: #{lenet5_forward.3} parent=1 // pred_check_branch
      %22 = sbr.rel (0) target = $region13
    $region12: #{lenet5_forward.3} parent=1 // pred_region
      _
    $region13: #{lenet5_forward.3} parent=1 // pred_fallthru
      _
    // Predicated region
    $region14: #{lenet5_forward.3} parent=1 // pred_check
      _
    $region15: #{lenet5_forward.3} parent=1 // pred_check_branch
      %24 = sbr.rel (0) target = $region17
    $region16: #{lenet5_forward.3} parent=1 // pred_region
      _
    $region17: #{lenet5_forward.3} parent=1 // pred_fallthru
      _
    // Predicated region
    $region18: #{lenet5_forward.3} parent=1 // pred_check
      _
    $region19: #{lenet5_forward.3} parent=1 // pred_check_branch
      %26 = sbr.rel (0) target = $region21
    $region20: #{lenet5_forward.3} parent=1 // pred_region
      _
    $region21: #{lenet5_forward.3} parent=1 // pred_fallthru
      _
    // Predicated region
    $region22: #{lenet5_forward.3} parent=1 // pred_check
      _
    $region23: #{lenet5_forward.3} parent=1 // pred_check_branch
      %28 = sbr.rel (0) target = $region25
    $region24: #{lenet5_forward.3} parent=1 // pred_region
      _
    $region25: #{lenet5_forward.3} parent=1 // pred_fallthru
      _
    // Predicated region
    $region26: #{lenet5_forward.3} parent=1 // pred_check
      _
    $region27: #{lenet5_forward.3} parent=1 // pred_check_branch
      %30 = sbr.rel (0) target = $region29
    $region28: #{lenet5_forward.3} parent=1 // pred_region
      _
    $region29: #{lenet5_forward.3} parent=1 // pred_fallthru
      _
    // Predicated region
    $region30: #{lenet5_forward.3} parent=1 // pred_check
      _
    $region31: #{lenet5_forward.3} parent=1 // pred_check_branch
      %32 = sbr.rel (0) target = $region33
    $region32: #{lenet5_forward.3} parent=1 // pred_region
      _
    $region33: #{lenet5_forward.3} parent=1 // pred_fallthru
      _
    // Predicated region
    $region34: #{lenet5_forward.3} parent=1 // pred_check
      _
    $region35: #{lenet5_forward.3} parent=1 // pred_check_branch
      %34 = sbr.rel (0) target = $region37
    $region36: #{lenet5_forward.3} parent=1 // pred_region
      _
    $region37: #{lenet5_forward.3} parent=1 // pred_fallthru
      _
    // Predicated region
    $region38: #{lenet5_forward.3} parent=1 // pred_check
      _
    $region39: #{lenet5_forward.3} parent=1 // pred_check_branch
      %36 = sbr.rel (0) target = $region41
    $region40: #{lenet5_forward.3} parent=1 // pred_region
      _
    $region41: #{lenet5_forward.3} parent=1 // pred_fallthru
      _
    // Predicated region
    $region42: #{lenet5_forward.3} parent=1 // pred_check
      _
    $region43: #{lenet5_forward.3} parent=1 // pred_check_branch
      %38 = sbr.rel (0) target = $region45
    $region44: #{lenet5_forward.3} parent=1 // pred_region
      _
    $region45: #{lenet5_forward.3} parent=1 // pred_fallthru
      _
    %v39 = vld [vmem:[%s0] sm:$0xff]
    %v40 = vld [vmem:[%s0 + $0x8] sm:$0xff]
    %v41 = vld [vmem:[%s0 + $0x10] sm:$0xff]
    %v42 = vld [vmem:[%s0 + $0x18] sm:$0xff]
    %v43 = vld [vmem:[%s0 + $0x20] sm:$0xff]
    %v44 = vld [vmem:[%s0 + $0x28] sm:$0xff]
    %v45 = vld [vmem:[%s0 + $0x30] sm:$0xff]
    %v46 = vld [vmem:[%s0 + $0x38] sm:$0xff]
    %v47 = vld [vmem:[%s0 + $0x40] sm:$0xff]
    %v48 = vld [vmem:[%s0 + $0x48] sm:$0xff]
    %v49 = vld [vmem:[%s0 + $0x50] sm:$0xff]
    %v50 = vld [vmem:[%s0 + $0x58] sm:$0xff]
    %v51 = vld [vmem:[%s0 + $0x60] sm:$0xff]
    %v52 = vld [vmem:[%s0 + $0x68] sm:$0xff]
    %v53 = vld [vmem:[%s0 + $0x70] sm:$0xff]
    %v54 = vld [vmem:[%s0 + $0x78] sm:$0xff]
    %v55 = vld [vmem:[%s0 + $0x80] sm:$0xff]
    %v56 = vld [vmem:[%s0 + $0x88] sm:$0xff]
    %v57 = vld [vmem:[%s0 + $0x90] sm:$0xff]
    %v58 = vld [vmem:[%s0 + $0x98] sm:$0xff]
    %v59 = vld [vmem:[%s0 + $0xa0] sm:$0xff]
    %v60 = vld [vmem:[%s0 + $0xa8] sm:$0xff]
    %v61 = vld [vmem:[%s0 + $0xb0] sm:$0xff]
    %v62 = vld [vmem:[%s0 + $0xb8] sm:$0xff]
    %v63 = vld [vmem:[%s0 + $0xc0] sm:$0xff]
    %v64 = vld [vmem:[%s0 + $0xc8] sm:$0xff]
    %v65 = vld [vmem:[%s0 + $0xd0] sm:$0xff]
    %v66 = vld [vmem:[%s0 + $0xd8] sm:$0xff]
    %v67 = vld [vmem:[%s0 + $0xe0] sm:$0xff]
    %v68 = vld [vmem:[%s0 + $0xe8] sm:$0xff]
    %v69 = vld [vmem:[%s0 + $0xf0] sm:$0xff]
    %v70 = vld [vmem:[%s0 + $0xf8] sm:$0xff]
    %v71 = vld [vmem:[%s0 + $0x100] sm:$0xff]
    %v72 = vld [vmem:[%s0 + $0x108] sm:$0xff]
    %v73 = vld [vmem:[%s0 + $0x110] sm:$0xff]
    %v74 = vld [vmem:[%s0 + $0x118] sm:$0xff]
    %v75 = vld [vmem:[%s0 + $0x120] sm:$0xff]
    %v76 = vld [vmem:[%s0 + $0x128] sm:$0xff]
    %v77 = vld [vmem:[%s0 + $0x130] sm:$0xff]
    %v78 = vld [vmem:[%s0 + $0x138] sm:$0xff]
    %v79 = vld [vmem:[%s0 + $0x140] sm:$0xff]
    %v80 = vld [vmem:[%s0 + $0x148] sm:$0xff]
    %v81 = vld [vmem:[%s0 + $0x150] sm:$0xff]
    %v82 = vld [vmem:[%s0 + $0x158] sm:$0xff]
    %v83 = vld [vmem:[%s0 + $0x160] sm:$0xff]
    %v84 = vld [vmem:[%s0 + $0x168] sm:$0xff]
    %v85 = vld [vmem:[%s0 + $0x170] sm:$0xff]
    %v86 = vld [vmem:[%s0 + $0x178] sm:$0xff]
    %v87 = vld [vmem:[%s0 + $0x180] sm:$0xff]
    %v88 = vld [vmem:[%s0 + $0x188] sm:$0xff]
    %v89 = vld [vmem:[%s0 + $0x190] sm:$0xff]
    %v90 = vld [vmem:[%s0 + $0x198] sm:$0xff]
    %v91 = vld [vmem:[%s0 + $0x1a0] sm:$0xff]
    %v92 = vld [vmem:[%s0 + $0x1a8] sm:$0xff]
    %v93 = vld [vmem:[%s0 + $0x1b0] sm:$0xff]
    %v94 = vld [vmem:[%s0 + $0x1b8] sm:$0xff]
    %v95 = vld [vmem:[%s0 + $0x1c0] sm:$0xff]
    %v96 = vld [vmem:[%s0 + $0x1c8] sm:$0xff]
    %v97 = vld [vmem:[%s0 + $0x1d0] sm:$0xff]
    %v98 = vld [vmem:[%s0 + $0x1d8] sm:$0xff]
    %v99 = vld [vmem:[%s0 + $0x1e0] sm:$0xff]
    %v100 = vld [vmem:[%s0 + $0x1e8] sm:$0xff]
    %v101 = vld [vmem:[%s0 + $0x1f0] sm:$0xff]
    %v102 = vld [vmem:[%s0 + $0x1f8] sm:$0xff]
    %v103 = vld [vmem:[%s0 + $0x200] sm:$0xff]
    %v104 = vld [vmem:[%s0 + $0x208] sm:$0xff]
    %v105 = vld [vmem:[%s0 + $0x210] sm:$0xff]
    %v106 = vld [vmem:[%s0 + $0x218] sm:$0xff]
    %v107 = vld [vmem:[%s0 + $0x220] sm:$0xff]
    %v108 = vld [vmem:[%s0 + $0x228] sm:$0xff]
    %v109 = vld [vmem:[%s0 + $0x230] sm:$0xff]
    %v110 = vld [vmem:[%s0 + $0x238] sm:$0xff]
    %v111 = vld [vmem:[%s0 + $0x240] sm:$0xff]
    %v112 = vld [vmem:[%s0 + $0x248] sm:$0xff]
    %v113 = vld [vmem:[%s0 + $0x250] sm:$0xff]
    %v114 = vld [vmem:[%s1] sm:$0xff]
    %v115 = vld [vmem:[%s1 + $0x8] sm:$0xff]
    %v116 = vld [vmem:[%s1 + $0x10] sm:$0xff]
    %v117 = vld [vmem:[%s1 + $0x18] sm:$0xff]
    %v118 = vld [vmem:[%s1 + $0x20] sm:$0xff]
    %v119 = vld [vmem:[%s1 + $0x28] sm:$0xff]
    %v120 = vld [vmem:[%s1 + $0x30] sm:$0xff]
    %v121 = vld [vmem:[%s1 + $0x38] sm:$0xff]
    %v122 = vld [vmem:[%s1 + $0x40] sm:$0xff]
    %v123 = vld [vmem:[%s1 + $0x48] sm:$0xff]
    %v124 = vld [vmem:[%s1 + $0x50] sm:$0xff]
    %v125 = vld [vmem:[%s1 + $0x58] sm:$0xff]
    %v126 = vld [vmem:[%s1 + $0x60] sm:$0xff]
    %v127 = vld [vmem:[%s1 + $0x68] sm:$0xff]
    %v128 = vld [vmem:[%s1 + $0x70] sm:$0xff]
    %v129 = vld [vmem:[%s1 + $0x78] sm:$0xff]
    %v130 = vld [vmem:[%s1 + $0x80] sm:$0xff]
    %v131 = vld [vmem:[%s1 + $0x88] sm:$0xff]
    %v132 = vld [vmem:[%s1 + $0x90] sm:$0xff]
    %v133 = vld [vmem:[%s1 + $0x98] sm:$0xff]
    %v134 = vld [vmem:[%s1 + $0xa0] sm:$0xff]
    %v135 = vld [vmem:[%s1 + $0xa8] sm:$0xff]
    %v136 = vld [vmem:[%s1 + $0xb0] sm:$0xff]
    %v137 = vld [vmem:[%s1 + $0xb8] sm:$0xff]
    %v138 = vld [vmem:[%s1 + $0xc0] sm:$0xff]
    %v139 = vld [vmem:[%s1 + $0xc8] sm:$0xff]
    %v140 = vld [vmem:[%s1 + $0xd0] sm:$0xff]
    %v141 = vld [vmem:[%s1 + $0xd8] sm:$0xff]
    %v142 = vld [vmem:[%s1 + $0xe0] sm:$0xff]
    %v143 = vld [vmem:[%s1 + $0xe8] sm:$0xff]
    %v144 = vld [vmem:[%s1 + $0xf0] sm:$0xff]
    %v145 = vld [vmem:[%s1 + $0xf8] sm:$0xff]
    %v146 = vld [vmem:[%s1 + $0x100] sm:$0xff]
    %v147 = vld [vmem:[%s1 + $0x108] sm:$0xff]
    %v148 = vld [vmem:[%s1 + $0x110] sm:$0xff]
    %v149 = vld [vmem:[%s1 + $0x118] sm:$0xff]
    %v150 = vld [vmem:[%s1 + $0x120] sm:$0xff]
    %v151 = vld [vmem:[%s1 + $0x128] sm:$0xf]
    %v152 = vld [vmem:[%s2] sm:$0x1]
    %v154 = vlaneseq
    %v155 = vshrl.u32 %v154, 7
    %v156 = vsub.s32 0, %v155
    %v157 = vrot.slane %v152, %v156
    %vm159 = vcmask 359424
    %v161 = vsel %vm159, %v41, 0
    %v164 = vsel %vm159, %v44, 0
    %v167 = vsel %vm159, %v47, 0
    %v170 = vsel %vm159, %v50, 0
    %v173 = vsel %vm159, %v53, 0
    %v176 = vsel %vm159, %v56, 0
    %v179 = vsel %vm159, %v59, 0
    %v182 = vsel %vm159, %v62, 0
    %v185 = vsel %vm159, %v65, 0
    %v188 = vsel %vm159, %v68, 0
    %v191 = vsel %vm159, %v71, 0
    %v194 = vsel %vm159, %v74, 0
    %v197 = vsel %vm159, %v77, 0
    %v200 = vsel %vm159, %v80, 0
    %v203 = vsel %vm159, %v83, 0
    %v206 = vsel %vm159, %v86, 0
    %v209 = vsel %vm159, %v89, 0
    %v212 = vsel %vm159, %v92, 0
    %v215 = vsel %vm159, %v95, 0
    %v218 = vsel %vm159, %v98, 0
    %v221 = vsel %vm159, %v101, 0
    %v224 = vsel %vm159, %v104, 0
    %v227 = vsel %vm159, %v107, 0
    %v230 = vsel %vm159, %v110, 0
    %v233 = vsel %vm159, %v113, 0
    %vm235 = vcmask 1043456
    %v237 = vsel %vm235, %v151, 0
    %239 = vmatprep.subr.mxu0 0.0
    %240 = vmatpush1.msra.mxu0 %v129
    %241 = vmatprep.subr.mxu0 0.0
    %242 = vmatpush1.msra.mxu0 %v128
    %243 = vmatprep.subr.mxu0 0.0
    %244 = vmatpush1.msra.mxu0 %v127
    %245 = vmatprep.subr.mxu0 0.0
    %246 = vmatpush1.msra.mxu0 %v126
    %247 = vmatprep.subr.mxu0 0.0
    %248 = vmatpush1.msra.mxu0 %v125
    %249 = vmatprep.subr.mxu0 0.0
    %250 = vmatpush1.msra.mxu0 %v124
    %251 = vmatprep.subr.mxu0 0.0
    %252 = vmatpush1.msra.mxu0 %v123
    %253 = vmatprep.subr.mxu0 0.0
    %254 = vmatpush1.msra.mxu0 %v122
    %255 = vmatprep.subr.mxu0 0.0
    %256 = vmatpush1.msra.mxu0 %v121
    %257 = vmatprep.subr.mxu0 0.0
    %258 = vmatpush1.msra.mxu0 %v120
    %259 = vmatprep.subr.mxu0 0.0
    %260 = vmatpush1.msra.mxu0 %v119
    %261 = vmatprep.subr.mxu0 0.0
    %262 = vmatpush1.msra.mxu0 %v118
    %263 = vmatprep.subr.mxu0 0.0
    %264 = vmatpush1.msra.mxu0 %v117
    %265 = vmatprep.subr.mxu0 0.0
    %266 = vmatpush1.msra.mxu0 %v116
    %267 = vmatprep.subr.mxu0 0.0
    %268 = vmatpush1.msra.mxu0 %v115
    %269 = vmatprep.subr.mxu0 0.0
    %270 = vmatpush1.msra.mxu0 %v114
    %271 = vmatprep.subr.mxu0 0.0
    %272 = vmatpush2.msra.mxu0 %v145
    %273 = vmatprep.subr.mxu0 0.0
    %274 = vmatpush2.msra.mxu0 %v144
    %275 = vmatprep.subr.mxu0 0.0
    %276 = vmatpush2.msra.mxu0 %v143
    %277 = vmatprep.subr.mxu0 0.0
    %278 = vmatpush2.msra.mxu0 %v142
    %279 = vmatprep.subr.mxu0 0.0
    %280 = vmatpush2.msra.mxu0 %v141
    %281 = vmatprep.subr.mxu0 0.0
    %282 = vmatpush2.msra.mxu0 %v140
    %283 = vmatprep.subr.mxu0 0.0
    %284 = vmatpush2.msra.mxu0 %v139
    %285 = vmatprep.subr.mxu0 0.0
    %286 = vmatpush2.msra.mxu0 %v138
    %287 = vmatprep.subr.mxu0 0.0
    %288 = vmatpush2.msra.mxu0 %v137
    %289 = vmatprep.subr.mxu0 0.0
    %290 = vmatpush2.msra.mxu0 %v136
    %291 = vmatprep.subr.mxu0 0.0
    %292 = vmatpush2.msra.mxu0 %v135
    %293 = vmatprep.subr.mxu0 0.0
    %294 = vmatpush2.msra.mxu0 %v134
    %295 = vmatprep.subr.mxu0 0.0
    %296 = vmatpush2.msra.mxu0 %v133
    %297 = vmatprep.subr.mxu0 0.0
    %298 = vmatpush2.msra.mxu0 %v132
    %299 = vmatprep.subr.mxu0 0.0
    %300 = vmatpush2.msra.mxu0 %v131
    %301 = vmatprep.subr.mxu0 0.0
    %302 = vmatpush2.msra.mxu0 %v130
    %303 = vmatprep.mubr.f32.mxu0 %v40
    %304 = vmatmul.mubr.f32.gmra.mxu0 %v39
    %v305 = vpop.f32.mrf.mxu0
    %v306 = vadd.f32 %v157, %v305
    %v307 = vpop.f32.mrf.mxu0
    %308 = vmatprep.mubr.f32.mxu0 %v43
    %309 = vmatmul.mubr.f32.gmra.mxu0 %v42
    %v310 = vpop.f32.mrf.mxu0
    %v311 = vadd.f32 %v157, %v310
    %v312 = vpop.f32.mrf.mxu0
    %313 = vmatprep.mubr.f32.mxu0 %v46
    %314 = vmatmul.mubr.f32.gmra.mxu0 %v45
    %v315 = vpop.f32.mrf.mxu0
    %v316 = vadd.f32 %v157, %v315
    %v317 = vpop.f32.mrf.mxu0
    %318 = vmatprep.mubr.f32.mxu0 %v49
    %319 = vmatmul.mubr.f32.gmra.mxu0 %v48
    %v320 = vpop.f32.mrf.mxu0
    %v321 = vadd.f32 %v157, %v320
    %v322 = vpop.f32.mrf.mxu0
    %323 = vmatprep.mubr.f32.mxu0 %v52
    %324 = vmatmul.mubr.f32.gmra.mxu0 %v51
    %v325 = vpop.f32.mrf.mxu0
    %v326 = vadd.f32 %v157, %v325
    %v327 = vpop.f32.mrf.mxu0
    %328 = vmatprep.mubr.f32.mxu0 %v55
    %329 = vmatmul.mubr.f32.gmra.mxu0 %v54
    %v330 = vpop.f32.mrf.mxu0
    %v331 = vadd.f32 %v157, %v330
    %v332 = vpop.f32.mrf.mxu0
    %333 = vmatprep.mubr.f32.mxu0 %v58
    %334 = vmatmul.mubr.f32.gmra.mxu0 %v57
    %v335 = vpop.f32.mrf.mxu0
    %v336 = vadd.f32 %v157, %v335
    %v337 = vpop.f32.mrf.mxu0
    %338 = vmatprep.mubr.f32.mxu0 %v61
    %339 = vmatmul.mubr.f32.gmra.mxu0 %v60
    %v340 = vpop.f32.mrf.mxu0
    %v341 = vadd.f32 %v157, %v340
    %v342 = vpop.f32.mrf.mxu0
    %343 = vmatprep.mubr.f32.mxu0 %v64
    %344 = vmatmul.mubr.f32.gmra.mxu0 %v63
    %v345 = vpop.f32.mrf.mxu0
    %v346 = vadd.f32 %v157, %v345
    %v347 = vpop.f32.mrf.mxu0
    %348 = vmatprep.mubr.f32.mxu0 %v67
    %349 = vmatmul.mubr.f32.gmra.mxu0 %v66
    %v350 = vpop.f32.mrf.mxu0
    %v351 = vadd.f32 %v157, %v350
    %v352 = vpop.f32.mrf.mxu0
    %353 = vmatprep.mubr.f32.mxu0 %v70
    %354 = vmatmul.mubr.f32.gmra.mxu0 %v69
    %v355 = vpop.f32.mrf.mxu0
    %v356 = vadd.f32 %v157, %v355
    %v357 = vpop.f32.mrf.mxu0
    %358 = vmatprep.mubr.f32.mxu0 %v73
    %359 = vmatmul.mubr.f32.gmra.mxu0 %v72
    %v360 = vpop.f32.mrf.mxu0
    %v361 = vadd.f32 %v157, %v360
    %v362 = vpop.f32.mrf.mxu0
    %363 = vmatprep.mubr.f32.mxu0 %v76
    %364 = vmatmul.mubr.f32.gmra.mxu0 %v75
    %v365 = vpop.f32.mrf.mxu0
    %v366 = vadd.f32 %v157, %v365
    %v367 = vpop.f32.mrf.mxu0
    %368 = vmatprep.mubr.f32.mxu0 %v79
    %369 = vmatmul.mubr.f32.gmra.mxu0 %v78
    %v370 = vpop.f32.mrf.mxu0
    %v371 = vadd.f32 %v157, %v370
    %v372 = vpop.f32.mrf.mxu0
    %373 = vmatprep.mubr.f32.mxu0 %v82
    %374 = vmatmul.mubr.f32.gmra.mxu0 %v81
    %v375 = vpop.f32.mrf.mxu0
    %v376 = vadd.f32 %v157, %v375
    %v377 = vpop.f32.mrf.mxu0
    %378 = vmatprep.mubr.f32.mxu0 %v85
    %379 = vmatmul.mubr.f32.gmra.mxu0 %v84
    %v380 = vpop.f32.mrf.mxu0
    %v381 = vadd.f32 %v157, %v380
    %v382 = vpop.f32.mrf.mxu0
    %383 = vmatprep.mubr.f32.mxu0 %v88
    %384 = vmatmul.mubr.f32.gmra.mxu0 %v87
    %v385 = vpop.f32.mrf.mxu0
    %v386 = vadd.f32 %v157, %v385
    %v387 = vpop.f32.mrf.mxu0
    %388 = vmatprep.mubr.f32.mxu0 %v91
    %389 = vmatmul.mubr.f32.gmra.mxu0 %v90
    %v390 = vpop.f32.mrf.mxu0
    %v391 = vadd.f32 %v157, %v390
    %v392 = vpop.f32.mrf.mxu0
    %393 = vmatprep.mubr.f32.mxu0 %v94
    %394 = vmatmul.mubr.f32.gmra.mxu0 %v93
    %v395 = vpop.f32.mrf.mxu0
    %v396 = vadd.f32 %v157, %v395
    %v397 = vpop.f32.mrf.mxu0
    %398 = vmatprep.mubr.f32.mxu0 %v97
    %399 = vmatmul.mubr.f32.gmra.mxu0 %v96
    %v400 = vpop.f32.mrf.mxu0
    %v401 = vadd.f32 %v157, %v400
    %v402 = vpop.f32.mrf.mxu0
    %403 = vmatprep.mubr.f32.mxu0 %v100
    %404 = vmatmul.mubr.f32.gmra.mxu0 %v99
    %v405 = vpop.f32.mrf.mxu0
    %v406 = vadd.f32 %v157, %v405
    %v407 = vpop.f32.mrf.mxu0
    %408 = vmatprep.mubr.f32.mxu0 %v103
    %409 = vmatmul.mubr.f32.gmra.mxu0 %v102
    %v410 = vpop.f32.mrf.mxu0
    %v411 = vadd.f32 %v157, %v410
    %v412 = vpop.f32.mrf.mxu0
    %413 = vmatprep.mubr.f32.mxu0 %v106
    %414 = vmatmul.mubr.f32.gmra.mxu0 %v105
    %v415 = vpop.f32.mrf.mxu0
    %v416 = vadd.f32 %v157, %v415
    %v417 = vpop.f32.mrf.mxu0
    %418 = vmatprep.mubr.f32.mxu0 %v109
    %419 = vmatmul.mubr.f32.gmra.mxu0 %v108
    %v420 = vpop.f32.mrf.mxu0
    %v421 = vadd.f32 %v157, %v420
    %v422 = vpop.f32.mrf.mxu0
    %423 = vmatprep.mubr.f32.mxu0 %v112
    %424 = vmatmul.mubr.f32.gmra.mxu0 %v111
    %v425 = vpop.f32.mrf.mxu0
    %v426 = vadd.f32 %v157, %v425
    %v427 = vpop.f32.mrf.mxu0
    %428 = vdwg.mxu0
    %429 = vmatprep.subr.mxu0 0.0
    %430 = vmatpush1.msra.mxu0 0.0
    %431 = vmatprep.subr.mxu0 0.0
    %432 = vmatpush1.msra.mxu0 0.0
    %433 = vmatprep.subr.mxu0 0.0
    %434 = vmatpush1.msra.mxu0 0.0
    %435 = vmatprep.subr.mxu0 0.0
    %436 = vmatpush1.msra.mxu0 0.0
    %437 = vmatprep.subr.mxu0 0.0
    %438 = vmatpush1.msra.mxu0 0.0
    %439 = vmatprep.subr.mxu0 0.0
    %440 = vmatpush1.msra.mxu0 0.0
    %441 = vmatprep.subr.mxu0 0.0
    %442 = vmatpush1.msra.mxu0 0.0
    %443 = vmatprep.subr.mxu0 0.0
    %444 = vmatpush1.msra.mxu0 0.0
    %445 = vmatprep.subr.mxu0 0.0
    %446 = vmatpush1.msra.mxu0 0.0
    %447 = vmatprep.subr.mxu0 0.0
    %448 = vmatpush1.msra.mxu0 0.0
    %449 = vmatprep.subr.mxu0 0.0
    %450 = vmatpush1.msra.mxu0 %v237
    %451 = vmatprep.subr.mxu0 0.0
    %452 = vmatpush1.msra.mxu0 %v150
    %453 = vmatprep.subr.mxu0 0.0
    %454 = vmatpush1.msra.mxu0 %v149
    %455 = vmatprep.subr.mxu0 0.0
    %456 = vmatpush1.msra.mxu0 %v148
    %457 = vmatprep.subr.mxu0 0.0
    %458 = vmatpush1.msra.mxu0 %v147
    %459 = vmatprep.subr.mxu0 0.0
    %460 = vmatpush1.msra.mxu0 %v146
    %461 = vmatprep.subr.mxu0 0.0
    %462 = vmatpush2.msra.mxu0 0.0
    %463 = vmatprep.subr.mxu0 0.0
    %464 = vmatpush2.msra.mxu0 0.0
    %465 = vmatprep.subr.mxu0 0.0
    %466 = vmatpush2.msra.mxu0 0.0
    %467 = vmatprep.subr.mxu0 0.0
    %468 = vmatpush2.msra.mxu0 0.0
    %469 = vmatprep.subr.mxu0 0.0
    %470 = vmatpush2.msra.mxu0 0.0
    %471 = vmatprep.subr.mxu0 0.0
    %472 = vmatpush2.msra.mxu0 0.0
    %473 = vmatprep.subr.mxu0 0.0
    %474 = vmatpush2.msra.mxu0 0.0
    %475 = vmatprep.subr.mxu0 0.0
    %476 = vmatpush2.msra.mxu0 0.0
    %477 = vmatprep.subr.mxu0 0.0
    %478 = vmatpush2.msra.mxu0 0.0
    %479 = vmatprep.subr.mxu0 0.0
    %480 = vmatpush2.msra.mxu0 0.0
    %481 = vmatprep.subr.mxu0 0.0
    %482 = vmatpush2.msra.mxu0 0.0
    %483 = vmatprep.subr.mxu0 0.0
    %484 = vmatpush2.msra.mxu0 0.0
    %485 = vmatprep.subr.mxu0 0.0
    %486 = vmatpush2.msra.mxu0 0.0
    %487 = vmatprep.subr.mxu0 0.0
    %488 = vmatpush2.msra.mxu0 0.0
    %489 = vmatprep.subr.mxu0 0.0
    %490 = vmatpush2.msra.mxu0 0.0
    %491 = vmatprep.subr.mxu0 0.0
    %492 = vmatpush2.msra.mxu0 0.0
    %493 = vmatprep.mubr.f32.mxu0 0.0
    %494 = vmatmul.mubr.f32.gmra.mxu0 %v161
    %v495 = vpop.f32.mrf.mxu0
    %v496 = vadd.f32 %v306, %v495
    %v497 = vpop.f32.mrf.mxu0
    %498 = vmatprep.mubr.f32.mxu0 0.0
    %499 = vmatmul.mubr.f32.gmra.mxu0 %v164
    %v500 = vpop.f32.mrf.mxu0
    %v501 = vadd.f32 %v311, %v500
    %v502 = vpop.f32.mrf.mxu0
    %503 = vmatprep.mubr.f32.mxu0 0.0
    %504 = vmatmul.mubr.f32.gmra.mxu0 %v167
    %v505 = vpop.f32.mrf.mxu0
    %v506 = vadd.f32 %v316, %v505
    %v507 = vpop.f32.mrf.mxu0
    %508 = vmatprep.mubr.f32.mxu0 0.0
    %509 = vmatmul.mubr.f32.gmra.mxu0 %v170
    %v510 = vpop.f32.mrf.mxu0
    %v511 = vadd.f32 %v321, %v510
    %v512 = vpop.f32.mrf.mxu0
    %513 = vmatprep.mubr.f32.mxu0 0.0
    %514 = vmatmul.mubr.f32.gmra.mxu0 %v173
    %v515 = vpop.f32.mrf.mxu0
    %v516 = vadd.f32 %v326, %v515
    %v517 = vpop.f32.mrf.mxu0
    %518 = vmatprep.mubr.f32.mxu0 0.0
    %519 = vmatmul.mubr.f32.gmra.mxu0 %v176
    %v520 = vpop.f32.mrf.mxu0
    %v521 = vadd.f32 %v331, %v520
    %v522 = vpop.f32.mrf.mxu0
    %523 = vmatprep.mubr.f32.mxu0 0.0
    %524 = vmatmul.mubr.f32.gmra.mxu0 %v179
    %v525 = vpop.f32.mrf.mxu0
    %v526 = vadd.f32 %v336, %v525
    %v527 = vpop.f32.mrf.mxu0
    %528 = vmatprep.mubr.f32.mxu0 0.0
    %529 = vmatmul.mubr.f32.gmra.mxu0 %v182
    %v530 = vpop.f32.mrf.mxu0
    %v531 = vadd.f32 %v341, %v530
    %v532 = vpop.f32.mrf.mxu0
    %533 = vmatprep.mubr.f32.mxu0 0.0
    %534 = vmatmul.mubr.f32.gmra.mxu0 %v185
    %v535 = vpop.f32.mrf.mxu0
    %v536 = vadd.f32 %v346, %v535
    %v537 = vpop.f32.mrf.mxu0
    %538 = vmatprep.mubr.f32.mxu0 0.0
    %539 = vmatmul.mubr.f32.gmra.mxu0 %v188
    %v540 = vpop.f32.mrf.mxu0
    %v541 = vadd.f32 %v351, %v540
    %v542 = vpop.f32.mrf.mxu0
    %543 = vmatprep.mubr.f32.mxu0 0.0
    %544 = vmatmul.mubr.f32.gmra.mxu0 %v191
    %v545 = vpop.f32.mrf.mxu0
    %v546 = vadd.f32 %v356, %v545
    %v547 = vpop.f32.mrf.mxu0
    %548 = vmatprep.mubr.f32.mxu0 0.0
    %549 = vmatmul.mubr.f32.gmra.mxu0 %v194
    %v550 = vpop.f32.mrf.mxu0
    %v551 = vadd.f32 %v361, %v550
    %v552 = vpop.f32.mrf.mxu0
    %553 = vmatprep.mubr.f32.mxu0 0.0
    %554 = vmatmul.mubr.f32.gmra.mxu0 %v197
    %v555 = vpop.f32.mrf.mxu0
    %v556 = vadd.f32 %v366, %v555
    %v557 = vpop.f32.mrf.mxu0
    %558 = vmatprep.mubr.f32.mxu0 0.0
    %559 = vmatmul.mubr.f32.gmra.mxu0 %v200
    %v560 = vpop.f32.mrf.mxu0
    %v561 = vadd.f32 %v371, %v560
    %v562 = vpop.f32.mrf.mxu0
    %563 = vmatprep.mubr.f32.mxu0 0.0
    %564 = vmatmul.mubr.f32.gmra.mxu0 %v203
    %v565 = vpop.f32.mrf.mxu0
    %v566 = vadd.f32 %v376, %v565
    %v567 = vpop.f32.mrf.mxu0
    %568 = vmatprep.mubr.f32.mxu0 0.0
    %569 = vmatmul.mubr.f32.gmra.mxu0 %v206
    %v570 = vpop.f32.mrf.mxu0
    %v571 = vadd.f32 %v381, %v570
    %v572 = vpop.f32.mrf.mxu0
    %573 = vmatprep.mubr.f32.mxu0 0.0
    %574 = vmatmul.mubr.f32.gmra.mxu0 %v209
    %v575 = vpop.f32.mrf.mxu0
    %v576 = vadd.f32 %v386, %v575
    %v577 = vpop.f32.mrf.mxu0
    %578 = vmatprep.mubr.f32.mxu0 0.0
    %579 = vmatmul.mubr.f32.gmra.mxu0 %v212
    %v580 = vpop.f32.mrf.mxu0
    %v581 = vadd.f32 %v391, %v580
    %v582 = vpop.f32.mrf.mxu0
    %583 = vmatprep.mubr.f32.mxu0 0.0
    %584 = vmatmul.mubr.f32.gmra.mxu0 %v215
    %v585 = vpop.f32.mrf.mxu0
    %v586 = vadd.f32 %v396, %v585
    %v587 = vpop.f32.mrf.mxu0
    %588 = vmatprep.mubr.f32.mxu0 0.0
    %589 = vmatmul.mubr.f32.gmra.mxu0 %v218
    %v590 = vpop.f32.mrf.mxu0
    %v591 = vadd.f32 %v401, %v590
    %v592 = vpop.f32.mrf.mxu0
    %593 = vmatprep.mubr.f32.mxu0 0.0
    %594 = vmatmul.mubr.f32.gmra.mxu0 %v221
    %v595 = vpop.f32.mrf.mxu0
    %v596 = vadd.f32 %v406, %v595
    %v597 = vpop.f32.mrf.mxu0
    %598 = vmatprep.mubr.f32.mxu0 0.0
    %599 = vmatmul.mubr.f32.gmra.mxu0 %v224
    %v600 = vpop.f32.mrf.mxu0
    %v601 = vadd.f32 %v411, %v600
    %v602 = vpop.f32.mrf.mxu0
    %603 = vmatprep.mubr.f32.mxu0 0.0
    %604 = vmatmul.mubr.f32.gmra.mxu0 %v227
    %v605 = vpop.f32.mrf.mxu0
    %v606 = vadd.f32 %v416, %v605
    %v607 = vpop.f32.mrf.mxu0
    %608 = vmatprep.mubr.f32.mxu0 0.0
    %609 = vmatmul.mubr.f32.gmra.mxu0 %v230
    %v610 = vpop.f32.mrf.mxu0
    %v611 = vadd.f32 %v421, %v610
    %v612 = vpop.f32.mrf.mxu0
    %613 = vmatprep.mubr.f32.mxu0 0.0
    %614 = vmatmul.mubr.f32.gmra.mxu0 %v233
    %v615 = vpop.f32.mrf.mxu0
    %v616 = vadd.f32 %v426, %v615
    %v617 = vpop.f32.mrf.mxu0
    %618 = vdwg.mxu0
    %v619 = vmax.f32 %v496, 0.0
    %v620 = vmax.f32 %v501, 0.0
    %v621 = vmax.f32 %v506, 0.0
    %v622 = vmax.f32 %v511, 0.0
    %v623 = vmax.f32 %v516, 0.0
    %v624 = vmax.f32 %v521, 0.0
    %v625 = vmax.f32 %v526, 0.0
    %v626 = vmax.f32 %v531, 0.0
    %v627 = vmax.f32 %v536, 0.0
    %v628 = vmax.f32 %v541, 0.0
    %v629 = vmax.f32 %v546, 0.0
    %v630 = vmax.f32 %v551, 0.0
    %v631 = vmax.f32 %v556, 0.0
    %v632 = vmax.f32 %v561, 0.0
    %v633 = vmax.f32 %v566, 0.0
    %v634 = vmax.f32 %v571, 0.0
    %v635 = vmax.f32 %v576, 0.0
    %v636 = vmax.f32 %v581, 0.0
    %v637 = vmax.f32 %v586, 0.0
    %v638 = vmax.f32 %v591, 0.0
    %v639 = vmax.f32 %v596, 0.0
    %v640 = vmax.f32 %v601, 0.0
    %v641 = vmax.f32 %v606, 0.0
    %v642 = vmax.f32 %v611, 0.0
    %v643 = vmax.f32 %v616, 0.0
    %v645 = vrot.slane %v619, 2
    %v647 = vmax.f32 %v619, %v645
    %v649 = vrot.slane %v647, 4
    %v651 = vmax.f32 %v647, %v649
    %v652 = vld [vmem:[%s3] sm:$0xff]
    %v653 = vld [vmem:[%s3 + $0x8] sm:$0xff]
    %v654 = vld [vmem:[%s3 + $0x10] sm:$0xff]
    %v655 = vld [vmem:[%s3 + $0x18] sm:$0xff]
    %v656 = vld [vmem:[%s3 + $0x20] sm:$0xff]
    %v657 = vld [vmem:[%s3 + $0x28] sm:$0xff]
    %v658 = vld [vmem:[%s3 + $0x30] sm:$0xff]
    %v659 = vld [vmem:[%s3 + $0x38] sm:$0xff]
    %v660 = vld [vmem:[%s3 + $0x40] sm:$0xff]
    %v661 = vld [vmem:[%s3 + $0x48] sm:$0xff]
    %v662 = vld [vmem:[%s3 + $0x50] sm:$0xff]
    %v663 = vld [vmem:[%s3 + $0x58] sm:$0xff]
    %v665 = vrot.slane %v620, 2
    %v667 = vmax.f32 %v620, %v665
    %v669 = vrot.slane %v667, 4
    %v671 = vmax.f32 %v667, %v669
    %s672 = scalar_lea.vmem %s3, 96
    %v673 = vld [vmem:[%s672] sm:$0xff]
    %v674 = vld [vmem:[%s672 + $0x8] sm:$0xff]
    %v675 = vld [vmem:[%s672 + $0x10] sm:$0xff]
    %v676 = vld [vmem:[%s672 + $0x18] sm:$0xff]
    %v677 = vld [vmem:[%s672 + $0x20] sm:$0xff]
    %v678 = vld [vmem:[%s672 + $0x28] sm:$0xff]
    %v679 = vld [vmem:[%s672 + $0x30] sm:$0xff]
    %v680 = vld [vmem:[%s672 + $0x38] sm:$0xff]
    %v681 = vld [vmem:[%s672 + $0x40] sm:$0xff]
    %v682 = vld [vmem:[%s672 + $0x48] sm:$0xff]
    %v683 = vld [vmem:[%s672 + $0x50] sm:$0xff]
    %v684 = vld [vmem:[%s672 + $0x58] sm:$0xff]
    %vm685 = vcmask 261120
    %v687 = vsel %vm685, %v671, 0
    %689 = vmatprep.subr.mxu0 0.0
    %690 = vmatpush1.msra.mxu0 0.0
    %691 = vmatprep.subr.mxu0 0.0
    %692 = vmatpush1.msra.mxu0 0.0
    %693 = vmatprep.subr.mxu0 0.0
    %694 = vmatpush1.msra.mxu0 0.0
    %695 = vmatprep.subr.mxu0 0.0
    %696 = vmatpush1.msra.mxu0 0.0
    %697 = vmatprep.subr.mxu0 0.0
    %698 = vmatpush1.msra.mxu0 0.0
    %699 = vmatprep.subr.mxu0 0.0
    %700 = vmatpush1.msra.mxu0 0.0
    %701 = vmatprep.subr.mxu0 0.0
    %702 = vmatpush1.msra.mxu0 0.0
    %703 = vmatprep.subr.mxu0 0.0
    %704 = vmatpush1.msra.mxu0 0.0
    %705 = vmatprep.subr.mxu0 0.0
    %706 = vmatpush1.msra.mxu0 0.0
    %707 = vmatprep.subr.mxu0 0.0
    %708 = vmatpush1.msra.mxu0 0.0
    %709 = vmatprep.subr.mxu0 0.0
    %710 = vmatpush1.msra.mxu0 0.0
    %711 = vmatprep.subr.mxu0 0.0
    %712 = vmatpush1.msra.mxu0 0.0
    %713 = vmatprep.subr.mxu0 %v683
    %714 = vmatpush1.msra.mxu0 %v682
    %715 = vmatprep.subr.mxu0 %v680
    %716 = vmatpush1.msra.mxu0 %v679
    %717 = vmatprep.subr.mxu0 %v677
    %718 = vmatpush1.msra.mxu0 %v676
    %719 = vmatprep.subr.mxu0 %v674
    %720 = vmatpush1.msra.mxu0 %v673
    %721 = vmatprep.subr.mxu0 0.0
    %722 = vmatpush2.msra.mxu0 0.0
    %723 = vmatprep.subr.mxu0 0.0
    %724 = vmatpush2.msra.mxu0 0.0
    %725 = vmatprep.subr.mxu0 0.0
    %726 = vmatpush2.msra.mxu0 0.0
    %727 = vmatprep.subr.mxu0 0.0
    %728 = vmatpush2.msra.mxu0 0.0
    %729 = vmatprep.subr.mxu0 0.0
    %730 = vmatpush2.msra.mxu0 0.0
    %731 = vmatprep.subr.mxu0 0.0
    %732 = vmatpush2.msra.mxu0 0.0
    %733 = vmatprep.subr.mxu0 0.0
    %734 = vmatpush2.msra.mxu0 0.0
    %735 = vmatprep.subr.mxu0 0.0
    %736 = vmatpush2.msra.mxu0 0.0
    %737 = vmatprep.subr.mxu0 0.0
    %738 = vmatpush2.msra.mxu0 0.0
    %739 = vmatprep.subr.mxu0 0.0
    %740 = vmatpush2.msra.mxu0 0.0
    %741 = vmatprep.subr.mxu0 0.0
    %742 = vmatpush2.msra.mxu0 0.0
    %743 = vmatprep.subr.mxu0 0.0
    %744 = vmatpush2.msra.mxu0 0.0
    %745 = vmatprep.subr.mxu0 0.0
    %746 = vmatpush2.msra.mxu0 0.0
    %747 = vmatprep.subr.mxu0 0.0
    %748 = vmatpush2.msra.mxu0 0.0
    %749 = vmatprep.subr.mxu0 0.0
    %750 = vmatpush2.msra.mxu0 0.0
    %751 = vmatprep.subr.mxu0 0.0
    %752 = vmatpush2.msra.mxu0 0.0
    %753 = vmatprep.mubr.f32.mxu0 0.0
    %754 = vmatmul.mubr.f32.gmra.mxu0 %v687
    %v755 = vpop.f32.mrf.mxu0
    %v756 = vadd.f32 0.0, %v755
    %v757 = vpop.f32.mrf.mxu0
    %v758 = vadd.f32 0.0, %v757
    %759 = vdwg.mxu0
    %760 = vmatprep.subr.mxu0 0.0
    %761 = vmatpush1.msra.mxu0 0.0
    %762 = vmatprep.subr.mxu0 0.0
    %763 = vmatpush1.msra.mxu0 0.0
    %764 = vmatprep.subr.mxu0 0.0
    %765 = vmatpush1.msra.mxu0 0.0
    %766 = vmatprep.subr.mxu0 0.0
    %767 = vmatpush1.msra.mxu0 0.0
    %768 = vmatprep.subr.mxu0 0.0
    %769 = vmatpush1.msra.mxu0 0.0
    %770 = vmatprep.subr.mxu0 0.0
    %771 = vmatpush1.msra.mxu0 0.0
    %772 = vmatprep.subr.mxu0 0.0
    %773 = vmatpush1.msra.mxu0 0.0
    %774 = vmatprep.subr.mxu0 0.0
    %775 = vmatpush1.msra.mxu0 0.0
    %776 = vmatprep.subr.mxu0 0.0
    %777 = vmatpush1.msra.mxu0 0.0
    %778 = vmatprep.subr.mxu0 0.0
    %779 = vmatpush1.msra.mxu0 0.0
    %780 = vmatprep.subr.mxu0 0.0
    %781 = vmatpush1.msra.mxu0 0.0
    %782 = vmatprep.subr.mxu0 0.0
    %783 = vmatpush1.msra.mxu0 0.0
    %784 = vmatprep.subr.mxu0 0.0
    %785 = vmatpush1.msra.mxu0 %v684
    %786 = vmatprep.subr.mxu0 0.0
    %787 = vmatpush1.msra.mxu0 %v681
    %788 = vmatprep.subr.mxu0 0.0
    %789 = vmatpush1.msra.mxu0 %v678
    %790 = vmatprep.subr.mxu0 0.0
    %791 = vmatpush1.msra.mxu0 %v675
    %792 = vmatprep.subr.mxu0 0.0
    %793 = vmatpush2.msra.mxu0 0.0
    %794 = vmatprep.subr.mxu0 0.0
    %795 = vmatpush2.msra.mxu0 0.0
    %796 = vmatprep.subr.mxu0 0.0
    %797 = vmatpush2.msra.mxu0 0.0
    %798 = vmatprep.subr.mxu0 0.0
    %799 = vmatpush2.msra.mxu0 0.0
    %800 = vmatprep.subr.mxu0 0.0
    %801 = vmatpush2.msra.mxu0 0.0
    %802 = vmatprep.subr.mxu0 0.0
    %803 = vmatpush2.msra.mxu0 0.0
    %804 = vmatprep.subr.mxu0 0.0
    %805 = vmatpush2.msra.mxu0 0.0
    %806 = vmatprep.subr.mxu0 0.0
    %807 = vmatpush2.msra.mxu0 0.0
    %808 = vmatprep.subr.mxu0 0.0
    %809 = vmatpush2.msra.mxu0 0.0
    %810 = vmatprep.subr.mxu0 0.0
    %811 = vmatpush2.msra.mxu0 0.0
    %812 = vmatprep.subr.mxu0 0.0
    %813 = vmatpush2.msra.mxu0 0.0
    %814 = vmatprep.subr.mxu0 0.0
    %815 = vmatpush2.msra.mxu0 0.0
    %816 = vmatprep.subr.mxu0 0.0
    %817 = vmatpush2.msra.mxu0 0.0
    %818 = vmatprep.subr.mxu0 0.0
    %819 = vmatpush2.msra.mxu0 0.0
    %820 = vmatprep.subr.mxu0 0.0
    %821 = vmatpush2.msra.mxu0 0.0
    %822 = vmatprep.subr.mxu0 0.0
    %823 = vmatpush2.msra.mxu0 0.0
    %824 = vmatprep.mubr.f32.mxu0 0.0
    %825 = vmatmul.mubr.f32.gmra.mxu0 %v687
    %v826 = vpop.f32.mrf.mxu0
    %v827 = vadd.f32 0.0, %v826
    %v828 = vpop.f32.mrf.mxu0
    %829 = vdwg.mxu0
    %v831 = vsel %vm685, %v651, 0
    %833 = vmatprep.subr.mxu0 0.0
    %834 = vmatpush1.msra.mxu0 0.0
    %835 = vmatprep.subr.mxu0 0.0
    %836 = vmatpush1.msra.mxu0 0.0
    %837 = vmatprep.subr.mxu0 0.0
    %838 = vmatpush1.msra.mxu0 0.0
    %839 = vmatprep.subr.mxu0 0.0
    %840 = vmatpush1.msra.mxu0 0.0
    %841 = vmatprep.subr.mxu0 0.0
    %842 = vmatpush1.msra.mxu0 0.0
    %843 = vmatprep.subr.mxu0 0.0
    %844 = vmatpush1.msra.mxu0 0.0
    %845 = vmatprep.subr.mxu0 0.0
    %846 = vmatpush1.msra.mxu0 0.0
    %847 = vmatprep.subr.mxu0 0.0
    %848 = vmatpush1.msra.mxu0 0.0
    %849 = vmatprep.subr.mxu0 0.0
    %850 = vmatpush1.msra.mxu0 0.0
    %851 = vmatprep.subr.mxu0 0.0
    %852 = vmatpush1.msra.mxu0 0.0
    %853 = vmatprep.subr.mxu0 0.0
    %854 = vmatpush1.msra.mxu0 0.0
    %855 = vmatprep.subr.mxu0 0.0
    %856 = vmatpush1.msra.mxu0 0.0
    %857 = vmatprep.subr.mxu0 %v662
    %858 = vmatpush1.msra.mxu0 %v661
    %859 = vmatprep.subr.mxu0 %v659
    %860 = vmatpush1.msra.mxu0 %v658
    %861 = vmatprep.subr.mxu0 %v656
    %862 = vmatpush1.msra.mxu0 %v655
    %863 = vmatprep.subr.mxu0 %v653
    %864 = vmatpush1.msra.mxu0 %v652
    %865 = vmatprep.subr.mxu0 0.0
    %866 = vmatpush2.msra.mxu0 0.0
    %867 = vmatprep.subr.mxu0 0.0
    %868 = vmatpush2.msra.mxu0 0.0
    %869 = vmatprep.subr.mxu0 0.0
    %870 = vmatpush2.msra.mxu0 0.0
    %871 = vmatprep.subr.mxu0 0.0
    %872 = vmatpush2.msra.mxu0 0.0
    %873 = vmatprep.subr.mxu0 0.0
    %874 = vmatpush2.msra.mxu0 0.0
    %875 = vmatprep.subr.mxu0 0.0
    %876 = vmatpush2.msra.mxu0 0.0
    %877 = vmatprep.subr.mxu0 0.0
    %878 = vmatpush2.msra.mxu0 0.0
    %879 = vmatprep.subr.mxu0 0.0
    %880 = vmatpush2.msra.mxu0 0.0
    %881 = vmatprep.subr.mxu0 0.0
    %882 = vmatpush2.msra.mxu0 0.0
    %883 = vmatprep.subr.mxu0 0.0
    %884 = vmatpush2.msra.mxu0 0.0
    %885 = vmatprep.subr.mxu0 0.0
    %886 = vmatpush2.msra.mxu0 0.0
    %887 = vmatprep.subr.mxu0 0.0
    %888 = vmatpush2.msra.mxu0 0.0
    %889 = vmatprep.subr.mxu0 0.0
    %890 = vmatpush2.msra.mxu0 0.0
    %891 = vmatprep.subr.mxu0 0.0
    %892 = vmatpush2.msra.mxu0 0.0
    %893 = vmatprep.subr.mxu0 0.0
    %894 = vmatpush2.msra.mxu0 0.0
    %895 = vmatprep.subr.mxu0 0.0
    %896 = vmatpush2.msra.mxu0 0.0
    %897 = vmatprep.mubr.f32.mxu0 0.0
    %898 = vmatmul.mubr.f32.gmra.mxu0 %v831
    %v899 = vpop.f32.mrf.mxu0
    %v900 = vadd.f32 %v756, %v899
    %v901 = vpop.f32.mrf.mxu0
    %v902 = vadd.f32 %v758, %v901
    %903 = vdwg.mxu0
    %904 = vmatprep.subr.mxu0 0.0
    %905 = vmatpush1.msra.mxu0 0.0
    %906 = vmatprep.subr.mxu0 0.0
    %907 = vmatpush1.msra.mxu0 0.0
    %908 = vmatprep.subr.mxu0 0.0
    %909 = vmatpush1.msra.mxu0 0.0
    %910 = vmatprep.subr.mxu0 0.0
    %911 = vmatpush1.msra.mxu0 0.0
    %912 = vmatprep.subr.mxu0 0.0
    %913 = vmatpush1.msra.mxu0 0.0
    %914 = vmatprep.subr.mxu0 0.0
    %915 = vmatpush1.msra.mxu0 0.0
    %916 = vmatprep.subr.mxu0 0.0
    %917 = vmatpush1.msra.mxu0 0.0
    %918 = vmatprep.subr.mxu0 0.0
    %919 = vmatpush1.msra.mxu0 0.0
    %920 = vmatprep.subr.mxu0 0.0
    %921 = vmatpush1.msra.mxu0 0.0
    %922 = vmatprep.subr.mxu0 0.0
    %923 = vmatpush1.msra.mxu0 0.0
    %924 = vmatprep.subr.mxu0 0.0
    %925 = vmatpush1.msra.mxu0 0.0
    %926 = vmatprep.subr.mxu0 0.0
    %927 = vmatpush1.msra.mxu0 0.0
    %928 = vmatprep.subr.mxu0 0.0
    %929 = vmatpush1.msra.mxu0 %v663
    %930 = vmatprep.subr.mxu0 0.0
    %931 = vmatpush1.msra.mxu0 %v660
    %932 = vmatprep.subr.mxu0 0.0
    %933 = vmatpush1.msra.mxu0 %v657
    %934 = vmatprep.subr.mxu0 0.0
    %935 = vmatpush1.msra.mxu0 %v654
    %936 = vmatprep.subr.mxu0 0.0
    %937 = vmatpush2.msra.mxu0 0.0
    %938 = vmatprep.subr.mxu0 0.0
    %939 = vmatpush2.msra.mxu0 0.0
    %940 = vmatprep.subr.mxu0 0.0
    %941 = vmatpush2.msra.mxu0 0.0
    %942 = vmatprep.subr.mxu0 0.0
    %943 = vmatpush2.msra.mxu0 0.0
    %944 = vmatprep.subr.mxu0 0.0
    %945 = vmatpush2.msra.mxu0 0.0
    %946 = vmatprep.subr.mxu0 0.0
    %947 = vmatpush2.msra.mxu0 0.0
    %948 = vmatprep.subr.mxu0 0.0
    %949 = vmatpush2.msra.mxu0 0.0
    %950 = vmatprep.subr.mxu0 0.0
    %951 = vmatpush2.msra.mxu0 0.0
    %952 = vmatprep.subr.mxu0 0.0
    %953 = vmatpush2.msra.mxu0 0.0
    %954 = vmatprep.subr.mxu0 0.0
    %955 = vmatpush2.msra.mxu0 0.0
    %956 = vmatprep.subr.mxu0 0.0
    %957 = vmatpush2.msra.mxu0 0.0
    %958 = vmatprep.subr.mxu0 0.0
    %959 = vmatpush2.msra.mxu0 0.0
    %960 = vmatprep.subr.mxu0 0.0
    %961 = vmatpush2.msra.mxu0 0.0
    %962 = vmatprep.subr.mxu0 0.0
    %963 = vmatpush2.msra.mxu0 0.0
    %964 = vmatprep.subr.mxu0 0.0
    %965 = vmatpush2.msra.mxu0 0.0
    %966 = vmatprep.subr.mxu0 0.0
    %967 = vmatpush2.msra.mxu0 0.0
    %968 = vmatprep.mubr.f32.mxu0 0.0
    %969 = vmatmul.mubr.f32.gmra.mxu0 %v831
    %v970 = vpop.f32.mrf.mxu0
    %v971 = vadd.f32 %v827, %v970
    %v972 = vpop.f32.mrf.mxu0
    %973 = vdwg.mxu0
    %v975 = vrot.slane %v621, 2
    %v977 = vmax.f32 %v621, %v975
    %v979 = vrot.slane %v977, 4
    %v981 = vmax.f32 %v977, %v979
    %s982 = scalar_lea.vmem %s3, 192
    %v983 = vld [vmem:[%s982] sm:$0xff]
    %v984 = vld [vmem:[%s982 + $0x8] sm:$0xff]
    %v985 = vld [vmem:[%s982 + $0x10] sm:$0xff]
    %v986 = vld [vmem:[%s982 + $0x18] sm:$0xff]
    %v987 = vld [vmem:[%s982 + $0x20] sm:$0xff]
    %v988 = vld [vmem:[%s982 + $0x28] sm:$0xff]
    %v989 = vld [vmem:[%s982 + $0x30] sm:$0xff]
    %v990 = vld [vmem:[%s982 + $0x38] sm:$0xff]
    %v991 = vld [vmem:[%s982 + $0x40] sm:$0xff]
    %v992 = vld [vmem:[%s982 + $0x48] sm:$0xff]
    %v993 = vld [vmem:[%s982 + $0x50] sm:$0xff]
    %v994 = vld [vmem:[%s982 + $0x58] sm:$0xff]
    %v996 = vsel %vm685, %v981, 0
    %998 = vmatprep.subr.mxu0 0.0
    %999 = vmatpush1.msra.mxu0 0.0
    %1000 = vmatprep.subr.mxu0 0.0
    %1001 = vmatpush1.msra.mxu0 0.0
    %1002 = vmatprep.subr.mxu0 0.0
    %1003 = vmatpush1.msra.mxu0 0.0
    %1004 = vmatprep.subr.mxu0 0.0
    %1005 = vmatpush1.msra.mxu0 0.0
    %1006 = vmatprep.subr.mxu0 0.0
    %1007 = vmatpush1.msra.mxu0 0.0
    %1008 = vmatprep.subr.mxu0 0.0
    %1009 = vmatpush1.msra.mxu0 0.0
    %1010 = vmatprep.subr.mxu0 0.0
    %1011 = vmatpush1.msra.mxu0 0.0
    %1012 = vmatprep.subr.mxu0 0.0
    %1013 = vmatpush1.msra.mxu0 0.0
    %1014 = vmatprep.subr.mxu0 0.0
    %1015 = vmatpush1.msra.mxu0 0.0
    %1016 = vmatprep.subr.mxu0 0.0
    %1017 = vmatpush1.msra.mxu0 0.0
    %1018 = vmatprep.subr.mxu0 0.0
    %1019 = vmatpush1.msra.mxu0 0.0
    %1020 = vmatprep.subr.mxu0 0.0
    %1021 = vmatpush1.msra.mxu0 0.0
    %1022 = vmatprep.subr.mxu0 %v993
    %1023 = vmatpush1.msra.mxu0 %v992
    %1024 = vmatprep.subr.mxu0 %v990
    %1025 = vmatpush1.msra.mxu0 %v989
    %1026 = vmatprep.subr.mxu0 %v987
    %1027 = vmatpush1.msra.mxu0 %v986
    %1028 = vmatprep.subr.mxu0 %v984
    %1029 = vmatpush1.msra.mxu0 %v983
    %1030 = vmatprep.subr.mxu0 0.0
    %1031 = vmatpush2.msra.mxu0 0.0
    %1032 = vmatprep.subr.mxu0 0.0
    %1033 = vmatpush2.msra.mxu0 0.0
    %1034 = vmatprep.subr.mxu0 0.0
    %1035 = vmatpush2.msra.mxu0 0.0
    %1036 = vmatprep.subr.mxu0 0.0
    %1037 = vmatpush2.msra.mxu0 0.0
    %1038 = vmatprep.subr.mxu0 0.0
    %1039 = vmatpush2.msra.mxu0 0.0
    %1040 = vmatprep.subr.mxu0 0.0
    %1041 = vmatpush2.msra.mxu0 0.0
    %1042 = vmatprep.subr.mxu0 0.0
    %1043 = vmatpush2.msra.mxu0 0.0
    %1044 = vmatprep.subr.mxu0 0.0
    %1045 = vmatpush2.msra.mxu0 0.0
    %1046 = vmatprep.subr.mxu0 0.0
    %1047 = vmatpush2.msra.mxu0 0.0
    %1048 = vmatprep.subr.mxu0 0.0
    %1049 = vmatpush2.msra.mxu0 0.0
    %1050 = vmatprep.subr.mxu0 0.0
    %1051 = vmatpush2.msra.mxu0 0.0
    %1052 = vmatprep.subr.mxu0 0.0
    %1053 = vmatpush2.msra.mxu0 0.0
    %1054 = vmatprep.subr.mxu0 0.0
    %1055 = vmatpush2.msra.mxu0 0.0
    %1056 = vmatprep.subr.mxu0 0.0
    %1057 = vmatpush2.msra.mxu0 0.0
    %1058 = vmatprep.subr.mxu0 0.0
    %1059 = vmatpush2.msra.mxu0 0.0
    %1060 = vmatprep.subr.mxu0 0.0
    %1061 = vmatpush2.msra.mxu0 0.0
    %1062 = vmatprep.mubr.f32.mxu0 0.0
    %1063 = vmatmul.mubr.f32.gmra.mxu0 %v996
    %v1064 = vpop.f32.mrf.mxu0
    %v1065 = vadd.f32 0.0, %v1064
    %v1066 = vpop.f32.mrf.mxu0
    %v1067 = vadd.f32 0.0, %v1066
    %1068 = vdwg.mxu0
    %1069 = vmatprep.subr.mxu0 0.0
    %1070 = vmatpush1.msra.mxu0 0.0
    %1071 = vmatprep.subr.mxu0 0.0
    %1072 = vmatpush1.msra.mxu0 0.0
    %1073 = vmatprep.subr.mxu0 0.0
    %1074 = vmatpush1.msra.mxu0 0.0
    %1075 = vmatprep.subr.mxu0 0.0
    %1076 = vmatpush1.msra.mxu0 0.0
    %1077 = vmatprep.subr.mxu0 0.0
    %1078 = vmatpush1.msra.mxu0 0.0
    %1079 = vmatprep.subr.mxu0 0.0
    %1080 = vmatpush1.msra.mxu0 0.0
    %1081 = vmatprep.subr.mxu0 0.0
    %1082 = vmatpush1.msra.mxu0 0.0
    %1083 = vmatprep.subr.mxu0 0.0
    %1084 = vmatpush1.msra.mxu0 0.0
    %1085 = vmatprep.subr.mxu0 0.0
    %1086 = vmatpush1.msra.mxu0 0.0
    %1087 = vmatprep.subr.mxu0 0.0
    %1088 = vmatpush1.msra.mxu0 0.0
    %1089 = vmatprep.subr.mxu0 0.0
    %1090 = vmatpush1.msra.mxu0 0.0
    %1091 = vmatprep.subr.mxu0 0.0
    %1092 = vmatpush1.msra.mxu0 0.0
    %1093 = vmatprep.subr.mxu0 0.0
    %1094 = vmatpush1.msra.mxu0 %v994
    %1095 = vmatprep.subr.mxu0 0.0
    %1096 = vmatpush1.msra.mxu0 %v991
    %1097 = vmatprep.subr.mxu0 0.0
    %1098 = vmatpush1.msra.mxu0 %v988
    %1099 = vmatprep.subr.mxu0 0.0
    %1100 = vmatpush1.msra.mxu0 %v985
    %1101 = vmatprep.subr.mxu0 0.0
    %1102 = vmatpush2.msra.mxu0 0.0
    %1103 = vmatprep.subr.mxu0 0.0
    %1104 = vmatpush2.msra.mxu0 0.0
    %1105 = vmatprep.subr.mxu0 0.0
    %1106 = vmatpush2.msra.mxu0 0.0
    %1107 = vmatprep.subr.mxu0 0.0
    %1108 = vmatpush2.msra.mxu0 0.0
    %1109 = vmatprep.subr.mxu0 0.0
    %1110 = vmatpush2.msra.mxu0 0.0
    %1111 = vmatprep.subr.mxu0 0.0
    %1112 = vmatpush2.msra.mxu0 0.0
    %1113 = vmatprep.subr.mxu0 0.0
    %1114 = vmatpush2.msra.mxu0 0.0
    %1115 = vmatprep.subr.mxu0 0.0
    %1116 = vmatpush2.msra.mxu0 0.0
    %1117 = vmatprep.subr.mxu0 0.0
    %1118 = vmatpush2.msra.mxu0 0.0
    %1119 = vmatprep.subr.mxu0 0.0
    %1120 = vmatpush2.msra.mxu0 0.0
    %1121 = vmatprep.subr.mxu0 0.0
    %1122 = vmatpush2.msra.mxu0 0.0
    %1123 = vmatprep.subr.mxu0 0.0
    %1124 = vmatpush2.msra.mxu0 0.0
    %1125 = vmatprep.subr.mxu0 0.0
    %1126 = vmatpush2.msra.mxu0 0.0
    %1127 = vmatprep.subr.mxu0 0.0
    %1128 = vmatpush2.msra.mxu0 0.0
    %1129 = vmatprep.subr.mxu0 0.0
    %1130 = vmatpush2.msra.mxu0 0.0
    %1131 = vmatprep.subr.mxu0 0.0
    %1132 = vmatpush2.msra.mxu0 0.0
    %1133 = vmatprep.mubr.f32.mxu0 0.0
    %1134 = vmatmul.mubr.f32.gmra.mxu0 %v996
    %v1135 = vpop.f32.mrf.mxu0
    %v1136 = vadd.f32 0.0, %v1135
    %v1137 = vpop.f32.mrf.mxu0
    %1138 = vdwg.mxu0
    %v1139 = vadd.f32 %v900, %v1065
    %v1140 = vadd.f32 %v902, %v1067
    %v1141 = vadd.f32 %v971, %v1136
    %v1143 = vrot.slane %v622, 2
    %v1145 = vmax.f32 %v622, %v1143
    %v1147 = vrot.slane %v1145, 4
    %v1149 = vmax.f32 %v1145, %v1147
    %s1150 = scalar_lea.vmem %s3, 288
    %v1151 = vld [vmem:[%s1150] sm:$0xff]
    %v1152 = vld [vmem:[%s1150 + $0x8] sm:$0xff]
    %v1153 = vld [vmem:[%s1150 + $0x10] sm:$0xff]
    %v1154 = vld [vmem:[%s1150 + $0x18] sm:$0xff]
    %v1155 = vld [vmem:[%s1150 + $0x20] sm:$0xff]
    %v1156 = vld [vmem:[%s1150 + $0x28] sm:$0xff]
    %v1157 = vld [vmem:[%s1150 + $0x30] sm:$0xff]
    %v1158 = vld [vmem:[%s1150 + $0x38] sm:$0xff]
    %v1159 = vld [vmem:[%s1150 + $0x40] sm:$0xff]
    %v1160 = vld [vmem:[%s1150 + $0x48] sm:$0xff]
    %v1161 = vld [vmem:[%s1150 + $0x50] sm:$0xff]
    %v1162 = vld [vmem:[%s1150 + $0x58] sm:$0xff]
    %v1164 = vsel %vm685, %v1149, 0
    %1166 = vmatprep.subr.mxu0 0.0
    %1167 = vmatpush1.msra.mxu0 0.0
    %1168 = vmatprep.subr.mxu0 0.0
    %1169 = vmatpush1.msra.mxu0 0.0
    %1170 = vmatprep.subr.mxu0 0.0
    %1171 = vmatpush1.msra.mxu0 0.0
    %1172 = vmatprep.subr.mxu0 0.0
    %1173 = vmatpush1.msra.mxu0 0.0
    %1174 = vmatprep.subr.mxu0 0.0
    %1175 = vmatpush1.msra.mxu0 0.0
    %1176 = vmatprep.subr.mxu0 0.0
    %1177 = vmatpush1.msra.mxu0 0.0
    %1178 = vmatprep.subr.mxu0 0.0
    %1179 = vmatpush1.msra.mxu0 0.0
    %1180 = vmatprep.subr.mxu0 0.0
    %1181 = vmatpush1.msra.mxu0 0.0
    %1182 = vmatprep.subr.mxu0 0.0
    %1183 = vmatpush1.msra.mxu0 0.0
    %1184 = vmatprep.subr.mxu0 0.0
    %1185 = vmatpush1.msra.mxu0 0.0
    %1186 = vmatprep.subr.mxu0 0.0
    %1187 = vmatpush1.msra.mxu0 0.0
    %1188 = vmatprep.subr.mxu0 0.0
    %1189 = vmatpush1.msra.mxu0 0.0
    %1190 = vmatprep.subr.mxu0 %v1161
    %1191 = vmatpush1.msra.mxu0 %v1160
    %1192 = vmatprep.subr.mxu0 %v1158
    %1193 = vmatpush1.msra.mxu0 %v1157
    %1194 = vmatprep.subr.mxu0 %v1155
    %1195 = vmatpush1.msra.mxu0 %v1154
    %1196 = vmatprep.subr.mxu0 %v1152
    %1197 = vmatpush1.msra.mxu0 %v1151
    %1198 = vmatprep.subr.mxu0 0.0
    %1199 = vmatpush2.msra.mxu0 0.0
    %1200 = vmatprep.subr.mxu0 0.0
    %1201 = vmatpush2.msra.mxu0 0.0
    %1202 = vmatprep.subr.mxu0 0.0
    %1203 = vmatpush2.msra.mxu0 0.0
    %1204 = vmatprep.subr.mxu0 0.0
    %1205 = vmatpush2.msra.mxu0 0.0
    %1206 = vmatprep.subr.mxu0 0.0
    %1207 = vmatpush2.msra.mxu0 0.0
    %1208 = vmatprep.subr.mxu0 0.0
    %1209 = vmatpush2.msra.mxu0 0.0
    %1210 = vmatprep.subr.mxu0 0.0
    %1211 = vmatpush2.msra.mxu0 0.0
    %1212 = vmatprep.subr.mxu0 0.0
    %1213 = vmatpush2.msra.mxu0 0.0
    %1214 = vmatprep.subr.mxu0 0.0
    %1215 = vmatpush2.msra.mxu0 0.0
    %1216 = vmatprep.subr.mxu0 0.0
    %1217 = vmatpush2.msra.mxu0 0.0
    %1218 = vmatprep.subr.mxu0 0.0
    %1219 = vmatpush2.msra.mxu0 0.0
    %1220 = vmatprep.subr.mxu0 0.0
    %1221 = vmatpush2.msra.mxu0 0.0
    %1222 = vmatprep.subr.mxu0 0.0
    %1223 = vmatpush2.msra.mxu0 0.0
    %1224 = vmatprep.subr.mxu0 0.0
    %1225 = vmatpush2.msra.mxu0 0.0
    %1226 = vmatprep.subr.mxu0 0.0
    %1227 = vmatpush2.msra.mxu0 0.0
    %1228 = vmatprep.subr.mxu0 0.0
    %1229 = vmatpush2.msra.mxu0 0.0
    %1230 = vmatprep.mubr.f32.mxu0 0.0
    %1231 = vmatmul.mubr.f32.gmra.mxu0 %v1164
    %v1232 = vpop.f32.mrf.mxu0
    %v1233 = vadd.f32 0.0, %v1232
    %v1234 = vpop.f32.mrf.mxu0
    %v1235 = vadd.f32 0.0, %v1234
    %1236 = vdwg.mxu0
    %1237 = vmatprep.subr.mxu0 0.0
    %1238 = vmatpush1.msra.mxu0 0.0
    %1239 = vmatprep.subr.mxu0 0.0
    %1240 = vmatpush1.msra.mxu0 0.0
    %1241 = vmatprep.subr.mxu0 0.0
    %1242 = vmatpush1.msra.mxu0 0.0
    %1243 = vmatprep.subr.mxu0 0.0
    %1244 = vmatpush1.msra.mxu0 0.0
    %1245 = vmatprep.subr.mxu0 0.0
    %1246 = vmatpush1.msra.mxu0 0.0
    %1247 = vmatprep.subr.mxu0 0.0
    %1248 = vmatpush1.msra.mxu0 0.0
    %1249 = vmatprep.subr.mxu0 0.0
    %1250 = vmatpush1.msra.mxu0 0.0
    %1251 = vmatprep.subr.mxu0 0.0
    %1252 = vmatpush1.msra.mxu0 0.0
    %1253 = vmatprep.subr.mxu0 0.0
    %1254 = vmatpush1.msra.mxu0 0.0
    %1255 = vmatprep.subr.mxu0 0.0
    %1256 = vmatpush1.msra.mxu0 0.0
    %1257 = vmatprep.subr.mxu0 0.0
    %1258 = vmatpush1.msra.mxu0 0.0
    %1259 = vmatprep.subr.mxu0 0.0
    %1260 = vmatpush1.msra.mxu0 0.0
    %1261 = vmatprep.subr.mxu0 0.0
    %1262 = vmatpush1.msra.mxu0 %v1162
    %1263 = vmatprep.subr.mxu0 0.0
    %1264 = vmatpush1.msra.mxu0 %v1159
    %1265 = vmatprep.subr.mxu0 0.0
    %1266 = vmatpush1.msra.mxu0 %v1156
    %1267 = vmatprep.subr.mxu0 0.0
    %1268 = vmatpush1.msra.mxu0 %v1153
    %1269 = vmatprep.subr.mxu0 0.0
    %1270 = vmatpush2.msra.mxu0 0.0
    %1271 = vmatprep.subr.mxu0 0.0
    %1272 = vmatpush2.msra.mxu0 0.0
    %1273 = vmatprep.subr.mxu0 0.0
    %1274 = vmatpush2.msra.mxu0 0.0
    %1275 = vmatprep.subr.mxu0 0.0
    %1276 = vmatpush2.msra.mxu0 0.0
    %1277 = vmatprep.subr.mxu0 0.0
    %1278 = vmatpush2.msra.mxu0 0.0
    %1279 = vmatprep.subr.mxu0 0.0
    %1280 = vmatpush2.msra.mxu0 0.0
    %1281 = vmatprep.subr.mxu0 0.0
    %1282 = vmatpush2.msra.mxu0 0.0
    %1283 = vmatprep.subr.mxu0 0.0
    %1284 = vmatpush2.msra.mxu0 0.0
    %1285 = vmatprep.subr.mxu0 0.0
    %1286 = vmatpush2.msra.mxu0 0.0
    %1287 = vmatprep.subr.mxu0 0.0
    %1288 = vmatpush2.msra.mxu0 0.0
    %1289 = vmatprep.subr.mxu0 0.0
    %1290 = vmatpush2.msra.mxu0 0.0
    %1291 = vmatprep.subr.mxu0 0.0
    %1292 = vmatpush2.msra.mxu0 0.0
    %1293 = vmatprep.subr.mxu0 0.0
    %1294 = vmatpush2.msra.mxu0 0.0
    %1295 = vmatprep.subr.mxu0 0.0
    %1296 = vmatpush2.msra.mxu0 0.0
    %1297 = vmatprep.subr.mxu0 0.0
    %1298 = vmatpush2.msra.mxu0 0.0
    %1299 = vmatprep.subr.mxu0 0.0
    %1300 = vmatpush2.msra.mxu0 0.0
    %1301 = vmatprep.mubr.f32.mxu0 0.0
    %1302 = vmatmul.mubr.f32.gmra.mxu0 %v1164
    %v1303 = vpop.f32.mrf.mxu0
    %v1304 = vadd.f32 0.0, %v1303
    %v1305 = vpop.f32.mrf.mxu0
    %1306 = vdwg.mxu0
    %v1307 = vadd.f32 %v1139, %v1233
    %v1308 = vadd.f32 %v1140, %v1235
    %v1309 = vadd.f32 %v1141, %v1304
    %v1311 = vrot.slane %v623, 2
    %v1313 = vmax.f32 %v623, %v1311
    %v1315 = vrot.slane %v1313, 4
    %v1317 = vmax.f32 %v1313, %v1315
    %s1318 = scalar_lea.vmem %s3, 384
    %v1319 = vld [vmem:[%s1318] sm:$0xff]
    %v1320 = vld [vmem:[%s1318 + $0x8] sm:$0xff]
    %v1321 = vld [vmem:[%s1318 + $0x10] sm:$0xff]
    %v1322 = vld [vmem:[%s1318 + $0x18] sm:$0xff]
    %v1323 = vld [vmem:[%s1318 + $0x20] sm:$0xff]
    %v1324 = vld [vmem:[%s1318 + $0x28] sm:$0xff]
    %v1325 = vld [vmem:[%s1318 + $0x30] sm:$0xff]
    %v1326 = vld [vmem:[%s1318 + $0x38] sm:$0xff]
    %v1327 = vld [vmem:[%s1318 + $0x40] sm:$0xff]
    %v1328 = vld [vmem:[%s1318 + $0x48] sm:$0xff]
    %v1329 = vld [vmem:[%s1318 + $0x50] sm:$0xff]
    %v1330 = vld [vmem:[%s1318 + $0x58] sm:$0xff]
    %v1332 = vsel %vm685, %v1317, 0
    %1334 = vmatprep.subr.mxu0 0.0
    %1335 = vmatpush1.msra.mxu0 0.0
    %1336 = vmatprep.subr.mxu0 0.0
    %1337 = vmatpush1.msra.mxu0 0.0
    %1338 = vmatprep.subr.mxu0 0.0
    %1339 = vmatpush1.msra.mxu0 0.0
    %1340 = vmatprep.subr.mxu0 0.0
    %1341 = vmatpush1.msra.mxu0 0.0
    %1342 = vmatprep.subr.mxu0 0.0
    %1343 = vmatpush1.msra.mxu0 0.0
    %1344 = vmatprep.subr.mxu0 0.0
    %1345 = vmatpush1.msra.mxu0 0.0
    %1346 = vmatprep.subr.mxu0 0.0
    %1347 = vmatpush1.msra.mxu0 0.0
    %1348 = vmatprep.subr.mxu0 0.0
    %1349 = vmatpush1.msra.mxu0 0.0
    %1350 = vmatprep.subr.mxu0 0.0
    %1351 = vmatpush1.msra.mxu0 0.0
    %1352 = vmatprep.subr.mxu0 0.0
    %1353 = vmatpush1.msra.mxu0 0.0
    %1354 = vmatprep.subr.mxu0 0.0
    %1355 = vmatpush1.msra.mxu0 0.0
    %1356 = vmatprep.subr.mxu0 0.0
    %1357 = vmatpush1.msra.mxu0 0.0
    %1358 = vmatprep.subr.mxu0 %v1329
    %1359 = vmatpush1.msra.mxu0 %v1328
    %1360 = vmatprep.subr.mxu0 %v1326
    %1361 = vmatpush1.msra.mxu0 %v1325
    %1362 = vmatprep.subr.mxu0 %v1323
    %1363 = vmatpush1.msra.mxu0 %v1322
    %1364 = vmatprep.subr.mxu0 %v1320
    %1365 = vmatpush1.msra.mxu0 %v1319
    %1366 = vmatprep.subr.mxu0 0.0
    %1367 = vmatpush2.msra.mxu0 0.0
    %1368 = vmatprep.subr.mxu0 0.0
    %1369 = vmatpush2.msra.mxu0 0.0
    %1370 = vmatprep.subr.mxu0 0.0
    %1371 = vmatpush2.msra.mxu0 0.0
    %1372 = vmatprep.subr.mxu0 0.0
    %1373 = vmatpush2.msra.mxu0 0.0
    %1374 = vmatprep.subr.mxu0 0.0
    %1375 = vmatpush2.msra.mxu0 0.0
    %1376 = vmatprep.subr.mxu0 0.0
    %1377 = vmatpush2.msra.mxu0 0.0
    %1378 = vmatprep.subr.mxu0 0.0
    %1379 = vmatpush2.msra.mxu0 0.0
    %1380 = vmatprep.subr.mxu0 0.0
    %1381 = vmatpush2.msra.mxu0 0.0
    %1382 = vmatprep.subr.mxu0 0.0
    %1383 = vmatpush2.msra.mxu0 0.0
    %1384 = vmatprep.subr.mxu0 0.0
    %1385 = vmatpush2.msra.mxu0 0.0
    %1386 = vmatprep.subr.mxu0 0.0
    %1387 = vmatpush2.msra.mxu0 0.0
    %1388 = vmatprep.subr.mxu0 0.0
    %1389 = vmatpush2.msra.mxu0 0.0
    %1390 = vmatprep.subr.mxu0 0.0
    %1391 = vmatpush2.msra.mxu0 0.0
    %1392 = vmatprep.subr.mxu0 0.0
    %1393 = vmatpush2.msra.mxu0 0.0
    %1394 = vmatprep.subr.mxu0 0.0
    %1395 = vmatpush2.msra.mxu0 0.0
    %1396 = vmatprep.subr.mxu0 0.0
    %1397 = vmatpush2.msra.mxu0 0.0
    %1398 = vmatprep.mubr.f32.mxu0 0.0
    %1399 = vmatmul.mubr.f32.gmra.mxu0 %v1332
    %v1400 = vpop.f32.mrf.mxu0
    %v1401 = vadd.f32 0.0, %v1400
    %v1402 = vpop.f32.mrf.mxu0
    %v1403 = vadd.f32 0.0, %v1402
    %1404 = vdwg.mxu0
    %1405 = vmatprep.subr.mxu0 0.0
    %1406 = vmatpush1.msra.mxu0 0.0
    %1407 = vmatprep.subr.mxu0 0.0
    %1408 = vmatpush1.msra.mxu0 0.0
    %1409 = vmatprep.subr.mxu0 0.0
    %1410 = vmatpush1.msra.mxu0 0.0
    %1411 = vmatprep.subr.mxu0 0.0
    %1412 = vmatpush1.msra.mxu0 0.0
    %1413 = vmatprep.subr.mxu0 0.0
    %1414 = vmatpush1.msra.mxu0 0.0
    %1415 = vmatprep.subr.mxu0 0.0
    %1416 = vmatpush1.msra.mxu0 0.0
    %1417 = vmatprep.subr.mxu0 0.0
    %1418 = vmatpush1.msra.mxu0 0.0
    %1419 = vmatprep.subr.mxu0 0.0
    %1420 = vmatpush1.msra.mxu0 0.0
    %1421 = vmatprep.subr.mxu0 0.0
    %1422 = vmatpush1.msra.mxu0 0.0
    %1423 = vmatprep.subr.mxu0 0.0
    %1424 = vmatpush1.msra.mxu0 0.0
    %1425 = vmatprep.subr.mxu0 0.0
    %1426 = vmatpush1.msra.mxu0 0.0
    %1427 = vmatprep.subr.mxu0 0.0
    %1428 = vmatpush1.msra.mxu0 0.0
    %1429 = vmatprep.subr.mxu0 0.0
    %1430 = vmatpush1.msra.mxu0 %v1330
    %1431 = vmatprep.subr.mxu0 0.0
    %1432 = vmatpush1.msra.mxu0 %v1327
    %1433 = vmatprep.subr.mxu0 0.0
    %1434 = vmatpush1.msra.mxu0 %v1324
    %1435 = vmatprep.subr.mxu0 0.0
    %1436 = vmatpush1.msra.mxu0 %v1321
    %1437 = vmatprep.subr.mxu0 0.0
    %1438 = vmatpush2.msra.mxu0 0.0
    %1439 = vmatprep.subr.mxu0 0.0
    %1440 = vmatpush2.msra.mxu0 0.0
    %1441 = vmatprep.subr.mxu0 0.0
    %1442 = vmatpush2.msra.mxu0 0.0
    %1443 = vmatprep.subr.mxu0 0.0
    %1444 = vmatpush2.msra.mxu0 0.0
    %1445 = vmatprep.subr.mxu0 0.0
    %1446 = vmatpush2.msra.mxu0 0.0
    %1447 = vmatprep.subr.mxu0 0.0
    %1448 = vmatpush2.msra.mxu0 0.0
    %1449 = vmatprep.subr.mxu0 0.0
    %1450 = vmatpush2.msra.mxu0 0.0
    %1451 = vmatprep.subr.mxu0 0.0
    %1452 = vmatpush2.msra.mxu0 0.0
    %1453 = vmatprep.subr.mxu0 0.0
    %1454 = vmatpush2.msra.mxu0 0.0
    %1455 = vmatprep.subr.mxu0 0.0
    %1456 = vmatpush2.msra.mxu0 0.0
    %1457 = vmatprep.subr.mxu0 0.0
    %1458 = vmatpush2.msra.mxu0 0.0
    %1459 = vmatprep.subr.mxu0 0.0
    %1460 = vmatpush2.msra.mxu0 0.0
    %1461 = vmatprep.subr.mxu0 0.0
    %1462 = vmatpush2.msra.mxu0 0.0
    %1463 = vmatprep.subr.mxu0 0.0
    %1464 = vmatpush2.msra.mxu0 0.0
    %1465 = vmatprep.subr.mxu0 0.0
    %1466 = vmatpush2.msra.mxu0 0.0
    %1467 = vmatprep.subr.mxu0 0.0
    %1468 = vmatpush2.msra.mxu0 0.0
    %1469 = vmatprep.mubr.f32.mxu0 0.0
    %1470 = vmatmul.mubr.f32.gmra.mxu0 %v1332
    %v1471 = vpop.f32.mrf.mxu0
    %v1472 = vadd.f32 0.0, %v1471
    %v1473 = vpop.f32.mrf.mxu0
    %1474 = vdwg.mxu0
    %v1475 = vadd.f32 %v1307, %v1401
    %v1476 = vadd.f32 %v1308, %v1403
    %v1477 = vadd.f32 %v1309, %v1472
    %v1479 = vrot.slane %v624, 2
    %v1481 = vmax.f32 %v624, %v1479
    %v1483 = vrot.slane %v1481, 4
    %v1485 = vmax.f32 %v1481, %v1483
    %s1486 = scalar_lea.vmem %s3, 480
    %v1487 = vld [vmem:[%s1486] sm:$0xff]
    %v1488 = vld [vmem:[%s1486 + $0x8] sm:$0xff]
    %v1489 = vld [vmem:[%s1486 + $0x10] sm:$0xff]
    %v1490 = vld [vmem:[%s1486 + $0x18] sm:$0xff]
    %v1491 = vld [vmem:[%s1486 + $0x20] sm:$0xff]
    %v1492 = vld [vmem:[%s1486 + $0x28] sm:$0xff]
    %v1493 = vld [vmem:[%s1486 + $0x30] sm:$0xff]
    %v1494 = vld [vmem:[%s1486 + $0x38] sm:$0xff]
    %v1495 = vld [vmem:[%s1486 + $0x40] sm:$0xff]
    %v1496 = vld [vmem:[%s1486 + $0x48] sm:$0xff]
    %v1497 = vld [vmem:[%s1486 + $0x50] sm:$0xff]
    %v1498 = vld [vmem:[%s1486 + $0x58] sm:$0xff]
    %v1500 = vsel %vm685, %v1485, 0
    %1502 = vmatprep.subr.mxu0 0.0
    %1503 = vmatpush1.msra.mxu0 0.0
    %1504 = vmatprep.subr.mxu0 0.0
    %1505 = vmatpush1.msra.mxu0 0.0
    %1506 = vmatprep.subr.mxu0 0.0
    %1507 = vmatpush1.msra.mxu0 0.0
    %1508 = vmatprep.subr.mxu0 0.0
    %1509 = vmatpush1.msra.mxu0 0.0
    %1510 = vmatprep.subr.mxu0 0.0
    %1511 = vmatpush1.msra.mxu0 0.0
    %1512 = vmatprep.subr.mxu0 0.0
    %1513 = vmatpush1.msra.mxu0 0.0
    %1514 = vmatprep.subr.mxu0 0.0
    %1515 = vmatpush1.msra.mxu0 0.0
    %1516 = vmatprep.subr.mxu0 0.0
    %1517 = vmatpush1.msra.mxu0 0.0
    %1518 = vmatprep.subr.mxu0 0.0
    %1519 = vmatpush1.msra.mxu0 0.0
    %1520 = vmatprep.subr.mxu0 0.0
    %1521 = vmatpush1.msra.mxu0 0.0
    %1522 = vmatprep.subr.mxu0 0.0
    %1523 = vmatpush1.msra.mxu0 0.0
    %1524 = vmatprep.subr.mxu0 0.0
    %1525 = vmatpush1.msra.mxu0 0.0
    %1526 = vmatprep.subr.mxu0 %v1497
    %1527 = vmatpush1.msra.mxu0 %v1496
    %1528 = vmatprep.subr.mxu0 %v1494
    %1529 = vmatpush1.msra.mxu0 %v1493
    %1530 = vmatprep.subr.mxu0 %v1491
    %1531 = vmatpush1.msra.mxu0 %v1490
    %1532 = vmatprep.subr.mxu0 %v1488
    %1533 = vmatpush1.msra.mxu0 %v1487
    %1534 = vmatprep.subr.mxu0 0.0
    %1535 = vmatpush2.msra.mxu0 0.0
    %1536 = vmatprep.subr.mxu0 0.0
    %1537 = vmatpush2.msra.mxu0 0.0
    %1538 = vmatprep.subr.mxu0 0.0
    %1539 = vmatpush2.msra.mxu0 0.0
    %1540 = vmatprep.subr.mxu0 0.0
    %1541 = vmatpush2.msra.mxu0 0.0
    %1542 = vmatprep.subr.mxu0 0.0
    %1543 = vmatpush2.msra.mxu0 0.0
    %1544 = vmatprep.subr.mxu0 0.0
    %1545 = vmatpush2.msra.mxu0 0.0
    %1546 = vmatprep.subr.mxu0 0.0
    %1547 = vmatpush2.msra.mxu0 0.0
    %1548 = vmatprep.subr.mxu0 0.0
    %1549 = vmatpush2.msra.mxu0 0.0
    %1550 = vmatprep.subr.mxu0 0.0
    %1551 = vmatpush2.msra.mxu0 0.0
    %1552 = vmatprep.subr.mxu0 0.0
    %1553 = vmatpush2.msra.mxu0 0.0
    %1554 = vmatprep.subr.mxu0 0.0
    %1555 = vmatpush2.msra.mxu0 0.0
    %1556 = vmatprep.subr.mxu0 0.0
    %1557 = vmatpush2.msra.mxu0 0.0
    %1558 = vmatprep.subr.mxu0 0.0
    %1559 = vmatpush2.msra.mxu0 0.0
    %1560 = vmatprep.subr.mxu0 0.0
    %1561 = vmatpush2.msra.mxu0 0.0
    %1562 = vmatprep.subr.mxu0 0.0
    %1563 = vmatpush2.msra.mxu0 0.0
    %1564 = vmatprep.subr.mxu0 0.0
    %1565 = vmatpush2.msra.mxu0 0.0
    %1566 = vmatprep.mubr.f32.mxu0 0.0
    %1567 = vmatmul.mubr.f32.gmra.mxu0 %v1500
    %v1568 = vpop.f32.mrf.mxu0
    %v1569 = vadd.f32 0.0, %v1568
    %v1570 = vpop.f32.mrf.mxu0
    %v1571 = vadd.f32 0.0, %v1570
    %1572 = vdwg.mxu0
    %1573 = vmatprep.subr.mxu0 0.0
    %1574 = vmatpush1.msra.mxu0 0.0
    %1575 = vmatprep.subr.mxu0 0.0
    %1576 = vmatpush1.msra.mxu0 0.0
    %1577 = vmatprep.subr.mxu0 0.0
    %1578 = vmatpush1.msra.mxu0 0.0
    %1579 = vmatprep.subr.mxu0 0.0
    %1580 = vmatpush1.msra.mxu0 0.0
    %1581 = vmatprep.subr.mxu0 0.0
    %1582 = vmatpush1.msra.mxu0 0.0
    %1583 = vmatprep.subr.mxu0 0.0
    %1584 = vmatpush1.msra.mxu0 0.0
    %1585 = vmatprep.subr.mxu0 0.0
    %1586 = vmatpush1.msra.mxu0 0.0
    %1587 = vmatprep.subr.mxu0 0.0
    %1588 = vmatpush1.msra.mxu0 0.0
    %1589 = vmatprep.subr.mxu0 0.0
    %1590 = vmatpush1.msra.mxu0 0.0
    %1591 = vmatprep.subr.mxu0 0.0
    %1592 = vmatpush1.msra.mxu0 0.0
    %1593 = vmatprep.subr.mxu0 0.0
    %1594 = vmatpush1.msra.mxu0 0.0
    %1595 = vmatprep.subr.mxu0 0.0
    %1596 = vmatpush1.msra.mxu0 0.0
    %1597 = vmatprep.subr.mxu0 0.0
    %1598 = vmatpush1.msra.mxu0 %v1498
    %1599 = vmatprep.subr.mxu0 0.0
    %1600 = vmatpush1.msra.mxu0 %v1495
    %1601 = vmatprep.subr.mxu0 0.0
    %1602 = vmatpush1.msra.mxu0 %v1492
    %1603 = vmatprep.subr.mxu0 0.0
    %1604 = vmatpush1.msra.mxu0 %v1489
    %1605 = vmatprep.subr.mxu0 0.0
    %1606 = vmatpush2.msra.mxu0 0.0
    %1607 = vmatprep.subr.mxu0 0.0
    %1608 = vmatpush2.msra.mxu0 0.0
    %1609 = vmatprep.subr.mxu0 0.0
    %1610 = vmatpush2.msra.mxu0 0.0
    %1611 = vmatprep.subr.mxu0 0.0
    %1612 = vmatpush2.msra.mxu0 0.0
    %1613 = vmatprep.subr.mxu0 0.0
    %1614 = vmatpush2.msra.mxu0 0.0
    %1615 = vmatprep.subr.mxu0 0.0
    %1616 = vmatpush2.msra.mxu0 0.0
    %1617 = vmatprep.subr.mxu0 0.0
    %1618 = vmatpush2.msra.mxu0 0.0
    %1619 = vmatprep.subr.mxu0 0.0
    %1620 = vmatpush2.msra.mxu0 0.0
    %1621 = vmatprep.subr.mxu0 0.0
    %1622 = vmatpush2.msra.mxu0 0.0
    %1623 = vmatprep.subr.mxu0 0.0
    %1624 = vmatpush2.msra.mxu0 0.0
    %1625 = vmatprep.subr.mxu0 0.0
    %1626 = vmatpush2.msra.mxu0 0.0
    %1627 = vmatprep.subr.mxu0 0.0
    %1628 = vmatpush2.msra.mxu0 0.0
    %1629 = vmatprep.subr.mxu0 0.0
    %1630 = vmatpush2.msra.mxu0 0.0
    %1631 = vmatprep.subr.mxu0 0.0
    %1632 = vmatpush2.msra.mxu0 0.0
    %1633 = vmatprep.subr.mxu0 0.0
    %1634 = vmatpush2.msra.mxu0 0.0
    %1635 = vmatprep.subr.mxu0 0.0
    %1636 = vmatpush2.msra.mxu0 0.0
    %1637 = vmatprep.mubr.f32.mxu0 0.0
    %1638 = vmatmul.mubr.f32.gmra.mxu0 %v1500
    %v1639 = vpop.f32.mrf.mxu0
    %v1640 = vadd.f32 0.0, %v1639
    %v1641 = vpop.f32.mrf.mxu0
    %1642 = vdwg.mxu0
    %v1643 = vadd.f32 %v1475, %v1569
    %v1644 = vadd.f32 %v1476, %v1571
    %v1645 = vadd.f32 %v1477, %v1640
    %v1647 = vrot.slane %v625, 2
    %v1649 = vmax.f32 %v625, %v1647
    %v1651 = vrot.slane %v1649, 4
    %v1653 = vmax.f32 %v1649, %v1651
    %s1654 = scalar_lea.vmem %s3, 576
    %v1655 = vld [vmem:[%s1654] sm:$0xff]
    %v1656 = vld [vmem:[%s1654 + $0x8] sm:$0xff]
    %v1657 = vld [vmem:[%s1654 + $0x10] sm:$0xff]
    %v1658 = vld [vmem:[%s1654 + $0x18] sm:$0xff]
    %v1659 = vld [vmem:[%s1654 + $0x20] sm:$0xff]
    %v1660 = vld [vmem:[%s1654 + $0x28] sm:$0xff]
    %v1661 = vld [vmem:[%s1654 + $0x30] sm:$0xff]
    %v1662 = vld [vmem:[%s1654 + $0x38] sm:$0xff]
    %v1663 = vld [vmem:[%s1654 + $0x40] sm:$0xff]
    %v1664 = vld [vmem:[%s1654 + $0x48] sm:$0xff]
    %v1665 = vld [vmem:[%s1654 + $0x50] sm:$0xff]
    %v1666 = vld [vmem:[%s1654 + $0x58] sm:$0xff]
    %v1668 = vsel %vm685, %v1653, 0
    %1670 = vmatprep.subr.mxu0 0.0
    %1671 = vmatpush1.msra.mxu0 0.0
    %1672 = vmatprep.subr.mxu0 0.0
    %1673 = vmatpush1.msra.mxu0 0.0
    %1674 = vmatprep.subr.mxu0 0.0
    %1675 = vmatpush1.msra.mxu0 0.0
    %1676 = vmatprep.subr.mxu0 0.0
    %1677 = vmatpush1.msra.mxu0 0.0
    %1678 = vmatprep.subr.mxu0 0.0
    %1679 = vmatpush1.msra.mxu0 0.0
    %1680 = vmatprep.subr.mxu0 0.0
    %1681 = vmatpush1.msra.mxu0 0.0
    %1682 = vmatprep.subr.mxu0 0.0
    %1683 = vmatpush1.msra.mxu0 0.0
    %1684 = vmatprep.subr.mxu0 0.0
    %1685 = vmatpush1.msra.mxu0 0.0
    %1686 = vmatprep.subr.mxu0 0.0
    %1687 = vmatpush1.msra.mxu0 0.0
    %1688 = vmatprep.subr.mxu0 0.0
    %1689 = vmatpush1.msra.mxu0 0.0
    %1690 = vmatprep.subr.mxu0 0.0
    %1691 = vmatpush1.msra.mxu0 0.0
    %1692 = vmatprep.subr.mxu0 0.0
    %1693 = vmatpush1.msra.mxu0 0.0
    %1694 = vmatprep.subr.mxu0 %v1665
    %1695 = vmatpush1.msra.mxu0 %v1664
    %1696 = vmatprep.subr.mxu0 %v1662
    %1697 = vmatpush1.msra.mxu0 %v1661
    %1698 = vmatprep.subr.mxu0 %v1659
    %1699 = vmatpush1.msra.mxu0 %v1658
    %1700 = vmatprep.subr.mxu0 %v1656
    %1701 = vmatpush1.msra.mxu0 %v1655
    %1702 = vmatprep.subr.mxu0 0.0
    %1703 = vmatpush2.msra.mxu0 0.0
    %1704 = vmatprep.subr.mxu0 0.0
    %1705 = vmatpush2.msra.mxu0 0.0
    %1706 = vmatprep.subr.mxu0 0.0
    %1707 = vmatpush2.msra.mxu0 0.0
    %1708 = vmatprep.subr.mxu0 0.0
    %1709 = vmatpush2.msra.mxu0 0.0
    %1710 = vmatprep.subr.mxu0 0.0
    %1711 = vmatpush2.msra.mxu0 0.0
    %1712 = vmatprep.subr.mxu0 0.0
    %1713 = vmatpush2.msra.mxu0 0.0
    %1714 = vmatprep.subr.mxu0 0.0
    %1715 = vmatpush2.msra.mxu0 0.0
    %1716 = vmatprep.subr.mxu0 0.0
    %1717 = vmatpush2.msra.mxu0 0.0
    %1718 = vmatprep.subr.mxu0 0.0
    %1719 = vmatpush2.msra.mxu0 0.0
    %1720 = vmatprep.subr.mxu0 0.0
    %1721 = vmatpush2.msra.mxu0 0.0
    %1722 = vmatprep.subr.mxu0 0.0
    %1723 = vmatpush2.msra.mxu0 0.0
    %1724 = vmatprep.subr.mxu0 0.0
    %1725 = vmatpush2.msra.mxu0 0.0
    %1726 = vmatprep.subr.mxu0 0.0
    %1727 = vmatpush2.msra.mxu0 0.0
    %1728 = vmatprep.subr.mxu0 0.0
    %1729 = vmatpush2.msra.mxu0 0.0
    %1730 = vmatprep.subr.mxu0 0.0
    %1731 = vmatpush2.msra.mxu0 0.0
    %1732 = vmatprep.subr.mxu0 0.0
    %1733 = vmatpush2.msra.mxu0 0.0
    %1734 = vmatprep.mubr.f32.mxu0 0.0
    %1735 = vmatmul.mubr.f32.gmra.mxu0 %v1668
    %v1736 = vpop.f32.mrf.mxu0
    %v1737 = vadd.f32 0.0, %v1736
    %v1738 = vpop.f32.mrf.mxu0
    %v1739 = vadd.f32 0.0, %v1738
    %1740 = vdwg.mxu0
    %1741 = vmatprep.subr.mxu0 0.0
    %1742 = vmatpush1.msra.mxu0 0.0
    %1743 = vmatprep.subr.mxu0 0.0
    %1744 = vmatpush1.msra.mxu0 0.0
    %1745 = vmatprep.subr.mxu0 0.0
    %1746 = vmatpush1.msra.mxu0 0.0
    %1747 = vmatprep.subr.mxu0 0.0
    %1748 = vmatpush1.msra.mxu0 0.0
    %1749 = vmatprep.subr.mxu0 0.0
    %1750 = vmatpush1.msra.mxu0 0.0
    %1751 = vmatprep.subr.mxu0 0.0
    %1752 = vmatpush1.msra.mxu0 0.0
    %1753 = vmatprep.subr.mxu0 0.0
    %1754 = vmatpush1.msra.mxu0 0.0
    %1755 = vmatprep.subr.mxu0 0.0
    %1756 = vmatpush1.msra.mxu0 0.0
    %1757 = vmatprep.subr.mxu0 0.0
    %1758 = vmatpush1.msra.mxu0 0.0
    %1759 = vmatprep.subr.mxu0 0.0
    %1760 = vmatpush1.msra.mxu0 0.0
    %1761 = vmatprep.subr.mxu0 0.0
    %1762 = vmatpush1.msra.mxu0 0.0
    %1763 = vmatprep.subr.mxu0 0.0
    %1764 = vmatpush1.msra.mxu0 0.0
    %1765 = vmatprep.subr.mxu0 0.0
    %1766 = vmatpush1.msra.mxu0 %v1666
    %1767 = vmatprep.subr.mxu0 0.0
    %1768 = vmatpush1.msra.mxu0 %v1663
    %1769 = vmatprep.subr.mxu0 0.0
    %1770 = vmatpush1.msra.mxu0 %v1660
    %1771 = vmatprep.subr.mxu0 0.0
    %1772 = vmatpush1.msra.mxu0 %v1657
    %1773 = vmatprep.subr.mxu0 0.0
    %1774 = vmatpush2.msra.mxu0 0.0
    %1775 = vmatprep.subr.mxu0 0.0
    %1776 = vmatpush2.msra.mxu0 0.0
    %1777 = vmatprep.subr.mxu0 0.0
    %1778 = vmatpush2.msra.mxu0 0.0
    %1779 = vmatprep.subr.mxu0 0.0
    %1780 = vmatpush2.msra.mxu0 0.0
    %1781 = vmatprep.subr.mxu0 0.0
    %1782 = vmatpush2.msra.mxu0 0.0
    %1783 = vmatprep.subr.mxu0 0.0
    %1784 = vmatpush2.msra.mxu0 0.0
    %1785 = vmatprep.subr.mxu0 0.0
    %1786 = vmatpush2.msra.mxu0 0.0
    %1787 = vmatprep.subr.mxu0 0.0
    %1788 = vmatpush2.msra.mxu0 0.0
    %1789 = vmatprep.subr.mxu0 0.0
    %1790 = vmatpush2.msra.mxu0 0.0
    %1791 = vmatprep.subr.mxu0 0.0
    %1792 = vmatpush2.msra.mxu0 0.0
    %1793 = vmatprep.subr.mxu0 0.0
    %1794 = vmatpush2.msra.mxu0 0.0
    %1795 = vmatprep.subr.mxu0 0.0
    %1796 = vmatpush2.msra.mxu0 0.0
    %1797 = vmatprep.subr.mxu0 0.0
    %1798 = vmatpush2.msra.mxu0 0.0
    %1799 = vmatprep.subr.mxu0 0.0
    %1800 = vmatpush2.msra.mxu0 0.0
    %1801 = vmatprep.subr.mxu0 0.0
    %1802 = vmatpush2.msra.mxu0 0.0
    %1803 = vmatprep.subr.mxu0 0.0
    %1804 = vmatpush2.msra.mxu0 0.0
    %1805 = vmatprep.mubr.f32.mxu0 0.0
    %1806 = vmatmul.mubr.f32.gmra.mxu0 %v1668
    %v1807 = vpop.f32.mrf.mxu0
    %v1808 = vadd.f32 0.0, %v1807
    %v1809 = vpop.f32.mrf.mxu0
    %1810 = vdwg.mxu0
    %v1811 = vadd.f32 %v1643, %v1737
    %v1812 = vadd.f32 %v1644, %v1739
    %v1813 = vadd.f32 %v1645, %v1808
    %v1815 = vrot.slane %v626, 2
    %v1817 = vmax.f32 %v626, %v1815
    %v1819 = vrot.slane %v1817, 4
    %v1821 = vmax.f32 %v1817, %v1819
    %s1822 = scalar_lea.vmem %s3, 672
    %v1823 = vld [vmem:[%s1822] sm:$0xff]
    %v1824 = vld [vmem:[%s1822 + $0x8] sm:$0xff]
    %v1825 = vld [vmem:[%s1822 + $0x10] sm:$0xff]
    %v1826 = vld [vmem:[%s1822 + $0x18] sm:$0xff]
    %v1827 = vld [vmem:[%s1822 + $0x20] sm:$0xff]
    %v1828 = vld [vmem:[%s1822 + $0x28] sm:$0xff]
    %v1829 = vld [vmem:[%s1822 + $0x30] sm:$0xff]
    %v1830 = vld [vmem:[%s1822 + $0x38] sm:$0xff]
    %v1831 = vld [vmem:[%s1822 + $0x40] sm:$0xff]
    %v1832 = vld [vmem:[%s1822 + $0x48] sm:$0xff]
    %v1833 = vld [vmem:[%s1822 + $0x50] sm:$0xff]
    %v1834 = vld [vmem:[%s1822 + $0x58] sm:$0xff]
    %v1836 = vsel %vm685, %v1821, 0
    %1838 = vmatprep.subr.mxu0 0.0
    %1839 = vmatpush1.msra.mxu0 0.0
    %1840 = vmatprep.subr.mxu0 0.0
    %1841 = vmatpush1.msra.mxu0 0.0
    %1842 = vmatprep.subr.mxu0 0.0
    %1843 = vmatpush1.msra.mxu0 0.0
    %1844 = vmatprep.subr.mxu0 0.0
    %1845 = vmatpush1.msra.mxu0 0.0
    %1846 = vmatprep.subr.mxu0 0.0
    %1847 = vmatpush1.msra.mxu0 0.0
    %1848 = vmatprep.subr.mxu0 0.0
    %1849 = vmatpush1.msra.mxu0 0.0
    %1850 = vmatprep.subr.mxu0 0.0
    %1851 = vmatpush1.msra.mxu0 0.0
    %1852 = vmatprep.subr.mxu0 0.0
    %1853 = vmatpush1.msra.mxu0 0.0
    %1854 = vmatprep.subr.mxu0 0.0
    %1855 = vmatpush1.msra.mxu0 0.0
    %1856 = vmatprep.subr.mxu0 0.0
    %1857 = vmatpush1.msra.mxu0 0.0
    %1858 = vmatprep.subr.mxu0 0.0
    %1859 = vmatpush1.msra.mxu0 0.0
    %1860 = vmatprep.subr.mxu0 0.0
    %1861 = vmatpush1.msra.mxu0 0.0
    %1862 = vmatprep.subr.mxu0 %v1833
    %1863 = vmatpush1.msra.mxu0 %v1832
    %1864 = vmatprep.subr.mxu0 %v1830
    %1865 = vmatpush1.msra.mxu0 %v1829
    %1866 = vmatprep.subr.mxu0 %v1827
    %1867 = vmatpush1.msra.mxu0 %v1826
    %1868 = vmatprep.subr.mxu0 %v1824
    %1869 = vmatpush1.msra.mxu0 %v1823
    %1870 = vmatprep.subr.mxu0 0.0
    %1871 = vmatpush2.msra.mxu0 0.0
    %1872 = vmatprep.subr.mxu0 0.0
    %1873 = vmatpush2.msra.mxu0 0.0
    %1874 = vmatprep.subr.mxu0 0.0
    %1875 = vmatpush2.msra.mxu0 0.0
    %1876 = vmatprep.subr.mxu0 0.0
    %1877 = vmatpush2.msra.mxu0 0.0
    %1878 = vmatprep.subr.mxu0 0.0
    %1879 = vmatpush2.msra.mxu0 0.0
    %1880 = vmatprep.subr.mxu0 0.0
    %1881 = vmatpush2.msra.mxu0 0.0
    %1882 = vmatprep.subr.mxu0 0.0
    %1883 = vmatpush2.msra.mxu0 0.0
    %1884 = vmatprep.subr.mxu0 0.0
    %1885 = vmatpush2.msra.mxu0 0.0
    %1886 = vmatprep.subr.mxu0 0.0
    %1887 = vmatpush2.msra.mxu0 0.0
    %1888 = vmatprep.subr.mxu0 0.0
    %1889 = vmatpush2.msra.mxu0 0.0
    %1890 = vmatprep.subr.mxu0 0.0
    %1891 = vmatpush2.msra.mxu0 0.0
    %1892 = vmatprep.subr.mxu0 0.0
    %1893 = vmatpush2.msra.mxu0 0.0
    %1894 = vmatprep.subr.mxu0 0.0
    %1895 = vmatpush2.msra.mxu0 0.0
    %1896 = vmatprep.subr.mxu0 0.0
    %1897 = vmatpush2.msra.mxu0 0.0
    %1898 = vmatprep.subr.mxu0 0.0
    %1899 = vmatpush2.msra.mxu0 0.0
    %1900 = vmatprep.subr.mxu0 0.0
    %1901 = vmatpush2.msra.mxu0 0.0
    %1902 = vmatprep.mubr.f32.mxu0 0.0
    %1903 = vmatmul.mubr.f32.gmra.mxu0 %v1836
    %v1904 = vpop.f32.mrf.mxu0
    %v1905 = vadd.f32 0.0, %v1904
    %v1906 = vpop.f32.mrf.mxu0
    %v1907 = vadd.f32 0.0, %v1906
    %1908 = vdwg.mxu0
    %1909 = vmatprep.subr.mxu0 0.0
    %1910 = vmatpush1.msra.mxu0 0.0
    %1911 = vmatprep.subr.mxu0 0.0
    %1912 = vmatpush1.msra.mxu0 0.0
    %1913 = vmatprep.subr.mxu0 0.0
    %1914 = vmatpush1.msra.mxu0 0.0
    %1915 = vmatprep.subr.mxu0 0.0
    %1916 = vmatpush1.msra.mxu0 0.0
    %1917 = vmatprep.subr.mxu0 0.0
    %1918 = vmatpush1.msra.mxu0 0.0
    %1919 = vmatprep.subr.mxu0 0.0
    %1920 = vmatpush1.msra.mxu0 0.0
    %1921 = vmatprep.subr.mxu0 0.0
    %1922 = vmatpush1.msra.mxu0 0.0
    %1923 = vmatprep.subr.mxu0 0.0
    %1924 = vmatpush1.msra.mxu0 0.0
    %1925 = vmatprep.subr.mxu0 0.0
    %1926 = vmatpush1.msra.mxu0 0.0
    %1927 = vmatprep.subr.mxu0 0.0
    %1928 = vmatpush1.msra.mxu0 0.0
    %1929 = vmatprep.subr.mxu0 0.0
    %1930 = vmatpush1.msra.mxu0 0.0
    %1931 = vmatprep.subr.mxu0 0.0
    %1932 = vmatpush1.msra.mxu0 0.0
    %1933 = vmatprep.subr.mxu0 0.0
    %1934 = vmatpush1.msra.mxu0 %v1834
    %1935 = vmatprep.subr.mxu0 0.0
    %1936 = vmatpush1.msra.mxu0 %v1831
    %1937 = vmatprep.subr.mxu0 0.0
    %1938 = vmatpush1.msra.mxu0 %v1828
    %1939 = vmatprep.subr.mxu0 0.0
    %1940 = vmatpush1.msra.mxu0 %v1825
    %1941 = vmatprep.subr.mxu0 0.0
    %1942 = vmatpush2.msra.mxu0 0.0
    %1943 = vmatprep.subr.mxu0 0.0
    %1944 = vmatpush2.msra.mxu0 0.0
    %1945 = vmatprep.subr.mxu0 0.0
    %1946 = vmatpush2.msra.mxu0 0.0
    %1947 = vmatprep.subr.mxu0 0.0
    %1948 = vmatpush2.msra.mxu0 0.0
    %1949 = vmatprep.subr.mxu0 0.0
    %1950 = vmatpush2.msra.mxu0 0.0
    %1951 = vmatprep.subr.mxu0 0.0
    %1952 = vmatpush2.msra.mxu0 0.0
    %1953 = vmatprep.subr.mxu0 0.0
    %1954 = vmatpush2.msra.mxu0 0.0
    %1955 = vmatprep.subr.mxu0 0.0
    %1956 = vmatpush2.msra.mxu0 0.0
    %1957 = vmatprep.subr.mxu0 0.0
    %1958 = vmatpush2.msra.mxu0 0.0
    %1959 = vmatprep.subr.mxu0 0.0
    %1960 = vmatpush2.msra.mxu0 0.0
    %1961 = vmatprep.subr.mxu0 0.0
    %1962 = vmatpush2.msra.mxu0 0.0
    %1963 = vmatprep.subr.mxu0 0.0
    %1964 = vmatpush2.msra.mxu0 0.0
    %1965 = vmatprep.subr.mxu0 0.0
    %1966 = vmatpush2.msra.mxu0 0.0
    %1967 = vmatprep.subr.mxu0 0.0
    %1968 = vmatpush2.msra.mxu0 0.0
    %1969 = vmatprep.subr.mxu0 0.0
    %1970 = vmatpush2.msra.mxu0 0.0
    %1971 = vmatprep.subr.mxu0 0.0
    %1972 = vmatpush2.msra.mxu0 0.0
    %1973 = vmatprep.mubr.f32.mxu0 0.0
    %1974 = vmatmul.mubr.f32.gmra.mxu0 %v1836
    %v1975 = vpop.f32.mrf.mxu0
    %v1976 = vadd.f32 0.0, %v1975
    %v1977 = vpop.f32.mrf.mxu0
    %1978 = vdwg.mxu0
    %v1979 = vadd.f32 %v1811, %v1905
    %v1980 = vadd.f32 %v1812, %v1907
    %v1981 = vadd.f32 %v1813, %v1976
    %v1983 = vrot.slane %v627, 2
    %v1985 = vmax.f32 %v627, %v1983
    %v1987 = vrot.slane %v1985, 4
    %v1989 = vmax.f32 %v1985, %v1987
    %s1990 = scalar_lea.vmem %s3, 768
    %v1991 = vld [vmem:[%s1990] sm:$0xff]
    %v1992 = vld [vmem:[%s1990 + $0x8] sm:$0xff]
    %v1993 = vld [vmem:[%s1990 + $0x10] sm:$0xff]
    %v1994 = vld [vmem:[%s1990 + $0x18] sm:$0xff]
    %v1995 = vld [vmem:[%s1990 + $0x20] sm:$0xff]
    %v1996 = vld [vmem:[%s1990 + $0x28] sm:$0xff]
    %v1997 = vld [vmem:[%s1990 + $0x30] sm:$0xff]
    %v1998 = vld [vmem:[%s1990 + $0x38] sm:$0xff]
    %v1999 = vld [vmem:[%s1990 + $0x40] sm:$0xff]
    %v2000 = vld [vmem:[%s1990 + $0x48] sm:$0xff]
    %v2001 = vld [vmem:[%s1990 + $0x50] sm:$0xff]
    %v2002 = vld [vmem:[%s1990 + $0x58] sm:$0xff]
    %v2004 = vsel %vm685, %v1989, 0
    %2006 = vmatprep.subr.mxu0 0.0
    %2007 = vmatpush1.msra.mxu0 0.0
    %2008 = vmatprep.subr.mxu0 0.0
    %2009 = vmatpush1.msra.mxu0 0.0
    %2010 = vmatprep.subr.mxu0 0.0
    %2011 = vmatpush1.msra.mxu0 0.0
    %2012 = vmatprep.subr.mxu0 0.0
    %2013 = vmatpush1.msra.mxu0 0.0
    %2014 = vmatprep.subr.mxu0 0.0
    %2015 = vmatpush1.msra.mxu0 0.0
    %2016 = vmatprep.subr.mxu0 0.0
    %2017 = vmatpush1.msra.mxu0 0.0
    %2018 = vmatprep.subr.mxu0 0.0
    %2019 = vmatpush1.msra.mxu0 0.0
    %2020 = vmatprep.subr.mxu0 0.0
    %2021 = vmatpush1.msra.mxu0 0.0
    %2022 = vmatprep.subr.mxu0 0.0
    %2023 = vmatpush1.msra.mxu0 0.0
    %2024 = vmatprep.subr.mxu0 0.0
    %2025 = vmatpush1.msra.mxu0 0.0
    %2026 = vmatprep.subr.mxu0 0.0
    %2027 = vmatpush1.msra.mxu0 0.0
    %2028 = vmatprep.subr.mxu0 0.0
    %2029 = vmatpush1.msra.mxu0 0.0
    %2030 = vmatprep.subr.mxu0 %v2001
    %2031 = vmatpush1.msra.mxu0 %v2000
    %2032 = vmatprep.subr.mxu0 %v1998
    %2033 = vmatpush1.msra.mxu0 %v1997
    %2034 = vmatprep.subr.mxu0 %v1995
    %2035 = vmatpush1.msra.mxu0 %v1994
    %2036 = vmatprep.subr.mxu0 %v1992
    %2037 = vmatpush1.msra.mxu0 %v1991
    %2038 = vmatprep.subr.mxu0 0.0
    %2039 = vmatpush2.msra.mxu0 0.0
    %2040 = vmatprep.subr.mxu0 0.0
    %2041 = vmatpush2.msra.mxu0 0.0
    %2042 = vmatprep.subr.mxu0 0.0
    %2043 = vmatpush2.msra.mxu0 0.0
    %2044 = vmatprep.subr.mxu0 0.0
    %2045 = vmatpush2.msra.mxu0 0.0
    %2046 = vmatprep.subr.mxu0 0.0
    %2047 = vmatpush2.msra.mxu0 0.0
    %2048 = vmatprep.subr.mxu0 0.0
    %2049 = vmatpush2.msra.mxu0 0.0
    %2050 = vmatprep.subr.mxu0 0.0
    %2051 = vmatpush2.msra.mxu0 0.0
    %2052 = vmatprep.subr.mxu0 0.0
    %2053 = vmatpush2.msra.mxu0 0.0
    %2054 = vmatprep.subr.mxu0 0.0
    %2055 = vmatpush2.msra.mxu0 0.0
    %2056 = vmatprep.subr.mxu0 0.0
    %2057 = vmatpush2.msra.mxu0 0.0
    %2058 = vmatprep.subr.mxu0 0.0
    %2059 = vmatpush2.msra.mxu0 0.0
    %2060 = vmatprep.subr.mxu0 0.0
    %2061 = vmatpush2.msra.mxu0 0.0
    %2062 = vmatprep.subr.mxu0 0.0
    %2063 = vmatpush2.msra.mxu0 0.0
    %2064 = vmatprep.subr.mxu0 0.0
    %2065 = vmatpush2.msra.mxu0 0.0
    %2066 = vmatprep.subr.mxu0 0.0
    %2067 = vmatpush2.msra.mxu0 0.0
    %2068 = vmatprep.subr.mxu0 0.0
    %2069 = vmatpush2.msra.mxu0 0.0
    %2070 = vmatprep.mubr.f32.mxu0 0.0
    %2071 = vmatmul.mubr.f32.gmra.mxu0 %v2004
    %v2072 = vpop.f32.mrf.mxu0
    %v2073 = vadd.f32 0.0, %v2072
    %v2074 = vpop.f32.mrf.mxu0
    %v2075 = vadd.f32 0.0, %v2074
    %2076 = vdwg.mxu0
    %2077 = vmatprep.subr.mxu0 0.0
    %2078 = vmatpush1.msra.mxu0 0.0
    %2079 = vmatprep.subr.mxu0 0.0
    %2080 = vmatpush1.msra.mxu0 0.0
    %2081 = vmatprep.subr.mxu0 0.0
    %2082 = vmatpush1.msra.mxu0 0.0
    %2083 = vmatprep.subr.mxu0 0.0
    %2084 = vmatpush1.msra.mxu0 0.0
    %2085 = vmatprep.subr.mxu0 0.0
    %2086 = vmatpush1.msra.mxu0 0.0
    %2087 = vmatprep.subr.mxu0 0.0
    %2088 = vmatpush1.msra.mxu0 0.0
    %2089 = vmatprep.subr.mxu0 0.0
    %2090 = vmatpush1.msra.mxu0 0.0
    %2091 = vmatprep.subr.mxu0 0.0
    %2092 = vmatpush1.msra.mxu0 0.0
    %2093 = vmatprep.subr.mxu0 0.0
    %2094 = vmatpush1.msra.mxu0 0.0
    %2095 = vmatprep.subr.mxu0 0.0
    %2096 = vmatpush1.msra.mxu0 0.0
    %2097 = vmatprep.subr.mxu0 0.0
    %2098 = vmatpush1.msra.mxu0 0.0
    %2099 = vmatprep.subr.mxu0 0.0
    %2100 = vmatpush1.msra.mxu0 0.0
    %2101 = vmatprep.subr.mxu0 0.0
    %2102 = vmatpush1.msra.mxu0 %v2002
    %2103 = vmatprep.subr.mxu0 0.0
    %2104 = vmatpush1.msra.mxu0 %v1999
    %2105 = vmatprep.subr.mxu0 0.0
    %2106 = vmatpush1.msra.mxu0 %v1996
    %2107 = vmatprep.subr.mxu0 0.0
    %2108 = vmatpush1.msra.mxu0 %v1993
    %2109 = vmatprep.subr.mxu0 0.0
    %2110 = vmatpush2.msra.mxu0 0.0
    %2111 = vmatprep.subr.mxu0 0.0
    %2112 = vmatpush2.msra.mxu0 0.0
    %2113 = vmatprep.subr.mxu0 0.0
    %2114 = vmatpush2.msra.mxu0 0.0
    %2115 = vmatprep.subr.mxu0 0.0
    %2116 = vmatpush2.msra.mxu0 0.0
    %2117 = vmatprep.subr.mxu0 0.0
    %2118 = vmatpush2.msra.mxu0 0.0
    %2119 = vmatprep.subr.mxu0 0.0
    %2120 = vmatpush2.msra.mxu0 0.0
    %2121 = vmatprep.subr.mxu0 0.0
    %2122 = vmatpush2.msra.mxu0 0.0
    %2123 = vmatprep.subr.mxu0 0.0
    %2124 = vmatpush2.msra.mxu0 0.0
    %2125 = vmatprep.subr.mxu0 0.0
    %2126 = vmatpush2.msra.mxu0 0.0
    %2127 = vmatprep.subr.mxu0 0.0
    %2128 = vmatpush2.msra.mxu0 0.0
    %2129 = vmatprep.subr.mxu0 0.0
    %2130 = vmatpush2.msra.mxu0 0.0
    %2131 = vmatprep.subr.mxu0 0.0
    %2132 = vmatpush2.msra.mxu0 0.0
    %2133 = vmatprep.subr.mxu0 0.0
    %2134 = vmatpush2.msra.mxu0 0.0
    %2135 = vmatprep.subr.mxu0 0.0
    %2136 = vmatpush2.msra.mxu0 0.0
    %2137 = vmatprep.subr.mxu0 0.0
    %2138 = vmatpush2.msra.mxu0 0.0
    %2139 = vmatprep.subr.mxu0 0.0
    %2140 = vmatpush2.msra.mxu0 0.0
    %2141 = vmatprep.mubr.f32.mxu0 0.0
    %2142 = vmatmul.mubr.f32.gmra.mxu0 %v2004
    %v2143 = vpop.f32.mrf.mxu0
    %v2144 = vadd.f32 0.0, %v2143
    %v2145 = vpop.f32.mrf.mxu0
    %2146 = vdwg.mxu0
    %v2147 = vadd.f32 %v1979, %v2073
    %v2148 = vadd.f32 %v1980, %v2075
    %v2149 = vadd.f32 %v1981, %v2144
    %v2151 = vrot.slane %v628, 2
    %v2153 = vmax.f32 %v628, %v2151
    %v2155 = vrot.slane %v2153, 4
    %v2157 = vmax.f32 %v2153, %v2155
    %s2158 = scalar_lea.vmem %s3, 864
    %v2159 = vld [vmem:[%s2158] sm:$0xff]
    %v2160 = vld [vmem:[%s2158 + $0x8] sm:$0xff]
    %v2161 = vld [vmem:[%s2158 + $0x10] sm:$0xff]
    %v2162 = vld [vmem:[%s2158 + $0x18] sm:$0xff]
    %v2163 = vld [vmem:[%s2158 + $0x20] sm:$0xff]
    %v2164 = vld [vmem:[%s2158 + $0x28] sm:$0xff]
    %v2165 = vld [vmem:[%s2158 + $0x30] sm:$0xff]
    %v2166 = vld [vmem:[%s2158 + $0x38] sm:$0xff]
    %v2167 = vld [vmem:[%s2158 + $0x40] sm:$0xff]
    %v2168 = vld [vmem:[%s2158 + $0x48] sm:$0xff]
    %v2169 = vld [vmem:[%s2158 + $0x50] sm:$0xff]
    %v2170 = vld [vmem:[%s2158 + $0x58] sm:$0xff]
    %v2172 = vsel %vm685, %v2157, 0
    %2174 = vmatprep.subr.mxu0 0.0
    %2175 = vmatpush1.msra.mxu0 0.0
    %2176 = vmatprep.subr.mxu0 0.0
    %2177 = vmatpush1.msra.mxu0 0.0
    %2178 = vmatprep.subr.mxu0 0.0
    %2179 = vmatpush1.msra.mxu0 0.0
    %2180 = vmatprep.subr.mxu0 0.0
    %2181 = vmatpush1.msra.mxu0 0.0
    %2182 = vmatprep.subr.mxu0 0.0
    %2183 = vmatpush1.msra.mxu0 0.0
    %2184 = vmatprep.subr.mxu0 0.0
    %2185 = vmatpush1.msra.mxu0 0.0
    %2186 = vmatprep.subr.mxu0 0.0
    %2187 = vmatpush1.msra.mxu0 0.0
    %2188 = vmatprep.subr.mxu0 0.0
    %2189 = vmatpush1.msra.mxu0 0.0
    %2190 = vmatprep.subr.mxu0 0.0
    %2191 = vmatpush1.msra.mxu0 0.0
    %2192 = vmatprep.subr.mxu0 0.0
    %2193 = vmatpush1.msra.mxu0 0.0
    %2194 = vmatprep.subr.mxu0 0.0
    %2195 = vmatpush1.msra.mxu0 0.0
    %2196 = vmatprep.subr.mxu0 0.0
    %2197 = vmatpush1.msra.mxu0 0.0
    %2198 = vmatprep.subr.mxu0 %v2169
    %2199 = vmatpush1.msra.mxu0 %v2168
    %2200 = vmatprep.subr.mxu0 %v2166
    %2201 = vmatpush1.msra.mxu0 %v2165
    %2202 = vmatprep.subr.mxu0 %v2163
    %2203 = vmatpush1.msra.mxu0 %v2162
    %2204 = vmatprep.subr.mxu0 %v2160
    %2205 = vmatpush1.msra.mxu0 %v2159
    %2206 = vmatprep.subr.mxu0 0.0
    %2207 = vmatpush2.msra.mxu0 0.0
    %2208 = vmatprep.subr.mxu0 0.0
    %2209 = vmatpush2.msra.mxu0 0.0
    %2210 = vmatprep.subr.mxu0 0.0
    %2211 = vmatpush2.msra.mxu0 0.0
    %2212 = vmatprep.subr.mxu0 0.0
    %2213 = vmatpush2.msra.mxu0 0.0
    %2214 = vmatprep.subr.mxu0 0.0
    %2215 = vmatpush2.msra.mxu0 0.0
    %2216 = vmatprep.subr.mxu0 0.0
    %2217 = vmatpush2.msra.mxu0 0.0
    %2218 = vmatprep.subr.mxu0 0.0
    %2219 = vmatpush2.msra.mxu0 0.0
    %2220 = vmatprep.subr.mxu0 0.0
    %2221 = vmatpush2.msra.mxu0 0.0
    %2222 = vmatprep.subr.mxu0 0.0
    %2223 = vmatpush2.msra.mxu0 0.0
    %2224 = vmatprep.subr.mxu0 0.0
    %2225 = vmatpush2.msra.mxu0 0.0
    %2226 = vmatprep.subr.mxu0 0.0
    %2227 = vmatpush2.msra.mxu0 0.0
    %2228 = vmatprep.subr.mxu0 0.0
    %2229 = vmatpush2.msra.mxu0 0.0
    %2230 = vmatprep.subr.mxu0 0.0
    %2231 = vmatpush2.msra.mxu0 0.0
    %2232 = vmatprep.subr.mxu0 0.0
    %2233 = vmatpush2.msra.mxu0 0.0
    %2234 = vmatprep.subr.mxu0 0.0
    %2235 = vmatpush2.msra.mxu0 0.0
    %2236 = vmatprep.subr.mxu0 0.0
    %2237 = vmatpush2.msra.mxu0 0.0
    %2238 = vmatprep.mubr.f32.mxu0 0.0
    %2239 = vmatmul.mubr.f32.gmra.mxu0 %v2172
    %v2240 = vpop.f32.mrf.mxu0
    %v2241 = vadd.f32 0.0, %v2240
    %v2242 = vpop.f32.mrf.mxu0
    %v2243 = vadd.f32 0.0, %v2242
    %2244 = vdwg.mxu0
    %2245 = vmatprep.subr.mxu0 0.0
    %2246 = vmatpush1.msra.mxu0 0.0
    %2247 = vmatprep.subr.mxu0 0.0
    %2248 = vmatpush1.msra.mxu0 0.0
    %2249 = vmatprep.subr.mxu0 0.0
    %2250 = vmatpush1.msra.mxu0 0.0
    %2251 = vmatprep.subr.mxu0 0.0
    %2252 = vmatpush1.msra.mxu0 0.0
    %2253 = vmatprep.subr.mxu0 0.0
    %2254 = vmatpush1.msra.mxu0 0.0
    %2255 = vmatprep.subr.mxu0 0.0
    %2256 = vmatpush1.msra.mxu0 0.0
    %2257 = vmatprep.subr.mxu0 0.0
    %2258 = vmatpush1.msra.mxu0 0.0
    %2259 = vmatprep.subr.mxu0 0.0
    %2260 = vmatpush1.msra.mxu0 0.0
    %2261 = vmatprep.subr.mxu0 0.0
    %2262 = vmatpush1.msra.mxu0 0.0
    %2263 = vmatprep.subr.mxu0 0.0
    %2264 = vmatpush1.msra.mxu0 0.0
    %2265 = vmatprep.subr.mxu0 0.0
    %2266 = vmatpush1.msra.mxu0 0.0
    %2267 = vmatprep.subr.mxu0 0.0
    %2268 = vmatpush1.msra.mxu0 0.0
    %2269 = vmatprep.subr.mxu0 0.0
    %2270 = vmatpush1.msra.mxu0 %v2170
    %2271 = vmatprep.subr.mxu0 0.0
    %2272 = vmatpush1.msra.mxu0 %v2167
    %2273 = vmatprep.subr.mxu0 0.0
    %2274 = vmatpush1.msra.mxu0 %v2164
    %2275 = vmatprep.subr.mxu0 0.0
    %2276 = vmatpush1.msra.mxu0 %v2161
    %2277 = vmatprep.subr.mxu0 0.0
    %2278 = vmatpush2.msra.mxu0 0.0
    %2279 = vmatprep.subr.mxu0 0.0
    %2280 = vmatpush2.msra.mxu0 0.0
    %2281 = vmatprep.subr.mxu0 0.0
    %2282 = vmatpush2.msra.mxu0 0.0
    %2283 = vmatprep.subr.mxu0 0.0
    %2284 = vmatpush2.msra.mxu0 0.0
    %2285 = vmatprep.subr.mxu0 0.0
    %2286 = vmatpush2.msra.mxu0 0.0
    %2287 = vmatprep.subr.mxu0 0.0
    %2288 = vmatpush2.msra.mxu0 0.0
    %2289 = vmatprep.subr.mxu0 0.0
    %2290 = vmatpush2.msra.mxu0 0.0
    %2291 = vmatprep.subr.mxu0 0.0
    %2292 = vmatpush2.msra.mxu0 0.0
    %2293 = vmatprep.subr.mxu0 0.0
    %2294 = vmatpush2.msra.mxu0 0.0
    %2295 = vmatprep.subr.mxu0 0.0
    %2296 = vmatpush2.msra.mxu0 0.0
    %2297 = vmatprep.subr.mxu0 0.0
    %2298 = vmatpush2.msra.mxu0 0.0
    %2299 = vmatprep.subr.mxu0 0.0
    %2300 = vmatpush2.msra.mxu0 0.0
    %2301 = vmatprep.subr.mxu0 0.0
    %2302 = vmatpush2.msra.mxu0 0.0
    %2303 = vmatprep.subr.mxu0 0.0
    %2304 = vmatpush2.msra.mxu0 0.0
    %2305 = vmatprep.subr.mxu0 0.0
    %2306 = vmatpush2.msra.mxu0 0.0
    %2307 = vmatprep.subr.mxu0 0.0
    %2308 = vmatpush2.msra.mxu0 0.0
    %2309 = vmatprep.mubr.f32.mxu0 0.0
    %2310 = vmatmul.mubr.f32.gmra.mxu0 %v2172
    %v2311 = vpop.f32.mrf.mxu0
    %v2312 = vadd.f32 0.0, %v2311
    %v2313 = vpop.f32.mrf.mxu0
    %2314 = vdwg.mxu0
    %v2315 = vadd.f32 %v2147, %v2241
    %v2316 = vadd.f32 %v2148, %v2243
    %v2317 = vadd.f32 %v2149, %v2312
    %v2319 = vrot.slane %v629, 2
    %v2321 = vmax.f32 %v629, %v2319
    %v2323 = vrot.slane %v2321, 4
    %v2325 = vmax.f32 %v2321, %v2323
    %s2326 = scalar_lea.vmem %s3, 960
    %v2327 = vld [vmem:[%s2326] sm:$0xff]
    %v2328 = vld [vmem:[%s2326 + $0x8] sm:$0xff]
    %v2329 = vld [vmem:[%s2326 + $0x10] sm:$0xff]
    %v2330 = vld [vmem:[%s2326 + $0x18] sm:$0xff]
    %v2331 = vld [vmem:[%s2326 + $0x20] sm:$0xff]
    %v2332 = vld [vmem:[%s2326 + $0x28] sm:$0xff]
    %v2333 = vld [vmem:[%s2326 + $0x30] sm:$0xff]
    %v2334 = vld [vmem:[%s2326 + $0x38] sm:$0xff]
    %v2335 = vld [vmem:[%s2326 + $0x40] sm:$0xff]
    %v2336 = vld [vmem:[%s2326 + $0x48] sm:$0xff]
    %v2337 = vld [vmem:[%s2326 + $0x50] sm:$0xff]
    %v2338 = vld [vmem:[%s2326 + $0x58] sm:$0xff]
    %v2340 = vsel %vm685, %v2325, 0
    %2342 = vmatprep.subr.mxu0 0.0
    %2343 = vmatpush1.msra.mxu0 0.0
    %2344 = vmatprep.subr.mxu0 0.0
    %2345 = vmatpush1.msra.mxu0 0.0
    %2346 = vmatprep.subr.mxu0 0.0
    %2347 = vmatpush1.msra.mxu0 0.0
    %2348 = vmatprep.subr.mxu0 0.0
    %2349 = vmatpush1.msra.mxu0 0.0
    %2350 = vmatprep.subr.mxu0 0.0
    %2351 = vmatpush1.msra.mxu0 0.0
    %2352 = vmatprep.subr.mxu0 0.0
    %2353 = vmatpush1.msra.mxu0 0.0
    %2354 = vmatprep.subr.mxu0 0.0
    %2355 = vmatpush1.msra.mxu0 0.0
    %2356 = vmatprep.subr.mxu0 0.0
    %2357 = vmatpush1.msra.mxu0 0.0
    %2358 = vmatprep.subr.mxu0 0.0
    %2359 = vmatpush1.msra.mxu0 0.0
    %2360 = vmatprep.subr.mxu0 0.0
    %2361 = vmatpush1.msra.mxu0 0.0
    %2362 = vmatprep.subr.mxu0 0.0
    %2363 = vmatpush1.msra.mxu0 0.0
    %2364 = vmatprep.subr.mxu0 0.0
    %2365 = vmatpush1.msra.mxu0 0.0
    %2366 = vmatprep.subr.mxu0 %v2337
    %2367 = vmatpush1.msra.mxu0 %v2336
    %2368 = vmatprep.subr.mxu0 %v2334
    %2369 = vmatpush1.msra.mxu0 %v2333
    %2370 = vmatprep.subr.mxu0 %v2331
    %2371 = vmatpush1.msra.mxu0 %v2330
    %2372 = vmatprep.subr.mxu0 %v2328
    %2373 = vmatpush1.msra.mxu0 %v2327
    %2374 = vmatprep.subr.mxu0 0.0
    %2375 = vmatpush2.msra.mxu0 0.0
    %2376 = vmatprep.subr.mxu0 0.0
    %2377 = vmatpush2.msra.mxu0 0.0
    %2378 = vmatprep.subr.mxu0 0.0
    %2379 = vmatpush2.msra.mxu0 0.0
    %2380 = vmatprep.subr.mxu0 0.0
    %2381 = vmatpush2.msra.mxu0 0.0
    %2382 = vmatprep.subr.mxu0 0.0
    %2383 = vmatpush2.msra.mxu0 0.0
    %2384 = vmatprep.subr.mxu0 0.0
    %2385 = vmatpush2.msra.mxu0 0.0
    %2386 = vmatprep.subr.mxu0 0.0
    %2387 = vmatpush2.msra.mxu0 0.0
    %2388 = vmatprep.subr.mxu0 0.0
    %2389 = vmatpush2.msra.mxu0 0.0
    %2390 = vmatprep.subr.mxu0 0.0
    %2391 = vmatpush2.msra.mxu0 0.0
    %2392 = vmatprep.subr.mxu0 0.0
    %2393 = vmatpush2.msra.mxu0 0.0
    %2394 = vmatprep.subr.mxu0 0.0
    %2395 = vmatpush2.msra.mxu0 0.0
    %2396 = vmatprep.subr.mxu0 0.0
    %2397 = vmatpush2.msra.mxu0 0.0
    %2398 = vmatprep.subr.mxu0 0.0
    %2399 = vmatpush2.msra.mxu0 0.0
    %2400 = vmatprep.subr.mxu0 0.0
    %2401 = vmatpush2.msra.mxu0 0.0
    %2402 = vmatprep.subr.mxu0 0.0
    %2403 = vmatpush2.msra.mxu0 0.0
    %2404 = vmatprep.subr.mxu0 0.0
    %2405 = vmatpush2.msra.mxu0 0.0
    %2406 = vmatprep.mubr.f32.mxu0 0.0
    %2407 = vmatmul.mubr.f32.gmra.mxu0 %v2340
    %v2408 = vpop.f32.mrf.mxu0
    %v2409 = vadd.f32 0.0, %v2408
    %v2410 = vpop.f32.mrf.mxu0
    %v2411 = vadd.f32 0.0, %v2410
    %2412 = vdwg.mxu0
    %2413 = vmatprep.subr.mxu0 0.0
    %2414 = vmatpush1.msra.mxu0 0.0
    %2415 = vmatprep.subr.mxu0 0.0
    %2416 = vmatpush1.msra.mxu0 0.0
    %2417 = vmatprep.subr.mxu0 0.0
    %2418 = vmatpush1.msra.mxu0 0.0
    %2419 = vmatprep.subr.mxu0 0.0
    %2420 = vmatpush1.msra.mxu0 0.0
    %2421 = vmatprep.subr.mxu0 0.0
    %2422 = vmatpush1.msra.mxu0 0.0
    %2423 = vmatprep.subr.mxu0 0.0
    %2424 = vmatpush1.msra.mxu0 0.0
    %2425 = vmatprep.subr.mxu0 0.0
    %2426 = vmatpush1.msra.mxu0 0.0
    %2427 = vmatprep.subr.mxu0 0.0
    %2428 = vmatpush1.msra.mxu0 0.0
    %2429 = vmatprep.subr.mxu0 0.0
    %2430 = vmatpush1.msra.mxu0 0.0
    %2431 = vmatprep.subr.mxu0 0.0
    %2432 = vmatpush1.msra.mxu0 0.0
    %2433 = vmatprep.subr.mxu0 0.0
    %2434 = vmatpush1.msra.mxu0 0.0
    %2435 = vmatprep.subr.mxu0 0.0
    %2436 = vmatpush1.msra.mxu0 0.0
    %2437 = vmatprep.subr.mxu0 0.0
    %2438 = vmatpush1.msra.mxu0 %v2338
    %2439 = vmatprep.subr.mxu0 0.0
    %2440 = vmatpush1.msra.mxu0 %v2335
    %2441 = vmatprep.subr.mxu0 0.0
    %2442 = vmatpush1.msra.mxu0 %v2332
    %2443 = vmatprep.subr.mxu0 0.0
    %2444 = vmatpush1.msra.mxu0 %v2329
    %2445 = vmatprep.subr.mxu0 0.0
    %2446 = vmatpush2.msra.mxu0 0.0
    %2447 = vmatprep.subr.mxu0 0.0
    %2448 = vmatpush2.msra.mxu0 0.0
    %2449 = vmatprep.subr.mxu0 0.0
    %2450 = vmatpush2.msra.mxu0 0.0
    %2451 = vmatprep.subr.mxu0 0.0
    %2452 = vmatpush2.msra.mxu0 0.0
    %2453 = vmatprep.subr.mxu0 0.0
    %2454 = vmatpush2.msra.mxu0 0.0
    %2455 = vmatprep.subr.mxu0 0.0
    %2456 = vmatpush2.msra.mxu0 0.0
    %2457 = vmatprep.subr.mxu0 0.0
    %2458 = vmatpush2.msra.mxu0 0.0
    %2459 = vmatprep.subr.mxu0 0.0
    %2460 = vmatpush2.msra.mxu0 0.0
    %2461 = vmatprep.subr.mxu0 0.0
    %2462 = vmatpush2.msra.mxu0 0.0
    %2463 = vmatprep.subr.mxu0 0.0
    %2464 = vmatpush2.msra.mxu0 0.0
    %2465 = vmatprep.subr.mxu0 0.0
    %2466 = vmatpush2.msra.mxu0 0.0
    %2467 = vmatprep.subr.mxu0 0.0
    %2468 = vmatpush2.msra.mxu0 0.0
    %2469 = vmatprep.subr.mxu0 0.0
    %2470 = vmatpush2.msra.mxu0 0.0
    %2471 = vmatprep.subr.mxu0 0.0
    %2472 = vmatpush2.msra.mxu0 0.0
    %2473 = vmatprep.subr.mxu0 0.0
    %2474 = vmatpush2.msra.mxu0 0.0
    %2475 = vmatprep.subr.mxu0 0.0
    %2476 = vmatpush2.msra.mxu0 0.0
    %2477 = vmatprep.mubr.f32.mxu0 0.0
    %2478 = vmatmul.mubr.f32.gmra.mxu0 %v2340
    %v2479 = vpop.f32.mrf.mxu0
    %v2480 = vadd.f32 0.0, %v2479
    %v2481 = vpop.f32.mrf.mxu0
    %2482 = vdwg.mxu0
    %v2483 = vadd.f32 %v2315, %v2409
    %v2484 = vadd.f32 %v2316, %v2411
    %v2485 = vadd.f32 %v2317, %v2480
    %v2487 = vrot.slane %v630, 2
    %v2489 = vmax.f32 %v630, %v2487
    %v2491 = vrot.slane %v2489, 4
    %v2493 = vmax.f32 %v2489, %v2491
    %s2494 = scalar_lea.vmem %s3, 1056
    %v2495 = vld [vmem:[%s2494] sm:$0xff]
    %v2496 = vld [vmem:[%s2494 + $0x8] sm:$0xff]
    %v2497 = vld [vmem:[%s2494 + $0x10] sm:$0xff]
    %v2498 = vld [vmem:[%s2494 + $0x18] sm:$0xff]
    %v2499 = vld [vmem:[%s2494 + $0x20] sm:$0xff]
    %v2500 = vld [vmem:[%s2494 + $0x28] sm:$0xff]
    %v2501 = vld [vmem:[%s2494 + $0x30] sm:$0xff]
    %v2502 = vld [vmem:[%s2494 + $0x38] sm:$0xff]
    %v2503 = vld [vmem:[%s2494 + $0x40] sm:$0xff]
    %v2504 = vld [vmem:[%s2494 + $0x48] sm:$0xff]
    %v2505 = vld [vmem:[%s2494 + $0x50] sm:$0xff]
    %v2506 = vld [vmem:[%s2494 + $0x58] sm:$0xff]
    %v2508 = vsel %vm685, %v2493, 0
    %2510 = vmatprep.subr.mxu0 0.0
    %2511 = vmatpush1.msra.mxu0 0.0
    %2512 = vmatprep.subr.mxu0 0.0
    %2513 = vmatpush1.msra.mxu0 0.0
    %2514 = vmatprep.subr.mxu0 0.0
    %2515 = vmatpush1.msra.mxu0 0.0
    %2516 = vmatprep.subr.mxu0 0.0
    %2517 = vmatpush1.msra.mxu0 0.0
    %2518 = vmatprep.subr.mxu0 0.0
    %2519 = vmatpush1.msra.mxu0 0.0
    %2520 = vmatprep.subr.mxu0 0.0
    %2521 = vmatpush1.msra.mxu0 0.0
    %2522 = vmatprep.subr.mxu0 0.0
    %2523 = vmatpush1.msra.mxu0 0.0
    %2524 = vmatprep.subr.mxu0 0.0
    %2525 = vmatpush1.msra.mxu0 0.0
    %2526 = vmatprep.subr.mxu0 0.0
    %2527 = vmatpush1.msra.mxu0 0.0
    %2528 = vmatprep.subr.mxu0 0.0
    %2529 = vmatpush1.msra.mxu0 0.0
    %2530 = vmatprep.subr.mxu0 0.0
    %2531 = vmatpush1.msra.mxu0 0.0
    %2532 = vmatprep.subr.mxu0 0.0
    %2533 = vmatpush1.msra.mxu0 0.0
    %2534 = vmatprep.subr.mxu0 %v2505
    %2535 = vmatpush1.msra.mxu0 %v2504
    %2536 = vmatprep.subr.mxu0 %v2502
    %2537 = vmatpush1.msra.mxu0 %v2501
    %2538 = vmatprep.subr.mxu0 %v2499
    %2539 = vmatpush1.msra.mxu0 %v2498
    %2540 = vmatprep.subr.mxu0 %v2496
    %2541 = vmatpush1.msra.mxu0 %v2495
    %2542 = vmatprep.subr.mxu0 0.0
    %2543 = vmatpush2.msra.mxu0 0.0
    %2544 = vmatprep.subr.mxu0 0.0
    %2545 = vmatpush2.msra.mxu0 0.0
    %2546 = vmatprep.subr.mxu0 0.0
    %2547 = vmatpush2.msra.mxu0 0.0
    %2548 = vmatprep.subr.mxu0 0.0
    %2549 = vmatpush2.msra.mxu0 0.0
    %2550 = vmatprep.subr.mxu0 0.0
    %2551 = vmatpush2.msra.mxu0 0.0
    %2552 = vmatprep.subr.mxu0 0.0
    %2553 = vmatpush2.msra.mxu0 0.0
    %2554 = vmatprep.subr.mxu0 0.0
    %2555 = vmatpush2.msra.mxu0 0.0
    %2556 = vmatprep.subr.mxu0 0.0
    %2557 = vmatpush2.msra.mxu0 0.0
    %2558 = vmatprep.subr.mxu0 0.0
    %2559 = vmatpush2.msra.mxu0 0.0
    %2560 = vmatprep.subr.mxu0 0.0
    %2561 = vmatpush2.msra.mxu0 0.0
    %2562 = vmatprep.subr.mxu0 0.0
    %2563 = vmatpush2.msra.mxu0 0.0
    %2564 = vmatprep.subr.mxu0 0.0
    %2565 = vmatpush2.msra.mxu0 0.0
    %2566 = vmatprep.subr.mxu0 0.0
    %2567 = vmatpush2.msra.mxu0 0.0
    %2568 = vmatprep.subr.mxu0 0.0
    %2569 = vmatpush2.msra.mxu0 0.0
    %2570 = vmatprep.subr.mxu0 0.0
    %2571 = vmatpush2.msra.mxu0 0.0
    %2572 = vmatprep.subr.mxu0 0.0
    %2573 = vmatpush2.msra.mxu0 0.0
    %2574 = vmatprep.mubr.f32.mxu0 0.0
    %2575 = vmatmul.mubr.f32.gmra.mxu0 %v2508
    %v2576 = vpop.f32.mrf.mxu0
    %v2577 = vadd.f32 0.0, %v2576
    %v2578 = vpop.f32.mrf.mxu0
    %v2579 = vadd.f32 0.0, %v2578
    %2580 = vdwg.mxu0
    %2581 = vmatprep.subr.mxu0 0.0
    %2582 = vmatpush1.msra.mxu0 0.0
    %2583 = vmatprep.subr.mxu0 0.0
    %2584 = vmatpush1.msra.mxu0 0.0
    %2585 = vmatprep.subr.mxu0 0.0
    %2586 = vmatpush1.msra.mxu0 0.0
    %2587 = vmatprep.subr.mxu0 0.0
    %2588 = vmatpush1.msra.mxu0 0.0
    %2589 = vmatprep.subr.mxu0 0.0
    %2590 = vmatpush1.msra.mxu0 0.0
    %2591 = vmatprep.subr.mxu0 0.0
    %2592 = vmatpush1.msra.mxu0 0.0
    %2593 = vmatprep.subr.mxu0 0.0
    %2594 = vmatpush1.msra.mxu0 0.0
    %2595 = vmatprep.subr.mxu0 0.0
    %2596 = vmatpush1.msra.mxu0 0.0
    %2597 = vmatprep.subr.mxu0 0.0
    %2598 = vmatpush1.msra.mxu0 0.0
    %2599 = vmatprep.subr.mxu0 0.0
    %2600 = vmatpush1.msra.mxu0 0.0
    %2601 = vmatprep.subr.mxu0 0.0
    %2602 = vmatpush1.msra.mxu0 0.0
    %2603 = vmatprep.subr.mxu0 0.0
    %2604 = vmatpush1.msra.mxu0 0.0
    %2605 = vmatprep.subr.mxu0 0.0
    %2606 = vmatpush1.msra.mxu0 %v2506
    %2607 = vmatprep.subr.mxu0 0.0
    %2608 = vmatpush1.msra.mxu0 %v2503
    %2609 = vmatprep.subr.mxu0 0.0
    %2610 = vmatpush1.msra.mxu0 %v2500
    %2611 = vmatprep.subr.mxu0 0.0
    %2612 = vmatpush1.msra.mxu0 %v2497
    %2613 = vmatprep.subr.mxu0 0.0
    %2614 = vmatpush2.msra.mxu0 0.0
    %2615 = vmatprep.subr.mxu0 0.0
    %2616 = vmatpush2.msra.mxu0 0.0
    %2617 = vmatprep.subr.mxu0 0.0
    %2618 = vmatpush2.msra.mxu0 0.0
    %2619 = vmatprep.subr.mxu0 0.0
    %2620 = vmatpush2.msra.mxu0 0.0
    %2621 = vmatprep.subr.mxu0 0.0
    %2622 = vmatpush2.msra.mxu0 0.0
    %2623 = vmatprep.subr.mxu0 0.0
    %2624 = vmatpush2.msra.mxu0 0.0
    %2625 = vmatprep.subr.mxu0 0.0
    %2626 = vmatpush2.msra.mxu0 0.0
    %2627 = vmatprep.subr.mxu0 0.0
    %2628 = vmatpush2.msra.mxu0 0.0
    %2629 = vmatprep.subr.mxu0 0.0
    %2630 = vmatpush2.msra.mxu0 0.0
    %2631 = vmatprep.subr.mxu0 0.0
    %2632 = vmatpush2.msra.mxu0 0.0
    %2633 = vmatprep.subr.mxu0 0.0
    %2634 = vmatpush2.msra.mxu0 0.0
    %2635 = vmatprep.subr.mxu0 0.0
    %2636 = vmatpush2.msra.mxu0 0.0
    %2637 = vmatprep.subr.mxu0 0.0
    %2638 = vmatpush2.msra.mxu0 0.0
    %2639 = vmatprep.subr.mxu0 0.0
    %2640 = vmatpush2.msra.mxu0 0.0
    %2641 = vmatprep.subr.mxu0 0.0
    %2642 = vmatpush2.msra.mxu0 0.0
    %2643 = vmatprep.subr.mxu0 0.0
    %2644 = vmatpush2.msra.mxu0 0.0
    %2645 = vmatprep.mubr.f32.mxu0 0.0
    %2646 = vmatmul.mubr.f32.gmra.mxu0 %v2508
    %v2647 = vpop.f32.mrf.mxu0
    %v2648 = vadd.f32 0.0, %v2647
    %v2649 = vpop.f32.mrf.mxu0
    %2650 = vdwg.mxu0
    %v2651 = vadd.f32 %v2483, %v2577
    %v2652 = vadd.f32 %v2484, %v2579
    %v2653 = vadd.f32 %v2485, %v2648
    %v2655 = vrot.slane %v631, 2
    %v2657 = vmax.f32 %v631, %v2655
    %v2659 = vrot.slane %v2657, 4
    %v2661 = vmax.f32 %v2657, %v2659
    %s2662 = scalar_lea.vmem %s3, 1152
    %v2663 = vld [vmem:[%s2662] sm:$0xff]
    %v2664 = vld [vmem:[%s2662 + $0x8] sm:$0xff]
    %v2665 = vld [vmem:[%s2662 + $0x10] sm:$0xff]
    %v2666 = vld [vmem:[%s2662 + $0x18] sm:$0xff]
    %v2667 = vld [vmem:[%s2662 + $0x20] sm:$0xff]
    %v2668 = vld [vmem:[%s2662 + $0x28] sm:$0xff]
    %v2669 = vld [vmem:[%s2662 + $0x30] sm:$0xff]
    %v2670 = vld [vmem:[%s2662 + $0x38] sm:$0xff]
    %v2671 = vld [vmem:[%s2662 + $0x40] sm:$0xff]
    %v2672 = vld [vmem:[%s2662 + $0x48] sm:$0xff]
    %v2673 = vld [vmem:[%s2662 + $0x50] sm:$0xff]
    %v2674 = vld [vmem:[%s2662 + $0x58] sm:$0xff]
    %v2676 = vsel %vm685, %v2661, 0
    %2678 = vmatprep.subr.mxu0 0.0
    %2679 = vmatpush1.msra.mxu0 0.0
    %2680 = vmatprep.subr.mxu0 0.0
    %2681 = vmatpush1.msra.mxu0 0.0
    %2682 = vmatprep.subr.mxu0 0.0
    %2683 = vmatpush1.msra.mxu0 0.0
    %2684 = vmatprep.subr.mxu0 0.0
    %2685 = vmatpush1.msra.mxu0 0.0
    %2686 = vmatprep.subr.mxu0 0.0
    %2687 = vmatpush1.msra.mxu0 0.0
    %2688 = vmatprep.subr.mxu0 0.0
    %2689 = vmatpush1.msra.mxu0 0.0
    %2690 = vmatprep.subr.mxu0 0.0
    %2691 = vmatpush1.msra.mxu0 0.0
    %2692 = vmatprep.subr.mxu0 0.0
    %2693 = vmatpush1.msra.mxu0 0.0
    %2694 = vmatprep.subr.mxu0 0.0
    %2695 = vmatpush1.msra.mxu0 0.0
    %2696 = vmatprep.subr.mxu0 0.0
    %2697 = vmatpush1.msra.mxu0 0.0
    %2698 = vmatprep.subr.mxu0 0.0
    %2699 = vmatpush1.msra.mxu0 0.0
    %2700 = vmatprep.subr.mxu0 0.0
    %2701 = vmatpush1.msra.mxu0 0.0
    %2702 = vmatprep.subr.mxu0 %v2673
    %2703 = vmatpush1.msra.mxu0 %v2672
    %2704 = vmatprep.subr.mxu0 %v2670
    %2705 = vmatpush1.msra.mxu0 %v2669
    %2706 = vmatprep.subr.mxu0 %v2667
    %2707 = vmatpush1.msra.mxu0 %v2666
    %2708 = vmatprep.subr.mxu0 %v2664
    %2709 = vmatpush1.msra.mxu0 %v2663
    %2710 = vmatprep.subr.mxu0 0.0
    %2711 = vmatpush2.msra.mxu0 0.0
    %2712 = vmatprep.subr.mxu0 0.0
    %2713 = vmatpush2.msra.mxu0 0.0
    %2714 = vmatprep.subr.mxu0 0.0
    %2715 = vmatpush2.msra.mxu0 0.0
    %2716 = vmatprep.subr.mxu0 0.0
    %2717 = vmatpush2.msra.mxu0 0.0
    %2718 = vmatprep.subr.mxu0 0.0
    %2719 = vmatpush2.msra.mxu0 0.0
    %2720 = vmatprep.subr.mxu0 0.0
    %2721 = vmatpush2.msra.mxu0 0.0
    %2722 = vmatprep.subr.mxu0 0.0
    %2723 = vmatpush2.msra.mxu0 0.0
    %2724 = vmatprep.subr.mxu0 0.0
    %2725 = vmatpush2.msra.mxu0 0.0
    %2726 = vmatprep.subr.mxu0 0.0
    %2727 = vmatpush2.msra.mxu0 0.0
    %2728 = vmatprep.subr.mxu0 0.0
    %2729 = vmatpush2.msra.mxu0 0.0
    %2730 = vmatprep.subr.mxu0 0.0
    %2731 = vmatpush2.msra.mxu0 0.0
    %2732 = vmatprep.subr.mxu0 0.0
    %2733 = vmatpush2.msra.mxu0 0.0
    %2734 = vmatprep.subr.mxu0 0.0
    %2735 = vmatpush2.msra.mxu0 0.0
    %2736 = vmatprep.subr.mxu0 0.0
    %2737 = vmatpush2.msra.mxu0 0.0
    %2738 = vmatprep.subr.mxu0 0.0
    %2739 = vmatpush2.msra.mxu0 0.0
    %2740 = vmatprep.subr.mxu0 0.0
    %2741 = vmatpush2.msra.mxu0 0.0
    %2742 = vmatprep.mubr.f32.mxu0 0.0
    %2743 = vmatmul.mubr.f32.gmra.mxu0 %v2676
    %v2744 = vpop.f32.mrf.mxu0
    %v2745 = vadd.f32 0.0, %v2744
    %v2746 = vpop.f32.mrf.mxu0
    %v2747 = vadd.f32 0.0, %v2746
    %2748 = vdwg.mxu0
    %2749 = vmatprep.subr.mxu0 0.0
    %2750 = vmatpush1.msra.mxu0 0.0
    %2751 = vmatprep.subr.mxu0 0.0
    %2752 = vmatpush1.msra.mxu0 0.0
    %2753 = vmatprep.subr.mxu0 0.0
    %2754 = vmatpush1.msra.mxu0 0.0
    %2755 = vmatprep.subr.mxu0 0.0
    %2756 = vmatpush1.msra.mxu0 0.0
    %2757 = vmatprep.subr.mxu0 0.0
    %2758 = vmatpush1.msra.mxu0 0.0
    %2759 = vmatprep.subr.mxu0 0.0
    %2760 = vmatpush1.msra.mxu0 0.0
    %2761 = vmatprep.subr.mxu0 0.0
    %2762 = vmatpush1.msra.mxu0 0.0
    %2763 = vmatprep.subr.mxu0 0.0
    %2764 = vmatpush1.msra.mxu0 0.0
    %2765 = vmatprep.subr.mxu0 0.0
    %2766 = vmatpush1.msra.mxu0 0.0
    %2767 = vmatprep.subr.mxu0 0.0
    %2768 = vmatpush1.msra.mxu0 0.0
    %2769 = vmatprep.subr.mxu0 0.0
    %2770 = vmatpush1.msra.mxu0 0.0
    %2771 = vmatprep.subr.mxu0 0.0
    %2772 = vmatpush1.msra.mxu0 0.0
    %2773 = vmatprep.subr.mxu0 0.0
    %2774 = vmatpush1.msra.mxu0 %v2674
    %2775 = vmatprep.subr.mxu0 0.0
    %2776 = vmatpush1.msra.mxu0 %v2671
    %2777 = vmatprep.subr.mxu0 0.0
    %2778 = vmatpush1.msra.mxu0 %v2668
    %2779 = vmatprep.subr.mxu0 0.0
    %2780 = vmatpush1.msra.mxu0 %v2665
    %2781 = vmatprep.subr.mxu0 0.0
    %2782 = vmatpush2.msra.mxu0 0.0
    %2783 = vmatprep.subr.mxu0 0.0
    %2784 = vmatpush2.msra.mxu0 0.0
    %2785 = vmatprep.subr.mxu0 0.0
    %2786 = vmatpush2.msra.mxu0 0.0
    %2787 = vmatprep.subr.mxu0 0.0
    %2788 = vmatpush2.msra.mxu0 0.0
    %2789 = vmatprep.subr.mxu0 0.0
    %2790 = vmatpush2.msra.mxu0 0.0
    %2791 = vmatprep.subr.mxu0 0.0
    %2792 = vmatpush2.msra.mxu0 0.0
    %2793 = vmatprep.subr.mxu0 0.0
    %2794 = vmatpush2.msra.mxu0 0.0
    %2795 = vmatprep.subr.mxu0 0.0
    %2796 = vmatpush2.msra.mxu0 0.0
    %2797 = vmatprep.subr.mxu0 0.0
    %2798 = vmatpush2.msra.mxu0 0.0
    %2799 = vmatprep.subr.mxu0 0.0
    %2800 = vmatpush2.msra.mxu0 0.0
    %2801 = vmatprep.subr.mxu0 0.0
    %2802 = vmatpush2.msra.mxu0 0.0
    %2803 = vmatprep.subr.mxu0 0.0
    %2804 = vmatpush2.msra.mxu0 0.0
    %2805 = vmatprep.subr.mxu0 0.0
    %2806 = vmatpush2.msra.mxu0 0.0
    %2807 = vmatprep.subr.mxu0 0.0
    %2808 = vmatpush2.msra.mxu0 0.0
    %2809 = vmatprep.subr.mxu0 0.0
    %2810 = vmatpush2.msra.mxu0 0.0
    %2811 = vmatprep.subr.mxu0 0.0
    %2812 = vmatpush2.msra.mxu0 0.0
    %2813 = vmatprep.mubr.f32.mxu0 0.0
    %2814 = vmatmul.mubr.f32.gmra.mxu0 %v2676
    %v2815 = vpop.f32.mrf.mxu0
    %v2816 = vadd.f32 0.0, %v2815
    %v2817 = vpop.f32.mrf.mxu0
    %2818 = vdwg.mxu0
    %v2819 = vadd.f32 %v2651, %v2745
    %v2820 = vadd.f32 %v2652, %v2747
    %v2821 = vadd.f32 %v2653, %v2816
    %v2823 = vrot.slane %v632, 2
    %v2825 = vmax.f32 %v632, %v2823
    %v2827 = vrot.slane %v2825, 4
    %v2829 = vmax.f32 %v2825, %v2827
    %s2830 = scalar_lea.vmem %s3, 1248
    %v2831 = vld [vmem:[%s2830] sm:$0xff]
    %v2832 = vld [vmem:[%s2830 + $0x8] sm:$0xff]
    %v2833 = vld [vmem:[%s2830 + $0x10] sm:$0xff]
    %v2834 = vld [vmem:[%s2830 + $0x18] sm:$0xff]
    %v2835 = vld [vmem:[%s2830 + $0x20] sm:$0xff]
    %v2836 = vld [vmem:[%s2830 + $0x28] sm:$0xff]
    %v2837 = vld [vmem:[%s2830 + $0x30] sm:$0xff]
    %v2838 = vld [vmem:[%s2830 + $0x38] sm:$0xff]
    %v2839 = vld [vmem:[%s2830 + $0x40] sm:$0xff]
    %v2840 = vld [vmem:[%s2830 + $0x48] sm:$0xff]
    %v2841 = vld [vmem:[%s2830 + $0x50] sm:$0xff]
    %v2842 = vld [vmem:[%s2830 + $0x58] sm:$0xff]
    %v2844 = vsel %vm685, %v2829, 0
    %2846 = vmatprep.subr.mxu0 0.0
    %2847 = vmatpush1.msra.mxu0 0.0
    %2848 = vmatprep.subr.mxu0 0.0
    %2849 = vmatpush1.msra.mxu0 0.0
    %2850 = vmatprep.subr.mxu0 0.0
    %2851 = vmatpush1.msra.mxu0 0.0
    %2852 = vmatprep.subr.mxu0 0.0
    %2853 = vmatpush1.msra.mxu0 0.0
    %2854 = vmatprep.subr.mxu0 0.0
    %2855 = vmatpush1.msra.mxu0 0.0
    %2856 = vmatprep.subr.mxu0 0.0
    %2857 = vmatpush1.msra.mxu0 0.0
    %2858 = vmatprep.subr.mxu0 0.0
    %2859 = vmatpush1.msra.mxu0 0.0
    %2860 = vmatprep.subr.mxu0 0.0
    %2861 = vmatpush1.msra.mxu0 0.0
    %2862 = vmatprep.subr.mxu0 0.0
    %2863 = vmatpush1.msra.mxu0 0.0
    %2864 = vmatprep.subr.mxu0 0.0
    %2865 = vmatpush1.msra.mxu0 0.0
    %2866 = vmatprep.subr.mxu0 0.0
    %2867 = vmatpush1.msra.mxu0 0.0
    %2868 = vmatprep.subr.mxu0 0.0
    %2869 = vmatpush1.msra.mxu0 0.0
    %2870 = vmatprep.subr.mxu0 %v2841
    %2871 = vmatpush1.msra.mxu0 %v2840
    %2872 = vmatprep.subr.mxu0 %v2838
    %2873 = vmatpush1.msra.mxu0 %v2837
    %2874 = vmatprep.subr.mxu0 %v2835
    %2875 = vmatpush1.msra.mxu0 %v2834
    %2876 = vmatprep.subr.mxu0 %v2832
    %2877 = vmatpush1.msra.mxu0 %v2831
    %2878 = vmatprep.subr.mxu0 0.0
    %2879 = vmatpush2.msra.mxu0 0.0
    %2880 = vmatprep.subr.mxu0 0.0
    %2881 = vmatpush2.msra.mxu0 0.0
    %2882 = vmatprep.subr.mxu0 0.0
    %2883 = vmatpush2.msra.mxu0 0.0
    %2884 = vmatprep.subr.mxu0 0.0
    %2885 = vmatpush2.msra.mxu0 0.0
    %2886 = vmatprep.subr.mxu0 0.0
    %2887 = vmatpush2.msra.mxu0 0.0
    %2888 = vmatprep.subr.mxu0 0.0
    %2889 = vmatpush2.msra.mxu0 0.0
    %2890 = vmatprep.subr.mxu0 0.0
    %2891 = vmatpush2.msra.mxu0 0.0
    %2892 = vmatprep.subr.mxu0 0.0
    %2893 = vmatpush2.msra.mxu0 0.0
    %2894 = vmatprep.subr.mxu0 0.0
    %2895 = vmatpush2.msra.mxu0 0.0
    %2896 = vmatprep.subr.mxu0 0.0
    %2897 = vmatpush2.msra.mxu0 0.0
    %2898 = vmatprep.subr.mxu0 0.0
    %2899 = vmatpush2.msra.mxu0 0.0
    %2900 = vmatprep.subr.mxu0 0.0
    %2901 = vmatpush2.msra.mxu0 0.0
    %2902 = vmatprep.subr.mxu0 0.0
    %2903 = vmatpush2.msra.mxu0 0.0
    %2904 = vmatprep.subr.mxu0 0.0
    %2905 = vmatpush2.msra.mxu0 0.0
    %2906 = vmatprep.subr.mxu0 0.0
    %2907 = vmatpush2.msra.mxu0 0.0
    %2908 = vmatprep.subr.mxu0 0.0
    %2909 = vmatpush2.msra.mxu0 0.0
    %2910 = vmatprep.mubr.f32.mxu0 0.0
    %2911 = vmatmul.mubr.f32.gmra.mxu0 %v2844
    %v2912 = vpop.f32.mrf.mxu0
    %v2913 = vadd.f32 0.0, %v2912
    %v2914 = vpop.f32.mrf.mxu0
    %v2915 = vadd.f32 0.0, %v2914
    %2916 = vdwg.mxu0
    %2917 = vmatprep.subr.mxu0 0.0
    %2918 = vmatpush1.msra.mxu0 0.0
    %2919 = vmatprep.subr.mxu0 0.0
    %2920 = vmatpush1.msra.mxu0 0.0
    %2921 = vmatprep.subr.mxu0 0.0
    %2922 = vmatpush1.msra.mxu0 0.0
    %2923 = vmatprep.subr.mxu0 0.0
    %2924 = vmatpush1.msra.mxu0 0.0
    %2925 = vmatprep.subr.mxu0 0.0
    %2926 = vmatpush1.msra.mxu0 0.0
    %2927 = vmatprep.subr.mxu0 0.0
    %2928 = vmatpush1.msra.mxu0 0.0
    %2929 = vmatprep.subr.mxu0 0.0
    %2930 = vmatpush1.msra.mxu0 0.0
    %2931 = vmatprep.subr.mxu0 0.0
    %2932 = vmatpush1.msra.mxu0 0.0
    %2933 = vmatprep.subr.mxu0 0.0
    %2934 = vmatpush1.msra.mxu0 0.0
    %2935 = vmatprep.subr.mxu0 0.0
    %2936 = vmatpush1.msra.mxu0 0.0
    %2937 = vmatprep.subr.mxu0 0.0
    %2938 = vmatpush1.msra.mxu0 0.0
    %2939 = vmatprep.subr.mxu0 0.0
    %2940 = vmatpush1.msra.mxu0 0.0
    %2941 = vmatprep.subr.mxu0 0.0
    %2942 = vmatpush1.msra.mxu0 %v2842
    %2943 = vmatprep.subr.mxu0 0.0
    %2944 = vmatpush1.msra.mxu0 %v2839
    %2945 = vmatprep.subr.mxu0 0.0
    %2946 = vmatpush1.msra.mxu0 %v2836
    %2947 = vmatprep.subr.mxu0 0.0
    %2948 = vmatpush1.msra.mxu0 %v2833
    %2949 = vmatprep.subr.mxu0 0.0
    %2950 = vmatpush2.msra.mxu0 0.0
    %2951 = vmatprep.subr.mxu0 0.0
    %2952 = vmatpush2.msra.mxu0 0.0
    %2953 = vmatprep.subr.mxu0 0.0
    %2954 = vmatpush2.msra.mxu0 0.0
    %2955 = vmatprep.subr.mxu0 0.0
    %2956 = vmatpush2.msra.mxu0 0.0
    %2957 = vmatprep.subr.mxu0 0.0
    %2958 = vmatpush2.msra.mxu0 0.0
    %2959 = vmatprep.subr.mxu0 0.0
    %2960 = vmatpush2.msra.mxu0 0.0
    %2961 = vmatprep.subr.mxu0 0.0
    %2962 = vmatpush2.msra.mxu0 0.0
    %2963 = vmatprep.subr.mxu0 0.0
    %2964 = vmatpush2.msra.mxu0 0.0
    %2965 = vmatprep.subr.mxu0 0.0
    %2966 = vmatpush2.msra.mxu0 0.0
    %2967 = vmatprep.subr.mxu0 0.0
    %2968 = vmatpush2.msra.mxu0 0.0
    %2969 = vmatprep.subr.mxu0 0.0
    %2970 = vmatpush2.msra.mxu0 0.0
    %2971 = vmatprep.subr.mxu0 0.0
    %2972 = vmatpush2.msra.mxu0 0.0
    %2973 = vmatprep.subr.mxu0 0.0
    %2974 = vmatpush2.msra.mxu0 0.0
    %2975 = vmatprep.subr.mxu0 0.0
    %2976 = vmatpush2.msra.mxu0 0.0
    %2977 = vmatprep.subr.mxu0 0.0
    %2978 = vmatpush2.msra.mxu0 0.0
    %2979 = vmatprep.subr.mxu0 0.0
    %2980 = vmatpush2.msra.mxu0 0.0
    %2981 = vmatprep.mubr.f32.mxu0 0.0
    %2982 = vmatmul.mubr.f32.gmra.mxu0 %v2844
    %v2983 = vpop.f32.mrf.mxu0
    %v2984 = vadd.f32 0.0, %v2983
    %v2985 = vpop.f32.mrf.mxu0
    %2986 = vdwg.mxu0
    %v2987 = vadd.f32 %v2819, %v2913
    %v2988 = vadd.f32 %v2820, %v2915
    %v2989 = vadd.f32 %v2821, %v2984
    %v2991 = vrot.slane %v633, 2
    %v2993 = vmax.f32 %v633, %v2991
    %v2995 = vrot.slane %v2993, 4
    %v2997 = vmax.f32 %v2993, %v2995
    %s2998 = scalar_lea.vmem %s3, 1344
    %v2999 = vld [vmem:[%s2998] sm:$0xff]
    %v3000 = vld [vmem:[%s2998 + $0x8] sm:$0xff]
    %v3001 = vld [vmem:[%s2998 + $0x10] sm:$0xff]
    %v3002 = vld [vmem:[%s2998 + $0x18] sm:$0xff]
    %v3003 = vld [vmem:[%s2998 + $0x20] sm:$0xff]
    %v3004 = vld [vmem:[%s2998 + $0x28] sm:$0xff]
    %v3005 = vld [vmem:[%s2998 + $0x30] sm:$0xff]
    %v3006 = vld [vmem:[%s2998 + $0x38] sm:$0xff]
    %v3007 = vld [vmem:[%s2998 + $0x40] sm:$0xff]
    %v3008 = vld [vmem:[%s2998 + $0x48] sm:$0xff]
    %v3009 = vld [vmem:[%s2998 + $0x50] sm:$0xff]
    %v3010 = vld [vmem:[%s2998 + $0x58] sm:$0xff]
    %v3012 = vsel %vm685, %v2997, 0
    %3014 = vmatprep.subr.mxu0 0.0
    %3015 = vmatpush1.msra.mxu0 0.0
    %3016 = vmatprep.subr.mxu0 0.0
    %3017 = vmatpush1.msra.mxu0 0.0
    %3018 = vmatprep.subr.mxu0 0.0
    %3019 = vmatpush1.msra.mxu0 0.0
    %3020 = vmatprep.subr.mxu0 0.0
    %3021 = vmatpush1.msra.mxu0 0.0
    %3022 = vmatprep.subr.mxu0 0.0
    %3023 = vmatpush1.msra.mxu0 0.0
    %3024 = vmatprep.subr.mxu0 0.0
    %3025 = vmatpush1.msra.mxu0 0.0
    %3026 = vmatprep.subr.mxu0 0.0
    %3027 = vmatpush1.msra.mxu0 0.0
    %3028 = vmatprep.subr.mxu0 0.0
    %3029 = vmatpush1.msra.mxu0 0.0
    %3030 = vmatprep.subr.mxu0 0.0
    %3031 = vmatpush1.msra.mxu0 0.0
    %3032 = vmatprep.subr.mxu0 0.0
    %3033 = vmatpush1.msra.mxu0 0.0
    %3034 = vmatprep.subr.mxu0 0.0
    %3035 = vmatpush1.msra.mxu0 0.0
    %3036 = vmatprep.subr.mxu0 0.0
    %3037 = vmatpush1.msra.mxu0 0.0
    %3038 = vmatprep.subr.mxu0 %v3009
    %3039 = vmatpush1.msra.mxu0 %v3008
    %3040 = vmatprep.subr.mxu0 %v3006
    %3041 = vmatpush1.msra.mxu0 %v3005
    %3042 = vmatprep.subr.mxu0 %v3003
    %3043 = vmatpush1.msra.mxu0 %v3002
    %3044 = vmatprep.subr.mxu0 %v3000
    %3045 = vmatpush1.msra.mxu0 %v2999
    %3046 = vmatprep.subr.mxu0 0.0
    %3047 = vmatpush2.msra.mxu0 0.0
    %3048 = vmatprep.subr.mxu0 0.0
    %3049 = vmatpush2.msra.mxu0 0.0
    %3050 = vmatprep.subr.mxu0 0.0
    %3051 = vmatpush2.msra.mxu0 0.0
    %3052 = vmatprep.subr.mxu0 0.0
    %3053 = vmatpush2.msra.mxu0 0.0
    %3054 = vmatprep.subr.mxu0 0.0
    %3055 = vmatpush2.msra.mxu0 0.0
    %3056 = vmatprep.subr.mxu0 0.0
    %3057 = vmatpush2.msra.mxu0 0.0
    %3058 = vmatprep.subr.mxu0 0.0
    %3059 = vmatpush2.msra.mxu0 0.0
    %3060 = vmatprep.subr.mxu0 0.0
    %3061 = vmatpush2.msra.mxu0 0.0
    %3062 = vmatprep.subr.mxu0 0.0
    %3063 = vmatpush2.msra.mxu0 0.0
    %3064 = vmatprep.subr.mxu0 0.0
    %3065 = vmatpush2.msra.mxu0 0.0
    %3066 = vmatprep.subr.mxu0 0.0
    %3067 = vmatpush2.msra.mxu0 0.0
    %3068 = vmatprep.subr.mxu0 0.0
    %3069 = vmatpush2.msra.mxu0 0.0
    %3070 = vmatprep.subr.mxu0 0.0
    %3071 = vmatpush2.msra.mxu0 0.0
    %3072 = vmatprep.subr.mxu0 0.0
    %3073 = vmatpush2.msra.mxu0 0.0
    %3074 = vmatprep.subr.mxu0 0.0
    %3075 = vmatpush2.msra.mxu0 0.0
    %3076 = vmatprep.subr.mxu0 0.0
    %3077 = vmatpush2.msra.mxu0 0.0
    %3078 = vmatprep.mubr.f32.mxu0 0.0
    %3079 = vmatmul.mubr.f32.gmra.mxu0 %v3012
    %v3080 = vpop.f32.mrf.mxu0
    %v3081 = vadd.f32 0.0, %v3080
    %v3082 = vpop.f32.mrf.mxu0
    %v3083 = vadd.f32 0.0, %v3082
    %3084 = vdwg.mxu0
    %3085 = vmatprep.subr.mxu0 0.0
    %3086 = vmatpush1.msra.mxu0 0.0
    %3087 = vmatprep.subr.mxu0 0.0
    %3088 = vmatpush1.msra.mxu0 0.0
    %3089 = vmatprep.subr.mxu0 0.0
    %3090 = vmatpush1.msra.mxu0 0.0
    %3091 = vmatprep.subr.mxu0 0.0
    %3092 = vmatpush1.msra.mxu0 0.0
    %3093 = vmatprep.subr.mxu0 0.0
    %3094 = vmatpush1.msra.mxu0 0.0
    %3095 = vmatprep.subr.mxu0 0.0
    %3096 = vmatpush1.msra.mxu0 0.0
    %3097 = vmatprep.subr.mxu0 0.0
    %3098 = vmatpush1.msra.mxu0 0.0
    %3099 = vmatprep.subr.mxu0 0.0
    %3100 = vmatpush1.msra.mxu0 0.0
    %3101 = vmatprep.subr.mxu0 0.0
    %3102 = vmatpush1.msra.mxu0 0.0
    %3103 = vmatprep.subr.mxu0 0.0
    %3104 = vmatpush1.msra.mxu0 0.0
    %3105 = vmatprep.subr.mxu0 0.0
    %3106 = vmatpush1.msra.mxu0 0.0
    %3107 = vmatprep.subr.mxu0 0.0
    %3108 = vmatpush1.msra.mxu0 0.0
    %3109 = vmatprep.subr.mxu0 0.0
    %3110 = vmatpush1.msra.mxu0 %v3010
    %3111 = vmatprep.subr.mxu0 0.0
    %3112 = vmatpush1.msra.mxu0 %v3007
    %3113 = vmatprep.subr.mxu0 0.0
    %3114 = vmatpush1.msra.mxu0 %v3004
    %3115 = vmatprep.subr.mxu0 0.0
    %3116 = vmatpush1.msra.mxu0 %v3001
    %3117 = vmatprep.subr.mxu0 0.0
    %3118 = vmatpush2.msra.mxu0 0.0
    %3119 = vmatprep.subr.mxu0 0.0
    %3120 = vmatpush2.msra.mxu0 0.0
    %3121 = vmatprep.subr.mxu0 0.0
    %3122 = vmatpush2.msra.mxu0 0.0
    %3123 = vmatprep.subr.mxu0 0.0
    %3124 = vmatpush2.msra.mxu0 0.0
    %3125 = vmatprep.subr.mxu0 0.0
    %3126 = vmatpush2.msra.mxu0 0.0
    %3127 = vmatprep.subr.mxu0 0.0
    %3128 = vmatpush2.msra.mxu0 0.0
    %3129 = vmatprep.subr.mxu0 0.0
    %3130 = vmatpush2.msra.mxu0 0.0
    %3131 = vmatprep.subr.mxu0 0.0
    %3132 = vmatpush2.msra.mxu0 0.0
    %3133 = vmatprep.subr.mxu0 0.0
    %3134 = vmatpush2.msra.mxu0 0.0
    %3135 = vmatprep.subr.mxu0 0.0
    %3136 = vmatpush2.msra.mxu0 0.0
    %3137 = vmatprep.subr.mxu0 0.0
    %3138 = vmatpush2.msra.mxu0 0.0
    %3139 = vmatprep.subr.mxu0 0.0
    %3140 = vmatpush2.msra.mxu0 0.0
    %3141 = vmatprep.subr.mxu0 0.0
    %3142 = vmatpush2.msra.mxu0 0.0
    %3143 = vmatprep.subr.mxu0 0.0
    %3144 = vmatpush2.msra.mxu0 0.0
    %3145 = vmatprep.subr.mxu0 0.0
    %3146 = vmatpush2.msra.mxu0 0.0
    %3147 = vmatprep.subr.mxu0 0.0
    %3148 = vmatpush2.msra.mxu0 0.0
    %3149 = vmatprep.mubr.f32.mxu0 0.0
    %3150 = vmatmul.mubr.f32.gmra.mxu0 %v3012
    %v3151 = vpop.f32.mrf.mxu0
    %v3152 = vadd.f32 0.0, %v3151
    %v3153 = vpop.f32.mrf.mxu0
    %3154 = vdwg.mxu0
    %v3155 = vadd.f32 %v2987, %v3081
    %v3156 = vadd.f32 %v2988, %v3083
    %v3157 = vadd.f32 %v2989, %v3152
    %v3159 = vrot.slane %v634, 2
    %v3161 = vmax.f32 %v634, %v3159
    %v3163 = vrot.slane %v3161, 4
    %v3165 = vmax.f32 %v3161, %v3163
    %s3166 = scalar_lea.vmem %s3, 1440
    %v3167 = vld [vmem:[%s3166] sm:$0xff]
    %v3168 = vld [vmem:[%s3166 + $0x8] sm:$0xff]
    %v3169 = vld [vmem:[%s3166 + $0x10] sm:$0xff]
    %v3170 = vld [vmem:[%s3166 + $0x18] sm:$0xff]
    %v3171 = vld [vmem:[%s3166 + $0x20] sm:$0xff]
    %v3172 = vld [vmem:[%s3166 + $0x28] sm:$0xff]
    %v3173 = vld [vmem:[%s3166 + $0x30] sm:$0xff]
    %v3174 = vld [vmem:[%s3166 + $0x38] sm:$0xff]
    %v3175 = vld [vmem:[%s3166 + $0x40] sm:$0xff]
    %v3176 = vld [vmem:[%s3166 + $0x48] sm:$0xff]
    %v3177 = vld [vmem:[%s3166 + $0x50] sm:$0xff]
    %v3178 = vld [vmem:[%s3166 + $0x58] sm:$0xff]
    %v3180 = vsel %vm685, %v3165, 0
    %3182 = vmatprep.subr.mxu0 0.0
    %3183 = vmatpush1.msra.mxu0 0.0
    %3184 = vmatprep.subr.mxu0 0.0
    %3185 = vmatpush1.msra.mxu0 0.0
    %3186 = vmatprep.subr.mxu0 0.0
    %3187 = vmatpush1.msra.mxu0 0.0
    %3188 = vmatprep.subr.mxu0 0.0
    %3189 = vmatpush1.msra.mxu0 0.0
    %3190 = vmatprep.subr.mxu0 0.0
    %3191 = vmatpush1.msra.mxu0 0.0
    %3192 = vmatprep.subr.mxu0 0.0
    %3193 = vmatpush1.msra.mxu0 0.0
    %3194 = vmatprep.subr.mxu0 0.0
    %3195 = vmatpush1.msra.mxu0 0.0
    %3196 = vmatprep.subr.mxu0 0.0
    %3197 = vmatpush1.msra.mxu0 0.0
    %3198 = vmatprep.subr.mxu0 0.0
    %3199 = vmatpush1.msra.mxu0 0.0
    %3200 = vmatprep.subr.mxu0 0.0
    %3201 = vmatpush1.msra.mxu0 0.0
    %3202 = vmatprep.subr.mxu0 0.0
    %3203 = vmatpush1.msra.mxu0 0.0
    %3204 = vmatprep.subr.mxu0 0.0
    %3205 = vmatpush1.msra.mxu0 0.0
    %3206 = vmatprep.subr.mxu0 %v3177
    %3207 = vmatpush1.msra.mxu0 %v3176
    %3208 = vmatprep.subr.mxu0 %v3174
    %3209 = vmatpush1.msra.mxu0 %v3173
    %3210 = vmatprep.subr.mxu0 %v3171
    %3211 = vmatpush1.msra.mxu0 %v3170
    %3212 = vmatprep.subr.mxu0 %v3168
    %3213 = vmatpush1.msra.mxu0 %v3167
    %3214 = vmatprep.subr.mxu0 0.0
    %3215 = vmatpush2.msra.mxu0 0.0
    %3216 = vmatprep.subr.mxu0 0.0
    %3217 = vmatpush2.msra.mxu0 0.0
    %3218 = vmatprep.subr.mxu0 0.0
    %3219 = vmatpush2.msra.mxu0 0.0
    %3220 = vmatprep.subr.mxu0 0.0
    %3221 = vmatpush2.msra.mxu0 0.0
    %3222 = vmatprep.subr.mxu0 0.0
    %3223 = vmatpush2.msra.mxu0 0.0
    %3224 = vmatprep.subr.mxu0 0.0
    %3225 = vmatpush2.msra.mxu0 0.0
    %3226 = vmatprep.subr.mxu0 0.0
    %3227 = vmatpush2.msra.mxu0 0.0
    %3228 = vmatprep.subr.mxu0 0.0
    %3229 = vmatpush2.msra.mxu0 0.0
    %3230 = vmatprep.subr.mxu0 0.0
    %3231 = vmatpush2.msra.mxu0 0.0
    %3232 = vmatprep.subr.mxu0 0.0
    %3233 = vmatpush2.msra.mxu0 0.0
    %3234 = vmatprep.subr.mxu0 0.0
    %3235 = vmatpush2.msra.mxu0 0.0
    %3236 = vmatprep.subr.mxu0 0.0
    %3237 = vmatpush2.msra.mxu0 0.0
    %3238 = vmatprep.subr.mxu0 0.0
    %3239 = vmatpush2.msra.mxu0 0.0
    %3240 = vmatprep.subr.mxu0 0.0
    %3241 = vmatpush2.msra.mxu0 0.0
    %3242 = vmatprep.subr.mxu0 0.0
    %3243 = vmatpush2.msra.mxu0 0.0
    %3244 = vmatprep.subr.mxu0 0.0
    %3245 = vmatpush2.msra.mxu0 0.0
    %3246 = vmatprep.mubr.f32.mxu0 0.0
    %3247 = vmatmul.mubr.f32.gmra.mxu0 %v3180
    %v3248 = vpop.f32.mrf.mxu0
    %v3249 = vadd.f32 0.0, %v3248
    %v3250 = vpop.f32.mrf.mxu0
    %v3251 = vadd.f32 0.0, %v3250
    %3252 = vdwg.mxu0
    %3253 = vmatprep.subr.mxu0 0.0
    %3254 = vmatpush1.msra.mxu0 0.0
    %3255 = vmatprep.subr.mxu0 0.0
    %3256 = vmatpush1.msra.mxu0 0.0
    %3257 = vmatprep.subr.mxu0 0.0
    %3258 = vmatpush1.msra.mxu0 0.0
    %3259 = vmatprep.subr.mxu0 0.0
    %3260 = vmatpush1.msra.mxu0 0.0
    %3261 = vmatprep.subr.mxu0 0.0
    %3262 = vmatpush1.msra.mxu0 0.0
    %3263 = vmatprep.subr.mxu0 0.0
    %3264 = vmatpush1.msra.mxu0 0.0
    %3265 = vmatprep.subr.mxu0 0.0
    %3266 = vmatpush1.msra.mxu0 0.0
    %3267 = vmatprep.subr.mxu0 0.0
    %3268 = vmatpush1.msra.mxu0 0.0
    %3269 = vmatprep.subr.mxu0 0.0
    %3270 = vmatpush1.msra.mxu0 0.0
    %3271 = vmatprep.subr.mxu0 0.0
    %3272 = vmatpush1.msra.mxu0 0.0
    %3273 = vmatprep.subr.mxu0 0.0
    %3274 = vmatpush1.msra.mxu0 0.0
    %3275 = vmatprep.subr.mxu0 0.0
    %3276 = vmatpush1.msra.mxu0 0.0
    %3277 = vmatprep.subr.mxu0 0.0
    %3278 = vmatpush1.msra.mxu0 %v3178
    %3279 = vmatprep.subr.mxu0 0.0
    %3280 = vmatpush1.msra.mxu0 %v3175
    %3281 = vmatprep.subr.mxu0 0.0
    %3282 = vmatpush1.msra.mxu0 %v3172
    %3283 = vmatprep.subr.mxu0 0.0
    %3284 = vmatpush1.msra.mxu0 %v3169
    %3285 = vmatprep.subr.mxu0 0.0
    %3286 = vmatpush2.msra.mxu0 0.0
    %3287 = vmatprep.subr.mxu0 0.0
    %3288 = vmatpush2.msra.mxu0 0.0
    %3289 = vmatprep.subr.mxu0 0.0
    %3290 = vmatpush2.msra.mxu0 0.0
    %3291 = vmatprep.subr.mxu0 0.0
    %3292 = vmatpush2.msra.mxu0 0.0
    %3293 = vmatprep.subr.mxu0 0.0
    %3294 = vmatpush2.msra.mxu0 0.0
    %3295 = vmatprep.subr.mxu0 0.0
    %3296 = vmatpush2.msra.mxu0 0.0
    %3297 = vmatprep.subr.mxu0 0.0
    %3298 = vmatpush2.msra.mxu0 0.0
    %3299 = vmatprep.subr.mxu0 0.0
    %3300 = vmatpush2.msra.mxu0 0.0
    %3301 = vmatprep.subr.mxu0 0.0
    %3302 = vmatpush2.msra.mxu0 0.0
    %3303 = vmatprep.subr.mxu0 0.0
    %3304 = vmatpush2.msra.mxu0 0.0
    %3305 = vmatprep.subr.mxu0 0.0
    %3306 = vmatpush2.msra.mxu0 0.0
    %3307 = vmatprep.subr.mxu0 0.0
    %3308 = vmatpush2.msra.mxu0 0.0
    %3309 = vmatprep.subr.mxu0 0.0
    %3310 = vmatpush2.msra.mxu0 0.0
    %3311 = vmatprep.subr.mxu0 0.0
    %3312 = vmatpush2.msra.mxu0 0.0
    %3313 = vmatprep.subr.mxu0 0.0
    %3314 = vmatpush2.msra.mxu0 0.0
    %3315 = vmatprep.subr.mxu0 0.0
    %3316 = vmatpush2.msra.mxu0 0.0
    %3317 = vmatprep.mubr.f32.mxu0 0.0
    %3318 = vmatmul.mubr.f32.gmra.mxu0 %v3180
    %v3319 = vpop.f32.mrf.mxu0
    %v3320 = vadd.f32 0.0, %v3319
    %v3321 = vpop.f32.mrf.mxu0
    %3322 = vdwg.mxu0
    %v3323 = vadd.f32 %v3155, %v3249
    %v3324 = vadd.f32 %v3156, %v3251
    %v3325 = vadd.f32 %v3157, %v3320
    %v3327 = vrot.slane %v635, 2
    %v3329 = vmax.f32 %v635, %v3327
    %v3331 = vrot.slane %v3329, 4
    %v3333 = vmax.f32 %v3329, %v3331
    %s3334 = scalar_lea.vmem %s3, 1536
    %v3335 = vld [vmem:[%s3334] sm:$0xff]
    %v3336 = vld [vmem:[%s3334 + $0x8] sm:$0xff]
    %v3337 = vld [vmem:[%s3334 + $0x10] sm:$0xff]
    %v3338 = vld [vmem:[%s3334 + $0x18] sm:$0xff]
    %v3339 = vld [vmem:[%s3334 + $0x20] sm:$0xff]
    %v3340 = vld [vmem:[%s3334 + $0x28] sm:$0xff]
    %v3341 = vld [vmem:[%s3334 + $0x30] sm:$0xff]
    %v3342 = vld [vmem:[%s3334 + $0x38] sm:$0xff]
    %v3343 = vld [vmem:[%s3334 + $0x40] sm:$0xff]
    %v3344 = vld [vmem:[%s3334 + $0x48] sm:$0xff]
    %v3345 = vld [vmem:[%s3334 + $0x50] sm:$0xff]
    %v3346 = vld [vmem:[%s3334 + $0x58] sm:$0xff]
    %v3348 = vsel %vm685, %v3333, 0
    %3350 = vmatprep.subr.mxu0 0.0
    %3351 = vmatpush1.msra.mxu0 0.0
    %3352 = vmatprep.subr.mxu0 0.0
    %3353 = vmatpush1.msra.mxu0 0.0
    %3354 = vmatprep.subr.mxu0 0.0
    %3355 = vmatpush1.msra.mxu0 0.0
    %3356 = vmatprep.subr.mxu0 0.0
    %3357 = vmatpush1.msra.mxu0 0.0
    %3358 = vmatprep.subr.mxu0 0.0
    %3359 = vmatpush1.msra.mxu0 0.0
    %3360 = vmatprep.subr.mxu0 0.0
    %3361 = vmatpush1.msra.mxu0 0.0
    %3362 = vmatprep.subr.mxu0 0.0
    %3363 = vmatpush1.msra.mxu0 0.0
    %3364 = vmatprep.subr.mxu0 0.0
    %3365 = vmatpush1.msra.mxu0 0.0
    %3366 = vmatprep.subr.mxu0 0.0
    %3367 = vmatpush1.msra.mxu0 0.0
    %3368 = vmatprep.subr.mxu0 0.0
    %3369 = vmatpush1.msra.mxu0 0.0
    %3370 = vmatprep.subr.mxu0 0.0
    %3371 = vmatpush1.msra.mxu0 0.0
    %3372 = vmatprep.subr.mxu0 0.0
    %3373 = vmatpush1.msra.mxu0 0.0
    %3374 = vmatprep.subr.mxu0 %v3345
    %3375 = vmatpush1.msra.mxu0 %v3344
    %3376 = vmatprep.subr.mxu0 %v3342
    %3377 = vmatpush1.msra.mxu0 %v3341
    %3378 = vmatprep.subr.mxu0 %v3339
    %3379 = vmatpush1.msra.mxu0 %v3338
    %3380 = vmatprep.subr.mxu0 %v3336
    %3381 = vmatpush1.msra.mxu0 %v3335
    %3382 = vmatprep.subr.mxu0 0.0
    %3383 = vmatpush2.msra.mxu0 0.0
    %3384 = vmatprep.subr.mxu0 0.0
    %3385 = vmatpush2.msra.mxu0 0.0
    %3386 = vmatprep.subr.mxu0 0.0
    %3387 = vmatpush2.msra.mxu0 0.0
    %3388 = vmatprep.subr.mxu0 0.0
    %3389 = vmatpush2.msra.mxu0 0.0
    %3390 = vmatprep.subr.mxu0 0.0
    %3391 = vmatpush2.msra.mxu0 0.0
    %3392 = vmatprep.subr.mxu0 0.0
    %3393 = vmatpush2.msra.mxu0 0.0
    %3394 = vmatprep.subr.mxu0 0.0
    %3395 = vmatpush2.msra.mxu0 0.0
    %3396 = vmatprep.subr.mxu0 0.0
    %3397 = vmatpush2.msra.mxu0 0.0
    %3398 = vmatprep.subr.mxu0 0.0
    %3399 = vmatpush2.msra.mxu0 0.0
    %3400 = vmatprep.subr.mxu0 0.0
    %3401 = vmatpush2.msra.mxu0 0.0
    %3402 = vmatprep.subr.mxu0 0.0
    %3403 = vmatpush2.msra.mxu0 0.0
    %3404 = vmatprep.subr.mxu0 0.0
    %3405 = vmatpush2.msra.mxu0 0.0
    %3406 = vmatprep.subr.mxu0 0.0
    %3407 = vmatpush2.msra.mxu0 0.0
    %3408 = vmatprep.subr.mxu0 0.0
    %3409 = vmatpush2.msra.mxu0 0.0
    %3410 = vmatprep.subr.mxu0 0.0
    %3411 = vmatpush2.msra.mxu0 0.0
    %3412 = vmatprep.subr.mxu0 0.0
    %3413 = vmatpush2.msra.mxu0 0.0
    %3414 = vmatprep.mubr.f32.mxu0 0.0
    %3415 = vmatmul.mubr.f32.gmra.mxu0 %v3348
    %v3416 = vpop.f32.mrf.mxu0
    %v3417 = vadd.f32 0.0, %v3416
    %v3418 = vpop.f32.mrf.mxu0
    %v3419 = vadd.f32 0.0, %v3418
    %3420 = vdwg.mxu0
    %3421 = vmatprep.subr.mxu0 0.0
    %3422 = vmatpush1.msra.mxu0 0.0
    %3423 = vmatprep.subr.mxu0 0.0
    %3424 = vmatpush1.msra.mxu0 0.0
    %3425 = vmatprep.subr.mxu0 0.0
    %3426 = vmatpush1.msra.mxu0 0.0
    %3427 = vmatprep.subr.mxu0 0.0
    %3428 = vmatpush1.msra.mxu0 0.0
    %3429 = vmatprep.subr.mxu0 0.0
    %3430 = vmatpush1.msra.mxu0 0.0
    %3431 = vmatprep.subr.mxu0 0.0
    %3432 = vmatpush1.msra.mxu0 0.0
    %3433 = vmatprep.subr.mxu0 0.0
    %3434 = vmatpush1.msra.mxu0 0.0
    %3435 = vmatprep.subr.mxu0 0.0
    %3436 = vmatpush1.msra.mxu0 0.0
    %3437 = vmatprep.subr.mxu0 0.0
    %3438 = vmatpush1.msra.mxu0 0.0
    %3439 = vmatprep.subr.mxu0 0.0
    %3440 = vmatpush1.msra.mxu0 0.0
    %3441 = vmatprep.subr.mxu0 0.0
    %3442 = vmatpush1.msra.mxu0 0.0
    %3443 = vmatprep.subr.mxu0 0.0
    %3444 = vmatpush1.msra.mxu0 0.0
    %3445 = vmatprep.subr.mxu0 0.0
    %3446 = vmatpush1.msra.mxu0 %v3346
    %3447 = vmatprep.subr.mxu0 0.0
    %3448 = vmatpush1.msra.mxu0 %v3343
    %3449 = vmatprep.subr.mxu0 0.0
    %3450 = vmatpush1.msra.mxu0 %v3340
    %3451 = vmatprep.subr.mxu0 0.0
    %3452 = vmatpush1.msra.mxu0 %v3337
    %3453 = vmatprep.subr.mxu0 0.0
    %3454 = vmatpush2.msra.mxu0 0.0
    %3455 = vmatprep.subr.mxu0 0.0
    %3456 = vmatpush2.msra.mxu0 0.0
    %3457 = vmatprep.subr.mxu0 0.0
    %3458 = vmatpush2.msra.mxu0 0.0
    %3459 = vmatprep.subr.mxu0 0.0
    %3460 = vmatpush2.msra.mxu0 0.0
    %3461 = vmatprep.subr.mxu0 0.0
    %3462 = vmatpush2.msra.mxu0 0.0
    %3463 = vmatprep.subr.mxu0 0.0
    %3464 = vmatpush2.msra.mxu0 0.0
    %3465 = vmatprep.subr.mxu0 0.0
    %3466 = vmatpush2.msra.mxu0 0.0
    %3467 = vmatprep.subr.mxu0 0.0
    %3468 = vmatpush2.msra.mxu0 0.0
    %3469 = vmatprep.subr.mxu0 0.0
    %3470 = vmatpush2.msra.mxu0 0.0
    %3471 = vmatprep.subr.mxu0 0.0
    %3472 = vmatpush2.msra.mxu0 0.0
    %3473 = vmatprep.subr.mxu0 0.0
    %3474 = vmatpush2.msra.mxu0 0.0
    %3475 = vmatprep.subr.mxu0 0.0
    %3476 = vmatpush2.msra.mxu0 0.0
    %3477 = vmatprep.subr.mxu0 0.0
    %3478 = vmatpush2.msra.mxu0 0.0
    %3479 = vmatprep.subr.mxu0 0.0
    %3480 = vmatpush2.msra.mxu0 0.0
    %3481 = vmatprep.subr.mxu0 0.0
    %3482 = vmatpush2.msra.mxu0 0.0
    %3483 = vmatprep.subr.mxu0 0.0
    %3484 = vmatpush2.msra.mxu0 0.0
    %3485 = vmatprep.mubr.f32.mxu0 0.0
    %3486 = vmatmul.mubr.f32.gmra.mxu0 %v3348
    %v3487 = vpop.f32.mrf.mxu0
    %v3488 = vadd.f32 0.0, %v3487
    %v3489 = vpop.f32.mrf.mxu0
    %3490 = vdwg.mxu0
    %v3491 = vadd.f32 %v3323, %v3417
    %v3492 = vadd.f32 %v3324, %v3419
    %v3493 = vadd.f32 %v3325, %v3488
    %v3495 = vrot.slane %v636, 2
    %v3497 = vmax.f32 %v636, %v3495
    %v3499 = vrot.slane %v3497, 4
    %v3501 = vmax.f32 %v3497, %v3499
    %s3502 = scalar_lea.vmem %s3, 1632
    %v3503 = vld [vmem:[%s3502] sm:$0xff]
    %v3504 = vld [vmem:[%s3502 + $0x8] sm:$0xff]
    %v3505 = vld [vmem:[%s3502 + $0x10] sm:$0xff]
    %v3506 = vld [vmem:[%s3502 + $0x18] sm:$0xff]
    %v3507 = vld [vmem:[%s3502 + $0x20] sm:$0xff]
    %v3508 = vld [vmem:[%s3502 + $0x28] sm:$0xff]
    %v3509 = vld [vmem:[%s3502 + $0x30] sm:$0xff]
    %v3510 = vld [vmem:[%s3502 + $0x38] sm:$0xff]
    %v3511 = vld [vmem:[%s3502 + $0x40] sm:$0xff]
    %v3512 = vld [vmem:[%s3502 + $0x48] sm:$0xff]
    %v3513 = vld [vmem:[%s3502 + $0x50] sm:$0xff]
    %v3514 = vld [vmem:[%s3502 + $0x58] sm:$0xff]
    %v3516 = vsel %vm685, %v3501, 0
    %3518 = vmatprep.subr.mxu0 0.0
    %3519 = vmatpush1.msra.mxu0 0.0
    %3520 = vmatprep.subr.mxu0 0.0
    %3521 = vmatpush1.msra.mxu0 0.0
    %3522 = vmatprep.subr.mxu0 0.0
    %3523 = vmatpush1.msra.mxu0 0.0
    %3524 = vmatprep.subr.mxu0 0.0
    %3525 = vmatpush1.msra.mxu0 0.0
    %3526 = vmatprep.subr.mxu0 0.0
    %3527 = vmatpush1.msra.mxu0 0.0
    %3528 = vmatprep.subr.mxu0 0.0
    %3529 = vmatpush1.msra.mxu0 0.0
    %3530 = vmatprep.subr.mxu0 0.0
    %3531 = vmatpush1.msra.mxu0 0.0
    %3532 = vmatprep.subr.mxu0 0.0
    %3533 = vmatpush1.msra.mxu0 0.0
    %3534 = vmatprep.subr.mxu0 0.0
    %3535 = vmatpush1.msra.mxu0 0.0
    %3536 = vmatprep.subr.mxu0 0.0
    %3537 = vmatpush1.msra.mxu0 0.0
    %3538 = vmatprep.subr.mxu0 0.0
    %3539 = vmatpush1.msra.mxu0 0.0
    %3540 = vmatprep.subr.mxu0 0.0
    %3541 = vmatpush1.msra.mxu0 0.0
    %3542 = vmatprep.subr.mxu0 %v3513
    %3543 = vmatpush1.msra.mxu0 %v3512
    %3544 = vmatprep.subr.mxu0 %v3510
    %3545 = vmatpush1.msra.mxu0 %v3509
    %3546 = vmatprep.subr.mxu0 %v3507
    %3547 = vmatpush1.msra.mxu0 %v3506
    %3548 = vmatprep.subr.mxu0 %v3504
    %3549 = vmatpush1.msra.mxu0 %v3503
    %3550 = vmatprep.subr.mxu0 0.0
    %3551 = vmatpush2.msra.mxu0 0.0
    %3552 = vmatprep.subr.mxu0 0.0
    %3553 = vmatpush2.msra.mxu0 0.0
    %3554 = vmatprep.subr.mxu0 0.0
    %3555 = vmatpush2.msra.mxu0 0.0
    %3556 = vmatprep.subr.mxu0 0.0
    %3557 = vmatpush2.msra.mxu0 0.0
    %3558 = vmatprep.subr.mxu0 0.0
    %3559 = vmatpush2.msra.mxu0 0.0
    %3560 = vmatprep.subr.mxu0 0.0
    %3561 = vmatpush2.msra.mxu0 0.0
    %3562 = vmatprep.subr.mxu0 0.0
    %3563 = vmatpush2.msra.mxu0 0.0
    %3564 = vmatprep.subr.mxu0 0.0
    %3565 = vmatpush2.msra.mxu0 0.0
    %3566 = vmatprep.subr.mxu0 0.0
    %3567 = vmatpush2.msra.mxu0 0.0
    %3568 = vmatprep.subr.mxu0 0.0
    %3569 = vmatpush2.msra.mxu0 0.0
    %3570 = vmatprep.subr.mxu0 0.0
    %3571 = vmatpush2.msra.mxu0 0.0
    %3572 = vmatprep.subr.mxu0 0.0
    %3573 = vmatpush2.msra.mxu0 0.0
    %3574 = vmatprep.subr.mxu0 0.0
    %3575 = vmatpush2.msra.mxu0 0.0
    %3576 = vmatprep.subr.mxu0 0.0
    %3577 = vmatpush2.msra.mxu0 0.0
    %3578 = vmatprep.subr.mxu0 0.0
    %3579 = vmatpush2.msra.mxu0 0.0
    %3580 = vmatprep.subr.mxu0 0.0
    %3581 = vmatpush2.msra.mxu0 0.0
    %3582 = vmatprep.mubr.f32.mxu0 0.0
    %3583 = vmatmul.mubr.f32.gmra.mxu0 %v3516
    %v3584 = vpop.f32.mrf.mxu0
    %v3585 = vadd.f32 0.0, %v3584
    %v3586 = vpop.f32.mrf.mxu0
    %v3587 = vadd.f32 0.0, %v3586
    %3588 = vdwg.mxu0
    %3589 = vmatprep.subr.mxu0 0.0
    %3590 = vmatpush1.msra.mxu0 0.0
    %3591 = vmatprep.subr.mxu0 0.0
    %3592 = vmatpush1.msra.mxu0 0.0
    %3593 = vmatprep.subr.mxu0 0.0
    %3594 = vmatpush1.msra.mxu0 0.0
    %3595 = vmatprep.subr.mxu0 0.0
    %3596 = vmatpush1.msra.mxu0 0.0
    %3597 = vmatprep.subr.mxu0 0.0
    %3598 = vmatpush1.msra.mxu0 0.0
    %3599 = vmatprep.subr.mxu0 0.0
    %3600 = vmatpush1.msra.mxu0 0.0
    %3601 = vmatprep.subr.mxu0 0.0
    %3602 = vmatpush1.msra.mxu0 0.0
    %3603 = vmatprep.subr.mxu0 0.0
    %3604 = vmatpush1.msra.mxu0 0.0
    %3605 = vmatprep.subr.mxu0 0.0
    %3606 = vmatpush1.msra.mxu0 0.0
    %3607 = vmatprep.subr.mxu0 0.0
    %3608 = vmatpush1.msra.mxu0 0.0
    %3609 = vmatprep.subr.mxu0 0.0
    %3610 = vmatpush1.msra.mxu0 0.0
    %3611 = vmatprep.subr.mxu0 0.0
    %3612 = vmatpush1.msra.mxu0 0.0
    %3613 = vmatprep.subr.mxu0 0.0
    %3614 = vmatpush1.msra.mxu0 %v3514
    %3615 = vmatprep.subr.mxu0 0.0
    %3616 = vmatpush1.msra.mxu0 %v3511
    %3617 = vmatprep.subr.mxu0 0.0
    %3618 = vmatpush1.msra.mxu0 %v3508
    %3619 = vmatprep.subr.mxu0 0.0
    %3620 = vmatpush1.msra.mxu0 %v3505
    %3621 = vmatprep.subr.mxu0 0.0
    %3622 = vmatpush2.msra.mxu0 0.0
    %3623 = vmatprep.subr.mxu0 0.0
    %3624 = vmatpush2.msra.mxu0 0.0
    %3625 = vmatprep.subr.mxu0 0.0
    %3626 = vmatpush2.msra.mxu0 0.0
    %3627 = vmatprep.subr.mxu0 0.0
    %3628 = vmatpush2.msra.mxu0 0.0
    %3629 = vmatprep.subr.mxu0 0.0
    %3630 = vmatpush2.msra.mxu0 0.0
    %3631 = vmatprep.subr.mxu0 0.0
    %3632 = vmatpush2.msra.mxu0 0.0
    %3633 = vmatprep.subr.mxu0 0.0
    %3634 = vmatpush2.msra.mxu0 0.0
    %3635 = vmatprep.subr.mxu0 0.0
    %3636 = vmatpush2.msra.mxu0 0.0
    %3637 = vmatprep.subr.mxu0 0.0
    %3638 = vmatpush2.msra.mxu0 0.0
    %3639 = vmatprep.subr.mxu0 0.0
    %3640 = vmatpush2.msra.mxu0 0.0
    %3641 = vmatprep.subr.mxu0 0.0
    %3642 = vmatpush2.msra.mxu0 0.0
    %3643 = vmatprep.subr.mxu0 0.0
    %3644 = vmatpush2.msra.mxu0 0.0
    %3645 = vmatprep.subr.mxu0 0.0
    %3646 = vmatpush2.msra.mxu0 0.0
    %3647 = vmatprep.subr.mxu0 0.0
    %3648 = vmatpush2.msra.mxu0 0.0
    %3649 = vmatprep.subr.mxu0 0.0
    %3650 = vmatpush2.msra.mxu0 0.0
    %3651 = vmatprep.subr.mxu0 0.0
    %3652 = vmatpush2.msra.mxu0 0.0
    %3653 = vmatprep.mubr.f32.mxu0 0.0
    %3654 = vmatmul.mubr.f32.gmra.mxu0 %v3516
    %v3655 = vpop.f32.mrf.mxu0
    %v3656 = vadd.f32 0.0, %v3655
    %v3657 = vpop.f32.mrf.mxu0
    %3658 = vdwg.mxu0
    %v3659 = vadd.f32 %v3491, %v3585
    %v3660 = vadd.f32 %v3492, %v3587
    %v3661 = vadd.f32 %v3493, %v3656
    %v3663 = vrot.slane %v637, 2
    %v3665 = vmax.f32 %v637, %v3663
    %v3667 = vrot.slane %v3665, 4
    %v3669 = vmax.f32 %v3665, %v3667
    %s3670 = scalar_lea.vmem %s3, 1728
    %v3671 = vld [vmem:[%s3670] sm:$0xff]
    %v3672 = vld [vmem:[%s3670 + $0x8] sm:$0xff]
    %v3673 = vld [vmem:[%s3670 + $0x10] sm:$0xff]
    %v3674 = vld [vmem:[%s3670 + $0x18] sm:$0xff]
    %v3675 = vld [vmem:[%s3670 + $0x20] sm:$0xff]
    %v3676 = vld [vmem:[%s3670 + $0x28] sm:$0xff]
    %v3677 = vld [vmem:[%s3670 + $0x30] sm:$0xff]
    %v3678 = vld [vmem:[%s3670 + $0x38] sm:$0xff]
    %v3679 = vld [vmem:[%s3670 + $0x40] sm:$0xff]
    %v3680 = vld [vmem:[%s3670 + $0x48] sm:$0xff]
    %v3681 = vld [vmem:[%s3670 + $0x50] sm:$0xff]
    %v3682 = vld [vmem:[%s3670 + $0x58] sm:$0xff]
    %v3684 = vsel %vm685, %v3669, 0
    %3686 = vmatprep.subr.mxu0 0.0
    %3687 = vmatpush1.msra.mxu0 0.0
    %3688 = vmatprep.subr.mxu0 0.0
    %3689 = vmatpush1.msra.mxu0 0.0
    %3690 = vmatprep.subr.mxu0 0.0
    %3691 = vmatpush1.msra.mxu0 0.0
    %3692 = vmatprep.subr.mxu0 0.0
    %3693 = vmatpush1.msra.mxu0 0.0
    %3694 = vmatprep.subr.mxu0 0.0
    %3695 = vmatpush1.msra.mxu0 0.0
    %3696 = vmatprep.subr.mxu0 0.0
    %3697 = vmatpush1.msra.mxu0 0.0
    %3698 = vmatprep.subr.mxu0 0.0
    %3699 = vmatpush1.msra.mxu0 0.0
    %3700 = vmatprep.subr.mxu0 0.0
    %3701 = vmatpush1.msra.mxu0 0.0
    %3702 = vmatprep.subr.mxu0 0.0
    %3703 = vmatpush1.msra.mxu0 0.0
    %3704 = vmatprep.subr.mxu0 0.0
    %3705 = vmatpush1.msra.mxu0 0.0
    %3706 = vmatprep.subr.mxu0 0.0
    %3707 = vmatpush1.msra.mxu0 0.0
    %3708 = vmatprep.subr.mxu0 0.0
    %3709 = vmatpush1.msra.mxu0 0.0
    %3710 = vmatprep.subr.mxu0 %v3681
    %3711 = vmatpush1.msra.mxu0 %v3680
    %3712 = vmatprep.subr.mxu0 %v3678
    %3713 = vmatpush1.msra.mxu0 %v3677
    %3714 = vmatprep.subr.mxu0 %v3675
    %3715 = vmatpush1.msra.mxu0 %v3674
    %3716 = vmatprep.subr.mxu0 %v3672
    %3717 = vmatpush1.msra.mxu0 %v3671
    %3718 = vmatprep.subr.mxu0 0.0
    %3719 = vmatpush2.msra.mxu0 0.0
    %3720 = vmatprep.subr.mxu0 0.0
    %3721 = vmatpush2.msra.mxu0 0.0
    %3722 = vmatprep.subr.mxu0 0.0
    %3723 = vmatpush2.msra.mxu0 0.0
    %3724 = vmatprep.subr.mxu0 0.0
    %3725 = vmatpush2.msra.mxu0 0.0
    %3726 = vmatprep.subr.mxu0 0.0
    %3727 = vmatpush2.msra.mxu0 0.0
    %3728 = vmatprep.subr.mxu0 0.0
    %3729 = vmatpush2.msra.mxu0 0.0
    %3730 = vmatprep.subr.mxu0 0.0
    %3731 = vmatpush2.msra.mxu0 0.0
    %3732 = vmatprep.subr.mxu0 0.0
    %3733 = vmatpush2.msra.mxu0 0.0
    %3734 = vmatprep.subr.mxu0 0.0
    %3735 = vmatpush2.msra.mxu0 0.0
    %3736 = vmatprep.subr.mxu0 0.0
    %3737 = vmatpush2.msra.mxu0 0.0
    %3738 = vmatprep.subr.mxu0 0.0
    %3739 = vmatpush2.msra.mxu0 0.0
    %3740 = vmatprep.subr.mxu0 0.0
    %3741 = vmatpush2.msra.mxu0 0.0
    %3742 = vmatprep.subr.mxu0 0.0
    %3743 = vmatpush2.msra.mxu0 0.0
    %3744 = vmatprep.subr.mxu0 0.0
    %3745 = vmatpush2.msra.mxu0 0.0
    %3746 = vmatprep.subr.mxu0 0.0
    %3747 = vmatpush2.msra.mxu0 0.0
    %3748 = vmatprep.subr.mxu0 0.0
    %3749 = vmatpush2.msra.mxu0 0.0
    %3750 = vmatprep.mubr.f32.mxu0 0.0
    %3751 = vmatmul.mubr.f32.gmra.mxu0 %v3684
    %v3752 = vpop.f32.mrf.mxu0
    %v3753 = vadd.f32 0.0, %v3752
    %v3754 = vpop.f32.mrf.mxu0
    %v3755 = vadd.f32 0.0, %v3754
    %3756 = vdwg.mxu0
    %3757 = vmatprep.subr.mxu0 0.0
    %3758 = vmatpush1.msra.mxu0 0.0
    %3759 = vmatprep.subr.mxu0 0.0
    %3760 = vmatpush1.msra.mxu0 0.0
    %3761 = vmatprep.subr.mxu0 0.0
    %3762 = vmatpush1.msra.mxu0 0.0
    %3763 = vmatprep.subr.mxu0 0.0
    %3764 = vmatpush1.msra.mxu0 0.0
    %3765 = vmatprep.subr.mxu0 0.0
    %3766 = vmatpush1.msra.mxu0 0.0
    %3767 = vmatprep.subr.mxu0 0.0
    %3768 = vmatpush1.msra.mxu0 0.0
    %3769 = vmatprep.subr.mxu0 0.0
    %3770 = vmatpush1.msra.mxu0 0.0
    %3771 = vmatprep.subr.mxu0 0.0
    %3772 = vmatpush1.msra.mxu0 0.0
    %3773 = vmatprep.subr.mxu0 0.0
    %3774 = vmatpush1.msra.mxu0 0.0
    %3775 = vmatprep.subr.mxu0 0.0
    %3776 = vmatpush1.msra.mxu0 0.0
    %3777 = vmatprep.subr.mxu0 0.0
    %3778 = vmatpush1.msra.mxu0 0.0
    %3779 = vmatprep.subr.mxu0 0.0
    %3780 = vmatpush1.msra.mxu0 0.0
    %3781 = vmatprep.subr.mxu0 0.0
    %3782 = vmatpush1.msra.mxu0 %v3682
    %3783 = vmatprep.subr.mxu0 0.0
    %3784 = vmatpush1.msra.mxu0 %v3679
    %3785 = vmatprep.subr.mxu0 0.0
    %3786 = vmatpush1.msra.mxu0 %v3676
    %3787 = vmatprep.subr.mxu0 0.0
    %3788 = vmatpush1.msra.mxu0 %v3673
    %3789 = vmatprep.subr.mxu0 0.0
    %3790 = vmatpush2.msra.mxu0 0.0
    %3791 = vmatprep.subr.mxu0 0.0
    %3792 = vmatpush2.msra.mxu0 0.0
    %3793 = vmatprep.subr.mxu0 0.0
    %3794 = vmatpush2.msra.mxu0 0.0
    %3795 = vmatprep.subr.mxu0 0.0
    %3796 = vmatpush2.msra.mxu0 0.0
    %3797 = vmatprep.subr.mxu0 0.0
    %3798 = vmatpush2.msra.mxu0 0.0
    %3799 = vmatprep.subr.mxu0 0.0
    %3800 = vmatpush2.msra.mxu0 0.0
    %3801 = vmatprep.subr.mxu0 0.0
    %3802 = vmatpush2.msra.mxu0 0.0
    %3803 = vmatprep.subr.mxu0 0.0
    %3804 = vmatpush2.msra.mxu0 0.0
    %3805 = vmatprep.subr.mxu0 0.0
    %3806 = vmatpush2.msra.mxu0 0.0
    %3807 = vmatprep.subr.mxu0 0.0
    %3808 = vmatpush2.msra.mxu0 0.0
    %3809 = vmatprep.subr.mxu0 0.0
    %3810 = vmatpush2.msra.mxu0 0.0
    %3811 = vmatprep.subr.mxu0 0.0
    %3812 = vmatpush2.msra.mxu0 0.0
    %3813 = vmatprep.subr.mxu0 0.0
    %3814 = vmatpush2.msra.mxu0 0.0
    %3815 = vmatprep.subr.mxu0 0.0
    %3816 = vmatpush2.msra.mxu0 0.0
    %3817 = vmatprep.subr.mxu0 0.0
    %3818 = vmatpush2.msra.mxu0 0.0
    %3819 = vmatprep.subr.mxu0 0.0
    %3820 = vmatpush2.msra.mxu0 0.0
    %3821 = vmatprep.mubr.f32.mxu0 0.0
    %3822 = vmatmul.mubr.f32.gmra.mxu0 %v3684
    %v3823 = vpop.f32.mrf.mxu0
    %v3824 = vadd.f32 0.0, %v3823
    %v3825 = vpop.f32.mrf.mxu0
    %3826 = vdwg.mxu0
    %v3827 = vadd.f32 %v3659, %v3753
    %v3828 = vadd.f32 %v3660, %v3755
    %v3829 = vadd.f32 %v3661, %v3824
    %v3831 = vrot.slane %v638, 2
    %v3833 = vmax.f32 %v638, %v3831
    %v3835 = vrot.slane %v3833, 4
    %v3837 = vmax.f32 %v3833, %v3835
    %s3838 = scalar_lea.vmem %s3, 1824
    %v3839 = vld [vmem:[%s3838] sm:$0xff]
    %v3840 = vld [vmem:[%s3838 + $0x8] sm:$0xff]
    %v3841 = vld [vmem:[%s3838 + $0x10] sm:$0xff]
    %v3842 = vld [vmem:[%s3838 + $0x18] sm:$0xff]
    %v3843 = vld [vmem:[%s3838 + $0x20] sm:$0xff]
    %v3844 = vld [vmem:[%s3838 + $0x28] sm:$0xff]
    %v3845 = vld [vmem:[%s3838 + $0x30] sm:$0xff]
    %v3846 = vld [vmem:[%s3838 + $0x38] sm:$0xff]
    %v3847 = vld [vmem:[%s3838 + $0x40] sm:$0xff]
    %v3848 = vld [vmem:[%s3838 + $0x48] sm:$0xff]
    %v3849 = vld [vmem:[%s3838 + $0x50] sm:$0xff]
    %v3850 = vld [vmem:[%s3838 + $0x58] sm:$0xff]
    %v3852 = vsel %vm685, %v3837, 0
    %3854 = vmatprep.subr.mxu0 0.0
    %3855 = vmatpush1.msra.mxu0 0.0
    %3856 = vmatprep.subr.mxu0 0.0
    %3857 = vmatpush1.msra.mxu0 0.0
    %3858 = vmatprep.subr.mxu0 0.0
    %3859 = vmatpush1.msra.mxu0 0.0
    %3860 = vmatprep.subr.mxu0 0.0
    %3861 = vmatpush1.msra.mxu0 0.0
    %3862 = vmatprep.subr.mxu0 0.0
    %3863 = vmatpush1.msra.mxu0 0.0
    %3864 = vmatprep.subr.mxu0 0.0
    %3865 = vmatpush1.msra.mxu0 0.0
    %3866 = vmatprep.subr.mxu0 0.0
    %3867 = vmatpush1.msra.mxu0 0.0
    %3868 = vmatprep.subr.mxu0 0.0
    %3869 = vmatpush1.msra.mxu0 0.0
    %3870 = vmatprep.subr.mxu0 0.0
    %3871 = vmatpush1.msra.mxu0 0.0
    %3872 = vmatprep.subr.mxu0 0.0
    %3873 = vmatpush1.msra.mxu0 0.0
    %3874 = vmatprep.subr.mxu0 0.0
    %3875 = vmatpush1.msra.mxu0 0.0
    %3876 = vmatprep.subr.mxu0 0.0
    %3877 = vmatpush1.msra.mxu0 0.0
    %3878 = vmatprep.subr.mxu0 %v3849
    %3879 = vmatpush1.msra.mxu0 %v3848
    %3880 = vmatprep.subr.mxu0 %v3846
    %3881 = vmatpush1.msra.mxu0 %v3845
    %3882 = vmatprep.subr.mxu0 %v3843
    %3883 = vmatpush1.msra.mxu0 %v3842
    %3884 = vmatprep.subr.mxu0 %v3840
    %3885 = vmatpush1.msra.mxu0 %v3839
    %3886 = vmatprep.subr.mxu0 0.0
    %3887 = vmatpush2.msra.mxu0 0.0
    %3888 = vmatprep.subr.mxu0 0.0
    %3889 = vmatpush2.msra.mxu0 0.0
    %3890 = vmatprep.subr.mxu0 0.0
    %3891 = vmatpush2.msra.mxu0 0.0
    %3892 = vmatprep.subr.mxu0 0.0
    %3893 = vmatpush2.msra.mxu0 0.0
    %3894 = vmatprep.subr.mxu0 0.0
    %3895 = vmatpush2.msra.mxu0 0.0
    %3896 = vmatprep.subr.mxu0 0.0
    %3897 = vmatpush2.msra.mxu0 0.0
    %3898 = vmatprep.subr.mxu0 0.0
    %3899 = vmatpush2.msra.mxu0 0.0
    %3900 = vmatprep.subr.mxu0 0.0
    %3901 = vmatpush2.msra.mxu0 0.0
    %3902 = vmatprep.subr.mxu0 0.0
    %3903 = vmatpush2.msra.mxu0 0.0
    %3904 = vmatprep.subr.mxu0 0.0
    %3905 = vmatpush2.msra.mxu0 0.0
    %3906 = vmatprep.subr.mxu0 0.0
    %3907 = vmatpush2.msra.mxu0 0.0
    %3908 = vmatprep.subr.mxu0 0.0
    %3909 = vmatpush2.msra.mxu0 0.0
    %3910 = vmatprep.subr.mxu0 0.0
    %3911 = vmatpush2.msra.mxu0 0.0
    %3912 = vmatprep.subr.mxu0 0.0
    %3913 = vmatpush2.msra.mxu0 0.0
    %3914 = vmatprep.subr.mxu0 0.0
    %3915 = vmatpush2.msra.mxu0 0.0
    %3916 = vmatprep.subr.mxu0 0.0
    %3917 = vmatpush2.msra.mxu0 0.0
    %3918 = vmatprep.mubr.f32.mxu0 0.0
    %3919 = vmatmul.mubr.f32.gmra.mxu0 %v3852
    %v3920 = vpop.f32.mrf.mxu0
    %v3921 = vadd.f32 0.0, %v3920
    %v3922 = vpop.f32.mrf.mxu0
    %v3923 = vadd.f32 0.0, %v3922
    %3924 = vdwg.mxu0
    %3925 = vmatprep.subr.mxu0 0.0
    %3926 = vmatpush1.msra.mxu0 0.0
    %3927 = vmatprep.subr.mxu0 0.0
    %3928 = vmatpush1.msra.mxu0 0.0
    %3929 = vmatprep.subr.mxu0 0.0
    %3930 = vmatpush1.msra.mxu0 0.0
    %3931 = vmatprep.subr.mxu0 0.0
    %3932 = vmatpush1.msra.mxu0 0.0
    %3933 = vmatprep.subr.mxu0 0.0
    %3934 = vmatpush1.msra.mxu0 0.0
    %3935 = vmatprep.subr.mxu0 0.0
    %3936 = vmatpush1.msra.mxu0 0.0
    %3937 = vmatprep.subr.mxu0 0.0
    %3938 = vmatpush1.msra.mxu0 0.0
    %3939 = vmatprep.subr.mxu0 0.0
    %3940 = vmatpush1.msra.mxu0 0.0
    %3941 = vmatprep.subr.mxu0 0.0
    %3942 = vmatpush1.msra.mxu0 0.0
    %3943 = vmatprep.subr.mxu0 0.0
    %3944 = vmatpush1.msra.mxu0 0.0
    %3945 = vmatprep.subr.mxu0 0.0
    %3946 = vmatpush1.msra.mxu0 0.0
    %3947 = vmatprep.subr.mxu0 0.0
    %3948 = vmatpush1.msra.mxu0 0.0
    %3949 = vmatprep.subr.mxu0 0.0
    %3950 = vmatpush1.msra.mxu0 %v3850
    %3951 = vmatprep.subr.mxu0 0.0
    %3952 = vmatpush1.msra.mxu0 %v3847
    %3953 = vmatprep.subr.mxu0 0.0
    %3954 = vmatpush1.msra.mxu0 %v3844
    %3955 = vmatprep.subr.mxu0 0.0
    %3956 = vmatpush1.msra.mxu0 %v3841
    %3957 = vmatprep.subr.mxu0 0.0
    %3958 = vmatpush2.msra.mxu0 0.0
    %3959 = vmatprep.subr.mxu0 0.0
    %3960 = vmatpush2.msra.mxu0 0.0
    %3961 = vmatprep.subr.mxu0 0.0
    %3962 = vmatpush2.msra.mxu0 0.0
    %3963 = vmatprep.subr.mxu0 0.0
    %3964 = vmatpush2.msra.mxu0 0.0
    %3965 = vmatprep.subr.mxu0 0.0
    %3966 = vmatpush2.msra.mxu0 0.0
    %3967 = vmatprep.subr.mxu0 0.0
    %3968 = vmatpush2.msra.mxu0 0.0
    %3969 = vmatprep.subr.mxu0 0.0
    %3970 = vmatpush2.msra.mxu0 0.0
    %3971 = vmatprep.subr.mxu0 0.0
    %3972 = vmatpush2.msra.mxu0 0.0
    %3973 = vmatprep.subr.mxu0 0.0
    %3974 = vmatpush2.msra.mxu0 0.0
    %3975 = vmatprep.subr.mxu0 0.0
    %3976 = vmatpush2.msra.mxu0 0.0
    %3977 = vmatprep.subr.mxu0 0.0
    %3978 = vmatpush2.msra.mxu0 0.0
    %3979 = vmatprep.subr.mxu0 0.0
    %3980 = vmatpush2.msra.mxu0 0.0
    %3981 = vmatprep.subr.mxu0 0.0
    %3982 = vmatpush2.msra.mxu0 0.0
    %3983 = vmatprep.subr.mxu0 0.0
    %3984 = vmatpush2.msra.mxu0 0.0
    %3985 = vmatprep.subr.mxu0 0.0
    %3986 = vmatpush2.msra.mxu0 0.0
    %3987 = vmatprep.subr.mxu0 0.0
    %3988 = vmatpush2.msra.mxu0 0.0
    %3989 = vmatprep.mubr.f32.mxu0 0.0
    %3990 = vmatmul.mubr.f32.gmra.mxu0 %v3852
    %v3991 = vpop.f32.mrf.mxu0
    %v3992 = vadd.f32 0.0, %v3991
    %v3993 = vpop.f32.mrf.mxu0
    %3994 = vdwg.mxu0
    %v3995 = vadd.f32 %v3827, %v3921
    %v3996 = vadd.f32 %v3828, %v3923
    %v3997 = vadd.f32 %v3829, %v3992
    %v3999 = vrot.slane %v639, 2
    %v4001 = vmax.f32 %v639, %v3999
    %v4003 = vrot.slane %v4001, 4
    %v4005 = vmax.f32 %v4001, %v4003
    %s4006 = scalar_lea.vmem %s3, 1920
    %v4007 = vld [vmem:[%s4006] sm:$0xff]
    %v4008 = vld [vmem:[%s4006 + $0x8] sm:$0xff]
    %v4009 = vld [vmem:[%s4006 + $0x10] sm:$0xff]
    %v4010 = vld [vmem:[%s4006 + $0x18] sm:$0xff]
    %v4011 = vld [vmem:[%s4006 + $0x20] sm:$0xff]
    %v4012 = vld [vmem:[%s4006 + $0x28] sm:$0xff]
    %v4013 = vld [vmem:[%s4006 + $0x30] sm:$0xff]
    %v4014 = vld [vmem:[%s4006 + $0x38] sm:$0xff]
    %v4015 = vld [vmem:[%s4006 + $0x40] sm:$0xff]
    %v4016 = vld [vmem:[%s4006 + $0x48] sm:$0xff]
    %v4017 = vld [vmem:[%s4006 + $0x50] sm:$0xff]
    %v4018 = vld [vmem:[%s4006 + $0x58] sm:$0xff]
    %v4020 = vsel %vm685, %v4005, 0
    %4022 = vmatprep.subr.mxu0 0.0
    %4023 = vmatpush1.msra.mxu0 0.0
    %4024 = vmatprep.subr.mxu0 0.0
    %4025 = vmatpush1.msra.mxu0 0.0
    %4026 = vmatprep.subr.mxu0 0.0
    %4027 = vmatpush1.msra.mxu0 0.0
    %4028 = vmatprep.subr.mxu0 0.0
    %4029 = vmatpush1.msra.mxu0 0.0
    %4030 = vmatprep.subr.mxu0 0.0
    %4031 = vmatpush1.msra.mxu0 0.0
    %4032 = vmatprep.subr.mxu0 0.0
    %4033 = vmatpush1.msra.mxu0 0.0
    %4034 = vmatprep.subr.mxu0 0.0
    %4035 = vmatpush1.msra.mxu0 0.0
    %4036 = vmatprep.subr.mxu0 0.0
    %4037 = vmatpush1.msra.mxu0 0.0
    %4038 = vmatprep.subr.mxu0 0.0
    %4039 = vmatpush1.msra.mxu0 0.0
    %4040 = vmatprep.subr.mxu0 0.0
    %4041 = vmatpush1.msra.mxu0 0.0
    %4042 = vmatprep.subr.mxu0 0.0
    %4043 = vmatpush1.msra.mxu0 0.0
    %4044 = vmatprep.subr.mxu0 0.0
    %4045 = vmatpush1.msra.mxu0 0.0
    %4046 = vmatprep.subr.mxu0 %v4017
    %4047 = vmatpush1.msra.mxu0 %v4016
    %4048 = vmatprep.subr.mxu0 %v4014
    %4049 = vmatpush1.msra.mxu0 %v4013
    %4050 = vmatprep.subr.mxu0 %v4011
    %4051 = vmatpush1.msra.mxu0 %v4010
    %4052 = vmatprep.subr.mxu0 %v4008
    %4053 = vmatpush1.msra.mxu0 %v4007
    %4054 = vmatprep.subr.mxu0 0.0
    %4055 = vmatpush2.msra.mxu0 0.0
    %4056 = vmatprep.subr.mxu0 0.0
    %4057 = vmatpush2.msra.mxu0 0.0
    %4058 = vmatprep.subr.mxu0 0.0
    %4059 = vmatpush2.msra.mxu0 0.0
    %4060 = vmatprep.subr.mxu0 0.0
    %4061 = vmatpush2.msra.mxu0 0.0
    %4062 = vmatprep.subr.mxu0 0.0
    %4063 = vmatpush2.msra.mxu0 0.0
    %4064 = vmatprep.subr.mxu0 0.0
    %4065 = vmatpush2.msra.mxu0 0.0
    %4066 = vmatprep.subr.mxu0 0.0
    %4067 = vmatpush2.msra.mxu0 0.0
    %4068 = vmatprep.subr.mxu0 0.0
    %4069 = vmatpush2.msra.mxu0 0.0
    %4070 = vmatprep.subr.mxu0 0.0
    %4071 = vmatpush2.msra.mxu0 0.0
    %4072 = vmatprep.subr.mxu0 0.0
    %4073 = vmatpush2.msra.mxu0 0.0
    %4074 = vmatprep.subr.mxu0 0.0
    %4075 = vmatpush2.msra.mxu0 0.0
    %4076 = vmatprep.subr.mxu0 0.0
    %4077 = vmatpush2.msra.mxu0 0.0
    %4078 = vmatprep.subr.mxu0 0.0
    %4079 = vmatpush2.msra.mxu0 0.0
    %4080 = vmatprep.subr.mxu0 0.0
    %4081 = vmatpush2.msra.mxu0 0.0
    %4082 = vmatprep.subr.mxu0 0.0
    %4083 = vmatpush2.msra.mxu0 0.0
    %4084 = vmatprep.subr.mxu0 0.0
    %4085 = vmatpush2.msra.mxu0 0.0
    %4086 = vmatprep.mubr.f32.mxu0 0.0
    %4087 = vmatmul.mubr.f32.gmra.mxu0 %v4020
    %v4088 = vpop.f32.mrf.mxu0
    %v4089 = vadd.f32 0.0, %v4088
    %v4090 = vpop.f32.mrf.mxu0
    %v4091 = vadd.f32 0.0, %v4090
    %4092 = vdwg.mxu0
    %4093 = vmatprep.subr.mxu0 0.0
    %4094 = vmatpush1.msra.mxu0 0.0
    %4095 = vmatprep.subr.mxu0 0.0
    %4096 = vmatpush1.msra.mxu0 0.0
    %4097 = vmatprep.subr.mxu0 0.0
    %4098 = vmatpush1.msra.mxu0 0.0
    %4099 = vmatprep.subr.mxu0 0.0
    %4100 = vmatpush1.msra.mxu0 0.0
    %4101 = vmatprep.subr.mxu0 0.0
    %4102 = vmatpush1.msra.mxu0 0.0
    %4103 = vmatprep.subr.mxu0 0.0
    %4104 = vmatpush1.msra.mxu0 0.0
    %4105 = vmatprep.subr.mxu0 0.0
    %4106 = vmatpush1.msra.mxu0 0.0
    %4107 = vmatprep.subr.mxu0 0.0
    %4108 = vmatpush1.msra.mxu0 0.0
    %4109 = vmatprep.subr.mxu0 0.0
    %4110 = vmatpush1.msra.mxu0 0.0
    %4111 = vmatprep.subr.mxu0 0.0
    %4112 = vmatpush1.msra.mxu0 0.0
    %4113 = vmatprep.subr.mxu0 0.0
    %4114 = vmatpush1.msra.mxu0 0.0
    %4115 = vmatprep.subr.mxu0 0.0
    %4116 = vmatpush1.msra.mxu0 0.0
    %4117 = vmatprep.subr.mxu0 0.0
    %4118 = vmatpush1.msra.mxu0 %v4018
    %4119 = vmatprep.subr.mxu0 0.0
    %4120 = vmatpush1.msra.mxu0 %v4015
    %4121 = vmatprep.subr.mxu0 0.0
    %4122 = vmatpush1.msra.mxu0 %v4012
    %4123 = vmatprep.subr.mxu0 0.0
    %4124 = vmatpush1.msra.mxu0 %v4009
    %4125 = vmatprep.subr.mxu0 0.0
    %4126 = vmatpush2.msra.mxu0 0.0
    %4127 = vmatprep.subr.mxu0 0.0
    %4128 = vmatpush2.msra.mxu0 0.0
    %4129 = vmatprep.subr.mxu0 0.0
    %4130 = vmatpush2.msra.mxu0 0.0
    %4131 = vmatprep.subr.mxu0 0.0
    %4132 = vmatpush2.msra.mxu0 0.0
    %4133 = vmatprep.subr.mxu0 0.0
    %4134 = vmatpush2.msra.mxu0 0.0
    %4135 = vmatprep.subr.mxu0 0.0
    %4136 = vmatpush2.msra.mxu0 0.0
    %4137 = vmatprep.subr.mxu0 0.0
    %4138 = vmatpush2.msra.mxu0 0.0
    %4139 = vmatprep.subr.mxu0 0.0
    %4140 = vmatpush2.msra.mxu0 0.0
    %4141 = vmatprep.subr.mxu0 0.0
    %4142 = vmatpush2.msra.mxu0 0.0
    %4143 = vmatprep.subr.mxu0 0.0
    %4144 = vmatpush2.msra.mxu0 0.0
    %4145 = vmatprep.subr.mxu0 0.0
    %4146 = vmatpush2.msra.mxu0 0.0
    %4147 = vmatprep.subr.mxu0 0.0
    %4148 = vmatpush2.msra.mxu0 0.0
    %4149 = vmatprep.subr.mxu0 0.0
    %4150 = vmatpush2.msra.mxu0 0.0
    %4151 = vmatprep.subr.mxu0 0.0
    %4152 = vmatpush2.msra.mxu0 0.0
    %4153 = vmatprep.subr.mxu0 0.0
    %4154 = vmatpush2.msra.mxu0 0.0
    %4155 = vmatprep.subr.mxu0 0.0
    %4156 = vmatpush2.msra.mxu0 0.0
    %4157 = vmatprep.mubr.f32.mxu0 0.0
    %4158 = vmatmul.mubr.f32.gmra.mxu0 %v4020
    %v4159 = vpop.f32.mrf.mxu0
    %v4160 = vadd.f32 0.0, %v4159
    %v4161 = vpop.f32.mrf.mxu0
    %4162 = vdwg.mxu0
    %v4163 = vadd.f32 %v3995, %v4089
    %v4164 = vadd.f32 %v3996, %v4091
    %v4165 = vadd.f32 %v3997, %v4160
    %v4167 = vrot.slane %v640, 2
    %v4169 = vmax.f32 %v640, %v4167
    %v4171 = vrot.slane %v4169, 4
    %v4173 = vmax.f32 %v4169, %v4171
    %s4174 = scalar_lea.vmem %s3, 2016
    %v4175 = vld [vmem:[%s4174] sm:$0xff]
    %v4176 = vld [vmem:[%s4174 + $0x8] sm:$0xff]
    %v4177 = vld [vmem:[%s4174 + $0x10] sm:$0xff]
    %v4178 = vld [vmem:[%s4174 + $0x18] sm:$0xff]
    %v4179 = vld [vmem:[%s4174 + $0x20] sm:$0xff]
    %v4180 = vld [vmem:[%s4174 + $0x28] sm:$0xff]
    %v4181 = vld [vmem:[%s4174 + $0x30] sm:$0xff]
    %v4182 = vld [vmem:[%s4174 + $0x38] sm:$0xff]
    %v4183 = vld [vmem:[%s4174 + $0x40] sm:$0xff]
    %v4184 = vld [vmem:[%s4174 + $0x48] sm:$0xff]
    %v4185 = vld [vmem:[%s4174 + $0x50] sm:$0xff]
    %v4186 = vld [vmem:[%s4174 + $0x58] sm:$0xff]
    %v4188 = vsel %vm685, %v4173, 0
    %4190 = vmatprep.subr.mxu0 0.0
    %4191 = vmatpush1.msra.mxu0 0.0
    %4192 = vmatprep.subr.mxu0 0.0
    %4193 = vmatpush1.msra.mxu0 0.0
    %4194 = vmatprep.subr.mxu0 0.0
    %4195 = vmatpush1.msra.mxu0 0.0
    %4196 = vmatprep.subr.mxu0 0.0
    %4197 = vmatpush1.msra.mxu0 0.0
    %4198 = vmatprep.subr.mxu0 0.0
    %4199 = vmatpush1.msra.mxu0 0.0
    %4200 = vmatprep.subr.mxu0 0.0
    %4201 = vmatpush1.msra.mxu0 0.0
    %4202 = vmatprep.subr.mxu0 0.0
    %4203 = vmatpush1.msra.mxu0 0.0
    %4204 = vmatprep.subr.mxu0 0.0
    %4205 = vmatpush1.msra.mxu0 0.0
    %4206 = vmatprep.subr.mxu0 0.0
    %4207 = vmatpush1.msra.mxu0 0.0
    %4208 = vmatprep.subr.mxu0 0.0
    %4209 = vmatpush1.msra.mxu0 0.0
    %4210 = vmatprep.subr.mxu0 0.0
    %4211 = vmatpush1.msra.mxu0 0.0
    %4212 = vmatprep.subr.mxu0 0.0
    %4213 = vmatpush1.msra.mxu0 0.0
    %4214 = vmatprep.subr.mxu0 %v4185
    %4215 = vmatpush1.msra.mxu0 %v4184
    %4216 = vmatprep.subr.mxu0 %v4182
    %4217 = vmatpush1.msra.mxu0 %v4181
    %4218 = vmatprep.subr.mxu0 %v4179
    %4219 = vmatpush1.msra.mxu0 %v4178
    %4220 = vmatprep.subr.mxu0 %v4176
    %4221 = vmatpush1.msra.mxu0 %v4175
    %4222 = vmatprep.subr.mxu0 0.0
    %4223 = vmatpush2.msra.mxu0 0.0
    %4224 = vmatprep.subr.mxu0 0.0
    %4225 = vmatpush2.msra.mxu0 0.0
    %4226 = vmatprep.subr.mxu0 0.0
    %4227 = vmatpush2.msra.mxu0 0.0
    %4228 = vmatprep.subr.mxu0 0.0
    %4229 = vmatpush2.msra.mxu0 0.0
    %4230 = vmatprep.subr.mxu0 0.0
    %4231 = vmatpush2.msra.mxu0 0.0
    %4232 = vmatprep.subr.mxu0 0.0
    %4233 = vmatpush2.msra.mxu0 0.0
    %4234 = vmatprep.subr.mxu0 0.0
    %4235 = vmatpush2.msra.mxu0 0.0
    %4236 = vmatprep.subr.mxu0 0.0
    %4237 = vmatpush2.msra.mxu0 0.0
    %4238 = vmatprep.subr.mxu0 0.0
    %4239 = vmatpush2.msra.mxu0 0.0
    %4240 = vmatprep.subr.mxu0 0.0
    %4241 = vmatpush2.msra.mxu0 0.0
    %4242 = vmatprep.subr.mxu0 0.0
    %4243 = vmatpush2.msra.mxu0 0.0
    %4244 = vmatprep.subr.mxu0 0.0
    %4245 = vmatpush2.msra.mxu0 0.0
    %4246 = vmatprep.subr.mxu0 0.0
    %4247 = vmatpush2.msra.mxu0 0.0
    %4248 = vmatprep.subr.mxu0 0.0
    %4249 = vmatpush2.msra.mxu0 0.0
    %4250 = vmatprep.subr.mxu0 0.0
    %4251 = vmatpush2.msra.mxu0 0.0
    %4252 = vmatprep.subr.mxu0 0.0
    %4253 = vmatpush2.msra.mxu0 0.0
    %4254 = vmatprep.mubr.f32.mxu0 0.0
    %4255 = vmatmul.mubr.f32.gmra.mxu0 %v4188
    %v4256 = vpop.f32.mrf.mxu0
    %v4257 = vadd.f32 0.0, %v4256
    %v4258 = vpop.f32.mrf.mxu0
    %v4259 = vadd.f32 0.0, %v4258
    %4260 = vdwg.mxu0
    %4261 = vmatprep.subr.mxu0 0.0
    %4262 = vmatpush1.msra.mxu0 0.0
    %4263 = vmatprep.subr.mxu0 0.0
    %4264 = vmatpush1.msra.mxu0 0.0
    %4265 = vmatprep.subr.mxu0 0.0
    %4266 = vmatpush1.msra.mxu0 0.0
    %4267 = vmatprep.subr.mxu0 0.0
    %4268 = vmatpush1.msra.mxu0 0.0
    %4269 = vmatprep.subr.mxu0 0.0
    %4270 = vmatpush1.msra.mxu0 0.0
    %4271 = vmatprep.subr.mxu0 0.0
    %4272 = vmatpush1.msra.mxu0 0.0
    %4273 = vmatprep.subr.mxu0 0.0
    %4274 = vmatpush1.msra.mxu0 0.0
    %4275 = vmatprep.subr.mxu0 0.0
    %4276 = vmatpush1.msra.mxu0 0.0
    %4277 = vmatprep.subr.mxu0 0.0
    %4278 = vmatpush1.msra.mxu0 0.0
    %4279 = vmatprep.subr.mxu0 0.0
    %4280 = vmatpush1.msra.mxu0 0.0
    %4281 = vmatprep.subr.mxu0 0.0
    %4282 = vmatpush1.msra.mxu0 0.0
    %4283 = vmatprep.subr.mxu0 0.0
    %4284 = vmatpush1.msra.mxu0 0.0
    %4285 = vmatprep.subr.mxu0 0.0
    %4286 = vmatpush1.msra.mxu0 %v4186
    %4287 = vmatprep.subr.mxu0 0.0
    %4288 = vmatpush1.msra.mxu0 %v4183
    %4289 = vmatprep.subr.mxu0 0.0
    %4290 = vmatpush1.msra.mxu0 %v4180
    %4291 = vmatprep.subr.mxu0 0.0
    %4292 = vmatpush1.msra.mxu0 %v4177
    %4293 = vmatprep.subr.mxu0 0.0
    %4294 = vmatpush2.msra.mxu0 0.0
    %4295 = vmatprep.subr.mxu0 0.0
    %4296 = vmatpush2.msra.mxu0 0.0
    %4297 = vmatprep.subr.mxu0 0.0
    %4298 = vmatpush2.msra.mxu0 0.0
    %4299 = vmatprep.subr.mxu0 0.0
    %4300 = vmatpush2.msra.mxu0 0.0
    %4301 = vmatprep.subr.mxu0 0.0
    %4302 = vmatpush2.msra.mxu0 0.0
    %4303 = vmatprep.subr.mxu0 0.0
    %4304 = vmatpush2.msra.mxu0 0.0
    %4305 = vmatprep.subr.mxu0 0.0
    %4306 = vmatpush2.msra.mxu0 0.0
    %4307 = vmatprep.subr.mxu0 0.0
    %4308 = vmatpush2.msra.mxu0 0.0
    %4309 = vmatprep.subr.mxu0 0.0
    %4310 = vmatpush2.msra.mxu0 0.0
    %4311 = vmatprep.subr.mxu0 0.0
    %4312 = vmatpush2.msra.mxu0 0.0
    %4313 = vmatprep.subr.mxu0 0.0
    %4314 = vmatpush2.msra.mxu0 0.0
    %4315 = vmatprep.subr.mxu0 0.0
    %4316 = vmatpush2.msra.mxu0 0.0
    %4317 = vmatprep.subr.mxu0 0.0
    %4318 = vmatpush2.msra.mxu0 0.0
    %4319 = vmatprep.subr.mxu0 0.0
    %4320 = vmatpush2.msra.mxu0 0.0
    %4321 = vmatprep.subr.mxu0 0.0
    %4322 = vmatpush2.msra.mxu0 0.0
    %4323 = vmatprep.subr.mxu0 0.0
    %4324 = vmatpush2.msra.mxu0 0.0
    %4325 = vmatprep.mubr.f32.mxu0 0.0
    %4326 = vmatmul.mubr.f32.gmra.mxu0 %v4188
    %v4327 = vpop.f32.mrf.mxu0
    %v4328 = vadd.f32 0.0, %v4327
    %v4329 = vpop.f32.mrf.mxu0
    %4330 = vdwg.mxu0
    %v4331 = vadd.f32 %v4163, %v4257
    %v4332 = vadd.f32 %v4164, %v4259
    %v4333 = vadd.f32 %v4165, %v4328
    %v4335 = vrot.slane %v641, 2
    %v4337 = vmax.f32 %v641, %v4335
    %v4339 = vrot.slane %v4337, 4
    %v4341 = vmax.f32 %v4337, %v4339
    %s4342 = scalar_lea.vmem %s3, 2112
    %v4343 = vld [vmem:[%s4342] sm:$0xff]
    %v4344 = vld [vmem:[%s4342 + $0x8] sm:$0xff]
    %v4345 = vld [vmem:[%s4342 + $0x10] sm:$0xff]
    %v4346 = vld [vmem:[%s4342 + $0x18] sm:$0xff]
    %v4347 = vld [vmem:[%s4342 + $0x20] sm:$0xff]
    %v4348 = vld [vmem:[%s4342 + $0x28] sm:$0xff]
    %v4349 = vld [vmem:[%s4342 + $0x30] sm:$0xff]
    %v4350 = vld [vmem:[%s4342 + $0x38] sm:$0xff]
    %v4351 = vld [vmem:[%s4342 + $0x40] sm:$0xff]
    %v4352 = vld [vmem:[%s4342 + $0x48] sm:$0xff]
    %v4353 = vld [vmem:[%s4342 + $0x50] sm:$0xff]
    %v4354 = vld [vmem:[%s4342 + $0x58] sm:$0xff]
    %v4356 = vsel %vm685, %v4341, 0
    %4358 = vmatprep.subr.mxu0 0.0
    %4359 = vmatpush1.msra.mxu0 0.0
    %4360 = vmatprep.subr.mxu0 0.0
    %4361 = vmatpush1.msra.mxu0 0.0
    %4362 = vmatprep.subr.mxu0 0.0
    %4363 = vmatpush1.msra.mxu0 0.0
    %4364 = vmatprep.subr.mxu0 0.0
    %4365 = vmatpush1.msra.mxu0 0.0
    %4366 = vmatprep.subr.mxu0 0.0
    %4367 = vmatpush1.msra.mxu0 0.0
    %4368 = vmatprep.subr.mxu0 0.0
    %4369 = vmatpush1.msra.mxu0 0.0
    %4370 = vmatprep.subr.mxu0 0.0
    %4371 = vmatpush1.msra.mxu0 0.0
    %4372 = vmatprep.subr.mxu0 0.0
    %4373 = vmatpush1.msra.mxu0 0.0
    %4374 = vmatprep.subr.mxu0 0.0
    %4375 = vmatpush1.msra.mxu0 0.0
    %4376 = vmatprep.subr.mxu0 0.0
    %4377 = vmatpush1.msra.mxu0 0.0
    %4378 = vmatprep.subr.mxu0 0.0
    %4379 = vmatpush1.msra.mxu0 0.0
    %4380 = vmatprep.subr.mxu0 0.0
    %4381 = vmatpush1.msra.mxu0 0.0
    %4382 = vmatprep.subr.mxu0 %v4353
    %4383 = vmatpush1.msra.mxu0 %v4352
    %4384 = vmatprep.subr.mxu0 %v4350
    %4385 = vmatpush1.msra.mxu0 %v4349
    %4386 = vmatprep.subr.mxu0 %v4347
    %4387 = vmatpush1.msra.mxu0 %v4346
    %4388 = vmatprep.subr.mxu0 %v4344
    %4389 = vmatpush1.msra.mxu0 %v4343
    %4390 = vmatprep.subr.mxu0 0.0
    %4391 = vmatpush2.msra.mxu0 0.0
    %4392 = vmatprep.subr.mxu0 0.0
    %4393 = vmatpush2.msra.mxu0 0.0
    %4394 = vmatprep.subr.mxu0 0.0
    %4395 = vmatpush2.msra.mxu0 0.0
    %4396 = vmatprep.subr.mxu0 0.0
    %4397 = vmatpush2.msra.mxu0 0.0
    %4398 = vmatprep.subr.mxu0 0.0
    %4399 = vmatpush2.msra.mxu0 0.0
    %4400 = vmatprep.subr.mxu0 0.0
    %4401 = vmatpush2.msra.mxu0 0.0
    %4402 = vmatprep.subr.mxu0 0.0
    %4403 = vmatpush2.msra.mxu0 0.0
    %4404 = vmatprep.subr.mxu0 0.0
    %4405 = vmatpush2.msra.mxu0 0.0
    %4406 = vmatprep.subr.mxu0 0.0
    %4407 = vmatpush2.msra.mxu0 0.0
    %4408 = vmatprep.subr.mxu0 0.0
    %4409 = vmatpush2.msra.mxu0 0.0
    %4410 = vmatprep.subr.mxu0 0.0
    %4411 = vmatpush2.msra.mxu0 0.0
    %4412 = vmatprep.subr.mxu0 0.0
    %4413 = vmatpush2.msra.mxu0 0.0
    %4414 = vmatprep.subr.mxu0 0.0
    %4415 = vmatpush2.msra.mxu0 0.0
    %4416 = vmatprep.subr.mxu0 0.0
    %4417 = vmatpush2.msra.mxu0 0.0
    %4418 = vmatprep.subr.mxu0 0.0
    %4419 = vmatpush2.msra.mxu0 0.0
    %4420 = vmatprep.subr.mxu0 0.0
    %4421 = vmatpush2.msra.mxu0 0.0
    %4422 = vmatprep.mubr.f32.mxu0 0.0
    %4423 = vmatmul.mubr.f32.gmra.mxu0 %v4356
    %v4424 = vpop.f32.mrf.mxu0
    %v4425 = vadd.f32 0.0, %v4424
    %v4426 = vpop.f32.mrf.mxu0
    %v4427 = vadd.f32 0.0, %v4426
    %4428 = vdwg.mxu0
    %4429 = vmatprep.subr.mxu0 0.0
    %4430 = vmatpush1.msra.mxu0 0.0
    %4431 = vmatprep.subr.mxu0 0.0
    %4432 = vmatpush1.msra.mxu0 0.0
    %4433 = vmatprep.subr.mxu0 0.0
    %4434 = vmatpush1.msra.mxu0 0.0
    %4435 = vmatprep.subr.mxu0 0.0
    %4436 = vmatpush1.msra.mxu0 0.0
    %4437 = vmatprep.subr.mxu0 0.0
    %4438 = vmatpush1.msra.mxu0 0.0
    %4439 = vmatprep.subr.mxu0 0.0
    %4440 = vmatpush1.msra.mxu0 0.0
    %4441 = vmatprep.subr.mxu0 0.0
    %4442 = vmatpush1.msra.mxu0 0.0
    %4443 = vmatprep.subr.mxu0 0.0
    %4444 = vmatpush1.msra.mxu0 0.0
    %4445 = vmatprep.subr.mxu0 0.0
    %4446 = vmatpush1.msra.mxu0 0.0
    %4447 = vmatprep.subr.mxu0 0.0
    %4448 = vmatpush1.msra.mxu0 0.0
    %4449 = vmatprep.subr.mxu0 0.0
    %4450 = vmatpush1.msra.mxu0 0.0
    %4451 = vmatprep.subr.mxu0 0.0
    %4452 = vmatpush1.msra.mxu0 0.0
    %4453 = vmatprep.subr.mxu0 0.0
    %4454 = vmatpush1.msra.mxu0 %v4354
    %4455 = vmatprep.subr.mxu0 0.0
    %4456 = vmatpush1.msra.mxu0 %v4351
    %4457 = vmatprep.subr.mxu0 0.0
    %4458 = vmatpush1.msra.mxu0 %v4348
    %4459 = vmatprep.subr.mxu0 0.0
    %4460 = vmatpush1.msra.mxu0 %v4345
    %4461 = vmatprep.subr.mxu0 0.0
    %4462 = vmatpush2.msra.mxu0 0.0
    %4463 = vmatprep.subr.mxu0 0.0
    %4464 = vmatpush2.msra.mxu0 0.0
    %4465 = vmatprep.subr.mxu0 0.0
    %4466 = vmatpush2.msra.mxu0 0.0
    %4467 = vmatprep.subr.mxu0 0.0
    %4468 = vmatpush2.msra.mxu0 0.0
    %4469 = vmatprep.subr.mxu0 0.0
    %4470 = vmatpush2.msra.mxu0 0.0
    %4471 = vmatprep.subr.mxu0 0.0
    %4472 = vmatpush2.msra.mxu0 0.0
    %4473 = vmatprep.subr.mxu0 0.0
    %4474 = vmatpush2.msra.mxu0 0.0
    %4475 = vmatprep.subr.mxu0 0.0
    %4476 = vmatpush2.msra.mxu0 0.0
    %4477 = vmatprep.subr.mxu0 0.0
    %4478 = vmatpush2.msra.mxu0 0.0
    %4479 = vmatprep.subr.mxu0 0.0
    %4480 = vmatpush2.msra.mxu0 0.0
    %4481 = vmatprep.subr.mxu0 0.0
    %4482 = vmatpush2.msra.mxu0 0.0
    %4483 = vmatprep.subr.mxu0 0.0
    %4484 = vmatpush2.msra.mxu0 0.0
    %4485 = vmatprep.subr.mxu0 0.0
    %4486 = vmatpush2.msra.mxu0 0.0
    %4487 = vmatprep.subr.mxu0 0.0
    %4488 = vmatpush2.msra.mxu0 0.0
    %4489 = vmatprep.subr.mxu0 0.0
    %4490 = vmatpush2.msra.mxu0 0.0
    %4491 = vmatprep.subr.mxu0 0.0
    %4492 = vmatpush2.msra.mxu0 0.0
    %4493 = vmatprep.mubr.f32.mxu0 0.0
    %4494 = vmatmul.mubr.f32.gmra.mxu0 %v4356
    %v4495 = vpop.f32.mrf.mxu0
    %v4496 = vadd.f32 0.0, %v4495
    %v4497 = vpop.f32.mrf.mxu0
    %4498 = vdwg.mxu0
    %v4499 = vadd.f32 %v4331, %v4425
    %v4500 = vadd.f32 %v4332, %v4427
    %v4501 = vadd.f32 %v4333, %v4496
    %v4503 = vrot.slane %v642, 2
    %v4505 = vmax.f32 %v642, %v4503
    %v4507 = vrot.slane %v4505, 4
    %v4509 = vmax.f32 %v4505, %v4507
    %s4510 = scalar_lea.vmem %s3, 2208
    %v4511 = vld [vmem:[%s4510] sm:$0xff]
    %v4512 = vld [vmem:[%s4510 + $0x8] sm:$0xff]
    %v4513 = vld [vmem:[%s4510 + $0x10] sm:$0xff]
    %v4514 = vld [vmem:[%s4510 + $0x18] sm:$0xff]
    %v4515 = vld [vmem:[%s4510 + $0x20] sm:$0xff]
    %v4516 = vld [vmem:[%s4510 + $0x28] sm:$0xff]
    %v4517 = vld [vmem:[%s4510 + $0x30] sm:$0xff]
    %v4518 = vld [vmem:[%s4510 + $0x38] sm:$0xff]
    %v4519 = vld [vmem:[%s4510 + $0x40] sm:$0xff]
    %v4520 = vld [vmem:[%s4510 + $0x48] sm:$0xff]
    %v4521 = vld [vmem:[%s4510 + $0x50] sm:$0xff]
    %v4522 = vld [vmem:[%s4510 + $0x58] sm:$0xff]
    %v4524 = vsel %vm685, %v4509, 0
    %4526 = vmatprep.subr.mxu0 0.0
    %4527 = vmatpush1.msra.mxu0 0.0
    %4528 = vmatprep.subr.mxu0 0.0
    %4529 = vmatpush1.msra.mxu0 0.0
    %4530 = vmatprep.subr.mxu0 0.0
    %4531 = vmatpush1.msra.mxu0 0.0
    %4532 = vmatprep.subr.mxu0 0.0
    %4533 = vmatpush1.msra.mxu0 0.0
    %4534 = vmatprep.subr.mxu0 0.0
    %4535 = vmatpush1.msra.mxu0 0.0
    %4536 = vmatprep.subr.mxu0 0.0
    %4537 = vmatpush1.msra.mxu0 0.0
    %4538 = vmatprep.subr.mxu0 0.0
    %4539 = vmatpush1.msra.mxu0 0.0
    %4540 = vmatprep.subr.mxu0 0.0
    %4541 = vmatpush1.msra.mxu0 0.0
    %4542 = vmatprep.subr.mxu0 0.0
    %4543 = vmatpush1.msra.mxu0 0.0
    %4544 = vmatprep.subr.mxu0 0.0
    %4545 = vmatpush1.msra.mxu0 0.0
    %4546 = vmatprep.subr.mxu0 0.0
    %4547 = vmatpush1.msra.mxu0 0.0
    %4548 = vmatprep.subr.mxu0 0.0
    %4549 = vmatpush1.msra.mxu0 0.0
    %4550 = vmatprep.subr.mxu0 %v4521
    %4551 = vmatpush1.msra.mxu0 %v4520
    %4552 = vmatprep.subr.mxu0 %v4518
    %4553 = vmatpush1.msra.mxu0 %v4517
    %4554 = vmatprep.subr.mxu0 %v4515
    %4555 = vmatpush1.msra.mxu0 %v4514
    %4556 = vmatprep.subr.mxu0 %v4512
    %4557 = vmatpush1.msra.mxu0 %v4511
    %4558 = vmatprep.subr.mxu0 0.0
    %4559 = vmatpush2.msra.mxu0 0.0
    %4560 = vmatprep.subr.mxu0 0.0
    %4561 = vmatpush2.msra.mxu0 0.0
    %4562 = vmatprep.subr.mxu0 0.0
    %4563 = vmatpush2.msra.mxu0 0.0
    %4564 = vmatprep.subr.mxu0 0.0
    %4565 = vmatpush2.msra.mxu0 0.0
    %4566 = vmatprep.subr.mxu0 0.0
    %4567 = vmatpush2.msra.mxu0 0.0
    %4568 = vmatprep.subr.mxu0 0.0
    %4569 = vmatpush2.msra.mxu0 0.0
    %4570 = vmatprep.subr.mxu0 0.0
    %4571 = vmatpush2.msra.mxu0 0.0
    %4572 = vmatprep.subr.mxu0 0.0
    %4573 = vmatpush2.msra.mxu0 0.0
    %4574 = vmatprep.subr.mxu0 0.0
    %4575 = vmatpush2.msra.mxu0 0.0
    %4576 = vmatprep.subr.mxu0 0.0
    %4577 = vmatpush2.msra.mxu0 0.0
    %4578 = vmatprep.subr.mxu0 0.0
    %4579 = vmatpush2.msra.mxu0 0.0
    %4580 = vmatprep.subr.mxu0 0.0
    %4581 = vmatpush2.msra.mxu0 0.0
    %4582 = vmatprep.subr.mxu0 0.0
    %4583 = vmatpush2.msra.mxu0 0.0
    %4584 = vmatprep.subr.mxu0 0.0
    %4585 = vmatpush2.msra.mxu0 0.0
    %4586 = vmatprep.subr.mxu0 0.0
    %4587 = vmatpush2.msra.mxu0 0.0
    %4588 = vmatprep.subr.mxu0 0.0
    %4589 = vmatpush2.msra.mxu0 0.0
    %4590 = vmatprep.mubr.f32.mxu0 0.0
    %4591 = vmatmul.mubr.f32.gmra.mxu0 %v4524
    %v4592 = vpop.f32.mrf.mxu0
    %v4593 = vadd.f32 0.0, %v4592
    %v4594 = vpop.f32.mrf.mxu0
    %v4595 = vadd.f32 0.0, %v4594
    %4596 = vdwg.mxu0
    %4597 = vmatprep.subr.mxu0 0.0
    %4598 = vmatpush1.msra.mxu0 0.0
    %4599 = vmatprep.subr.mxu0 0.0
    %4600 = vmatpush1.msra.mxu0 0.0
    %4601 = vmatprep.subr.mxu0 0.0
    %4602 = vmatpush1.msra.mxu0 0.0
    %4603 = vmatprep.subr.mxu0 0.0
    %4604 = vmatpush1.msra.mxu0 0.0
    %4605 = vmatprep.subr.mxu0 0.0
    %4606 = vmatpush1.msra.mxu0 0.0
    %4607 = vmatprep.subr.mxu0 0.0
    %4608 = vmatpush1.msra.mxu0 0.0
    %4609 = vmatprep.subr.mxu0 0.0
    %4610 = vmatpush1.msra.mxu0 0.0
    %4611 = vmatprep.subr.mxu0 0.0
    %4612 = vmatpush1.msra.mxu0 0.0
    %4613 = vmatprep.subr.mxu0 0.0
    %4614 = vmatpush1.msra.mxu0 0.0
    %4615 = vmatprep.subr.mxu0 0.0
    %4616 = vmatpush1.msra.mxu0 0.0
    %4617 = vmatprep.subr.mxu0 0.0
    %4618 = vmatpush1.msra.mxu0 0.0
    %4619 = vmatprep.subr.mxu0 0.0
    %4620 = vmatpush1.msra.mxu0 0.0
    %4621 = vmatprep.subr.mxu0 0.0
    %4622 = vmatpush1.msra.mxu0 %v4522
    %4623 = vmatprep.subr.mxu0 0.0
    %4624 = vmatpush1.msra.mxu0 %v4519
    %4625 = vmatprep.subr.mxu0 0.0
    %4626 = vmatpush1.msra.mxu0 %v4516
    %4627 = vmatprep.subr.mxu0 0.0
    %4628 = vmatpush1.msra.mxu0 %v4513
    %4629 = vmatprep.subr.mxu0 0.0
    %4630 = vmatpush2.msra.mxu0 0.0
    %4631 = vmatprep.subr.mxu0 0.0
    %4632 = vmatpush2.msra.mxu0 0.0
    %4633 = vmatprep.subr.mxu0 0.0
    %4634 = vmatpush2.msra.mxu0 0.0
    %4635 = vmatprep.subr.mxu0 0.0
    %4636 = vmatpush2.msra.mxu0 0.0
    %4637 = vmatprep.subr.mxu0 0.0
    %4638 = vmatpush2.msra.mxu0 0.0
    %4639 = vmatprep.subr.mxu0 0.0
    %4640 = vmatpush2.msra.mxu0 0.0
    %4641 = vmatprep.subr.mxu0 0.0
    %4642 = vmatpush2.msra.mxu0 0.0
    %4643 = vmatprep.subr.mxu0 0.0
    %4644 = vmatpush2.msra.mxu0 0.0
    %4645 = vmatprep.subr.mxu0 0.0
    %4646 = vmatpush2.msra.mxu0 0.0
    %4647 = vmatprep.subr.mxu0 0.0
    %4648 = vmatpush2.msra.mxu0 0.0
    %4649 = vmatprep.subr.mxu0 0.0
    %4650 = vmatpush2.msra.mxu0 0.0
    %4651 = vmatprep.subr.mxu0 0.0
    %4652 = vmatpush2.msra.mxu0 0.0
    %4653 = vmatprep.subr.mxu0 0.0
    %4654 = vmatpush2.msra.mxu0 0.0
    %4655 = vmatprep.subr.mxu0 0.0
    %4656 = vmatpush2.msra.mxu0 0.0
    %4657 = vmatprep.subr.mxu0 0.0
    %4658 = vmatpush2.msra.mxu0 0.0
    %4659 = vmatprep.subr.mxu0 0.0
    %4660 = vmatpush2.msra.mxu0 0.0
    %4661 = vmatprep.mubr.f32.mxu0 0.0
    %4662 = vmatmul.mubr.f32.gmra.mxu0 %v4524
    %v4663 = vpop.f32.mrf.mxu0
    %v4664 = vadd.f32 0.0, %v4663
    %v4665 = vpop.f32.mrf.mxu0
    %4666 = vdwg.mxu0
    %v4667 = vadd.f32 %v4499, %v4593
    %v4668 = vadd.f32 %v4500, %v4595
    %v4669 = vadd.f32 %v4501, %v4664
    %v4671 = vrot.slane %v643, 2
    %v4673 = vmax.f32 %v643, %v4671
    %v4675 = vrot.slane %v4673, 4
    %v4677 = vmax.f32 %v4673, %v4675
    %s4678 = scalar_lea.vmem %s3, 2304
    %v4679 = vld [vmem:[%s4678] sm:$0xff]
    %v4680 = vld [vmem:[%s4678 + $0x8] sm:$0xff]
    %v4681 = vld [vmem:[%s4678 + $0x10] sm:$0xff]
    %v4682 = vld [vmem:[%s4678 + $0x18] sm:$0xff]
    %v4683 = vld [vmem:[%s4678 + $0x20] sm:$0xff]
    %v4684 = vld [vmem:[%s4678 + $0x28] sm:$0xff]
    %v4685 = vld [vmem:[%s4678 + $0x30] sm:$0xff]
    %v4686 = vld [vmem:[%s4678 + $0x38] sm:$0xff]
    %v4687 = vld [vmem:[%s4678 + $0x40] sm:$0xff]
    %v4688 = vld [vmem:[%s4678 + $0x48] sm:$0xff]
    %v4689 = vld [vmem:[%s4678 + $0x50] sm:$0xff]
    %v4690 = vld [vmem:[%s4678 + $0x58] sm:$0xff]
    %v4692 = vsel %vm685, %v4677, 0
    %4694 = vmatprep.subr.mxu0 0.0
    %4695 = vmatpush1.msra.mxu0 0.0
    %4696 = vmatprep.subr.mxu0 0.0
    %4697 = vmatpush1.msra.mxu0 0.0
    %4698 = vmatprep.subr.mxu0 0.0
    %4699 = vmatpush1.msra.mxu0 0.0
    %4700 = vmatprep.subr.mxu0 0.0
    %4701 = vmatpush1.msra.mxu0 0.0
    %4702 = vmatprep.subr.mxu0 0.0
    %4703 = vmatpush1.msra.mxu0 0.0
    %4704 = vmatprep.subr.mxu0 0.0
    %4705 = vmatpush1.msra.mxu0 0.0
    %4706 = vmatprep.subr.mxu0 0.0
    %4707 = vmatpush1.msra.mxu0 0.0
    %4708 = vmatprep.subr.mxu0 0.0
    %4709 = vmatpush1.msra.mxu0 0.0
    %4710 = vmatprep.subr.mxu0 0.0
    %4711 = vmatpush1.msra.mxu0 0.0
    %4712 = vmatprep.subr.mxu0 0.0
    %4713 = vmatpush1.msra.mxu0 0.0
    %4714 = vmatprep.subr.mxu0 0.0
    %4715 = vmatpush1.msra.mxu0 0.0
    %4716 = vmatprep.subr.mxu0 0.0
    %4717 = vmatpush1.msra.mxu0 0.0
    %4718 = vmatprep.subr.mxu0 %v4689
    %4719 = vmatpush1.msra.mxu0 %v4688
    %4720 = vmatprep.subr.mxu0 %v4686
    %4721 = vmatpush1.msra.mxu0 %v4685
    %4722 = vmatprep.subr.mxu0 %v4683
    %4723 = vmatpush1.msra.mxu0 %v4682
    %4724 = vmatprep.subr.mxu0 %v4680
    %4725 = vmatpush1.msra.mxu0 %v4679
    %4726 = vmatprep.subr.mxu0 0.0
    %4727 = vmatpush2.msra.mxu0 0.0
    %4728 = vmatprep.subr.mxu0 0.0
    %4729 = vmatpush2.msra.mxu0 0.0
    %4730 = vmatprep.subr.mxu0 0.0
    %4731 = vmatpush2.msra.mxu0 0.0
    %4732 = vmatprep.subr.mxu0 0.0
    %4733 = vmatpush2.msra.mxu0 0.0
    %4734 = vmatprep.subr.mxu0 0.0
    %4735 = vmatpush2.msra.mxu0 0.0
    %4736 = vmatprep.subr.mxu0 0.0
    %4737 = vmatpush2.msra.mxu0 0.0
    %4738 = vmatprep.subr.mxu0 0.0
    %4739 = vmatpush2.msra.mxu0 0.0
    %4740 = vmatprep.subr.mxu0 0.0
    %4741 = vmatpush2.msra.mxu0 0.0
    %4742 = vmatprep.subr.mxu0 0.0
    %4743 = vmatpush2.msra.mxu0 0.0
    %4744 = vmatprep.subr.mxu0 0.0
    %4745 = vmatpush2.msra.mxu0 0.0
    %4746 = vmatprep.subr.mxu0 0.0
    %4747 = vmatpush2.msra.mxu0 0.0
    %4748 = vmatprep.subr.mxu0 0.0
    %4749 = vmatpush2.msra.mxu0 0.0
    %4750 = vmatprep.subr.mxu0 0.0
    %4751 = vmatpush2.msra.mxu0 0.0
    %4752 = vmatprep.subr.mxu0 0.0
    %4753 = vmatpush2.msra.mxu0 0.0
    %4754 = vmatprep.subr.mxu0 0.0
    %4755 = vmatpush2.msra.mxu0 0.0
    %4756 = vmatprep.subr.mxu0 0.0
    %4757 = vmatpush2.msra.mxu0 0.0
    %4758 = vmatprep.mubr.f32.mxu0 0.0
    %4759 = vmatmul.mubr.f32.gmra.mxu0 %v4692
    %v4760 = vpop.f32.mrf.mxu0
    %v4761 = vadd.f32 0.0, %v4760
    %v4762 = vpop.f32.mrf.mxu0
    %v4763 = vadd.f32 0.0, %v4762
    %4764 = vdwg.mxu0
    %4765 = vmatprep.subr.mxu0 0.0
    %4766 = vmatpush1.msra.mxu0 0.0
    %4767 = vmatprep.subr.mxu0 0.0
    %4768 = vmatpush1.msra.mxu0 0.0
    %4769 = vmatprep.subr.mxu0 0.0
    %4770 = vmatpush1.msra.mxu0 0.0
    %4771 = vmatprep.subr.mxu0 0.0
    %4772 = vmatpush1.msra.mxu0 0.0
    %4773 = vmatprep.subr.mxu0 0.0
    %4774 = vmatpush1.msra.mxu0 0.0
    %4775 = vmatprep.subr.mxu0 0.0
    %4776 = vmatpush1.msra.mxu0 0.0
    %4777 = vmatprep.subr.mxu0 0.0
    %4778 = vmatpush1.msra.mxu0 0.0
    %4779 = vmatprep.subr.mxu0 0.0
    %4780 = vmatpush1.msra.mxu0 0.0
    %4781 = vmatprep.subr.mxu0 0.0
    %4782 = vmatpush1.msra.mxu0 0.0
    %4783 = vmatprep.subr.mxu0 0.0
    %4784 = vmatpush1.msra.mxu0 0.0
    %4785 = vmatprep.subr.mxu0 0.0
    %4786 = vmatpush1.msra.mxu0 0.0
    %4787 = vmatprep.subr.mxu0 0.0
    %4788 = vmatpush1.msra.mxu0 0.0
    %4789 = vmatprep.subr.mxu0 0.0
    %4790 = vmatpush1.msra.mxu0 %v4690
    %4791 = vmatprep.subr.mxu0 0.0
    %4792 = vmatpush1.msra.mxu0 %v4687
    %4793 = vmatprep.subr.mxu0 0.0
    %4794 = vmatpush1.msra.mxu0 %v4684
    %4795 = vmatprep.subr.mxu0 0.0
    %4796 = vmatpush1.msra.mxu0 %v4681
    %4797 = vmatprep.subr.mxu0 0.0
    %4798 = vmatpush2.msra.mxu0 0.0
    %4799 = vmatprep.subr.mxu0 0.0
    %4800 = vmatpush2.msra.mxu0 0.0
    %4801 = vmatprep.subr.mxu0 0.0
    %4802 = vmatpush2.msra.mxu0 0.0
    %4803 = vmatprep.subr.mxu0 0.0
    %4804 = vmatpush2.msra.mxu0 0.0
    %4805 = vmatprep.subr.mxu0 0.0
    %4806 = vmatpush2.msra.mxu0 0.0
    %4807 = vmatprep.subr.mxu0 0.0
    %4808 = vmatpush2.msra.mxu0 0.0
    %4809 = vmatprep.subr.mxu0 0.0
    %4810 = vmatpush2.msra.mxu0 0.0
    %4811 = vmatprep.subr.mxu0 0.0
    %4812 = vmatpush2.msra.mxu0 0.0
    %4813 = vmatprep.subr.mxu0 0.0
    %4814 = vmatpush2.msra.mxu0 0.0
    %4815 = vmatprep.subr.mxu0 0.0
    %4816 = vmatpush2.msra.mxu0 0.0
    %4817 = vmatprep.subr.mxu0 0.0
    %4818 = vmatpush2.msra.mxu0 0.0
    %4819 = vmatprep.subr.mxu0 0.0
    %4820 = vmatpush2.msra.mxu0 0.0
    %4821 = vmatprep.subr.mxu0 0.0
    %4822 = vmatpush2.msra.mxu0 0.0
    %4823 = vmatprep.subr.mxu0 0.0
    %4824 = vmatpush2.msra.mxu0 0.0
    %4825 = vmatprep.subr.mxu0 0.0
    %4826 = vmatpush2.msra.mxu0 0.0
    %4827 = vmatprep.subr.mxu0 0.0
    %4828 = vmatpush2.msra.mxu0 0.0
    %4829 = vmatprep.mubr.f32.mxu0 0.0
    %4830 = vmatmul.mubr.f32.gmra.mxu0 %v4692
    %v4831 = vpop.f32.mrf.mxu0
    %v4832 = vadd.f32 0.0, %v4831
    %v4833 = vpop.f32.mrf.mxu0
    %4834 = vdwg.mxu0
    %v4835 = vadd.f32 %v4667, %v4761
    %v4836 = vadd.f32 %v4668, %v4763
    %v4837 = vadd.f32 %v4669, %v4832
    %v4838 = vld [vmem:[%s4] sm:$0x7]
    %v4840 = vlaneseq
    %v4841 = vshrl.u32 %v4840, 7
    %v4842 = vsub.s32 0, %v4841
    %v4843 = vrot.slane %v4838, %v4842
    %v4844 = vlaneseq
    %v4845 = vshrl.u32 %v4844, 7
    %v4846 = vsub.s32 1, %v4845
    %v4847 = vrot.slane %v4838, %v4846
    %v4848 = vlaneseq
    %v4849 = vshrl.u32 %v4848, 7
    %v4850 = vsub.s32 2, %v4849
    %v4851 = vrot.slane %v4838, %v4850
    %v4855 = vadd.f32 %v4835, %v4843
    %v4856 = vadd.f32 %v4836, %v4847
    %v4857 = vadd.f32 %v4837, %v4851
    %v4858 = vmax.f32 %v4855, 0.0
    %v4859 = vmax.f32 %v4856, 0.0
    %v4860 = vmax.f32 %v4857, 0.0
    %v4861 = vld [vmem:[%s5] sm:$0xff]
    %v4862 = vld [vmem:[%s5 + $0x8] sm:$0xff]
    %v4863 = vld [vmem:[%s5 + $0x10] sm:$0xff]
    %v4864 = vld [vmem:[%s5 + $0x18] sm:$0xff]
    %v4865 = vld [vmem:[%s5 + $0x20] sm:$0xff]
    %v4866 = vld [vmem:[%s5 + $0x28] sm:$0xff]
    %v4867 = vld [vmem:[%s5 + $0x30] sm:$0xff]
    %v4868 = vld [vmem:[%s5 + $0x38] sm:$0xff]
    %v4869 = vld [vmem:[%s5 + $0x40] sm:$0xff]
    %v4870 = vld [vmem:[%s5 + $0x48] sm:$0xff]
    %v4871 = vld [vmem:[%s5 + $0x50] sm:$0xff]
    %v4872 = vld [vmem:[%s5 + $0x58] sm:$0xff]
    %v4873 = vld [vmem:[%s5 + $0x60] sm:$0xff]
    %v4874 = vld [vmem:[%s5 + $0x68] sm:$0xff]
    %v4875 = vld [vmem:[%s5 + $0x70] sm:$0xff]
    %v4876 = vld [vmem:[%s5 + $0x78] sm:$0xff]
    %v4877 = vld [vmem:[%s5 + $0x80] sm:$0xff]
    %v4878 = vld [vmem:[%s5 + $0x88] sm:$0xff]
    %v4879 = vld [vmem:[%s5 + $0x90] sm:$0xff]
    %v4880 = vld [vmem:[%s5 + $0x98] sm:$0xff]
    %v4881 = vld [vmem:[%s5 + $0xa0] sm:$0xff]
    %v4882 = vld [vmem:[%s5 + $0xa8] sm:$0xff]
    %v4883 = vld [vmem:[%s5 + $0xb0] sm:$0xff]
    %v4884 = vld [vmem:[%s5 + $0xb8] sm:$0xff]
    %v4885 = vld [vmem:[%s5 + $0xc0] sm:$0xff]
    %v4886 = vld [vmem:[%s5 + $0xc8] sm:$0xff]
    %v4887 = vld [vmem:[%s5 + $0xd0] sm:$0xff]
    %v4888 = vld [vmem:[%s5 + $0xd8] sm:$0xff]
    %v4889 = vld [vmem:[%s5 + $0xe0] sm:$0xff]
    %v4890 = vld [vmem:[%s5 + $0xe8] sm:$0xff]
    %v4891 = vld [vmem:[%s5 + $0xf0] sm:$0xff]
    %v4892 = vld [vmem:[%s5 + $0xf8] sm:$0xff]
    %v4893 = vld [vmem:[%s5 + $0x100] sm:$0xff]
    %v4894 = vld [vmem:[%s5 + $0x108] sm:$0xff]
    %v4895 = vld [vmem:[%s5 + $0x110] sm:$0xff]
    %v4896 = vld [vmem:[%s5 + $0x118] sm:$0xff]
    %v4897 = vld [vmem:[%s5 + $0x120] sm:$0xff]
    %v4898 = vld [vmem:[%s5 + $0x128] sm:$0xff]
    %v4899 = vld [vmem:[%s5 + $0x130] sm:$0xff]
    %v4900 = vld [vmem:[%s5 + $0x138] sm:$0xff]
    %v4901 = vld [vmem:[%s5 + $0x140] sm:$0xff]
    %v4902 = vld [vmem:[%s5 + $0x148] sm:$0xff]
    %v4903 = vld [vmem:[%s5 + $0x150] sm:$0xff]
    %v4904 = vld [vmem:[%s5 + $0x158] sm:$0xff]
    %v4905 = vld [vmem:[%s5 + $0x160] sm:$0xff]
    %v4906 = vld [vmem:[%s5 + $0x168] sm:$0xff]
    %v4907 = vld [vmem:[%s5 + $0x170] sm:$0xff]
    %v4908 = vld [vmem:[%s5 + $0x178] sm:$0xff]
    %v4909 = vld [vmem:[%s5 + $0x180] sm:$0xff]
    %v4910 = vld [vmem:[%s5 + $0x188] sm:$0xff]
    %v4911 = vld [vmem:[%s5 + $0x190] sm:$0xff]
    %v4912 = vld [vmem:[%s5 + $0x198] sm:$0xff]
    %v4913 = vld [vmem:[%s5 + $0x1a0] sm:$0xff]
    %v4914 = vld [vmem:[%s5 + $0x1a8] sm:$0xff]
    %v4915 = vld [vmem:[%s5 + $0x1b0] sm:$0xff]
    %v4916 = vld [vmem:[%s5 + $0x1b8] sm:$0xff]
    %v4917 = vld [vmem:[%s5 + $0x1c0] sm:$0xff]
    %v4918 = vld [vmem:[%s5 + $0x1c8] sm:$0xff]
    %v4919 = vld [vmem:[%s5 + $0x1d0] sm:$0xff]
    %v4920 = vld [vmem:[%s5 + $0x1d8] sm:$0xff]
    %v4921 = vld [vmem:[%s5 + $0x1e0] sm:$0xff]
    %v4922 = vld [vmem:[%s5 + $0x1e8] sm:$0xff]
    %v4923 = vld [vmem:[%s5 + $0x1f0] sm:$0xff]
    %v4924 = vld [vmem:[%s5 + $0x1f8] sm:$0xff]
    %v4925 = vld [vmem:[%s5 + $0x200] sm:$0xff]
    %v4926 = vld [vmem:[%s5 + $0x208] sm:$0xff]
    %v4927 = vld [vmem:[%s5 + $0x210] sm:$0xff]
    %v4928 = vld [vmem:[%s5 + $0x218] sm:$0xff]
    %v4929 = vld [vmem:[%s5 + $0x220] sm:$0xff]
    %v4930 = vld [vmem:[%s5 + $0x228] sm:$0xff]
    %v4931 = vld [vmem:[%s5 + $0x230] sm:$0xff]
    %v4932 = vld [vmem:[%s5 + $0x238] sm:$0xff]
    %v4933 = vld [vmem:[%s5 + $0x240] sm:$0xff]
    %v4934 = vld [vmem:[%s5 + $0x248] sm:$0xff]
    %v4935 = vld [vmem:[%s5 + $0x250] sm:$0xff]
    %v4936 = vld [vmem:[%s5 + $0x258] sm:$0xff]
    %v4937 = vld [vmem:[%s5 + $0x260] sm:$0xff]
    %v4938 = vld [vmem:[%s5 + $0x268] sm:$0xff]
    %v4939 = vld [vmem:[%s5 + $0x270] sm:$0xff]
    %v4940 = vld [vmem:[%s5 + $0x278] sm:$0xff]
    %v4941 = vld [vmem:[%s5 + $0x280] sm:$0xff]
    %v4942 = vld [vmem:[%s5 + $0x288] sm:$0xff]
    %v4943 = vld [vmem:[%s5 + $0x290] sm:$0xff]
    %v4944 = vld [vmem:[%s5 + $0x298] sm:$0xff]
    %v4945 = vld [vmem:[%s6] sm:$0x3]
    %v4947 = vlaneseq
    %v4948 = vshrl.u32 %v4947, 7
    %v4949 = vsub.s32 0, %v4948
    %v4950 = vrot.slane %v4945, %v4949
    %v4951 = vlaneseq
    %v4952 = vshrl.u32 %v4951, 7
    %v4953 = vsub.s32 1, %v4952
    %v4954 = vrot.slane %v4945, %v4953
    %vm4957 = vcmask 654336
    %v4959 = vsel %vm4957, %v4860, 0
    %4961 = vmatprep.subr.mxu0 %v4892
    %4962 = vmatpush1.msra.mxu0 %v4891
    %4963 = vmatprep.subr.mxu0 %v4890
    %4964 = vmatpush1.msra.mxu0 %v4889
    %4965 = vmatprep.subr.mxu0 %v4888
    %4966 = vmatpush1.msra.mxu0 %v4887
    %4967 = vmatprep.subr.mxu0 %v4886
    %4968 = vmatpush1.msra.mxu0 %v4885
    %4969 = vmatprep.subr.mxu0 %v4884
    %4970 = vmatpush1.msra.mxu0 %v4883
    %4971 = vmatprep.subr.mxu0 %v4882
    %4972 = vmatpush1.msra.mxu0 %v4881
    %4973 = vmatprep.subr.mxu0 %v4880
    %4974 = vmatpush1.msra.mxu0 %v4879
    %4975 = vmatprep.subr.mxu0 %v4878
    %4976 = vmatpush1.msra.mxu0 %v4877
    %4977 = vmatprep.subr.mxu0 %v4876
    %4978 = vmatpush1.msra.mxu0 %v4875
    %4979 = vmatprep.subr.mxu0 %v4874
    %4980 = vmatpush1.msra.mxu0 %v4873
    %4981 = vmatprep.subr.mxu0 %v4872
    %4982 = vmatpush1.msra.mxu0 %v4871
    %4983 = vmatprep.subr.mxu0 %v4870
    %4984 = vmatpush1.msra.mxu0 %v4869
    %4985 = vmatprep.subr.mxu0 %v4868
    %4986 = vmatpush1.msra.mxu0 %v4867
    %4987 = vmatprep.subr.mxu0 %v4866
    %4988 = vmatpush1.msra.mxu0 %v4865
    %4989 = vmatprep.subr.mxu0 %v4864
    %4990 = vmatpush1.msra.mxu0 %v4863
    %4991 = vmatprep.subr.mxu0 %v4862
    %4992 = vmatpush1.msra.mxu0 %v4861
    %4993 = vmatprep.subr.mxu0 %v4924
    %4994 = vmatpush2.msra.mxu0 %v4923
    %4995 = vmatprep.subr.mxu0 %v4922
    %4996 = vmatpush2.msra.mxu0 %v4921
    %4997 = vmatprep.subr.mxu0 %v4920
    %4998 = vmatpush2.msra.mxu0 %v4919
    %4999 = vmatprep.subr.mxu0 %v4918
    %5000 = vmatpush2.msra.mxu0 %v4917
    %5001 = vmatprep.subr.mxu0 %v4916
    %5002 = vmatpush2.msra.mxu0 %v4915
    %5003 = vmatprep.subr.mxu0 %v4914
    %5004 = vmatpush2.msra.mxu0 %v4913
    %5005 = vmatprep.subr.mxu0 %v4912
    %5006 = vmatpush2.msra.mxu0 %v4911
    %5007 = vmatprep.subr.mxu0 %v4910
    %5008 = vmatpush2.msra.mxu0 %v4909
    %5009 = vmatprep.subr.mxu0 %v4908
    %5010 = vmatpush2.msra.mxu0 %v4907
    %5011 = vmatprep.subr.mxu0 %v4906
    %5012 = vmatpush2.msra.mxu0 %v4905
    %5013 = vmatprep.subr.mxu0 %v4904
    %5014 = vmatpush2.msra.mxu0 %v4903
    %5015 = vmatprep.subr.mxu0 %v4902
    %5016 = vmatpush2.msra.mxu0 %v4901
    %5017 = vmatprep.subr.mxu0 %v4900
    %5018 = vmatpush2.msra.mxu0 %v4899
    %5019 = vmatprep.subr.mxu0 %v4898
    %5020 = vmatpush2.msra.mxu0 %v4897
    %5021 = vmatprep.subr.mxu0 %v4896
    %5022 = vmatpush2.msra.mxu0 %v4895
    %5023 = vmatprep.subr.mxu0 %v4894
    %5024 = vmatpush2.msra.mxu0 %v4893
    %5025 = vmatprep.mubr.f32.mxu0 %v4859
    %5026 = vmatmul.mubr.f32.gmra.mxu0 %v4858
    %v5027 = vpop.f32.mrf.mxu0
    %v5028 = vadd.f32 %v4950, %v5027
    %v5029 = vpop.f32.mrf.mxu0
    %v5030 = vadd.f32 %v4954, %v5029
    %5031 = vdwg.mxu0
    %5032 = vmatprep.subr.mxu0 0.0
    %5033 = vmatpush1.msra.mxu0 0.0
    %5034 = vmatprep.subr.mxu0 0.0
    %5035 = vmatpush1.msra.mxu0 0.0
    %5036 = vmatprep.subr.mxu0 0.0
    %5037 = vmatpush1.msra.mxu0 0.0
    %5038 = vmatprep.subr.mxu0 0.0
    %5039 = vmatpush1.msra.mxu0 0.0
    %5040 = vmatprep.subr.mxu0 0.0
    %5041 = vmatpush1.msra.mxu0 0.0
    %5042 = vmatprep.subr.mxu0 0.0
    %5043 = vmatpush1.msra.mxu0 0.0
    %5044 = vmatprep.subr.mxu0 %v4944
    %5045 = vmatpush1.msra.mxu0 %v4943
    %5046 = vmatprep.subr.mxu0 %v4942
    %5047 = vmatpush1.msra.mxu0 %v4941
    %5048 = vmatprep.subr.mxu0 %v4940
    %5049 = vmatpush1.msra.mxu0 %v4939
    %5050 = vmatprep.subr.mxu0 %v4938
    %5051 = vmatpush1.msra.mxu0 %v4937
    %5052 = vmatprep.subr.mxu0 %v4936
    %5053 = vmatpush1.msra.mxu0 %v4935
    %5054 = vmatprep.subr.mxu0 %v4934
    %5055 = vmatpush1.msra.mxu0 %v4933
    %5056 = vmatprep.subr.mxu0 %v4932
    %5057 = vmatpush1.msra.mxu0 %v4931
    %5058 = vmatprep.subr.mxu0 %v4930
    %5059 = vmatpush1.msra.mxu0 %v4929
    %5060 = vmatprep.subr.mxu0 %v4928
    %5061 = vmatpush1.msra.mxu0 %v4927
    %5062 = vmatprep.subr.mxu0 %v4926
    %5063 = vmatpush1.msra.mxu0 %v4925
    %5064 = vmatprep.subr.mxu0 0.0
    %5065 = vmatpush2.msra.mxu0 0.0
    %5066 = vmatprep.subr.mxu0 0.0
    %5067 = vmatpush2.msra.mxu0 0.0
    %5068 = vmatprep.subr.mxu0 0.0
    %5069 = vmatpush2.msra.mxu0 0.0
    %5070 = vmatprep.subr.mxu0 0.0
    %5071 = vmatpush2.msra.mxu0 0.0
    %5072 = vmatprep.subr.mxu0 0.0
    %5073 = vmatpush2.msra.mxu0 0.0
    %5074 = vmatprep.subr.mxu0 0.0
    %5075 = vmatpush2.msra.mxu0 0.0
    %5076 = vmatprep.subr.mxu0 0.0
    %5077 = vmatpush2.msra.mxu0 0.0
    %5078 = vmatprep.subr.mxu0 0.0
    %5079 = vmatpush2.msra.mxu0 0.0
    %5080 = vmatprep.subr.mxu0 0.0
    %5081 = vmatpush2.msra.mxu0 0.0
    %5082 = vmatprep.subr.mxu0 0.0
    %5083 = vmatpush2.msra.mxu0 0.0
    %5084 = vmatprep.subr.mxu0 0.0
    %5085 = vmatpush2.msra.mxu0 0.0
    %5086 = vmatprep.subr.mxu0 0.0
    %5087 = vmatpush2.msra.mxu0 0.0
    %5088 = vmatprep.subr.mxu0 0.0
    %5089 = vmatpush2.msra.mxu0 0.0
    %5090 = vmatprep.subr.mxu0 0.0
    %5091 = vmatpush2.msra.mxu0 0.0
    %5092 = vmatprep.subr.mxu0 0.0
    %5093 = vmatpush2.msra.mxu0 0.0
    %5094 = vmatprep.subr.mxu0 0.0
    %5095 = vmatpush2.msra.mxu0 0.0
    %5096 = vmatprep.mubr.f32.mxu0 0.0
    %5097 = vmatmul.mubr.f32.gmra.mxu0 %v4959
    %v5098 = vpop.f32.mrf.mxu0
    %v5099 = vadd.f32 %v5028, %v5098
    %v5100 = vpop.f32.mrf.mxu0
    %v5101 = vadd.f32 %v5030, %v5100
    %5102 = vdwg.mxu0
    %v5103 = vmax.f32 %v5099, 0.0
    %v5104 = vmax.f32 %v5101, 0.0
    %v5105 = vld [vmem:[%s7] sm:$0xff]
    %v5106 = vld [vmem:[%s7 + $0x8] sm:$0xff]
    %v5107 = vld [vmem:[%s7 + $0x10] sm:$0xff]
    %v5108 = vld [vmem:[%s7 + $0x18] sm:$0xff]
    %v5109 = vld [vmem:[%s7 + $0x20] sm:$0xff]
    %v5110 = vld [vmem:[%s7 + $0x28] sm:$0xff]
    %v5111 = vld [vmem:[%s7 + $0x30] sm:$0xff]
    %v5112 = vld [vmem:[%s7 + $0x38] sm:$0xff]
    %v5113 = vld [vmem:[%s7 + $0x40] sm:$0xff]
    %v5114 = vld [vmem:[%s7 + $0x48] sm:$0xff]
    %v5115 = vld [vmem:[%s7 + $0x50] sm:$0xff]
    %v5116 = vld [vmem:[%s7 + $0x58] sm:$0xff]
    %v5117 = vld [vmem:[%s7 + $0x60] sm:$0xff]
    %v5118 = vld [vmem:[%s7 + $0x68] sm:$0xff]
    %v5119 = vld [vmem:[%s7 + $0x70] sm:$0xff]
    %v5120 = vld [vmem:[%s7 + $0x78] sm:$0xff]
    %v5121 = vld [vmem:[%s7 + $0x80] sm:$0xff]
    %v5122 = vld [vmem:[%s7 + $0x88] sm:$0xff]
    %v5123 = vld [vmem:[%s7 + $0x90] sm:$0xff]
    %v5124 = vld [vmem:[%s7 + $0x98] sm:$0xff]
    %v5125 = vld [vmem:[%s7 + $0xa0] sm:$0xff]
    %v5126 = vld [vmem:[%s8] sm:$0x1]
    %v5128 = vlaneseq
    %v5129 = vshrl.u32 %v5128, 7
    %v5130 = vsub.s32 0, %v5129
    %v5131 = vrot.slane %v5126, %v5130
    %vm5133 = vcmask 326656
    %v5135 = vsel %vm5133, %v5104, 0
    %5137 = vmatprep.subr.mxu0 0.0
    %5138 = vmatpush1.msra.mxu0 %v5120
    %5139 = vmatprep.subr.mxu0 0.0
    %5140 = vmatpush1.msra.mxu0 %v5119
    %5141 = vmatprep.subr.mxu0 0.0
    %5142 = vmatpush1.msra.mxu0 %v5118
    %5143 = vmatprep.subr.mxu0 0.0
    %5144 = vmatpush1.msra.mxu0 %v5117
    %5145 = vmatprep.subr.mxu0 0.0
    %5146 = vmatpush1.msra.mxu0 %v5116
    %5147 = vmatprep.subr.mxu0 0.0
    %5148 = vmatpush1.msra.mxu0 %v5115
    %5149 = vmatprep.subr.mxu0 0.0
    %5150 = vmatpush1.msra.mxu0 %v5114
    %5151 = vmatprep.subr.mxu0 0.0
    %5152 = vmatpush1.msra.mxu0 %v5113
    %5153 = vmatprep.subr.mxu0 0.0
    %5154 = vmatpush1.msra.mxu0 %v5112
    %5155 = vmatprep.subr.mxu0 0.0
    %5156 = vmatpush1.msra.mxu0 %v5111
    %5157 = vmatprep.subr.mxu0 0.0
    %5158 = vmatpush1.msra.mxu0 %v5110
    %5159 = vmatprep.subr.mxu0 0.0
    %5160 = vmatpush1.msra.mxu0 %v5109
    %5161 = vmatprep.subr.mxu0 0.0
    %5162 = vmatpush1.msra.mxu0 %v5108
    %5163 = vmatprep.subr.mxu0 0.0
    %5164 = vmatpush1.msra.mxu0 %v5107
    %5165 = vmatprep.subr.mxu0 0.0
    %5166 = vmatpush1.msra.mxu0 %v5106
    %5167 = vmatprep.subr.mxu0 0.0
    %5168 = vmatpush1.msra.mxu0 %v5105
    %5169 = vmatprep.subr.mxu0 0.0
    %5170 = vmatpush2.msra.mxu0 0.0
    %5171 = vmatprep.subr.mxu0 0.0
    %5172 = vmatpush2.msra.mxu0 0.0
    %5173 = vmatprep.subr.mxu0 0.0
    %5174 = vmatpush2.msra.mxu0 0.0
    %5175 = vmatprep.subr.mxu0 0.0
    %5176 = vmatpush2.msra.mxu0 0.0
    %5177 = vmatprep.subr.mxu0 0.0
    %5178 = vmatpush2.msra.mxu0 0.0
    %5179 = vmatprep.subr.mxu0 0.0
    %5180 = vmatpush2.msra.mxu0 0.0
    %5181 = vmatprep.subr.mxu0 0.0
    %5182 = vmatpush2.msra.mxu0 0.0
    %5183 = vmatprep.subr.mxu0 0.0
    %5184 = vmatpush2.msra.mxu0 0.0
    %5185 = vmatprep.subr.mxu0 0.0
    %5186 = vmatpush2.msra.mxu0 0.0
    %5187 = vmatprep.subr.mxu0 0.0
    %5188 = vmatpush2.msra.mxu0 0.0
    %5189 = vmatprep.subr.mxu0 0.0
    %5190 = vmatpush2.msra.mxu0 0.0
    %5191 = vmatprep.subr.mxu0 0.0
    %5192 = vmatpush2.msra.mxu0 %v5125
    %5193 = vmatprep.subr.mxu0 0.0
    %5194 = vmatpush2.msra.mxu0 %v5124
    %5195 = vmatprep.subr.mxu0 0.0
    %5196 = vmatpush2.msra.mxu0 %v5123
    %5197 = vmatprep.subr.mxu0 0.0
    %5198 = vmatpush2.msra.mxu0 %v5122
    %5199 = vmatprep.subr.mxu0 0.0
    %5200 = vmatpush2.msra.mxu0 %v5121
    %5201 = vmatprep.mubr.f32.mxu0 %v5135
    %5202 = vmatmul.mubr.f32.gmra.mxu0 %v5103
    %v5203 = vpop.f32.mrf.mxu0
    %v5204 = vadd.f32 %v5131, %v5203
    %v5205 = vpop.f32.mrf.mxu0
    %5206 = vdwg.mxu0
    %v5207 = vmax.f32 %v5204, 0.0
    %v5208 = vld [vmem:[%s9] sm:$0xff]
    %v5209 = vld [vmem:[%s9 + $0x8] sm:$0xff]
    %v5210 = vld [vmem:[%s9 + $0x10] sm:$0xff]
    %v5211 = vld [vmem:[%s9 + $0x18] sm:$0xff]
    %v5212 = vld [vmem:[%s9 + $0x20] sm:$0xff]
    %v5213 = vld [vmem:[%s9 + $0x28] sm:$0xff]
    %v5214 = vld [vmem:[%s9 + $0x30] sm:$0xff]
    %v5215 = vld [vmem:[%s9 + $0x38] sm:$0xff]
    %v5216 = vld [vmem:[%s9 + $0x40] sm:$0xff]
    %v5217 = vld [vmem:[%s9 + $0x48] sm:$0xff]
    %v5218 = vld [vmem:[%s9 + $0x50] sm:$0xf]
    %v5219 = vld [vmem:[%s10] sm:$0x1]
    %v5221 = vlaneseq
    %v5222 = vshrl.u32 %v5221, 7
    %v5223 = vsub.s32 0, %v5222
    %v5224 = vrot.slane %v5219, %v5223
    %vm5226 = vcmask 687104
    %v5228 = vsel %vm5226, %v5207, 0
    %v5231 = vsel %vm235, %v5218, 0
    %5233 = vmatprep.subr.mxu0 0.0
    %5234 = vmatpush1.msra.mxu0 0.0
    %5235 = vmatprep.subr.mxu0 0.0
    %5236 = vmatpush1.msra.mxu0 0.0
    %5237 = vmatprep.subr.mxu0 0.0
    %5238 = vmatpush1.msra.mxu0 0.0
    %5239 = vmatprep.subr.mxu0 0.0
    %5240 = vmatpush1.msra.mxu0 0.0
    %5241 = vmatprep.subr.mxu0 0.0
    %5242 = vmatpush1.msra.mxu0 0.0
    %5243 = vmatprep.subr.mxu0 0.0
    %5244 = vmatpush1.msra.mxu0 %v5231
    %5245 = vmatprep.subr.mxu0 0.0
    %5246 = vmatpush1.msra.mxu0 %v5217
    %5247 = vmatprep.subr.mxu0 0.0
    %5248 = vmatpush1.msra.mxu0 %v5216
    %5249 = vmatprep.subr.mxu0 0.0
    %5250 = vmatpush1.msra.mxu0 %v5215
    %5251 = vmatprep.subr.mxu0 0.0
    %5252 = vmatpush1.msra.mxu0 %v5214
    %5253 = vmatprep.subr.mxu0 0.0
    %5254 = vmatpush1.msra.mxu0 %v5213
    %5255 = vmatprep.subr.mxu0 0.0
    %5256 = vmatpush1.msra.mxu0 %v5212
    %5257 = vmatprep.subr.mxu0 0.0
    %5258 = vmatpush1.msra.mxu0 %v5211
    %5259 = vmatprep.subr.mxu0 0.0
    %5260 = vmatpush1.msra.mxu0 %v5210
    %5261 = vmatprep.subr.mxu0 0.0
    %5262 = vmatpush1.msra.mxu0 %v5209
    %5263 = vmatprep.subr.mxu0 0.0
    %5264 = vmatpush1.msra.mxu0 %v5208
    %5265 = vmatprep.subr.mxu0 0.0
    %5266 = vmatpush2.msra.mxu0 0.0
    %5267 = vmatprep.subr.mxu0 0.0
    %5268 = vmatpush2.msra.mxu0 0.0
    %5269 = vmatprep.subr.mxu0 0.0
    %5270 = vmatpush2.msra.mxu0 0.0
    %5271 = vmatprep.subr.mxu0 0.0
    %5272 = vmatpush2.msra.mxu0 0.0
    %5273 = vmatprep.subr.mxu0 0.0
    %5274 = vmatpush2.msra.mxu0 0.0
    %5275 = vmatprep.subr.mxu0 0.0
    %5276 = vmatpush2.msra.mxu0 0.0
    %5277 = vmatprep.subr.mxu0 0.0
    %5278 = vmatpush2.msra.mxu0 0.0
    %5279 = vmatprep.subr.mxu0 0.0
    %5280 = vmatpush2.msra.mxu0 0.0
    %5281 = vmatprep.subr.mxu0 0.0
    %5282 = vmatpush2.msra.mxu0 0.0
    %5283 = vmatprep.subr.mxu0 0.0
    %5284 = vmatpush2.msra.mxu0 0.0
    %5285 = vmatprep.subr.mxu0 0.0
    %5286 = vmatpush2.msra.mxu0 0.0
    %5287 = vmatprep.subr.mxu0 0.0
    %5288 = vmatpush2.msra.mxu0 0.0
    %5289 = vmatprep.subr.mxu0 0.0
    %5290 = vmatpush2.msra.mxu0 0.0
    %5291 = vmatprep.subr.mxu0 0.0
    %5292 = vmatpush2.msra.mxu0 0.0
    %5293 = vmatprep.subr.mxu0 0.0
    %5294 = vmatpush2.msra.mxu0 0.0
    %5295 = vmatprep.subr.mxu0 0.0
    %5296 = vmatpush2.msra.mxu0 0.0
    %5297 = vmatprep.mubr.f32.mxu0 0.0
    %5298 = vmatmul.mubr.f32.gmra.mxu0 %v5228
    %v5299 = vpop.f32.mrf.mxu0
    %v5300 = vadd.f32 %v5224, %v5299
    %v5301 = vpop.f32.mrf.mxu0
    %5302 = vdwg.mxu0
    %vm5303 = vcmask 74752
    %5304 = vst.msk [vmem:[#allocation2] sm:$0x3] %vm5303, %v5300
    // Predicated region
    $region46: #{lenet5_forward.3} parent=1 // pred_check
      _
    $region47: #{lenet5_forward.3} parent=1 // pred_check_branch
      %5306 = sbr.rel (0) target = $region49
    $region48: #{lenet5_forward.3} parent=1 // pred_region
      %s5308 = ssub.s32 32, 32
      %5309 = vsyncadd [#allocation3], %s5308
      %s5311 = sshll.u32 [#allocation2], 4
      %s5312 = int_to_ptr.vmem [resolvable:$true] %s5311
      %5314 = dma.vmem_to_hbm [thread:$0]  %s5312, 32, %s11, [#allocation3]
    $region49: #{lenet5_forward.3} parent=1 // pred_fallthru
      _
    // Predicated region
    $region50: #{lenet5_forward.3} parent=1 // pred_check
      _
    $region51: #{lenet5_forward.3} parent=1 // pred_check_branch
      %5316 = sbr.rel (0) target = $region53
    $region52: #{lenet5_forward.3} parent=1 // pred_region
      %5317 = dma.done [#allocation3], 32
    $region53: #{lenet5_forward.3} parent=1 // pred_fallthru
      _
    %5318 = vsyncpa [#allocation3], 1

</llo_original>
